<compile_context>
chip_gen: v6e
topology: v6e:2x2x1
jax: 0.10.0
libtpu: 0.0.40
codegen_flags: <defaults>
</compile_context>

<pallas_src>
from functools import partial

import numpy as np

import jax
import jax.numpy as jnp
from jax.experimental import pallas as pl
from jax.experimental.pallas import tpu as pltpu


def _round_up(x, m):
    return ((x + m - 1) // m) * m


# ---------------------------------------------------------------------------
# Fused kernel: full forward pass for a block of B samples
# ---------------------------------------------------------------------------

def _onset_net_kernel(x_ref, w1_ref, b1_ref, w2_ref, b2_ref,
                      wf1_ref, bf1_ref, wf2_ref, bf2_ref, out_ref, acc2_ref):
    f32 = jnp.float32
    bf16 = jnp.bfloat16
    B = out_ref.shape[0]                               # samples per grid step

    # ---- conv1 (1->16, 3x3, stride 2, pad 1) + ReLU, fused 2x2 max-pool ----
    # x_ref[phase, s*B + n, :] = padded input row (16*s + phase) of sample n.
    # Conv1 output rows oh are produced in 8 phase groups g = oh % 8; each group's
    # matmuls cover all 4 "s" slots and all B samples at once (M = 4*B rows).
    b1 = b1_ref[...]                                   # (1, 512) f32
    p1 = []                                            # p1[m][s*B+n, pw*16+c1] = pool1[4s+m, pw, c1]
    for m in range(4):                                 # pool1 row phase (ph % 4)
        ys = []
        for dh in range(2):                            # conv1 row parity inside the pooled pair
            g = 2 * m + dh                             # conv1 rows oh = 8*s + g
            acc = None
            for kh in range(3):
                r0 = 2 * g + kh                        # padded input rows 16*s + r0
                lhs = x_ref[r0 % 16, pl.ds((r0 // 16) * B, 4 * B), :]   # (4B, 65) bf16
                d = jnp.dot(lhs, w1_ref[kh], preferred_element_type=f32)
                acc = d if acc is None else acc + d
            ys.append(jnp.maximum(acc + b1, 0.0))      # (4B, 512), cols = (owp, pw, c1)
        # 2x2 max pool: rows pair across the two row parities, columns pair across the
        # two contiguous 256-wide output-column-parity halves.
        p1.append(jnp.maximum(jnp.maximum(ys[0][:, 0:256], ys[0][:, 256:512]),
                              jnp.maximum(ys[1][:, 0:256], ys[1][:, 256:512]))
                  .astype(bf16))                       # (4B, 256)

    # ---- conv2 (16->32, 3x3, stride 2, pad 1) + ReLU, fused 2x2 max-pool ----
    # Conv2 output rows oh2 = 2*t + dh2 need pool1 rows 4*t + (2*dh2 + kh2 - 1).
    b2 = b2_ref[...]                                   # (1, 256) f32

    # dh2 = 0: taps c = 0 (kh2=1), 1 (kh2=2) and the top-pad-shifted c = -1 (kh2=0).
    acc2_ref[...] = (jnp.dot(p1[0], w2_ref[1], preferred_element_type=f32)
                     + jnp.dot(p1[1], w2_ref[2], preferred_element_type=f32) + b2)
    # kh2=0 needs pool1 rows 4t-1: zero pad for t=0, p1[3] rows (t-1) for t>=1 ->
    # accumulate the shifted dot straight into rows [B:4B] (no zero-row concatenate).
    shift = jnp.dot(p1[3][0:3 * B, :], w2_ref[0], preferred_element_type=f32)   # (3B, 256)
    acc2_ref[pl.ds(B, 3 * B), :] += shift
    y2_even = jnp.maximum(acc2_ref[...], 0.0)          # (4B, 256): conv2 rows 2t

    # dh2 = 1: taps c = 1, 2, 3 (no padding involved).
    y2_odd = jnp.maximum(jnp.dot(p1[1], w2_ref[0], preferred_element_type=f32)
                         + jnp.dot(p1[2], w2_ref[1], preferred_element_type=f32)
                         + jnp.dot(p1[3], w2_ref[2], preferred_element_type=f32) + b2,
                         0.0)                          # (4B, 256): conv2 rows 2t+1

    # 2x2 max pool -> (4B, 128): rows (u, n), cols = v*32 + c2.
    p2 = jnp.maximum(jnp.maximum(y2_even[:, 0:128], y2_even[:, 128:256]),
                     jnp.maximum(y2_odd[:, 0:128], y2_odd[:, 128:256])).astype(bf16)

    # ---- Flatten + fc1 (512->512) + ReLU + fc2 (512->60, padded to 128 lanes) ----
    # PyTorch Flatten (C,H,W) order is folded into wf1; contract the 4 pool2 rows u.
    h = bf1_ref[...]                                   # (1, 512) f32, broadcasts over B
    for u in range(4):
        h = h + jnp.dot(p2[u * B:(u + 1) * B, :], wf1_ref[u], preferred_element_type=f32)
    h = jnp.maximum(h, 0.0).astype(bf16)               # (B, 512)
    out_ref[...] = (jnp.dot(h, wf2_ref[...], preferred_element_type=f32)
                    + bf2_ref[...]).astype(out_ref.dtype)


# ---------------------------------------------------------------------------
# pallas_call wrapper
# ---------------------------------------------------------------------------

def _pallas_forward(x_slab, packed, bb):
    G = x_slab.shape[0] // 16
    call = pl.pallas_call(
        _onset_net_kernel,
        grid=(G,),
        out_shape=jax.ShapeDtypeStruct((G * bb, 128), jnp.float32),
        in_specs=[
            pl.BlockSpec((16, 5 * bb, 65), lambda i: (i, 0, 0)),    # phase-major input block
            pl.BlockSpec((3, 65, 512), lambda i: (0, 0, 0)),        # conv1 banded weights (bf16)
            pl.BlockSpec((1, 512), lambda i: (0, 0)),               # conv1 bias
            pl.BlockSpec((3, 256, 256), lambda i: (0, 0, 0)),       # conv2 banded weights (bf16)
            pl.BlockSpec((1, 256), lambda i: (0, 0)),               # conv2 bias
            pl.BlockSpec((4, 128, 512), lambda i: (0, 0, 0)),       # fc1 (flatten-permuted, split)
            pl.BlockSpec((1, 512), lambda i: (0, 0)),               # fc1 bias
            pl.BlockSpec((512, 128), lambda i: (0, 0)),             # fc2 (transposed, lane-padded)
            pl.BlockSpec((1, 128), lambda i: (0, 0)),               # fc2 bias (lane-padded)
        ],
        out_specs=pl.BlockSpec((bb, 128), lambda i: (i, 0)),
        scratch_shapes=[pltpu.VMEM((4 * bb, 256), jnp.float32)],    # conv2 even-row accumulator
        compiler_params=pltpu.CompilerParams(
            dimension_semantics=("parallel",)),
    )
    return call(x_slab, packed["W1"], packed["b1"], packed["W2"], packed["b2"],
                packed["Wfc1"], packed["bfc1"], packed["Wfc2"], packed["bfc2"])


@partial(jax.jit, static_argnames=("batch_block",))
def onset_detection_net(spectrogram, packed, batch_block=64):
    """spectrogram: (N, 1, 64, 64) float32 -> (N, 60) float32."""
    assert batch_block % 16 == 0
    n = spectrogram.shape[0]
    bb = min(batch_block, _round_up(n, 16))            # samples per grid step
    n_pad = _round_up(n, bb)
    G = n_pad // bb

    x = spectrogram[:, 0].astype(jnp.bfloat16)          # (N, 64, 64)
    if n_pad != n:
        x = jnp.pad(x, ((0, n_pad - n), (0, 0), (0, 0)))
    # Zero-pad top/left by 1 (conv padding=1; only the top/left pad is ever read), pad
    # rows up to 80 so they split into 16 row phases x 5 slots, and make the layout
    # phase-major with the sample index adjacent to the slot index:
    #   x_slab[g*16 + phase, s*bb + n, :] = padded row (16*s + phase) of sample (g, n).
    xp = jnp.pad(x, ((0, 0), (1, 15), (1, 0)))           # (n_pad, 80, 65)
    x_slab = (xp.reshape(G, bb, 5, 16, 65)
                .transpose(0, 3, 2, 1, 4)                # (G, 16, 5, bb, 65)
                .reshape(G * 16, 5 * bb, 65))

    out = _pallas_forward(x_slab, packed, bb)            # (n_pad, 128)
    return out[:n, :60]


# ---------------------------------------------------------------------------
# One-time weight packing (host side, outside jit)
# ---------------------------------------------------------------------------

def init_params(key):
    ks = jax.random.split(key, 8)
    s = 0.05
    return {
        "conv1_w": jax.random.normal(ks[0], (16, 1, 3, 3), jnp.float32) * s,
        "conv1_b": jax.random.normal(ks[1], (16,), jnp.float32) * s,
        "conv2_w": jax.random.normal(ks[2], (32, 16, 3, 3), jnp.float32) * s,
        "conv2_b": jax.random.normal(ks[3], (32,), jnp.float32) * s,
        "fc1_w":   jax.random.normal(ks[4], (512, 512), jnp.float32) * s,
        "fc1_b":   jax.random.normal(ks[5], (512,), jnp.float32) * s,
        "fc2_w":   jax.random.normal(ks[6], (60, 512), jnp.float32) * s,
        "fc2_b":   jax.random.normal(ks[7], (60,), jnp.float32) * s,
    }


def pack_params(params):
    """Pre-pack PyTorch-layout parameters into the kernel's matmul layouts (bf16)."""
    w1 = np.asarray(params["conv1_w"], np.float32)   # (cout=16, cin=1, kh, kw)
    b1 = np.asarray(params["conv1_b"], np.float32)
    w2 = np.asarray(params["conv2_w"], np.float32)   # (cout=32, cin=16, kh, kw)
    b2 = np.asarray(params["conv2_b"], np.float32)
    fw1 = np.asarray(params["fc1_w"], np.float32)    # (512 out, 512 in)
    fb1 = np.asarray(params["fc1_b"], np.float32)
    fw2 = np.asarray(params["fc2_w"], np.float32)    # (60, 512)
    fb2 = np.asarray(params["fc2_b"], np.float32)

    # conv1: banded matrix per kernel row kh. Matmul input row = one padded image row
    # (65 cols; col 0 is the zero left-pad). Output col j = owp*256 + ows*16 + cout
    # with ow = 2*ows + owp (parity grouping => 2x2 pool = max of two 256-wide halves).
    W1 = np.zeros((3, 65, 512), np.float32)
    for kh in range(3):
        for ow in range(32):
            owp, ows = ow % 2, ow // 2
            j0 = owp * 256 + ows * 16
            for kw in range(3):
                q = 2 * ow + kw                      # padded input column
                W1[kh, q, j0:j0 + 16] = w1[:, 0, kh, kw]
    b1big = np.tile(b1, 32).reshape(1, 512)

    # conv2: matmul input row = one pool1 row, 256 cols laid out as pw*16 + c1
    # (pw = pool1 column; the zero left-pad column is simply absent). Output col
    # j = ow2p*128 + ow2s*32 + c2 with ow2 = 2*ow2s + ow2p.
    W2 = np.zeros((3, 256, 256), np.float32)
    for kh2 in range(3):
        for ow2 in range(8):
            ow2p, ow2s = ow2 % 2, ow2 // 2
            j0 = ow2p * 128 + ow2s * 32
            for kw2 in range(3):
                q = 2 * ow2 + kw2                    # padded pool1 column (0 = left pad)
                if q == 0:
                    continue
                pw = q - 1
                W2[kh2, pw * 16:(pw + 1) * 16, j0:j0 + 32] = w2[:, :, kh2, kw2].T
    b2big = np.tile(b2, 8).reshape(1, 256)

    # fc1: fold the PyTorch Flatten order (c2, u, v) into the weight columns so the
    # kernel consumes pool2 in its native (u, v*32 + c2) layout; split the 512-wide
    # contraction into 4 blocks of 128 (one per pool2 row u).
    Wt = fw1.T                                        # (in=512, out=512), in idx = c2*16 + u*4 + v
    Wfc1 = Wt.reshape(32, 4, 4, 512).transpose(1, 2, 0, 3).reshape(4, 128, 512)
    bfc1 = fb1.reshape(1, 512)

    # fc2: transpose and zero-pad to 128 output lanes (lane-dense output stores).
    Wfc2 = np.zeros((512, 128), np.float32)
    Wfc2[:, :60] = fw2.T
    bfc2 = np.zeros((1, 128), np.float32)
    bfc2[0, :60] = fb2

    return {
        "W1":   jnp.asarray(W1,   jnp.bfloat16),
        "b1":   jnp.asarray(b1big, jnp.float32),
        "W2":   jnp.asarray(W2,   jnp.bfloat16),
        "b2":   jnp.asarray(b2big, jnp.float32),
        "Wfc1": jnp.asarray(Wfc1, jnp.bfloat16),
        "bfc1": jnp.asarray(bfc1, jnp.float32),
        "Wfc2": jnp.asarray(Wfc2, jnp.bfloat16),
        "bfc2": jnp.asarray(bfc2, jnp.float32),
    }


# ---------------------------------------------------------------------------
# Pure-JAX reference (documents the intended PyTorch semantics)
# ---------------------------------------------------------------------------

def reference_forward(spectrogram, params):
    y = jax.lax.conv_general_dilated(
        spectrogram, params["conv1_w"], (2, 2), ((1, 1), (1, 1)),
        dimension_numbers=("NCHW", "OIHW", "NCHW"))
    y = jax.nn.relu(y + params["conv1_b"][None, :, None, None])
    y = jax.lax.reduce_window(y, -jnp.inf, jax.lax.max, (1, 1, 2, 2), (1, 1, 2, 2), "VALID")
    y = jax.lax.conv_general_dilated(
        y, params["conv2_w"], (2, 2), ((1, 1), (1, 1)),
        dimension_numbers=("NCHW", "OIHW", "NCHW"))
    y = jax.nn.relu(y + params["conv2_b"][None, :, None, None])
    y = jax.lax.reduce_window(y, -jnp.inf, jax.lax.max, (1, 1, 2, 2), (1, 1, 2, 2), "VALID")
    flat = y.reshape(y.shape[0], -1)                  # PyTorch Flatten: (C, H, W) order
    h = jax.nn.relu(flat @ params["fc1_w"].T + params["fc1_b"])
    return h @ params["fc2_w"].T + params["fc2_b"]


if __name__ == "__main__":
    key = jax.random.PRNGKey(0)
    pkey, xkey = jax.random.split(key)
    params = init_params(pkey)
    packed = pack_params(params)                      # one-time weight packing

    # 64x64 spatial size is implied by Linear(512, 512): 32 ch * 4 * 4 after /16 downsampling.
    spectrogram = jax.random.normal(xkey, (2, 1, 64, 64), jnp.float32)

    out = jax.block_until_ready(onset_detection_net(spectrogram, packed))
    assert out.shape == (2, 60), out.shape

    ref = jax.block_until_ready(reference_forward(spectrogram, params))
    err = float(jnp.max(jnp.abs(out - ref)))
    assert err < 2e-2, f"max abs error vs reference: {err}"

    print("KERNEL_OK")
</pallas_src>

<mosaic_0001>
module attributes {stable_mosaic.version = 11 : i64} {
  func.func @_onset_net_kernel(%arg0: i32, %arg1: memref<16x80x65xbf16, #tpu.memory_space<vmem>>, %arg2: memref<3x65x512xbf16, #tpu.memory_space<vmem>>, %arg3: memref<1x512xf32, #tpu.memory_space<vmem>>, %arg4: memref<3x256x256xbf16, #tpu.memory_space<vmem>>, %arg5: memref<1x256xf32, #tpu.memory_space<vmem>>, %arg6: memref<4x128x512xbf16, #tpu.memory_space<vmem>>, %arg7: memref<1x512xf32, #tpu.memory_space<vmem>>, %arg8: memref<512x128xbf16, #tpu.memory_space<vmem>>, %arg9: memref<1x128xf32, #tpu.memory_space<vmem>>, %arg10: memref<16x128xf32, #tpu.memory_space<vmem>>, %arg11: memref<64x256xf32, #tpu.memory_space<vmem>>) attributes {dimension_semantics = [#tpu.dimension_semantics<parallel>], iteration_bounds = array<i64: 1>, scalar_prefetch = 0 : i64, scratch_operands = 1 : i64, tpu.core_type = #tpu.core_type<tc>, window_params = [{transform_indices = @transform_0, window_bounds = array<i64: 16, 80, 65>}, {pipeline_mode = #tpu.pipeline_mode<synchronous>, transform_indices = @transform_1, window_bounds = array<i64: 3, 65, 512>}, {pipeline_mode = #tpu.pipeline_mode<synchronous>, transform_indices = @transform_2, window_bounds = array<i64: 1, 512>}, {pipeline_mode = #tpu.pipeline_mode<synchronous>, transform_indices = @transform_3, window_bounds = array<i64: 3, 256, 256>}, {pipeline_mode = #tpu.pipeline_mode<synchronous>, transform_indices = @transform_4, window_bounds = array<i64: 1, 256>}, {pipeline_mode = #tpu.pipeline_mode<synchronous>, transform_indices = @transform_5, window_bounds = array<i64: 4, 128, 512>}, {pipeline_mode = #tpu.pipeline_mode<synchronous>, transform_indices = @transform_6, window_bounds = array<i64: 1, 512>}, {pipeline_mode = #tpu.pipeline_mode<synchronous>, transform_indices = @transform_7, window_bounds = array<i64: 512, 128>}, {pipeline_mode = #tpu.pipeline_mode<synchronous>, transform_indices = @transform_8, window_bounds = array<i64: 1, 128>}, {transform_indices = @transform_9, window_bounds = array<i64: 16, 128>}]} {
    %c0 = arith.constant 0 : index
    %c0_0 = arith.constant 0 : index
    %0 = vector.load %arg3[%c0, %c0_0] : memref<1x512xf32, #tpu.memory_space<vmem>>, vector<1x512xf32>
    %c0_1 = arith.constant 0 : index
    %c0_2 = arith.constant 0 : index
    %c0_3 = arith.constant 0 : index
    %1 = vector.load %arg1[%c0_1, %c0_2, %c0_3] : memref<16x80x65xbf16, #tpu.memory_space<vmem>>, vector<1x64x65xbf16>
    %2 = vector.shape_cast %1 : vector<1x64x65xbf16> to vector<64x65xbf16>
    %c0_4 = arith.constant 0 : index
    %c0_5 = arith.constant 0 : index
    %c0_6 = arith.constant 0 : index
    %3 = vector.load %arg2[%c0_4, %c0_5, %c0_6] : memref<3x65x512xbf16, #tpu.memory_space<vmem>>, vector<1x65x512xbf16>
    %4 = vector.shape_cast %3 : vector<1x65x512xbf16> to vector<65x512xbf16>
    %cst = arith.constant dense<0.000000e+00> : vector<64x512xf32>
    %5 = tpu.matmul %2, %4, %cst {dimension_numbers = #tpu.dot_dimension_numbers<[1], [0], [0], [1], [0, 0, 1, 1], [], []>} : vector<64x65xbf16>, vector<65x512xbf16>, vector<64x512xf32> -> vector<64x512xf32>
    %c1 = arith.constant 1 : index
    %c0_7 = arith.constant 0 : index
    %c0_8 = arith.constant 0 : index
    %6 = vector.load %arg1[%c1, %c0_7, %c0_8] : memref<16x80x65xbf16, #tpu.memory_space<vmem>>, vector<1x64x65xbf16>
    %7 = vector.shape_cast %6 : vector<1x64x65xbf16> to vector<64x65xbf16>
    %c1_9 = arith.constant 1 : index
    %c0_10 = arith.constant 0 : index
    %c0_11 = arith.constant 0 : index
    %8 = vector.load %arg2[%c1_9, %c0_10, %c0_11] : memref<3x65x512xbf16, #tpu.memory_space<vmem>>, vector<1x65x512xbf16>
    %9 = vector.shape_cast %8 : vector<1x65x512xbf16> to vector<65x512xbf16>
    %cst_12 = arith.constant dense<0.000000e+00> : vector<64x512xf32>
    %10 = tpu.matmul %7, %9, %cst_12 {dimension_numbers = #tpu.dot_dimension_numbers<[1], [0], [0], [1], [0, 0, 1, 1], [], []>} : vector<64x65xbf16>, vector<65x512xbf16>, vector<64x512xf32> -> vector<64x512xf32>
    %11 = arith.addf %5, %10 : vector<64x512xf32>
    %c2 = arith.constant 2 : index
    %c0_13 = arith.constant 0 : index
    %c0_14 = arith.constant 0 : index
    %12 = vector.load %arg1[%c2, %c0_13, %c0_14] : memref<16x80x65xbf16, #tpu.memory_space<vmem>>, vector<1x64x65xbf16>
    %13 = vector.shape_cast %12 : vector<1x64x65xbf16> to vector<64x65xbf16>
    %c2_15 = arith.constant 2 : index
    %c0_16 = arith.constant 0 : index
    %c0_17 = arith.constant 0 : index
    %14 = vector.load %arg2[%c2_15, %c0_16, %c0_17] : memref<3x65x512xbf16, #tpu.memory_space<vmem>>, vector<1x65x512xbf16>
    %15 = vector.shape_cast %14 : vector<1x65x512xbf16> to vector<65x512xbf16>
    %cst_18 = arith.constant dense<0.000000e+00> : vector<64x512xf32>
    %16 = tpu.matmul %13, %15, %cst_18 {dimension_numbers = #tpu.dot_dimension_numbers<[1], [0], [0], [1], [0, 0, 1, 1], [], []>} : vector<64x65xbf16>, vector<65x512xbf16>, vector<64x512xf32> -> vector<64x512xf32>
    %17 = arith.addf %11, %16 : vector<64x512xf32>
    %18 = vector.broadcast %0 : vector<1x512xf32> to vector<64x512xf32>
    %19 = arith.addf %17, %18 : vector<64x512xf32>
    %cst_19 = arith.constant 0.000000e+00 : f32
    %20 = vector.broadcast %cst_19 : f32 to vector<64x512xf32>
    %21 = arith.maximumf %19, %20 : vector<64x512xf32>
    %c2_20 = arith.constant 2 : index
    %c0_21 = arith.constant 0 : index
    %c0_22 = arith.constant 0 : index
    %22 = vector.load %arg1[%c2_20, %c0_21, %c0_22] : memref<16x80x65xbf16, #tpu.memory_space<vmem>>, vector<1x64x65xbf16>
    %23 = vector.shape_cast %22 : vector<1x64x65xbf16> to vector<64x65xbf16>
    %c0_23 = arith.constant 0 : index
    %c0_24 = arith.constant 0 : index
    %c0_25 = arith.constant 0 : index
    %24 = vector.load %arg2[%c0_23, %c0_24, %c0_25] : memref<3x65x512xbf16, #tpu.memory_space<vmem>>, vector<1x65x512xbf16>
    %25 = vector.shape_cast %24 : vector<1x65x512xbf16> to vector<65x512xbf16>
    %cst_26 = arith.constant dense<0.000000e+00> : vector<64x512xf32>
    %26 = tpu.matmul %23, %25, %cst_26 {dimension_numbers = #tpu.dot_dimension_numbers<[1], [0], [0], [1], [0, 0, 1, 1], [], []>} : vector<64x65xbf16>, vector<65x512xbf16>, vector<64x512xf32> -> vector<64x512xf32>
    %c3 = arith.constant 3 : index
    %c0_27 = arith.constant 0 : index
    %c0_28 = arith.constant 0 : index
    %27 = vector.load %arg1[%c3, %c0_27, %c0_28] : memref<16x80x65xbf16, #tpu.memory_space<vmem>>, vector<1x64x65xbf16>
    %28 = vector.shape_cast %27 : vector<1x64x65xbf16> to vector<64x65xbf16>
    %c1_29 = arith.constant 1 : index
    %c0_30 = arith.constant 0 : index
    %c0_31 = arith.constant 0 : index
    %29 = vector.load %arg2[%c1_29, %c0_30, %c0_31] : memref<3x65x512xbf16, #tpu.memory_space<vmem>>, vector<1x65x512xbf16>
    %30 = vector.shape_cast %29 : vector<1x65x512xbf16> to vector<65x512xbf16>
    %cst_32 = arith.constant dense<0.000000e+00> : vector<64x512xf32>
    %31 = tpu.matmul %28, %30, %cst_32 {dimension_numbers = #tpu.dot_dimension_numbers<[1], [0], [0], [1], [0, 0, 1, 1], [], []>} : vector<64x65xbf16>, vector<65x512xbf16>, vector<64x512xf32> -> vector<64x512xf32>
    %32 = arith.addf %26, %31 : vector<64x512xf32>
    %c4 = arith.constant 4 : index
    %c0_33 = arith.constant 0 : index
    %c0_34 = arith.constant 0 : index
    %33 = vector.load %arg1[%c4, %c0_33, %c0_34] : memref<16x80x65xbf16, #tpu.memory_space<vmem>>, vector<1x64x65xbf16>
    %34 = vector.shape_cast %33 : vector<1x64x65xbf16> to vector<64x65xbf16>
    %c2_35 = arith.constant 2 : index
    %c0_36 = arith.constant 0 : index
    %c0_37 = arith.constant 0 : index
    %35 = vector.load %arg2[%c2_35, %c0_36, %c0_37] : memref<3x65x512xbf16, #tpu.memory_space<vmem>>, vector<1x65x512xbf16>
    %36 = vector.shape_cast %35 : vector<1x65x512xbf16> to vector<65x512xbf16>
    %cst_38 = arith.constant dense<0.000000e+00> : vector<64x512xf32>
    %37 = tpu.matmul %34, %36, %cst_38 {dimension_numbers = #tpu.dot_dimension_numbers<[1], [0], [0], [1], [0, 0, 1, 1], [], []>} : vector<64x65xbf16>, vector<65x512xbf16>, vector<64x512xf32> -> vector<64x512xf32>
    %38 = arith.addf %32, %37 : vector<64x512xf32>
    %39 = vector.broadcast %0 : vector<1x512xf32> to vector<64x512xf32>
    %40 = arith.addf %38, %39 : vector<64x512xf32>
    %cst_39 = arith.constant 0.000000e+00 : f32
    %41 = vector.broadcast %cst_39 : f32 to vector<64x512xf32>
    %42 = arith.maximumf %40, %41 : vector<64x512xf32>
    %43 = vector.extract_strided_slice %21 {offsets = [0, 0], sizes = [64, 256], strides = [1, 1]} : vector<64x512xf32> to vector<64x256xf32>
    %44 = vector.extract_strided_slice %21 {offsets = [0, 256], sizes = [64, 256], strides = [1, 1]} : vector<64x512xf32> to vector<64x256xf32>
    %45 = arith.maximumf %43, %44 : vector<64x256xf32>
    %46 = vector.extract_strided_slice %42 {offsets = [0, 0], sizes = [64, 256], strides = [1, 1]} : vector<64x512xf32> to vector<64x256xf32>
    %47 = vector.extract_strided_slice %42 {offsets = [0, 256], sizes = [64, 256], strides = [1, 1]} : vector<64x512xf32> to vector<64x256xf32>
    %48 = arith.maximumf %46, %47 : vector<64x256xf32>
    %49 = arith.maximumf %45, %48 : vector<64x256xf32>
    %50 = arith.truncf %49 : vector<64x256xf32> to vector<64x256xbf16>
    %c4_40 = arith.constant 4 : index
    %c0_41 = arith.constant 0 : index
    %c0_42 = arith.constant 0 : index
    %51 = vector.load %arg1[%c4_40, %c0_41, %c0_42] : memref<16x80x65xbf16, #tpu.memory_space<vmem>>, vector<1x64x65xbf16>
    %52 = vector.shape_cast %51 : vector<1x64x65xbf16> to vector<64x65xbf16>
    %c0_43 = arith.constant 0 : index
    %c0_44 = arith.constant 0 : index
    %c0_45 = arith.constant 0 : index
    %53 = vector.load %arg2[%c0_43, %c0_44, %c0_45] : memref<3x65x512xbf16, #tpu.memory_space<vmem>>, vector<1x65x512xbf16>
    %54 = vector.shape_cast %53 : vector<1x65x512xbf16> to vector<65x512xbf16>
    %cst_46 = arith.constant dense<0.000000e+00> : vector<64x512xf32>
    %55 = tpu.matmul %52, %54, %cst_46 {dimension_numbers = #tpu.dot_dimension_numbers<[1], [0], [0], [1], [0, 0, 1, 1], [], []>} : vector<64x65xbf16>, vector<65x512xbf16>, vector<64x512xf32> -> vector<64x512xf32>
    %c5 = arith.constant 5 : index
    %c0_47 = arith.constant 0 : index
    %c0_48 = arith.constant 0 : index
    %56 = vector.load %arg1[%c5, %c0_47, %c0_48] : memref<16x80x65xbf16, #tpu.memory_space<vmem>>, vector<1x64x65xbf16>
    %57 = vector.shape_cast %56 : vector<1x64x65xbf16> to vector<64x65xbf16>
    %c1_49 = arith.constant 1 : index
    %c0_50 = arith.constant 0 : index
    %c0_51 = arith.constant 0 : index
    %58 = vector.load %arg2[%c1_49, %c0_50, %c0_51] : memref<3x65x512xbf16, #tpu.memory_space<vmem>>, vector<1x65x512xbf16>
    %59 = vector.shape_cast %58 : vector<1x65x512xbf16> to vector<65x512xbf16>
    %cst_52 = arith.constant dense<0.000000e+00> : vector<64x512xf32>
    %60 = tpu.matmul %57, %59, %cst_52 {dimension_numbers = #tpu.dot_dimension_numbers<[1], [0], [0], [1], [0, 0, 1, 1], [], []>} : vector<64x65xbf16>, vector<65x512xbf16>, vector<64x512xf32> -> vector<64x512xf32>
    %61 = arith.addf %55, %60 : vector<64x512xf32>
    %c6 = arith.constant 6 : index
    %c0_53 = arith.constant 0 : index
    %c0_54 = arith.constant 0 : index
    %62 = vector.load %arg1[%c6, %c0_53, %c0_54] : memref<16x80x65xbf16, #tpu.memory_space<vmem>>, vector<1x64x65xbf16>
    %63 = vector.shape_cast %62 : vector<1x64x65xbf16> to vector<64x65xbf16>
    %c2_55 = arith.constant 2 : index
    %c0_56 = arith.constant 0 : index
    %c0_57 = arith.constant 0 : index
    %64 = vector.load %arg2[%c2_55, %c0_56, %c0_57] : memref<3x65x512xbf16, #tpu.memory_space<vmem>>, vector<1x65x512xbf16>
    %65 = vector.shape_cast %64 : vector<1x65x512xbf16> to vector<65x512xbf16>
    %cst_58 = arith.constant dense<0.000000e+00> : vector<64x512xf32>
    %66 = tpu.matmul %63, %65, %cst_58 {dimension_numbers = #tpu.dot_dimension_numbers<[1], [0], [0], [1], [0, 0, 1, 1], [], []>} : vector<64x65xbf16>, vector<65x512xbf16>, vector<64x512xf32> -> vector<64x512xf32>
    %67 = arith.addf %61, %66 : vector<64x512xf32>
    %68 = vector.broadcast %0 : vector<1x512xf32> to vector<64x512xf32>
    %69 = arith.addf %67, %68 : vector<64x512xf32>
    %cst_59 = arith.constant 0.000000e+00 : f32
    %70 = vector.broadcast %cst_59 : f32 to vector<64x512xf32>
    %71 = arith.maximumf %69, %70 : vector<64x512xf32>
    %c6_60 = arith.constant 6 : index
    %c0_61 = arith.constant 0 : index
    %c0_62 = arith.constant 0 : index
    %72 = vector.load %arg1[%c6_60, %c0_61, %c0_62] : memref<16x80x65xbf16, #tpu.memory_space<vmem>>, vector<1x64x65xbf16>
    %73 = vector.shape_cast %72 : vector<1x64x65xbf16> to vector<64x65xbf16>
    %c0_63 = arith.constant 0 : index
    %c0_64 = arith.constant 0 : index
    %c0_65 = arith.constant 0 : index
    %74 = vector.load %arg2[%c0_63, %c0_64, %c0_65] : memref<3x65x512xbf16, #tpu.memory_space<vmem>>, vector<1x65x512xbf16>
    %75 = vector.shape_cast %74 : vector<1x65x512xbf16> to vector<65x512xbf16>
    %cst_66 = arith.constant dense<0.000000e+00> : vector<64x512xf32>
    %76 = tpu.matmul %73, %75, %cst_66 {dimension_numbers = #tpu.dot_dimension_numbers<[1], [0], [0], [1], [0, 0, 1, 1], [], []>} : vector<64x65xbf16>, vector<65x512xbf16>, vector<64x512xf32> -> vector<64x512xf32>
    %c7 = arith.constant 7 : index
    %c0_67 = arith.constant 0 : index
    %c0_68 = arith.constant 0 : index
    %77 = vector.load %arg1[%c7, %c0_67, %c0_68] : memref<16x80x65xbf16, #tpu.memory_space<vmem>>, vector<1x64x65xbf16>
    %78 = vector.shape_cast %77 : vector<1x64x65xbf16> to vector<64x65xbf16>
    %c1_69 = arith.constant 1 : index
    %c0_70 = arith.constant 0 : index
    %c0_71 = arith.constant 0 : index
    %79 = vector.load %arg2[%c1_69, %c0_70, %c0_71] : memref<3x65x512xbf16, #tpu.memory_space<vmem>>, vector<1x65x512xbf16>
    %80 = vector.shape_cast %79 : vector<1x65x512xbf16> to vector<65x512xbf16>
    %cst_72 = arith.constant dense<0.000000e+00> : vector<64x512xf32>
    %81 = tpu.matmul %78, %80, %cst_72 {dimension_numbers = #tpu.dot_dimension_numbers<[1], [0], [0], [1], [0, 0, 1, 1], [], []>} : vector<64x65xbf16>, vector<65x512xbf16>, vector<64x512xf32> -> vector<64x512xf32>
    %82 = arith.addf %76, %81 : vector<64x512xf32>
    %c8 = arith.constant 8 : index
    %c0_73 = arith.constant 0 : index
    %c0_74 = arith.constant 0 : index
    %83 = vector.load %arg1[%c8, %c0_73, %c0_74] : memref<16x80x65xbf16, #tpu.memory_space<vmem>>, vector<1x64x65xbf16>
    %84 = vector.shape_cast %83 : vector<1x64x65xbf16> to vector<64x65xbf16>
    %c2_75 = arith.constant 2 : index
    %c0_76 = arith.constant 0 : index
    %c0_77 = arith.constant 0 : index
    %85 = vector.load %arg2[%c2_75, %c0_76, %c0_77] : memref<3x65x512xbf16, #tpu.memory_space<vmem>>, vector<1x65x512xbf16>
    %86 = vector.shape_cast %85 : vector<1x65x512xbf16> to vector<65x512xbf16>
    %cst_78 = arith.constant dense<0.000000e+00> : vector<64x512xf32>
    %87 = tpu.matmul %84, %86, %cst_78 {dimension_numbers = #tpu.dot_dimension_numbers<[1], [0], [0], [1], [0, 0, 1, 1], [], []>} : vector<64x65xbf16>, vector<65x512xbf16>, vector<64x512xf32> -> vector<64x512xf32>
    %88 = arith.addf %82, %87 : vector<64x512xf32>
    %89 = vector.broadcast %0 : vector<1x512xf32> to vector<64x512xf32>
    %90 = arith.addf %88, %89 : vector<64x512xf32>
    %cst_79 = arith.constant 0.000000e+00 : f32
    %91 = vector.broadcast %cst_79 : f32 to vector<64x512xf32>
    %92 = arith.maximumf %90, %91 : vector<64x512xf32>
    %93 = vector.extract_strided_slice %71 {offsets = [0, 0], sizes = [64, 256], strides = [1, 1]} : vector<64x512xf32> to vector<64x256xf32>
    %94 = vector.extract_strided_slice %71 {offsets = [0, 256], sizes = [64, 256], strides = [1, 1]} : vector<64x512xf32> to vector<64x256xf32>
    %95 = arith.maximumf %93, %94 : vector<64x256xf32>
    %96 = vector.extract_strided_slice %92 {offsets = [0, 0], sizes = [64, 256], strides = [1, 1]} : vector<64x512xf32> to vector<64x256xf32>
    %97 = vector.extract_strided_slice %92 {offsets = [0, 256], sizes = [64, 256], strides = [1, 1]} : vector<64x512xf32> to vector<64x256xf32>
    %98 = arith.maximumf %96, %97 : vector<64x256xf32>
    %99 = arith.maximumf %95, %98 : vector<64x256xf32>
    %100 = arith.truncf %99 : vector<64x256xf32> to vector<64x256xbf16>
    %c8_80 = arith.constant 8 : index
    %c0_81 = arith.constant 0 : index
    %c0_82 = arith.constant 0 : index
    %101 = vector.load %arg1[%c8_80, %c0_81, %c0_82] : memref<16x80x65xbf16, #tpu.memory_space<vmem>>, vector<1x64x65xbf16>
    %102 = vector.shape_cast %101 : vector<1x64x65xbf16> to vector<64x65xbf16>
    %c0_83 = arith.constant 0 : index
    %c0_84 = arith.constant 0 : index
    %c0_85 = arith.constant 0 : index
    %103 = vector.load %arg2[%c0_83, %c0_84, %c0_85] : memref<3x65x512xbf16, #tpu.memory_space<vmem>>, vector<1x65x512xbf16>
    %104 = vector.shape_cast %103 : vector<1x65x512xbf16> to vector<65x512xbf16>
    %cst_86 = arith.constant dense<0.000000e+00> : vector<64x512xf32>
    %105 = tpu.matmul %102, %104, %cst_86 {dimension_numbers = #tpu.dot_dimension_numbers<[1], [0], [0], [1], [0, 0, 1, 1], [], []>} : vector<64x65xbf16>, vector<65x512xbf16>, vector<64x512xf32> -> vector<64x512xf32>
    %c9 = arith.constant 9 : index
    %c0_87 = arith.constant 0 : index
    %c0_88 = arith.constant 0 : index
    %106 = vector.load %arg1[%c9, %c0_87, %c0_88] : memref<16x80x65xbf16, #tpu.memory_space<vmem>>, vector<1x64x65xbf16>
    %107 = vector.shape_cast %106 : vector<1x64x65xbf16> to vector<64x65xbf16>
    %c1_89 = arith.constant 1 : index
    %c0_90 = arith.constant 0 : index
    %c0_91 = arith.constant 0 : index
    %108 = vector.load %arg2[%c1_89, %c0_90, %c0_91] : memref<3x65x512xbf16, #tpu.memory_space<vmem>>, vector<1x65x512xbf16>
    %109 = vector.shape_cast %108 : vector<1x65x512xbf16> to vector<65x512xbf16>
    %cst_92 = arith.constant dense<0.000000e+00> : vector<64x512xf32>
    %110 = tpu.matmul %107, %109, %cst_92 {dimension_numbers = #tpu.dot_dimension_numbers<[1], [0], [0], [1], [0, 0, 1, 1], [], []>} : vector<64x65xbf16>, vector<65x512xbf16>, vector<64x512xf32> -> vector<64x512xf32>
    %111 = arith.addf %105, %110 : vector<64x512xf32>
    %c10 = arith.constant 10 : index
    %c0_93 = arith.constant 0 : index
    %c0_94 = arith.constant 0 : index
    %112 = vector.load %arg1[%c10, %c0_93, %c0_94] : memref<16x80x65xbf16, #tpu.memory_space<vmem>>, vector<1x64x65xbf16>
    %113 = vector.shape_cast %112 : vector<1x64x65xbf16> to vector<64x65xbf16>
    %c2_95 = arith.constant 2 : index
    %c0_96 = arith.constant 0 : index
    %c0_97 = arith.constant 0 : index
    %114 = vector.load %arg2[%c2_95, %c0_96, %c0_97] : memref<3x65x512xbf16, #tpu.memory_space<vmem>>, vector<1x65x512xbf16>
    %115 = vector.shape_cast %114 : vector<1x65x512xbf16> to vector<65x512xbf16>
    %cst_98 = arith.constant dense<0.000000e+00> : vector<64x512xf32>
    %116 = tpu.matmul %113, %115, %cst_98 {dimension_numbers = #tpu.dot_dimension_numbers<[1], [0], [0], [1], [0, 0, 1, 1], [], []>} : vector<64x65xbf16>, vector<65x512xbf16>, vector<64x512xf32> -> vector<64x512xf32>
    %117 = arith.addf %111, %116 : vector<64x512xf32>
    %118 = vector.broadcast %0 : vector<1x512xf32> to vector<64x512xf32>
    %119 = arith.addf %117, %118 : vector<64x512xf32>
    %cst_99 = arith.constant 0.000000e+00 : f32
    %120 = vector.broadcast %cst_99 : f32 to vector<64x512xf32>
    %121 = arith.maximumf %119, %120 : vector<64x512xf32>
    %c10_100 = arith.constant 10 : index
    %c0_101 = arith.constant 0 : index
    %c0_102 = arith.constant 0 : index
    %122 = vector.load %arg1[%c10_100, %c0_101, %c0_102] : memref<16x80x65xbf16, #tpu.memory_space<vmem>>, vector<1x64x65xbf16>
    %123 = vector.shape_cast %122 : vector<1x64x65xbf16> to vector<64x65xbf16>
    %c0_103 = arith.constant 0 : index
    %c0_104 = arith.constant 0 : index
    %c0_105 = arith.constant 0 : index
    %124 = vector.load %arg2[%c0_103, %c0_104, %c0_105] : memref<3x65x512xbf16, #tpu.memory_space<vmem>>, vector<1x65x512xbf16>
    %125 = vector.shape_cast %124 : vector<1x65x512xbf16> to vector<65x512xbf16>
    %cst_106 = arith.constant dense<0.000000e+00> : vector<64x512xf32>
    %126 = tpu.matmul %123, %125, %cst_106 {dimension_numbers = #tpu.dot_dimension_numbers<[1], [0], [0], [1], [0, 0, 1, 1], [], []>} : vector<64x65xbf16>, vector<65x512xbf16>, vector<64x512xf32> -> vector<64x512xf32>
    %c11 = arith.constant 11 : index
    %c0_107 = arith.constant 0 : index
    %c0_108 = arith.constant 0 : index
    %127 = vector.load %arg1[%c11, %c0_107, %c0_108] : memref<16x80x65xbf16, #tpu.memory_space<vmem>>, vector<1x64x65xbf16>
    %128 = vector.shape_cast %127 : vector<1x64x65xbf16> to vector<64x65xbf16>
    %c1_109 = arith.constant 1 : index
    %c0_110 = arith.constant 0 : index
    %c0_111 = arith.constant 0 : index
    %129 = vector.load %arg2[%c1_109, %c0_110, %c0_111] : memref<3x65x512xbf16, #tpu.memory_space<vmem>>, vector<1x65x512xbf16>
    %130 = vector.shape_cast %129 : vector<1x65x512xbf16> to vector<65x512xbf16>
    %cst_112 = arith.constant dense<0.000000e+00> : vector<64x512xf32>
    %131 = tpu.matmul %128, %130, %cst_112 {dimension_numbers = #tpu.dot_dimension_numbers<[1], [0], [0], [1], [0, 0, 1, 1], [], []>} : vector<64x65xbf16>, vector<65x512xbf16>, vector<64x512xf32> -> vector<64x512xf32>
    %132 = arith.addf %126, %131 : vector<64x512xf32>
    %c12 = arith.constant 12 : index
    %c0_113 = arith.constant 0 : index
    %c0_114 = arith.constant 0 : index
    %133 = vector.load %arg1[%c12, %c0_113, %c0_114] : memref<16x80x65xbf16, #tpu.memory_space<vmem>>, vector<1x64x65xbf16>
    %134 = vector.shape_cast %133 : vector<1x64x65xbf16> to vector<64x65xbf16>
    %c2_115 = arith.constant 2 : index
    %c0_116 = arith.constant 0 : index
    %c0_117 = arith.constant 0 : index
    %135 = vector.load %arg2[%c2_115, %c0_116, %c0_117] : memref<3x65x512xbf16, #tpu.memory_space<vmem>>, vector<1x65x512xbf16>
    %136 = vector.shape_cast %135 : vector<1x65x512xbf16> to vector<65x512xbf16>
    %cst_118 = arith.constant dense<0.000000e+00> : vector<64x512xf32>
    %137 = tpu.matmul %134, %136, %cst_118 {dimension_numbers = #tpu.dot_dimension_numbers<[1], [0], [0], [1], [0, 0, 1, 1], [], []>} : vector<64x65xbf16>, vector<65x512xbf16>, vector<64x512xf32> -> vector<64x512xf32>
    %138 = arith.addf %132, %137 : vector<64x512xf32>
    %139 = vector.broadcast %0 : vector<1x512xf32> to vector<64x512xf32>
    %140 = arith.addf %138, %139 : vector<64x512xf32>
    %cst_119 = arith.constant 0.000000e+00 : f32
    %141 = vector.broadcast %cst_119 : f32 to vector<64x512xf32>
    %142 = arith.maximumf %140, %141 : vector<64x512xf32>
    %143 = vector.extract_strided_slice %121 {offsets = [0, 0], sizes = [64, 256], strides = [1, 1]} : vector<64x512xf32> to vector<64x256xf32>
    %144 = vector.extract_strided_slice %121 {offsets = [0, 256], sizes = [64, 256], strides = [1, 1]} : vector<64x512xf32> to vector<64x256xf32>
    %145 = arith.maximumf %143, %144 : vector<64x256xf32>
    %146 = vector.extract_strided_slice %142 {offsets = [0, 0], sizes = [64, 256], strides = [1, 1]} : vector<64x512xf32> to vector<64x256xf32>
    %147 = vector.extract_strided_slice %142 {offsets = [0, 256], sizes = [64, 256], strides = [1, 1]} : vector<64x512xf32> to vector<64x256xf32>
    %148 = arith.maximumf %146, %147 : vector<64x256xf32>
    %149 = arith.maximumf %145, %148 : vector<64x256xf32>
    %150 = arith.truncf %149 : vector<64x256xf32> to vector<64x256xbf16>
    %c12_120 = arith.constant 12 : index
    %c0_121 = arith.constant 0 : index
    %c0_122 = arith.constant 0 : index
    %151 = vector.load %arg1[%c12_120, %c0_121, %c0_122] : memref<16x80x65xbf16, #tpu.memory_space<vmem>>, vector<1x64x65xbf16>
    %152 = vector.shape_cast %151 : vector<1x64x65xbf16> to vector<64x65xbf16>
    %c0_123 = arith.constant 0 : index
    %c0_124 = arith.constant 0 : index
    %c0_125 = arith.constant 0 : index
    %153 = vector.load %arg2[%c0_123, %c0_124, %c0_125] : memref<3x65x512xbf16, #tpu.memory_space<vmem>>, vector<1x65x512xbf16>
    %154 = vector.shape_cast %153 : vector<1x65x512xbf16> to vector<65x512xbf16>
    %cst_126 = arith.constant dense<0.000000e+00> : vector<64x512xf32>
    %155 = tpu.matmul %152, %154, %cst_126 {dimension_numbers = #tpu.dot_dimension_numbers<[1], [0], [0], [1], [0, 0, 1, 1], [], []>} : vector<64x65xbf16>, vector<65x512xbf16>, vector<64x512xf32> -> vector<64x512xf32>
    %c13 = arith.constant 13 : index
    %c0_127 = arith.constant 0 : index
    %c0_128 = arith.constant 0 : index
    %156 = vector.load %arg1[%c13, %c0_127, %c0_128] : memref<16x80x65xbf16, #tpu.memory_space<vmem>>, vector<1x64x65xbf16>
    %157 = vector.shape_cast %156 : vector<1x64x65xbf16> to vector<64x65xbf16>
    %c1_129 = arith.constant 1 : index
    %c0_130 = arith.constant 0 : index
    %c0_131 = arith.constant 0 : index
    %158 = vector.load %arg2[%c1_129, %c0_130, %c0_131] : memref<3x65x512xbf16, #tpu.memory_space<vmem>>, vector<1x65x512xbf16>
    %159 = vector.shape_cast %158 : vector<1x65x512xbf16> to vector<65x512xbf16>
    %cst_132 = arith.constant dense<0.000000e+00> : vector<64x512xf32>
    %160 = tpu.matmul %157, %159, %cst_132 {dimension_numbers = #tpu.dot_dimension_numbers<[1], [0], [0], [1], [0, 0, 1, 1], [], []>} : vector<64x65xbf16>, vector<65x512xbf16>, vector<64x512xf32> -> vector<64x512xf32>
    %161 = arith.addf %155, %160 : vector<64x512xf32>
    %c14 = arith.constant 14 : index
    %c0_133 = arith.constant 0 : index
    %c0_134 = arith.constant 0 : index
    %162 = vector.load %arg1[%c14, %c0_133, %c0_134] : memref<16x80x65xbf16, #tpu.memory_space<vmem>>, vector<1x64x65xbf16>
    %163 = vector.shape_cast %162 : vector<1x64x65xbf16> to vector<64x65xbf16>
    %c2_135 = arith.constant 2 : index
    %c0_136 = arith.constant 0 : index
    %c0_137 = arith.constant 0 : index
    %164 = vector.load %arg2[%c2_135, %c0_136, %c0_137] : memref<3x65x512xbf16, #tpu.memory_space<vmem>>, vector<1x65x512xbf16>
    %165 = vector.shape_cast %164 : vector<1x65x512xbf16> to vector<65x512xbf16>
    %cst_138 = arith.constant dense<0.000000e+00> : vector<64x512xf32>
    %166 = tpu.matmul %163, %165, %cst_138 {dimension_numbers = #tpu.dot_dimension_numbers<[1], [0], [0], [1], [0, 0, 1, 1], [], []>} : vector<64x65xbf16>, vector<65x512xbf16>, vector<64x512xf32> -> vector<64x512xf32>
    %167 = arith.addf %161, %166 : vector<64x512xf32>
    %168 = vector.broadcast %0 : vector<1x512xf32> to vector<64x512xf32>
    %169 = arith.addf %167, %168 : vector<64x512xf32>
    %cst_139 = arith.constant 0.000000e+00 : f32
    %170 = vector.broadcast %cst_139 : f32 to vector<64x512xf32>
    %171 = arith.maximumf %169, %170 : vector<64x512xf32>
    %c14_140 = arith.constant 14 : index
    %c0_141 = arith.constant 0 : index
    %c0_142 = arith.constant 0 : index
    %172 = vector.load %arg1[%c14_140, %c0_141, %c0_142] : memref<16x80x65xbf16, #tpu.memory_space<vmem>>, vector<1x64x65xbf16>
    %173 = vector.shape_cast %172 : vector<1x64x65xbf16> to vector<64x65xbf16>
    %c0_143 = arith.constant 0 : index
    %c0_144 = arith.constant 0 : index
    %c0_145 = arith.constant 0 : index
    %174 = vector.load %arg2[%c0_143, %c0_144, %c0_145] : memref<3x65x512xbf16, #tpu.memory_space<vmem>>, vector<1x65x512xbf16>
    %175 = vector.shape_cast %174 : vector<1x65x512xbf16> to vector<65x512xbf16>
    %cst_146 = arith.constant dense<0.000000e+00> : vector<64x512xf32>
    %176 = tpu.matmul %173, %175, %cst_146 {dimension_numbers = #tpu.dot_dimension_numbers<[1], [0], [0], [1], [0, 0, 1, 1], [], []>} : vector<64x65xbf16>, vector<65x512xbf16>, vector<64x512xf32> -> vector<64x512xf32>
    %c15 = arith.constant 15 : index
    %c0_147 = arith.constant 0 : index
    %c0_148 = arith.constant 0 : index
    %177 = vector.load %arg1[%c15, %c0_147, %c0_148] : memref<16x80x65xbf16, #tpu.memory_space<vmem>>, vector<1x64x65xbf16>
    %178 = vector.shape_cast %177 : vector<1x64x65xbf16> to vector<64x65xbf16>
    %c1_149 = arith.constant 1 : index
    %c0_150 = arith.constant 0 : index
    %c0_151 = arith.constant 0 : index
    %179 = vector.load %arg2[%c1_149, %c0_150, %c0_151] : memref<3x65x512xbf16, #tpu.memory_space<vmem>>, vector<1x65x512xbf16>
    %180 = vector.shape_cast %179 : vector<1x65x512xbf16> to vector<65x512xbf16>
    %cst_152 = arith.constant dense<0.000000e+00> : vector<64x512xf32>
    %181 = tpu.matmul %178, %180, %cst_152 {dimension_numbers = #tpu.dot_dimension_numbers<[1], [0], [0], [1], [0, 0, 1, 1], [], []>} : vector<64x65xbf16>, vector<65x512xbf16>, vector<64x512xf32> -> vector<64x512xf32>
    %182 = arith.addf %176, %181 : vector<64x512xf32>
    %c0_153 = arith.constant 0 : index
    %c16 = arith.constant 16 : index
    %c0_154 = arith.constant 0 : index
    %183 = vector.load %arg1[%c0_153, %c16, %c0_154] : memref<16x80x65xbf16, #tpu.memory_space<vmem>>, vector<1x64x65xbf16>
    %184 = vector.shape_cast %183 : vector<1x64x65xbf16> to vector<64x65xbf16>
    %c2_155 = arith.constant 2 : index
    %c0_156 = arith.constant 0 : index
    %c0_157 = arith.constant 0 : index
    %185 = vector.load %arg2[%c2_155, %c0_156, %c0_157] : memref<3x65x512xbf16, #tpu.memory_space<vmem>>, vector<1x65x512xbf16>
    %186 = vector.shape_cast %185 : vector<1x65x512xbf16> to vector<65x512xbf16>
    %cst_158 = arith.constant dense<0.000000e+00> : vector<64x512xf32>
    %187 = tpu.matmul %184, %186, %cst_158 {dimension_numbers = #tpu.dot_dimension_numbers<[1], [0], [0], [1], [0, 0, 1, 1], [], []>} : vector<64x65xbf16>, vector<65x512xbf16>, vector<64x512xf32> -> vector<64x512xf32>
    %188 = arith.addf %182, %187 : vector<64x512xf32>
    %189 = vector.broadcast %0 : vector<1x512xf32> to vector<64x512xf32>
    %190 = arith.addf %188, %189 : vector<64x512xf32>
    %cst_159 = arith.constant 0.000000e+00 : f32
    %191 = vector.broadcast %cst_159 : f32 to vector<64x512xf32>
    %192 = arith.maximumf %190, %191 : vector<64x512xf32>
    %193 = vector.extract_strided_slice %171 {offsets = [0, 0], sizes = [64, 256], strides = [1, 1]} : vector<64x512xf32> to vector<64x256xf32>
    %194 = vector.extract_strided_slice %171 {offsets = [0, 256], sizes = [64, 256], strides = [1, 1]} : vector<64x512xf32> to vector<64x256xf32>
    %195 = arith.maximumf %193, %194 : vector<64x256xf32>
    %196 = vector.extract_strided_slice %192 {offsets = [0, 0], sizes = [64, 256], strides = [1, 1]} : vector<64x512xf32> to vector<64x256xf32>
    %197 = vector.extract_strided_slice %192 {offsets = [0, 256], sizes = [64, 256], strides = [1, 1]} : vector<64x512xf32> to vector<64x256xf32>
    %198 = arith.maximumf %196, %197 : vector<64x256xf32>
    %199 = arith.maximumf %195, %198 : vector<64x256xf32>
    %200 = arith.truncf %199 : vector<64x256xf32> to vector<64x256xbf16>
    %c0_160 = arith.constant 0 : index
    %c0_161 = arith.constant 0 : index
    %201 = vector.load %arg5[%c0_160, %c0_161] : memref<1x256xf32, #tpu.memory_space<vmem>>, vector<1x256xf32>
    %c1_162 = arith.constant 1 : index
    %c0_163 = arith.constant 0 : index
    %c0_164 = arith.constant 0 : index
    %202 = vector.load %arg4[%c1_162, %c0_163, %c0_164] : memref<3x256x256xbf16, #tpu.memory_space<vmem>>, vector<1x256x256xbf16>
    %203 = vector.shape_cast %202 : vector<1x256x256xbf16> to vector<256x256xbf16>
    %cst_165 = arith.constant dense<0.000000e+00> : vector<64x256xf32>
    %204 = tpu.matmul %50, %203, %cst_165 {dimension_numbers = #tpu.dot_dimension_numbers<[1], [0], [0], [1], [0, 0, 1, 1], [], []>} : vector<64x256xbf16>, vector<256x256xbf16>, vector<64x256xf32> -> vector<64x256xf32>
    %c2_166 = arith.constant 2 : index
    %c0_167 = arith.constant 0 : index
    %c0_168 = arith.constant 0 : index
    %205 = vector.load %arg4[%c2_166, %c0_167, %c0_168] : memref<3x256x256xbf16, #tpu.memory_space<vmem>>, vector<1x256x256xbf16>
    %206 = vector.shape_cast %205 : vector<1x256x256xbf16> to vector<256x256xbf16>
    %cst_169 = arith.constant dense<0.000000e+00> : vector<64x256xf32>
    %207 = tpu.matmul %100, %206, %cst_169 {dimension_numbers = #tpu.dot_dimension_numbers<[1], [0], [0], [1], [0, 0, 1, 1], [], []>} : vector<64x256xbf16>, vector<256x256xbf16>, vector<64x256xf32> -> vector<64x256xf32>
    %208 = arith.addf %204, %207 : vector<64x256xf32>
    %209 = vector.broadcast %201 : vector<1x256xf32> to vector<64x256xf32>
    %210 = arith.addf %208, %209 : vector<64x256xf32>
    %c0_170 = arith.constant 0 : index
    %c0_171 = arith.constant 0 : index
    %211 = vector.load %arg11[%c0_170, %c0_171] : memref<64x256xf32, #tpu.memory_space<vmem>>, vector<64x256xf32>
    tpu.vector_store %arg11[%c0_170, %c0_171], %210 {strides = array<i32>} : memref<64x256xf32, #tpu.memory_space<vmem>>, vector<64x256xf32>,
    %212 = vector.extract_strided_slice %200 {offsets = [0, 0], sizes = [48, 256], strides = [1, 1]} : vector<64x256xbf16> to vector<48x256xbf16>
    %c0_172 = arith.constant 0 : index
    %c0_173 = arith.constant 0 : index
    %c0_174 = arith.constant 0 : index
    %213 = vector.load %arg4[%c0_172, %c0_173, %c0_174] : memref<3x256x256xbf16, #tpu.memory_space<vmem>>, vector<1x256x256xbf16>
    %214 = vector.shape_cast %213 : vector<1x256x256xbf16> to vector<256x256xbf16>
    %cst_175 = arith.constant dense<0.000000e+00> : vector<48x256xf32>
    %215 = tpu.matmul %212, %214, %cst_175 {dimension_numbers = #tpu.dot_dimension_numbers<[1], [0], [0], [1], [0, 0, 1, 1], [], []>} : vector<48x256xbf16>, vector<256x256xbf16>, vector<48x256xf32> -> vector<48x256xf32>
    %c16_176 = arith.constant 16 : index
    %c0_177 = arith.constant 0 : index
    %216 = vector.load %arg11[%c16_176, %c0_177] : memref<64x256xf32, #tpu.memory_space<vmem>>, vector<48x256xf32>
    %217 = arith.addf %216, %215 : vector<48x256xf32>
    %c16_178 = arith.constant 16 : index
    %c0_179 = arith.constant 0 : index
    %218 = vector.load %arg11[%c16_178, %c0_179] : memref<64x256xf32, #tpu.memory_space<vmem>>, vector<48x256xf32>
    tpu.vector_store %arg11[%c16_178, %c0_179], %217 {strides = array<i32>} : memref<64x256xf32, #tpu.memory_space<vmem>>, vector<48x256xf32>,
    %c0_180 = arith.constant 0 : index
    %c0_181 = arith.constant 0 : index
    %219 = vector.load %arg11[%c0_180, %c0_181] : memref<64x256xf32, #tpu.memory_space<vmem>>, vector<64x256xf32>
    %cst_182 = arith.constant 0.000000e+00 : f32
    %220 = vector.broadcast %cst_182 : f32 to vector<64x256xf32>
    %221 = arith.maximumf %219, %220 : vector<64x256xf32>
    %c0_183 = arith.constant 0 : index
    %c0_184 = arith.constant 0 : index
    %c0_185 = arith.constant 0 : index
    %222 = vector.load %arg4[%c0_183, %c0_184, %c0_185] : memref<3x256x256xbf16, #tpu.memory_space<vmem>>, vector<1x256x256xbf16>
    %223 = vector.shape_cast %222 : vector<1x256x256xbf16> to vector<256x256xbf16>
    %cst_186 = arith.constant dense<0.000000e+00> : vector<64x256xf32>
    %224 = tpu.matmul %100, %223, %cst_186 {dimension_numbers = #tpu.dot_dimension_numbers<[1], [0], [0], [1], [0, 0, 1, 1], [], []>} : vector<64x256xbf16>, vector<256x256xbf16>, vector<64x256xf32> -> vector<64x256xf32>
    %c1_187 = arith.constant 1 : index
    %c0_188 = arith.constant 0 : index
    %c0_189 = arith.constant 0 : index
    %225 = vector.load %arg4[%c1_187, %c0_188, %c0_189] : memref<3x256x256xbf16, #tpu.memory_space<vmem>>, vector<1x256x256xbf16>
    %226 = vector.shape_cast %225 : vector<1x256x256xbf16> to vector<256x256xbf16>
    %cst_190 = arith.constant dense<0.000000e+00> : vector<64x256xf32>
    %227 = tpu.matmul %150, %226, %cst_190 {dimension_numbers = #tpu.dot_dimension_numbers<[1], [0], [0], [1], [0, 0, 1, 1], [], []>} : vector<64x256xbf16>, vector<256x256xbf16>, vector<64x256xf32> -> vector<64x256xf32>
    %228 = arith.addf %224, %227 : vector<64x256xf32>
    %c2_191 = arith.constant 2 : index
    %c0_192 = arith.constant 0 : index
    %c0_193 = arith.constant 0 : index
    %229 = vector.load %arg4[%c2_191, %c0_192, %c0_193] : memref<3x256x256xbf16, #tpu.memory_space<vmem>>, vector<1x256x256xbf16>
    %230 = vector.shape_cast %229 : vector<1x256x256xbf16> to vector<256x256xbf16>
    %cst_194 = arith.constant dense<0.000000e+00> : vector<64x256xf32>
    %231 = tpu.matmul %200, %230, %cst_194 {dimension_numbers = #tpu.dot_dimension_numbers<[1], [0], [0], [1], [0, 0, 1, 1], [], []>} : vector<64x256xbf16>, vector<256x256xbf16>, vector<64x256xf32> -> vector<64x256xf32>
    %232 = arith.addf %228, %231 : vector<64x256xf32>
    %233 = vector.broadcast %201 : vector<1x256xf32> to vector<64x256xf32>
    %234 = arith.addf %232, %233 : vector<64x256xf32>
    %cst_195 = arith.constant 0.000000e+00 : f32
    %235 = vector.broadcast %cst_195 : f32 to vector<64x256xf32>
    %236 = arith.maximumf %234, %235 : vector<64x256xf32>
    %237 = vector.extract_strided_slice %221 {offsets = [0, 0], sizes = [64, 128], strides = [1, 1]} : vector<64x256xf32> to vector<64x128xf32>
    %238 = vector.extract_strided_slice %221 {offsets = [0, 128], sizes = [64, 128], strides = [1, 1]} : vector<64x256xf32> to vector<64x128xf32>
    %239 = arith.maximumf %237, %238 : vector<64x128xf32>
    %240 = vector.extract_strided_slice %236 {offsets = [0, 0], sizes = [64, 128], strides = [1, 1]} : vector<64x256xf32> to vector<64x128xf32>
    %241 = vector.extract_strided_slice %236 {offsets = [0, 128], sizes = [64, 128], strides = [1, 1]} : vector<64x256xf32> to vector<64x128xf32>
    %242 = arith.maximumf %240, %241 : vector<64x128xf32>
    %243 = arith.maximumf %239, %242 : vector<64x128xf32>
    %244 = arith.truncf %243 : vector<64x128xf32> to vector<64x128xbf16>
    %c0_196 = arith.constant 0 : index
    %c0_197 = arith.constant 0 : index
    %245 = vector.load %arg7[%c0_196, %c0_197] : memref<1x512xf32, #tpu.memory_space<vmem>>, vector<1x512xf32>
    %246 = vector.extract_strided_slice %244 {offsets = [0, 0], sizes = [16, 128], strides = [1, 1]} : vector<64x128xbf16> to vector<16x128xbf16>
    %c0_198 = arith.constant 0 : index
    %c0_199 = arith.constant 0 : index
    %c0_200 = arith.constant 0 : index
    %247 = vector.load %arg6[%c0_198, %c0_199, %c0_200] : memref<4x128x512xbf16, #tpu.memory_space<vmem>>, vector<1x128x512xbf16>
    %248 = vector.shape_cast %247 : vector<1x128x512xbf16> to vector<128x512xbf16>
    %cst_201 = arith.constant dense<0.000000e+00> : vector<16x512xf32>
    %249 = tpu.matmul %246, %248, %cst_201 {dimension_numbers = #tpu.dot_dimension_numbers<[1], [0], [0], [1], [0, 0, 1, 1], [], []>} : vector<16x128xbf16>, vector<128x512xbf16>, vector<16x512xf32> -> vector<16x512xf32>
    %250 = vector.broadcast %245 : vector<1x512xf32> to vector<16x512xf32>
    %251 = arith.addf %250, %249 : vector<16x512xf32>
    %252 = vector.extract_strided_slice %244 {offsets = [16, 0], sizes = [16, 128], strides = [1, 1]} : vector<64x128xbf16> to vector<16x128xbf16>
    %c1_202 = arith.constant 1 : index
    %c0_203 = arith.constant 0 : index
    %c0_204 = arith.constant 0 : index
    %253 = vector.load %arg6[%c1_202, %c0_203, %c0_204] : memref<4x128x512xbf16, #tpu.memory_space<vmem>>, vector<1x128x512xbf16>
    %254 = vector.shape_cast %253 : vector<1x128x512xbf16> to vector<128x512xbf16>
    %cst_205 = arith.constant dense<0.000000e+00> : vector<16x512xf32>
    %255 = tpu.matmul %252, %254, %cst_205 {dimension_numbers = #tpu.dot_dimension_numbers<[1], [0], [0], [1], [0, 0, 1, 1], [], []>} : vector<16x128xbf16>, vector<128x512xbf16>, vector<16x512xf32> -> vector<16x512xf32>
    %256 = arith.addf %251, %255 : vector<16x512xf32>
    %257 = vector.extract_strided_slice %244 {offsets = [32, 0], sizes = [16, 128], strides = [1, 1]} : vector<64x128xbf16> to vector<16x128xbf16>
    %c2_206 = arith.constant 2 : index
    %c0_207 = arith.constant 0 : index
    %c0_208 = arith.constant 0 : index
    %258 = vector.load %arg6[%c2_206, %c0_207, %c0_208] : memref<4x128x512xbf16, #tpu.memory_space<vmem>>, vector<1x128x512xbf16>
    %259 = vector.shape_cast %258 : vector<1x128x512xbf16> to vector<128x512xbf16>
    %cst_209 = arith.constant dense<0.000000e+00> : vector<16x512xf32>
    %260 = tpu.matmul %257, %259, %cst_209 {dimension_numbers = #tpu.dot_dimension_numbers<[1], [0], [0], [1], [0, 0, 1, 1], [], []>} : vector<16x128xbf16>, vector<128x512xbf16>, vector<16x512xf32> -> vector<16x512xf32>
    %261 = arith.addf %256, %260 : vector<16x512xf32>
    %262 = vector.extract_strided_slice %244 {offsets = [48, 0], sizes = [16, 128], strides = [1, 1]} : vector<64x128xbf16> to vector<16x128xbf16>
    %c3_210 = arith.constant 3 : index
    %c0_211 = arith.constant 0 : index
    %c0_212 = arith.constant 0 : index
    %263 = vector.load %arg6[%c3_210, %c0_211, %c0_212] : memref<4x128x512xbf16, #tpu.memory_space<vmem>>, vector<1x128x512xbf16>
    %264 = vector.shape_cast %263 : vector<1x128x512xbf16> to vector<128x512xbf16>
    %cst_213 = arith.constant dense<0.000000e+00> : vector<16x512xf32>
    %265 = tpu.matmul %262, %264, %cst_213 {dimension_numbers = #tpu.dot_dimension_numbers<[1], [0], [0], [1], [0, 0, 1, 1], [], []>} : vector<16x128xbf16>, vector<128x512xbf16>, vector<16x512xf32> -> vector<16x512xf32>
    %266 = arith.addf %261, %265 : vector<16x512xf32>
    %cst_214 = arith.constant 0.000000e+00 : f32
    %267 = vector.broadcast %cst_214 : f32 to vector<16x512xf32>
    %268 = arith.maximumf %266, %267 : vector<16x512xf32>
    %269 = arith.truncf %268 : vector<16x512xf32> to vector<16x512xbf16>
    %c0_215 = arith.constant 0 : index
    %c0_216 = arith.constant 0 : index
    %270 = vector.load %arg8[%c0_215, %c0_216] : memref<512x128xbf16, #tpu.memory_space<vmem>>, vector<512x128xbf16>
    %cst_217 = arith.constant dense<0.000000e+00> : vector<16x128xf32>
    %271 = tpu.matmul %269, %270, %cst_217 {dimension_numbers = #tpu.dot_dimension_numbers<[1], [0], [0], [1], [0, 0, 1, 1], [], []>} : vector<16x512xbf16>, vector<512x128xbf16>, vector<16x128xf32> -> vector<16x128xf32>
    %c0_218 = arith.constant 0 : index
    %c0_219 = arith.constant 0 : index
    %272 = vector.load %arg9[%c0_218, %c0_219] : memref<1x128xf32, #tpu.memory_space<vmem>>, vector<1x128xf32>
    %273 = vector.broadcast %272 : vector<1x128xf32> to vector<16x128xf32>
    %274 = arith.addf %271, %273 : vector<16x128xf32>
    %c0_220 = arith.constant 0 : index
    %c0_221 = arith.constant 0 : index
    %275 = vector.load %arg10[%c0_220, %c0_221] : memref<16x128xf32, #tpu.memory_space<vmem>>, vector<16x128xf32>
    tpu.vector_store %arg10[%c0_220, %c0_221], %274 {strides = array<i32>} : memref<16x128xf32, #tpu.memory_space<vmem>>, vector<16x128xf32>,
    return
  }
  func.func @transform_0(%arg0: i32) -> (i32, i32, i32) {
    %c0_i32 = arith.constant 0 : i32
    %c0_i32_0 = arith.constant 0 : i32
    %c0_i32_1 = arith.constant 0 : i32
    return %arg0, %c0_i32, %c0_i32_0 : i32, i32, i32
  }
  func.func @transform_1(%arg0: i32) -> (i32, i32, i32) {
    %c0_i32 = arith.constant 0 : i32
    %c0_i32_0 = arith.constant 0 : i32
    %c0_i32_1 = arith.constant 0 : i32
    %c0_i32_2 = arith.constant 0 : i32
    return %c0_i32, %c0_i32_0, %c0_i32_1 : i32, i32, i32
  }
  func.func @transform_2(%arg0: i32) -> (i32, i32) {
    %c0_i32 = arith.constant 0 : i32
    %c0_i32_0 = arith.constant 0 : i32
    %c0_i32_1 = arith.constant 0 : i32
    return %c0_i32, %c0_i32_0 : i32, i32
  }
  func.func @transform_3(%arg0: i32) -> (i32, i32, i32) {
    %c0_i32 = arith.constant 0 : i32
    %c0_i32_0 = arith.constant 0 : i32
    %c0_i32_1 = arith.constant 0 : i32
    %c0_i32_2 = arith.constant 0 : i32
    return %c0_i32, %c0_i32_0, %c0_i32_1 : i32, i32, i32
  }
  func.func @transform_4(%arg0: i32) -> (i32, i32) {
    %c0_i32 = arith.constant 0 : i32
    %c0_i32_0 = arith.constant 0 : i32
    %c0_i32_1 = arith.constant 0 : i32
    return %c0_i32, %c0_i32_0 : i32, i32
  }
  func.func @transform_5(%arg0: i32) -> (i32, i32, i32) {
    %c0_i32 = arith.constant 0 : i32
    %c0_i32_0 = arith.constant 0 : i32
    %c0_i32_1 = arith.constant 0 : i32
    %c0_i32_2 = arith.constant 0 : i32
    return %c0_i32, %c0_i32_0, %c0_i32_1 : i32, i32, i32
  }
  func.func @transform_6(%arg0: i32) -> (i32, i32) {
    %c0_i32 = arith.constant 0 : i32
    %c0_i32_0 = arith.constant 0 : i32
    %c0_i32_1 = arith.constant 0 : i32
    return %c0_i32, %c0_i32_0 : i32, i32
  }
  func.func @transform_7(%arg0: i32) -> (i32, i32) {
    %c0_i32 = arith.constant 0 : i32
    %c0_i32_0 = arith.constant 0 : i32
    %c0_i32_1 = arith.constant 0 : i32
    return %c0_i32, %c0_i32_0 : i32, i32
  }
  func.func @transform_8(%arg0: i32) -> (i32, i32) {
    %c0_i32 = arith.constant 0 : i32
    %c0_i32_0 = arith.constant 0 : i32
    %c0_i32_1 = arith.constant 0 : i32
    return %c0_i32, %c0_i32_0 : i32, i32
  }
  func.func @transform_9(%arg0: i32) -> (i32, i32) {
    %c0_i32 = arith.constant 0 : i32
    %c0_i32_0 = arith.constant 0 : i32
    return %arg0, %c0_i32 : i32, i32
  }
}

</mosaic_0001>

<llo_original>
// kernel: onset_detection_net.1
$region0: #{onset_detection_net.1}
  #allocation0 [shape = 'u32[]', space=smem, size = 0x4, offset = 0x4, fixed_abs, tag = 'smem constant byte address 0x4 - core index']
  #allocation1 [shape = 'u32[144,128]{1,0:T(1,128)}', space=vmem, size = 0x12000, scoped, tag = 'internal scratch']
  #allocation2 [shape = 'f32[64,256]{1,0:T(8,128)}', space=vmem, size = 0x10000, scoped, tag = 'scratch operand']
  %s0 = inlined_call_operand.vmem [shape: bf16[16,80,65], index: 0, kind: input, shape index: {}]
  %s1 = inlined_call_operand.hbm [shape: bf16[3,65,512], index: 1, kind: input, shape index: {}]
  %s2 = inlined_call_operand.vmem [shape: f32[1,512], index: 2, kind: input, shape index: {}]
  %s3 = inlined_call_operand.vmem [shape: bf16[3,256,256], index: 3, kind: input, shape index: {}]
  %s4 = inlined_call_operand.vmem [shape: f32[1,256], index: 4, kind: input, shape index: {}]
  %s5 = inlined_call_operand.vmem [shape: bf16[4,128,512], index: 5, kind: input, shape index: {}]
  %s6 = inlined_call_operand.vmem [shape: f32[1,512], index: 6, kind: input, shape index: {}]
  %s7 = inlined_call_operand.vmem [shape: bf16[512,128], index: 7, kind: input, shape index: {}]
  %s8 = inlined_call_operand.vmem [shape: f32[1,128], index: 8, kind: input, shape index: {}]
  %s9 = inlined_call_operand.vmem [shape: f32[16,128], index: 9, kind: output, shape index: {}]
  %s10 = sld [smem:[#allocation0]]
  $region50: #{onset_detection_net.1} parent=0
    _
  %s12 = ssub.s32 1, %s10
  %s13 = scalar_select 0, %s12, %s10
  $region1: #{onset_detection_net.1} parent=0
    #allocation3 [shape = 'u8[221184]{0}', space=vmem, size = 0x36000, scoped, tag = 'input window, operand 1, single buffered']
    #allocation4 [shape = 's32[1]{0}', space=sflag, size = 0x4, scoped, tag = 'scoped memory for onset_detection_net.1']
    %14 = vsyncpa [#allocation4], 0
    // Predicated region
    $region2: #{onset_detection_net.1} parent=1 // pred_check
      _
    $region3: #{onset_detection_net.1} parent=1 // pred_check_branch
      %16 = sbr.rel (0) target = $region5
    $region4: #{onset_detection_net.1} parent=1 // pred_region
      _
    $region5: #{onset_detection_net.1} parent=1 // pred_fallthru
      _
    // Predicated region
    $region6: #{onset_detection_net.1} parent=1 // pred_check
      _
    $region7: #{onset_detection_net.1} parent=1 // pred_check_branch
      %18 = sbr.rel (0) target = $region9
    $region8: #{onset_detection_net.1} parent=1 // pred_region
      %s20 = ssub.s32 6912, 6912
      %21 = vsyncadd [#allocation4], %s20
      %s22 = sshll.u32 [#allocation3], 4
      %s23 = int_to_ptr.vmem [resolvable:$true] %s22
      %28 = dma.hbm_to_vmem [thread:$0]  %s1, 6912, %s23, [#allocation4], 256, 256, 16
    $region9: #{onset_detection_net.1} parent=1 // pred_fallthru
      _
    // Predicated region
    $region10: #{onset_detection_net.1} parent=1 // pred_check
      _
    $region11: #{onset_detection_net.1} parent=1 // pred_check_branch
      %30 = sbr.rel (0) target = $region13
    $region12: #{onset_detection_net.1} parent=1 // pred_region
      _
    $region13: #{onset_detection_net.1} parent=1 // pred_fallthru
      _
    // Predicated region
    $region14: #{onset_detection_net.1} parent=1 // pred_check
      _
    $region15: #{onset_detection_net.1} parent=1 // pred_check_branch
      %32 = sbr.rel (0) target = $region17
    $region16: #{onset_detection_net.1} parent=1 // pred_region
      _
    $region17: #{onset_detection_net.1} parent=1 // pred_fallthru
      _
    // Predicated region
    $region18: #{onset_detection_net.1} parent=1 // pred_check
      _
    $region19: #{onset_detection_net.1} parent=1 // pred_check_branch
      %34 = sbr.rel (0) target = $region21
    $region20: #{onset_detection_net.1} parent=1 // pred_region
      _
    $region21: #{onset_detection_net.1} parent=1 // pred_fallthru
      _
    // Predicated region
    $region22: #{onset_detection_net.1} parent=1 // pred_check
      _
    $region23: #{onset_detection_net.1} parent=1 // pred_check_branch
      %36 = sbr.rel (0) target = $region25
    $region24: #{onset_detection_net.1} parent=1 // pred_region
      _
    $region25: #{onset_detection_net.1} parent=1 // pred_fallthru
      _
    // Predicated region
    $region26: #{onset_detection_net.1} parent=1 // pred_check
      _
    $region27: #{onset_detection_net.1} parent=1 // pred_check_branch
      %38 = sbr.rel (0) target = $region29
    $region28: #{onset_detection_net.1} parent=1 // pred_region
      _
    $region29: #{onset_detection_net.1} parent=1 // pred_fallthru
      _
    // Predicated region
    $region30: #{onset_detection_net.1} parent=1 // pred_check
      _
    $region31: #{onset_detection_net.1} parent=1 // pred_check_branch
      %40 = sbr.rel (0) target = $region33
    $region32: #{onset_detection_net.1} parent=1 // pred_region
      _
    $region33: #{onset_detection_net.1} parent=1 // pred_fallthru
      _
    // Predicated region
    $region34: #{onset_detection_net.1} parent=1 // pred_check
      _
    $region35: #{onset_detection_net.1} parent=1 // pred_check_branch
      %42 = sbr.rel (0) target = $region37
    $region36: #{onset_detection_net.1} parent=1 // pred_region
      _
    $region37: #{onset_detection_net.1} parent=1 // pred_fallthru
      _
    // Predicated region
    $region38: #{onset_detection_net.1} parent=1 // pred_check
      _
    $region39: #{onset_detection_net.1} parent=1 // pred_check_branch
      %44 = sbr.rel (0) target = $region41
    $region40: #{onset_detection_net.1} parent=1 // pred_region
      %45 = dma.done [#allocation4], 6912
    $region41: #{onset_detection_net.1} parent=1 // pred_fallthru
      _
    %v47 = vld [vmem:[%s2] sm:$0xf]
    %v48 = vld [vmem:[%s0] sm:$0xf]
    %v49 = vld [vmem:[%s0 + $0x4] sm:$0xf]
    %v50 = vld [vmem:[%s0 + $0x8] sm:$0xf]
    %v51 = vld [vmem:[%s0 + $0xc] sm:$0xf]
    %v52 = vld [vmem:[%s0 + $0x10] sm:$0xf]
    %v53 = vld [vmem:[%s0 + $0x14] sm:$0xf]
    %v54 = vld [vmem:[%s0 + $0x18] sm:$0xf]
    %v55 = vld [vmem:[%s0 + $0x1c] sm:$0xf]
    %v56 = vld [vmem:[#allocation3] sm:$0xff]
    %v57 = vld [vmem:[#allocation3 + $0x8] sm:$0xff]
    %v58 = vld [vmem:[#allocation3 + $0x10] sm:$0xff]
    %v59 = vld [vmem:[#allocation3 + $0x18] sm:$0xff]
    %v60 = vld [vmem:[#allocation3 + $0x20] sm:$0xff]
    %v61 = vld [vmem:[#allocation3 + $0x28] sm:$0xff]
    %v62 = vld [vmem:[#allocation3 + $0x30] sm:$0xff]
    %v63 = vld [vmem:[#allocation3 + $0x38] sm:$0xff]
    %v64 = vld [vmem:[#allocation3 + $0x40] sm:$0xff]
    %v65 = vld [vmem:[#allocation3 + $0x48] sm:$0xff]
    %v66 = vld [vmem:[#allocation3 + $0x50] sm:$0xff]
    %v67 = vld [vmem:[#allocation3 + $0x58] sm:$0xff]
    %v68 = vld [vmem:[#allocation3 + $0x60] sm:$0xff]
    %v69 = vld [vmem:[#allocation3 + $0x68] sm:$0xff]
    %v70 = vld [vmem:[#allocation3 + $0x70] sm:$0xff]
    %v71 = vld [vmem:[#allocation3 + $0x78] sm:$0xff]
    %v72 = vld [vmem:[#allocation3 + $0x80] sm:$0x11]
    %v73 = vld [vmem:[#allocation3 + $0x88] sm:$0x11]
    %s74 = scalar_lea.vmem %s0, 40
    %v75 = vld [vmem:[%s74] sm:$0xf]
    %v76 = vld [vmem:[%s74 + $0x4] sm:$0xf]
    %v77 = vld [vmem:[%s74 + $0x8] sm:$0xf]
    %v78 = vld [vmem:[%s74 + $0xc] sm:$0xf]
    %v79 = vld [vmem:[%s74 + $0x10] sm:$0xf]
    %v80 = vld [vmem:[%s74 + $0x14] sm:$0xf]
    %v81 = vld [vmem:[%s74 + $0x18] sm:$0xf]
    %v82 = vld [vmem:[%s74 + $0x1c] sm:$0xf]
    %s83 = scalar_lea.vmem [#allocation3], 144
    %v84 = vld [vmem:[%s83] sm:$0xff]
    %v85 = vld [vmem:[%s83 + $0x8] sm:$0xff]
    %v86 = vld [vmem:[%s83 + $0x10] sm:$0xff]
    %v87 = vld [vmem:[%s83 + $0x18] sm:$0xff]
    %v88 = vld [vmem:[%s83 + $0x20] sm:$0xff]
    %v89 = vld [vmem:[%s83 + $0x28] sm:$0xff]
    %v90 = vld [vmem:[%s83 + $0x30] sm:$0xff]
    %v91 = vld [vmem:[%s83 + $0x38] sm:$0xff]
    %v92 = vld [vmem:[%s83 + $0x40] sm:$0xff]
    %v93 = vld [vmem:[%s83 + $0x48] sm:$0xff]
    %v94 = vld [vmem:[%s83 + $0x50] sm:$0xff]
    %v95 = vld [vmem:[%s83 + $0x58] sm:$0xff]
    %v96 = vld [vmem:[%s83 + $0x60] sm:$0xff]
    %v97 = vld [vmem:[%s83 + $0x68] sm:$0xff]
    %v98 = vld [vmem:[%s83 + $0x70] sm:$0xff]
    %v99 = vld [vmem:[%s83 + $0x78] sm:$0xff]
    %v100 = vld [vmem:[%s83 + $0x80] sm:$0x11]
    %v101 = vld [vmem:[%s83 + $0x88] sm:$0x11]
    %v110 = vunpack.c.l.b16 %v75
    %v111 = vunpack.c.l.b16 %v76
    %v112 = vunpack.c.l.b16 %v77
    %v113 = vunpack.c.l.b16 %v78
    %v114 = vunpack.c.l.b16 %v79
    %v115 = vunpack.c.l.b16 %v80
    %v116 = vunpack.c.l.b16 %v81
    %v117 = vunpack.c.l.b16 %v82
    %v118 = vpack.c.b16 %v111, %v110
    %v119 = vpack.c.b16 %v113, %v112
    %v120 = vpack.c.b16 %v115, %v114
    %v121 = vpack.c.b16 %v117, %v116
    %v140 = vunpack.c.l.b16 %v84
    %v141 = vunpack.c.h.b16 %v84
    %v142 = vunpack.c.l.b16 %v85
    %v143 = vunpack.c.h.b16 %v85
    %v144 = vunpack.c.l.b16 %v86
    %v145 = vunpack.c.h.b16 %v86
    %v146 = vunpack.c.l.b16 %v87
    %v147 = vunpack.c.h.b16 %v87
    %v148 = vunpack.c.l.b16 %v88
    %v149 = vunpack.c.h.b16 %v88
    %v150 = vunpack.c.l.b16 %v89
    %v151 = vunpack.c.h.b16 %v89
    %v152 = vunpack.c.l.b16 %v90
    %v153 = vunpack.c.h.b16 %v90
    %v154 = vunpack.c.l.b16 %v91
    %v155 = vunpack.c.h.b16 %v91
    %v156 = vunpack.c.l.b16 %v92
    %v157 = vunpack.c.h.b16 %v92
    %v158 = vunpack.c.l.b16 %v93
    %v159 = vunpack.c.h.b16 %v93
    %v160 = vunpack.c.l.b16 %v94
    %v161 = vunpack.c.h.b16 %v94
    %v162 = vunpack.c.l.b16 %v95
    %v163 = vunpack.c.h.b16 %v95
    %v164 = vunpack.c.l.b16 %v96
    %v165 = vunpack.c.h.b16 %v96
    %v166 = vunpack.c.l.b16 %v97
    %v167 = vunpack.c.h.b16 %v97
    %v168 = vunpack.c.l.b16 %v98
    %v169 = vunpack.c.h.b16 %v98
    %v170 = vunpack.c.l.b16 %v99
    %v171 = vunpack.c.h.b16 %v99
    %v172 = vunpack.c.l.b16 %v100
    %v173 = vunpack.c.h.b16 %v100
    %v174 = vunpack.c.l.b16 %v101
    %v175 = vunpack.c.h.b16 %v101
    %v176 = vpack.c.b16 %v144, %v140
    %v177 = vpack.c.b16 %v145, %v141
    %v178 = vpack.c.b16 %v146, %v142
    %v179 = vpack.c.b16 %v147, %v143
    %v180 = vpack.c.b16 %v152, %v148
    %v181 = vpack.c.b16 %v153, %v149
    %v182 = vpack.c.b16 %v154, %v150
    %v183 = vpack.c.b16 %v155, %v151
    %v184 = vpack.c.b16 %v160, %v156
    %v185 = vpack.c.b16 %v161, %v157
    %v186 = vpack.c.b16 %v162, %v158
    %v187 = vpack.c.b16 %v163, %v159
    %v188 = vpack.c.b16 %v168, %v164
    %v189 = vpack.c.b16 %v169, %v165
    %v190 = vpack.c.b16 %v170, %v166
    %v191 = vpack.c.b16 %v171, %v167
    %v192 = vpack.c.b16 %v172, %v172
    %v193 = vpack.c.b16 %v173, %v173
    %v194 = vpack.c.b16 %v174, %v174
    %v195 = vpack.c.b16 %v175, %v175
    %vm212 = vcmask 531456
    %v214 = vsel %vm212, %v118, 0
    %v217 = vsel %vm212, %v119, 0
    %v220 = vsel %vm212, %v120, 0
    %v223 = vsel %vm212, %v121, 0
    %vm225 = vcmask 1040384
    %v226 = vsel 0, 4294967295, 65535
    %v227 = vsel %vm225, %v226, 0
    %v229 = vand.u32 %v192, %v227
    %v232 = vand.u32 %v193, %v227
    %v235 = vand.u32 %v194, %v227
    %v238 = vand.u32 %v195, %v227
    %240 = vmatprep.subr.bf16.mxu0 0
    %241 = vmatpush1.bf16.msra.mxu0 0
    %242 = vmatprep.subr.bf16.mxu0 0
    %243 = vmatpush1.bf16.msra.mxu0 0
    %244 = vmatprep.subr.bf16.mxu0 0
    %245 = vmatpush1.bf16.msra.mxu0 0
    %246 = vmatprep.subr.bf16.mxu0 %v232
    %247 = vmatpush1.bf16.msra.mxu0 %v229
    %248 = vmatprep.subr.bf16.mxu0 %v189
    %249 = vmatpush1.bf16.msra.mxu0 %v188
    %250 = vmatprep.subr.bf16.mxu0 %v185
    %251 = vmatpush1.bf16.msra.mxu0 %v184
    %252 = vmatprep.subr.bf16.mxu0 %v181
    %253 = vmatpush1.bf16.msra.mxu0 %v180
    %254 = vmatprep.subr.bf16.mxu0 %v177
    %255 = vmatpush1.bf16.msra.mxu0 %v176
    %256 = vmatprep.subr.bf16.mxu0 0
    %257 = vmatpush2.bf16.msra.mxu0 0
    %258 = vmatprep.subr.bf16.mxu0 0
    %259 = vmatpush2.bf16.msra.mxu0 0
    %260 = vmatprep.subr.bf16.mxu0 0
    %261 = vmatpush2.bf16.msra.mxu0 0
    %262 = vmatprep.subr.bf16.mxu0 0
    %263 = vmatpush2.bf16.msra.mxu0 0
    %264 = vmatprep.subr.bf16.mxu0 0
    %265 = vmatpush2.bf16.msra.mxu0 0
    %266 = vmatprep.subr.bf16.mxu0 0
    %267 = vmatpush2.bf16.msra.mxu0 0
    %268 = vmatprep.subr.bf16.mxu0 0
    %269 = vmatpush2.bf16.msra.mxu0 0
    %270 = vmatprep.subr.bf16.mxu0 0
    %271 = vmatpush2.bf16.msra.mxu0 0
    %272 = vmatprep.mubr.bf16.mxu0 0
    %273 = vmatmul.mubr.bf16.gmra.mxu0 %v214
    %v274 = vpop.f32.mrf.mxu0
    %v275 = vadd.f32 0.0, %v274
    %v276 = vpop.f32.mrf.mxu0
    %v277 = vadd.f32 0.0, %v276
    %v278 = vpop.f32.mrf.mxu0
    %v279 = vadd.f32 0.0, %v278
    %v280 = vpop.f32.mrf.mxu0
    %v281 = vadd.f32 0.0, %v280
    %282 = vmatprep.mubr.bf16.mxu0 0
    %283 = vmatmul.mubr.bf16.gmra.mxu0 %v217
    %v284 = vpop.f32.mrf.mxu0
    %v285 = vadd.f32 0.0, %v284
    %v286 = vpop.f32.mrf.mxu0
    %v287 = vadd.f32 0.0, %v286
    %v288 = vpop.f32.mrf.mxu0
    %v289 = vadd.f32 0.0, %v288
    %v290 = vpop.f32.mrf.mxu0
    %v291 = vadd.f32 0.0, %v290
    %292 = vmatprep.mubr.bf16.mxu0 0
    %293 = vmatmul.mubr.bf16.gmra.mxu0 %v220
    %v294 = vpop.f32.mrf.mxu0
    %v295 = vadd.f32 0.0, %v294
    %v296 = vpop.f32.mrf.mxu0
    %v297 = vadd.f32 0.0, %v296
    %v298 = vpop.f32.mrf.mxu0
    %v299 = vadd.f32 0.0, %v298
    %v300 = vpop.f32.mrf.mxu0
    %v301 = vadd.f32 0.0, %v300
    %302 = vmatprep.mubr.bf16.mxu0 0
    %303 = vmatmul.mubr.bf16.gmra.mxu0 %v223
    %v304 = vpop.f32.mrf.mxu0
    %v305 = vadd.f32 0.0, %v304
    %v306 = vpop.f32.mrf.mxu0
    %v307 = vadd.f32 0.0, %v306
    %v308 = vpop.f32.mrf.mxu0
    %v309 = vadd.f32 0.0, %v308
    %v310 = vpop.f32.mrf.mxu0
    %v311 = vadd.f32 0.0, %v310
    %312 = vdwg.mxu0
    %313 = vmatprep.subr.bf16.mxu0 0
    %314 = vmatpush1.bf16.msra.mxu0 0
    %315 = vmatprep.subr.bf16.mxu0 0
    %316 = vmatpush1.bf16.msra.mxu0 0
    %317 = vmatprep.subr.bf16.mxu0 0
    %318 = vmatpush1.bf16.msra.mxu0 0
    %319 = vmatprep.subr.bf16.mxu0 %v238
    %320 = vmatpush1.bf16.msra.mxu0 %v235
    %321 = vmatprep.subr.bf16.mxu0 %v191
    %322 = vmatpush1.bf16.msra.mxu0 %v190
    %323 = vmatprep.subr.bf16.mxu0 %v187
    %324 = vmatpush1.bf16.msra.mxu0 %v186
    %325 = vmatprep.subr.bf16.mxu0 %v183
    %326 = vmatpush1.bf16.msra.mxu0 %v182
    %327 = vmatprep.subr.bf16.mxu0 %v179
    %328 = vmatpush1.bf16.msra.mxu0 %v178
    %329 = vmatprep.subr.bf16.mxu0 0
    %330 = vmatpush2.bf16.msra.mxu0 0
    %331 = vmatprep.subr.bf16.mxu0 0
    %332 = vmatpush2.bf16.msra.mxu0 0
    %333 = vmatprep.subr.bf16.mxu0 0
    %334 = vmatpush2.bf16.msra.mxu0 0
    %335 = vmatprep.subr.bf16.mxu0 0
    %336 = vmatpush2.bf16.msra.mxu0 0
    %337 = vmatprep.subr.bf16.mxu0 0
    %338 = vmatpush2.bf16.msra.mxu0 0
    %339 = vmatprep.subr.bf16.mxu0 0
    %340 = vmatpush2.bf16.msra.mxu0 0
    %341 = vmatprep.subr.bf16.mxu0 0
    %342 = vmatpush2.bf16.msra.mxu0 0
    %343 = vmatprep.subr.bf16.mxu0 0
    %344 = vmatpush2.bf16.msra.mxu0 0
    %345 = vmatprep.mubr.bf16.mxu0 0
    %346 = vmatmul.mubr.bf16.gmra.mxu0 %v214
    %v347 = vpop.f32.mrf.mxu0
    %v348 = vadd.f32 0.0, %v347
    %v349 = vpop.f32.mrf.mxu0
    %v350 = vadd.f32 0.0, %v349
    %v351 = vpop.f32.mrf.mxu0
    %v352 = vadd.f32 0.0, %v351
    %v353 = vpop.f32.mrf.mxu0
    %v354 = vadd.f32 0.0, %v353
    %355 = vmatprep.mubr.bf16.mxu0 0
    %356 = vmatmul.mubr.bf16.gmra.mxu0 %v217
    %v357 = vpop.f32.mrf.mxu0
    %v358 = vadd.f32 0.0, %v357
    %v359 = vpop.f32.mrf.mxu0
    %v360 = vadd.f32 0.0, %v359
    %v361 = vpop.f32.mrf.mxu0
    %v362 = vadd.f32 0.0, %v361
    %v363 = vpop.f32.mrf.mxu0
    %v364 = vadd.f32 0.0, %v363
    %365 = vmatprep.mubr.bf16.mxu0 0
    %366 = vmatmul.mubr.bf16.gmra.mxu0 %v220
    %v367 = vpop.f32.mrf.mxu0
    %v368 = vadd.f32 0.0, %v367
    %v369 = vpop.f32.mrf.mxu0
    %v370 = vadd.f32 0.0, %v369
    %v371 = vpop.f32.mrf.mxu0
    %v372 = vadd.f32 0.0, %v371
    %v373 = vpop.f32.mrf.mxu0
    %v374 = vadd.f32 0.0, %v373
    %375 = vmatprep.mubr.bf16.mxu0 0
    %376 = vmatmul.mubr.bf16.gmra.mxu0 %v223
    %v377 = vpop.f32.mrf.mxu0
    %v378 = vadd.f32 0.0, %v377
    %v379 = vpop.f32.mrf.mxu0
    %v380 = vadd.f32 0.0, %v379
    %v381 = vpop.f32.mrf.mxu0
    %v382 = vadd.f32 0.0, %v381
    %v383 = vpop.f32.mrf.mxu0
    %v384 = vadd.f32 0.0, %v383
    %385 = vdwg.mxu0
    %v394 = vunpack.c.l.b16 %v48
    %v395 = vunpack.c.l.b16 %v49
    %v396 = vunpack.c.l.b16 %v50
    %v397 = vunpack.c.l.b16 %v51
    %v398 = vunpack.c.l.b16 %v52
    %v399 = vunpack.c.l.b16 %v53
    %v400 = vunpack.c.l.b16 %v54
    %v401 = vunpack.c.l.b16 %v55
    %v402 = vpack.c.b16 %v395, %v394
    %v403 = vpack.c.b16 %v397, %v396
    %v404 = vpack.c.b16 %v399, %v398
    %v405 = vpack.c.b16 %v401, %v400
    %v424 = vunpack.c.l.b16 %v56
    %v425 = vunpack.c.h.b16 %v56
    %v426 = vunpack.c.l.b16 %v57
    %v427 = vunpack.c.h.b16 %v57
    %v428 = vunpack.c.l.b16 %v58
    %v429 = vunpack.c.h.b16 %v58
    %v430 = vunpack.c.l.b16 %v59
    %v431 = vunpack.c.h.b16 %v59
    %v432 = vunpack.c.l.b16 %v60
    %v433 = vunpack.c.h.b16 %v60
    %v434 = vunpack.c.l.b16 %v61
    %v435 = vunpack.c.h.b16 %v61
    %v436 = vunpack.c.l.b16 %v62
    %v437 = vunpack.c.h.b16 %v62
    %v438 = vunpack.c.l.b16 %v63
    %v439 = vunpack.c.h.b16 %v63
    %v440 = vunpack.c.l.b16 %v64
    %v441 = vunpack.c.h.b16 %v64
    %v442 = vunpack.c.l.b16 %v65
    %v443 = vunpack.c.h.b16 %v65
    %v444 = vunpack.c.l.b16 %v66
    %v445 = vunpack.c.h.b16 %v66
    %v446 = vunpack.c.l.b16 %v67
    %v447 = vunpack.c.h.b16 %v67
    %v448 = vunpack.c.l.b16 %v68
    %v449 = vunpack.c.h.b16 %v68
    %v450 = vunpack.c.l.b16 %v69
    %v451 = vunpack.c.h.b16 %v69
    %v452 = vunpack.c.l.b16 %v70
    %v453 = vunpack.c.h.b16 %v70
    %v454 = vunpack.c.l.b16 %v71
    %v455 = vunpack.c.h.b16 %v71
    %v456 = vunpack.c.l.b16 %v72
    %v457 = vunpack.c.h.b16 %v72
    %v458 = vunpack.c.l.b16 %v73
    %v459 = vunpack.c.h.b16 %v73
    %v460 = vpack.c.b16 %v428, %v424
    %v461 = vpack.c.b16 %v429, %v425
    %v462 = vpack.c.b16 %v430, %v426
    %v463 = vpack.c.b16 %v431, %v427
    %v464 = vpack.c.b16 %v436, %v432
    %v465 = vpack.c.b16 %v437, %v433
    %v466 = vpack.c.b16 %v438, %v434
    %v467 = vpack.c.b16 %v439, %v435
    %v468 = vpack.c.b16 %v444, %v440
    %v469 = vpack.c.b16 %v445, %v441
    %v470 = vpack.c.b16 %v446, %v442
    %v471 = vpack.c.b16 %v447, %v443
    %v472 = vpack.c.b16 %v452, %v448
    %v473 = vpack.c.b16 %v453, %v449
    %v474 = vpack.c.b16 %v454, %v450
    %v475 = vpack.c.b16 %v455, %v451
    %v476 = vpack.c.b16 %v456, %v456
    %v477 = vpack.c.b16 %v457, %v457
    %v478 = vpack.c.b16 %v458, %v458
    %v479 = vpack.c.b16 %v459, %v459
    %v497 = vsel %vm212, %v402, 0
    %v500 = vsel %vm212, %v403, 0
    %v503 = vsel %vm212, %v404, 0
    %v506 = vsel %vm212, %v405, 0
    %v509 = vand.u32 %v476, %v227
    %v512 = vand.u32 %v477, %v227
    %v515 = vand.u32 %v478, %v227
    %v518 = vand.u32 %v479, %v227
    %520 = vmatprep.subr.bf16.mxu0 0
    %521 = vmatpush1.bf16.msra.mxu0 0
    %522 = vmatprep.subr.bf16.mxu0 0
    %523 = vmatpush1.bf16.msra.mxu0 0
    %524 = vmatprep.subr.bf16.mxu0 0
    %525 = vmatpush1.bf16.msra.mxu0 0
    %526 = vmatprep.subr.bf16.mxu0 %v512
    %527 = vmatpush1.bf16.msra.mxu0 %v509
    %528 = vmatprep.subr.bf16.mxu0 %v473
    %529 = vmatpush1.bf16.msra.mxu0 %v472
    %530 = vmatprep.subr.bf16.mxu0 %v469
    %531 = vmatpush1.bf16.msra.mxu0 %v468
    %532 = vmatprep.subr.bf16.mxu0 %v465
    %533 = vmatpush1.bf16.msra.mxu0 %v464
    %534 = vmatprep.subr.bf16.mxu0 %v461
    %535 = vmatpush1.bf16.msra.mxu0 %v460
    %536 = vmatprep.subr.bf16.mxu0 0
    %537 = vmatpush2.bf16.msra.mxu0 0
    %538 = vmatprep.subr.bf16.mxu0 0
    %539 = vmatpush2.bf16.msra.mxu0 0
    %540 = vmatprep.subr.bf16.mxu0 0
    %541 = vmatpush2.bf16.msra.mxu0 0
    %542 = vmatprep.subr.bf16.mxu0 0
    %543 = vmatpush2.bf16.msra.mxu0 0
    %544 = vmatprep.subr.bf16.mxu0 0
    %545 = vmatpush2.bf16.msra.mxu0 0
    %546 = vmatprep.subr.bf16.mxu0 0
    %547 = vmatpush2.bf16.msra.mxu0 0
    %548 = vmatprep.subr.bf16.mxu0 0
    %549 = vmatpush2.bf16.msra.mxu0 0
    %550 = vmatprep.subr.bf16.mxu0 0
    %551 = vmatpush2.bf16.msra.mxu0 0
    %552 = vmatprep.mubr.bf16.mxu0 0
    %553 = vmatmul.mubr.bf16.gmra.mxu0 %v497
    %v554 = vpop.f32.mrf.mxu0
    %v555 = vadd.f32 %v275, %v554
    %v556 = vpop.f32.mrf.mxu0
    %v557 = vadd.f32 %v277, %v556
    %v558 = vpop.f32.mrf.mxu0
    %v559 = vadd.f32 %v279, %v558
    %v560 = vpop.f32.mrf.mxu0
    %v561 = vadd.f32 %v281, %v560
    %562 = vmatprep.mubr.bf16.mxu0 0
    %563 = vmatmul.mubr.bf16.gmra.mxu0 %v500
    %v564 = vpop.f32.mrf.mxu0
    %v565 = vadd.f32 %v285, %v564
    %v566 = vpop.f32.mrf.mxu0
    %v567 = vadd.f32 %v287, %v566
    %v568 = vpop.f32.mrf.mxu0
    %v569 = vadd.f32 %v289, %v568
    %v570 = vpop.f32.mrf.mxu0
    %v571 = vadd.f32 %v291, %v570
    %572 = vmatprep.mubr.bf16.mxu0 0
    %573 = vmatmul.mubr.bf16.gmra.mxu0 %v503
    %v574 = vpop.f32.mrf.mxu0
    %v575 = vadd.f32 %v295, %v574
    %v576 = vpop.f32.mrf.mxu0
    %v577 = vadd.f32 %v297, %v576
    %v578 = vpop.f32.mrf.mxu0
    %v579 = vadd.f32 %v299, %v578
    %v580 = vpop.f32.mrf.mxu0
    %v581 = vadd.f32 %v301, %v580
    %582 = vmatprep.mubr.bf16.mxu0 0
    %583 = vmatmul.mubr.bf16.gmra.mxu0 %v506
    %v584 = vpop.f32.mrf.mxu0
    %v585 = vadd.f32 %v305, %v584
    %v586 = vpop.f32.mrf.mxu0
    %v587 = vadd.f32 %v307, %v586
    %v588 = vpop.f32.mrf.mxu0
    %v589 = vadd.f32 %v309, %v588
    %v590 = vpop.f32.mrf.mxu0
    %v591 = vadd.f32 %v311, %v590
    %592 = vdwg.mxu0
    %593 = vmatprep.subr.bf16.mxu0 0
    %594 = vmatpush1.bf16.msra.mxu0 0
    %595 = vmatprep.subr.bf16.mxu0 0
    %596 = vmatpush1.bf16.msra.mxu0 0
    %597 = vmatprep.subr.bf16.mxu0 0
    %598 = vmatpush1.bf16.msra.mxu0 0
    %599 = vmatprep.subr.bf16.mxu0 %v518
    %600 = vmatpush1.bf16.msra.mxu0 %v515
    %601 = vmatprep.subr.bf16.mxu0 %v475
    %602 = vmatpush1.bf16.msra.mxu0 %v474
    %603 = vmatprep.subr.bf16.mxu0 %v471
    %604 = vmatpush1.bf16.msra.mxu0 %v470
    %605 = vmatprep.subr.bf16.mxu0 %v467
    %606 = vmatpush1.bf16.msra.mxu0 %v466
    %607 = vmatprep.subr.bf16.mxu0 %v463
    %608 = vmatpush1.bf16.msra.mxu0 %v462
    %609 = vmatprep.subr.bf16.mxu0 0
    %610 = vmatpush2.bf16.msra.mxu0 0
    %611 = vmatprep.subr.bf16.mxu0 0
    %612 = vmatpush2.bf16.msra.mxu0 0
    %613 = vmatprep.subr.bf16.mxu0 0
    %614 = vmatpush2.bf16.msra.mxu0 0
    %615 = vmatprep.subr.bf16.mxu0 0
    %616 = vmatpush2.bf16.msra.mxu0 0
    %617 = vmatprep.subr.bf16.mxu0 0
    %618 = vmatpush2.bf16.msra.mxu0 0
    %619 = vmatprep.subr.bf16.mxu0 0
    %620 = vmatpush2.bf16.msra.mxu0 0
    %621 = vmatprep.subr.bf16.mxu0 0
    %622 = vmatpush2.bf16.msra.mxu0 0
    %623 = vmatprep.subr.bf16.mxu0 0
    %624 = vmatpush2.bf16.msra.mxu0 0
    %625 = vmatprep.mubr.bf16.mxu0 0
    %626 = vmatmul.mubr.bf16.gmra.mxu0 %v497
    %v627 = vpop.f32.mrf.mxu0
    %v628 = vadd.f32 %v348, %v627
    %v629 = vpop.f32.mrf.mxu0
    %v630 = vadd.f32 %v350, %v629
    %v631 = vpop.f32.mrf.mxu0
    %v632 = vadd.f32 %v352, %v631
    %v633 = vpop.f32.mrf.mxu0
    %v634 = vadd.f32 %v354, %v633
    %635 = vmatprep.mubr.bf16.mxu0 0
    %636 = vmatmul.mubr.bf16.gmra.mxu0 %v500
    %v637 = vpop.f32.mrf.mxu0
    %v638 = vadd.f32 %v358, %v637
    %v639 = vpop.f32.mrf.mxu0
    %v640 = vadd.f32 %v360, %v639
    %v641 = vpop.f32.mrf.mxu0
    %v642 = vadd.f32 %v362, %v641
    %v643 = vpop.f32.mrf.mxu0
    %v644 = vadd.f32 %v364, %v643
    %645 = vmatprep.mubr.bf16.mxu0 0
    %646 = vmatmul.mubr.bf16.gmra.mxu0 %v503
    %v647 = vpop.f32.mrf.mxu0
    %v648 = vadd.f32 %v368, %v647
    %v649 = vpop.f32.mrf.mxu0
    %v650 = vadd.f32 %v370, %v649
    %v651 = vpop.f32.mrf.mxu0
    %v652 = vadd.f32 %v372, %v651
    %v653 = vpop.f32.mrf.mxu0
    %v654 = vadd.f32 %v374, %v653
    %655 = vmatprep.mubr.bf16.mxu0 0
    %656 = vmatmul.mubr.bf16.gmra.mxu0 %v506
    %v657 = vpop.f32.mrf.mxu0
    %v658 = vadd.f32 %v378, %v657
    %v659 = vpop.f32.mrf.mxu0
    %v660 = vadd.f32 %v380, %v659
    %v661 = vpop.f32.mrf.mxu0
    %v662 = vadd.f32 %v382, %v661
    %v663 = vpop.f32.mrf.mxu0
    %v664 = vadd.f32 %v384, %v663
    %665 = vdwg.mxu0
    %s666 = scalar_lea.vmem %s0, 80
    %v667 = vld [vmem:[%s666] sm:$0xf]
    %v668 = vld [vmem:[%s666 + $0x4] sm:$0xf]
    %v669 = vld [vmem:[%s666 + $0x8] sm:$0xf]
    %v670 = vld [vmem:[%s666 + $0xc] sm:$0xf]
    %v671 = vld [vmem:[%s666 + $0x10] sm:$0xf]
    %v672 = vld [vmem:[%s666 + $0x14] sm:$0xf]
    %v673 = vld [vmem:[%s666 + $0x18] sm:$0xf]
    %v674 = vld [vmem:[%s666 + $0x1c] sm:$0xf]
    %s675 = scalar_lea.vmem [#allocation3], 288
    %v676 = vld [vmem:[%s675] sm:$0xff]
    %v677 = vld [vmem:[%s675 + $0x8] sm:$0xff]
    %v678 = vld [vmem:[%s675 + $0x10] sm:$0xff]
    %v679 = vld [vmem:[%s675 + $0x18] sm:$0xff]
    %v680 = vld [vmem:[%s675 + $0x20] sm:$0xff]
    %v681 = vld [vmem:[%s675 + $0x28] sm:$0xff]
    %v682 = vld [vmem:[%s675 + $0x30] sm:$0xff]
    %v683 = vld [vmem:[%s675 + $0x38] sm:$0xff]
    %v684 = vld [vmem:[%s675 + $0x40] sm:$0xff]
    %v685 = vld [vmem:[%s675 + $0x48] sm:$0xff]
    %v686 = vld [vmem:[%s675 + $0x50] sm:$0xff]
    %v687 = vld [vmem:[%s675 + $0x58] sm:$0xff]
    %v688 = vld [vmem:[%s675 + $0x60] sm:$0xff]
    %v689 = vld [vmem:[%s675 + $0x68] sm:$0xff]
    %v690 = vld [vmem:[%s675 + $0x70] sm:$0xff]
    %v691 = vld [vmem:[%s675 + $0x78] sm:$0xff]
    %v692 = vld [vmem:[%s675 + $0x80] sm:$0x11]
    %v693 = vld [vmem:[%s675 + $0x88] sm:$0x11]
    %v702 = vunpack.c.l.b16 %v667
    %v703 = vunpack.c.l.b16 %v668
    %v704 = vunpack.c.l.b16 %v669
    %v705 = vunpack.c.l.b16 %v670
    %v706 = vunpack.c.l.b16 %v671
    %v707 = vunpack.c.l.b16 %v672
    %v708 = vunpack.c.l.b16 %v673
    %v709 = vunpack.c.l.b16 %v674
    %v710 = vpack.c.b16 %v703, %v702
    %v711 = vpack.c.b16 %v705, %v704
    %v712 = vpack.c.b16 %v707, %v706
    %v713 = vpack.c.b16 %v709, %v708
    %v732 = vunpack.c.l.b16 %v676
    %v733 = vunpack.c.h.b16 %v676
    %v734 = vunpack.c.l.b16 %v677
    %v735 = vunpack.c.h.b16 %v677
    %v736 = vunpack.c.l.b16 %v678
    %v737 = vunpack.c.h.b16 %v678
    %v738 = vunpack.c.l.b16 %v679
    %v739 = vunpack.c.h.b16 %v679
    %v740 = vunpack.c.l.b16 %v680
    %v741 = vunpack.c.h.b16 %v680
    %v742 = vunpack.c.l.b16 %v681
    %v743 = vunpack.c.h.b16 %v681
    %v744 = vunpack.c.l.b16 %v682
    %v745 = vunpack.c.h.b16 %v682
    %v746 = vunpack.c.l.b16 %v683
    %v747 = vunpack.c.h.b16 %v683
    %v748 = vunpack.c.l.b16 %v684
    %v749 = vunpack.c.h.b16 %v684
    %v750 = vunpack.c.l.b16 %v685
    %v751 = vunpack.c.h.b16 %v685
    %v752 = vunpack.c.l.b16 %v686
    %v753 = vunpack.c.h.b16 %v686
    %v754 = vunpack.c.l.b16 %v687
    %v755 = vunpack.c.h.b16 %v687
    %v756 = vunpack.c.l.b16 %v688
    %v757 = vunpack.c.h.b16 %v688
    %v758 = vunpack.c.l.b16 %v689
    %v759 = vunpack.c.h.b16 %v689
    %v760 = vunpack.c.l.b16 %v690
    %v761 = vunpack.c.h.b16 %v690
    %v762 = vunpack.c.l.b16 %v691
    %v763 = vunpack.c.h.b16 %v691
    %v764 = vunpack.c.l.b16 %v692
    %v765 = vunpack.c.h.b16 %v692
    %v766 = vunpack.c.l.b16 %v693
    %v767 = vunpack.c.h.b16 %v693
    %v768 = vpack.c.b16 %v736, %v732
    %v769 = vpack.c.b16 %v737, %v733
    %v770 = vpack.c.b16 %v738, %v734
    %v771 = vpack.c.b16 %v739, %v735
    %v772 = vpack.c.b16 %v744, %v740
    %v773 = vpack.c.b16 %v745, %v741
    %v774 = vpack.c.b16 %v746, %v742
    %v775 = vpack.c.b16 %v747, %v743
    %v776 = vpack.c.b16 %v752, %v748
    %v777 = vpack.c.b16 %v753, %v749
    %v778 = vpack.c.b16 %v754, %v750
    %v779 = vpack.c.b16 %v755, %v751
    %v780 = vpack.c.b16 %v760, %v756
    %v781 = vpack.c.b16 %v761, %v757
    %v782 = vpack.c.b16 %v762, %v758
    %v783 = vpack.c.b16 %v763, %v759
    %v784 = vpack.c.b16 %v764, %v764
    %v785 = vpack.c.b16 %v765, %v765
    %v786 = vpack.c.b16 %v766, %v766
    %v787 = vpack.c.b16 %v767, %v767
    %v805 = vsel %vm212, %v710, 0
    %v808 = vsel %vm212, %v711, 0
    %v811 = vsel %vm212, %v712, 0
    %v814 = vsel %vm212, %v713, 0
    %v817 = vand.u32 %v784, %v227
    %v820 = vand.u32 %v785, %v227
    %v823 = vand.u32 %v786, %v227
    %v826 = vand.u32 %v787, %v227
    %828 = vmatprep.subr.bf16.mxu0 0
    %829 = vmatpush1.bf16.msra.mxu0 0
    %830 = vmatprep.subr.bf16.mxu0 0
    %831 = vmatpush1.bf16.msra.mxu0 0
    %832 = vmatprep.subr.bf16.mxu0 0
    %833 = vmatpush1.bf16.msra.mxu0 0
    %834 = vmatprep.subr.bf16.mxu0 %v820
    %835 = vmatpush1.bf16.msra.mxu0 %v817
    %836 = vmatprep.subr.bf16.mxu0 %v781
    %837 = vmatpush1.bf16.msra.mxu0 %v780
    %838 = vmatprep.subr.bf16.mxu0 %v777
    %839 = vmatpush1.bf16.msra.mxu0 %v776
    %840 = vmatprep.subr.bf16.mxu0 %v773
    %841 = vmatpush1.bf16.msra.mxu0 %v772
    %842 = vmatprep.subr.bf16.mxu0 %v769
    %843 = vmatpush1.bf16.msra.mxu0 %v768
    %844 = vmatprep.subr.bf16.mxu0 0
    %845 = vmatpush2.bf16.msra.mxu0 0
    %846 = vmatprep.subr.bf16.mxu0 0
    %847 = vmatpush2.bf16.msra.mxu0 0
    %848 = vmatprep.subr.bf16.mxu0 0
    %849 = vmatpush2.bf16.msra.mxu0 0
    %850 = vmatprep.subr.bf16.mxu0 0
    %851 = vmatpush2.bf16.msra.mxu0 0
    %852 = vmatprep.subr.bf16.mxu0 0
    %853 = vmatpush2.bf16.msra.mxu0 0
    %854 = vmatprep.subr.bf16.mxu0 0
    %855 = vmatpush2.bf16.msra.mxu0 0
    %856 = vmatprep.subr.bf16.mxu0 0
    %857 = vmatpush2.bf16.msra.mxu0 0
    %858 = vmatprep.subr.bf16.mxu0 0
    %859 = vmatpush2.bf16.msra.mxu0 0
    %860 = vmatprep.mubr.bf16.mxu0 0
    %861 = vmatmul.mubr.bf16.gmra.mxu0 %v805
    %v862 = vpop.f32.mrf.mxu0
    %v863 = vadd.f32 0.0, %v862
    %v864 = vpop.f32.mrf.mxu0
    %v865 = vadd.f32 0.0, %v864
    %v866 = vpop.f32.mrf.mxu0
    %v867 = vadd.f32 0.0, %v866
    %v868 = vpop.f32.mrf.mxu0
    %v869 = vadd.f32 0.0, %v868
    %870 = vmatprep.mubr.bf16.mxu0 0
    %871 = vmatmul.mubr.bf16.gmra.mxu0 %v808
    %v872 = vpop.f32.mrf.mxu0
    %v873 = vadd.f32 0.0, %v872
    %v874 = vpop.f32.mrf.mxu0
    %v875 = vadd.f32 0.0, %v874
    %v876 = vpop.f32.mrf.mxu0
    %v877 = vadd.f32 0.0, %v876
    %v878 = vpop.f32.mrf.mxu0
    %v879 = vadd.f32 0.0, %v878
    %880 = vmatprep.mubr.bf16.mxu0 0
    %881 = vmatmul.mubr.bf16.gmra.mxu0 %v811
    %v882 = vpop.f32.mrf.mxu0
    %v883 = vadd.f32 0.0, %v882
    %v884 = vpop.f32.mrf.mxu0
    %v885 = vadd.f32 0.0, %v884
    %v886 = vpop.f32.mrf.mxu0
    %v887 = vadd.f32 0.0, %v886
    %v888 = vpop.f32.mrf.mxu0
    %v889 = vadd.f32 0.0, %v888
    %890 = vmatprep.mubr.bf16.mxu0 0
    %891 = vmatmul.mubr.bf16.gmra.mxu0 %v814
    %v892 = vpop.f32.mrf.mxu0
    %v893 = vadd.f32 0.0, %v892
    %v894 = vpop.f32.mrf.mxu0
    %v895 = vadd.f32 0.0, %v894
    %v896 = vpop.f32.mrf.mxu0
    %v897 = vadd.f32 0.0, %v896
    %v898 = vpop.f32.mrf.mxu0
    %v899 = vadd.f32 0.0, %v898
    %900 = vdwg.mxu0
    %901 = vmatprep.subr.bf16.mxu0 0
    %902 = vmatpush1.bf16.msra.mxu0 0
    %903 = vmatprep.subr.bf16.mxu0 0
    %904 = vmatpush1.bf16.msra.mxu0 0
    %905 = vmatprep.subr.bf16.mxu0 0
    %906 = vmatpush1.bf16.msra.mxu0 0
    %907 = vmatprep.subr.bf16.mxu0 %v826
    %908 = vmatpush1.bf16.msra.mxu0 %v823
    %909 = vmatprep.subr.bf16.mxu0 %v783
    %910 = vmatpush1.bf16.msra.mxu0 %v782
    %911 = vmatprep.subr.bf16.mxu0 %v779
    %912 = vmatpush1.bf16.msra.mxu0 %v778
    %913 = vmatprep.subr.bf16.mxu0 %v775
    %914 = vmatpush1.bf16.msra.mxu0 %v774
    %915 = vmatprep.subr.bf16.mxu0 %v771
    %916 = vmatpush1.bf16.msra.mxu0 %v770
    %917 = vmatprep.subr.bf16.mxu0 0
    %918 = vmatpush2.bf16.msra.mxu0 0
    %919 = vmatprep.subr.bf16.mxu0 0
    %920 = vmatpush2.bf16.msra.mxu0 0
    %921 = vmatprep.subr.bf16.mxu0 0
    %922 = vmatpush2.bf16.msra.mxu0 0
    %923 = vmatprep.subr.bf16.mxu0 0
    %924 = vmatpush2.bf16.msra.mxu0 0
    %925 = vmatprep.subr.bf16.mxu0 0
    %926 = vmatpush2.bf16.msra.mxu0 0
    %927 = vmatprep.subr.bf16.mxu0 0
    %928 = vmatpush2.bf16.msra.mxu0 0
    %929 = vmatprep.subr.bf16.mxu0 0
    %930 = vmatpush2.bf16.msra.mxu0 0
    %931 = vmatprep.subr.bf16.mxu0 0
    %932 = vmatpush2.bf16.msra.mxu0 0
    %933 = vmatprep.mubr.bf16.mxu0 0
    %934 = vmatmul.mubr.bf16.gmra.mxu0 %v805
    %v935 = vpop.f32.mrf.mxu0
    %v936 = vadd.f32 0.0, %v935
    %v937 = vpop.f32.mrf.mxu0
    %v938 = vadd.f32 0.0, %v937
    %v939 = vpop.f32.mrf.mxu0
    %v940 = vadd.f32 0.0, %v939
    %v941 = vpop.f32.mrf.mxu0
    %v942 = vadd.f32 0.0, %v941
    %943 = vmatprep.mubr.bf16.mxu0 0
    %944 = vmatmul.mubr.bf16.gmra.mxu0 %v808
    %v945 = vpop.f32.mrf.mxu0
    %v946 = vadd.f32 0.0, %v945
    %v947 = vpop.f32.mrf.mxu0
    %v948 = vadd.f32 0.0, %v947
    %v949 = vpop.f32.mrf.mxu0
    %v950 = vadd.f32 0.0, %v949
    %v951 = vpop.f32.mrf.mxu0
    %v952 = vadd.f32 0.0, %v951
    %953 = vmatprep.mubr.bf16.mxu0 0
    %954 = vmatmul.mubr.bf16.gmra.mxu0 %v811
    %v955 = vpop.f32.mrf.mxu0
    %v956 = vadd.f32 0.0, %v955
    %v957 = vpop.f32.mrf.mxu0
    %v958 = vadd.f32 0.0, %v957
    %v959 = vpop.f32.mrf.mxu0
    %v960 = vadd.f32 0.0, %v959
    %v961 = vpop.f32.mrf.mxu0
    %v962 = vadd.f32 0.0, %v961
    %963 = vmatprep.mubr.bf16.mxu0 0
    %964 = vmatmul.mubr.bf16.gmra.mxu0 %v814
    %v965 = vpop.f32.mrf.mxu0
    %v966 = vadd.f32 0.0, %v965
    %v967 = vpop.f32.mrf.mxu0
    %v968 = vadd.f32 0.0, %v967
    %v969 = vpop.f32.mrf.mxu0
    %v970 = vadd.f32 0.0, %v969
    %v971 = vpop.f32.mrf.mxu0
    %v972 = vadd.f32 0.0, %v971
    %973 = vdwg.mxu0
    %v974 = vadd.f32 %v555, %v863
    %v975 = vadd.f32 %v557, %v865
    %v976 = vadd.f32 %v628, %v936
    %v977 = vadd.f32 %v630, %v938
    %v978 = vadd.f32 %v559, %v867
    %v979 = vadd.f32 %v561, %v869
    %v980 = vadd.f32 %v632, %v940
    %v981 = vadd.f32 %v634, %v942
    %v982 = vadd.f32 %v565, %v873
    %v983 = vadd.f32 %v567, %v875
    %v984 = vadd.f32 %v638, %v946
    %v985 = vadd.f32 %v640, %v948
    %v986 = vadd.f32 %v569, %v877
    %v987 = vadd.f32 %v571, %v879
    %v988 = vadd.f32 %v642, %v950
    %v989 = vadd.f32 %v644, %v952
    %v990 = vadd.f32 %v575, %v883
    %v991 = vadd.f32 %v577, %v885
    %v992 = vadd.f32 %v648, %v956
    %v993 = vadd.f32 %v650, %v958
    %v994 = vadd.f32 %v579, %v887
    %v995 = vadd.f32 %v581, %v889
    %v996 = vadd.f32 %v652, %v960
    %v997 = vadd.f32 %v654, %v962
    %v998 = vadd.f32 %v585, %v893
    %v999 = vadd.f32 %v587, %v895
    %v1000 = vadd.f32 %v658, %v966
    %v1001 = vadd.f32 %v660, %v968
    %v1002 = vadd.f32 %v589, %v897
    %v1003 = vadd.f32 %v591, %v899
    %v1004 = vadd.f32 %v662, %v970
    %v1005 = vadd.f32 %v664, %v972
    %v1007 = vlaneseq
    %v1008 = vshrl.u32 %v1007, 7
    %v1009 = vsub.s32 0, %v1008
    %v1010 = vrot.slane %v47, %v1009
    %v1011 = vlaneseq
    %v1012 = vshrl.u32 %v1011, 7
    %v1013 = vsub.s32 1, %v1012
    %v1014 = vrot.slane %v47, %v1013
    %v1015 = vlaneseq
    %v1016 = vshrl.u32 %v1015, 7
    %v1017 = vsub.s32 2, %v1016
    %v1018 = vrot.slane %v47, %v1017
    %v1019 = vlaneseq
    %v1020 = vshrl.u32 %v1019, 7
    %v1021 = vsub.s32 3, %v1020
    %v1022 = vrot.slane %v47, %v1021
    %v1027 = vadd.f32 %v974, %v1010
    %v1028 = vadd.f32 %v975, %v1014
    %v1029 = vadd.f32 %v976, %v1018
    %v1030 = vadd.f32 %v977, %v1022
    %v1031 = vadd.f32 %v978, %v1010
    %v1032 = vadd.f32 %v979, %v1014
    %v1033 = vadd.f32 %v980, %v1018
    %v1034 = vadd.f32 %v981, %v1022
    %v1035 = vadd.f32 %v982, %v1010
    %v1036 = vadd.f32 %v983, %v1014
    %v1037 = vadd.f32 %v984, %v1018
    %v1038 = vadd.f32 %v985, %v1022
    %v1039 = vadd.f32 %v986, %v1010
    %v1040 = vadd.f32 %v987, %v1014
    %v1041 = vadd.f32 %v988, %v1018
    %v1042 = vadd.f32 %v989, %v1022
    %v1043 = vadd.f32 %v990, %v1010
    %v1044 = vadd.f32 %v991, %v1014
    %v1045 = vadd.f32 %v992, %v1018
    %v1046 = vadd.f32 %v993, %v1022
    %v1047 = vadd.f32 %v994, %v1010
    %v1048 = vadd.f32 %v995, %v1014
    %v1049 = vadd.f32 %v996, %v1018
    %v1050 = vadd.f32 %v997, %v1022
    %v1051 = vadd.f32 %v998, %v1010
    %v1052 = vadd.f32 %v999, %v1014
    %v1053 = vadd.f32 %v1000, %v1018
    %v1054 = vadd.f32 %v1001, %v1022
    %v1055 = vadd.f32 %v1002, %v1010
    %v1056 = vadd.f32 %v1003, %v1014
    %v1057 = vadd.f32 %v1004, %v1018
    %v1058 = vadd.f32 %v1005, %v1022
    %v1059 = vmax.f32 %v1027, 0.0
    %v1060 = vmax.f32 %v1028, 0.0
    %v1061 = vmax.f32 %v1029, 0.0
    %v1062 = vmax.f32 %v1030, 0.0
    %v1063 = vmax.f32 %v1031, 0.0
    %v1064 = vmax.f32 %v1032, 0.0
    %v1065 = vmax.f32 %v1033, 0.0
    %v1066 = vmax.f32 %v1034, 0.0
    %v1067 = vmax.f32 %v1035, 0.0
    %v1068 = vmax.f32 %v1036, 0.0
    %v1069 = vmax.f32 %v1037, 0.0
    %v1070 = vmax.f32 %v1038, 0.0
    %v1071 = vmax.f32 %v1039, 0.0
    %v1072 = vmax.f32 %v1040, 0.0
    %v1073 = vmax.f32 %v1041, 0.0
    %v1074 = vmax.f32 %v1042, 0.0
    %v1075 = vmax.f32 %v1043, 0.0
    %v1076 = vmax.f32 %v1044, 0.0
    %v1077 = vmax.f32 %v1045, 0.0
    %v1078 = vmax.f32 %v1046, 0.0
    %v1079 = vmax.f32 %v1047, 0.0
    %v1080 = vmax.f32 %v1048, 0.0
    %v1081 = vmax.f32 %v1049, 0.0
    %v1082 = vmax.f32 %v1050, 0.0
    %v1083 = vmax.f32 %v1051, 0.0
    %v1084 = vmax.f32 %v1052, 0.0
    %v1085 = vmax.f32 %v1053, 0.0
    %v1086 = vmax.f32 %v1054, 0.0
    %v1087 = vmax.f32 %v1055, 0.0
    %v1088 = vmax.f32 %v1056, 0.0
    %v1089 = vmax.f32 %v1057, 0.0
    %v1090 = vmax.f32 %v1058, 0.0
    %s1091 = scalar_lea.vmem %s0, 120
    %v1092 = vld [vmem:[%s1091] sm:$0xf]
    %v1093 = vld [vmem:[%s1091 + $0x4] sm:$0xf]
    %v1094 = vld [vmem:[%s1091 + $0x8] sm:$0xf]
    %v1095 = vld [vmem:[%s1091 + $0xc] sm:$0xf]
    %v1096 = vld [vmem:[%s1091 + $0x10] sm:$0xf]
    %v1097 = vld [vmem:[%s1091 + $0x14] sm:$0xf]
    %v1098 = vld [vmem:[%s1091 + $0x18] sm:$0xf]
    %v1099 = vld [vmem:[%s1091 + $0x1c] sm:$0xf]
    %v1108 = vunpack.c.l.b16 %v1092
    %v1109 = vunpack.c.l.b16 %v1093
    %v1110 = vunpack.c.l.b16 %v1094
    %v1111 = vunpack.c.l.b16 %v1095
    %v1112 = vunpack.c.l.b16 %v1096
    %v1113 = vunpack.c.l.b16 %v1097
    %v1114 = vunpack.c.l.b16 %v1098
    %v1115 = vunpack.c.l.b16 %v1099
    %v1116 = vpack.c.b16 %v1109, %v1108
    %v1117 = vpack.c.b16 %v1111, %v1110
    %v1118 = vpack.c.b16 %v1113, %v1112
    %v1119 = vpack.c.b16 %v1115, %v1114
    %v1121 = vsel %vm212, %v1116, 0
    %v1124 = vsel %vm212, %v1117, 0
    %v1127 = vsel %vm212, %v1118, 0
    %v1130 = vsel %vm212, %v1119, 0
    %1132 = vmatprep.subr.bf16.mxu0 0
    %1133 = vmatpush1.bf16.msra.mxu0 0
    %1134 = vmatprep.subr.bf16.mxu0 0
    %1135 = vmatpush1.bf16.msra.mxu0 0
    %1136 = vmatprep.subr.bf16.mxu0 0
    %1137 = vmatpush1.bf16.msra.mxu0 0
    %1138 = vmatprep.subr.bf16.mxu0 %v232
    %1139 = vmatpush1.bf16.msra.mxu0 %v229
    %1140 = vmatprep.subr.bf16.mxu0 %v189
    %1141 = vmatpush1.bf16.msra.mxu0 %v188
    %1142 = vmatprep.subr.bf16.mxu0 %v185
    %1143 = vmatpush1.bf16.msra.mxu0 %v184
    %1144 = vmatprep.subr.bf16.mxu0 %v181
    %1145 = vmatpush1.bf16.msra.mxu0 %v180
    %1146 = vmatprep.subr.bf16.mxu0 %v177
    %1147 = vmatpush1.bf16.msra.mxu0 %v176
    %1148 = vmatprep.subr.bf16.mxu0 0
    %1149 = vmatpush2.bf16.msra.mxu0 0
    %1150 = vmatprep.subr.bf16.mxu0 0
    %1151 = vmatpush2.bf16.msra.mxu0 0
    %1152 = vmatprep.subr.bf16.mxu0 0
    %1153 = vmatpush2.bf16.msra.mxu0 0
    %1154 = vmatprep.subr.bf16.mxu0 0
    %1155 = vmatpush2.bf16.msra.mxu0 0
    %1156 = vmatprep.subr.bf16.mxu0 0
    %1157 = vmatpush2.bf16.msra.mxu0 0
    %1158 = vmatprep.subr.bf16.mxu0 0
    %1159 = vmatpush2.bf16.msra.mxu0 0
    %1160 = vmatprep.subr.bf16.mxu0 0
    %1161 = vmatpush2.bf16.msra.mxu0 0
    %1162 = vmatprep.subr.bf16.mxu0 0
    %1163 = vmatpush2.bf16.msra.mxu0 0
    %1164 = vmatprep.mubr.bf16.mxu0 0
    %1165 = vmatmul.mubr.bf16.gmra.mxu0 %v1121
    %v1166 = vpop.f32.mrf.mxu0
    %v1167 = vadd.f32 0.0, %v1166
    %v1168 = vpop.f32.mrf.mxu0
    %v1169 = vadd.f32 0.0, %v1168
    %v1170 = vpop.f32.mrf.mxu0
    %v1171 = vadd.f32 0.0, %v1170
    %v1172 = vpop.f32.mrf.mxu0
    %v1173 = vadd.f32 0.0, %v1172
    %1174 = vmatprep.mubr.bf16.mxu0 0
    %1175 = vmatmul.mubr.bf16.gmra.mxu0 %v1124
    %v1176 = vpop.f32.mrf.mxu0
    %v1177 = vadd.f32 0.0, %v1176
    %v1178 = vpop.f32.mrf.mxu0
    %v1179 = vadd.f32 0.0, %v1178
    %v1180 = vpop.f32.mrf.mxu0
    %v1181 = vadd.f32 0.0, %v1180
    %v1182 = vpop.f32.mrf.mxu0
    %v1183 = vadd.f32 0.0, %v1182
    %1184 = vmatprep.mubr.bf16.mxu0 0
    %1185 = vmatmul.mubr.bf16.gmra.mxu0 %v1127
    %v1186 = vpop.f32.mrf.mxu0
    %v1187 = vadd.f32 0.0, %v1186
    %v1188 = vpop.f32.mrf.mxu0
    %v1189 = vadd.f32 0.0, %v1188
    %v1190 = vpop.f32.mrf.mxu0
    %v1191 = vadd.f32 0.0, %v1190
    %v1192 = vpop.f32.mrf.mxu0
    %v1193 = vadd.f32 0.0, %v1192
    %1194 = vmatprep.mubr.bf16.mxu0 0
    %1195 = vmatmul.mubr.bf16.gmra.mxu0 %v1130
    %v1196 = vpop.f32.mrf.mxu0
    %v1197 = vadd.f32 0.0, %v1196
    %v1198 = vpop.f32.mrf.mxu0
    %v1199 = vadd.f32 0.0, %v1198
    %v1200 = vpop.f32.mrf.mxu0
    %v1201 = vadd.f32 0.0, %v1200
    %v1202 = vpop.f32.mrf.mxu0
    %v1203 = vadd.f32 0.0, %v1202
    %1204 = vdwg.mxu0
    %1205 = vmatprep.subr.bf16.mxu0 0
    %1206 = vmatpush1.bf16.msra.mxu0 0
    %1207 = vmatprep.subr.bf16.mxu0 0
    %1208 = vmatpush1.bf16.msra.mxu0 0
    %1209 = vmatprep.subr.bf16.mxu0 0
    %1210 = vmatpush1.bf16.msra.mxu0 0
    %1211 = vmatprep.subr.bf16.mxu0 %v238
    %1212 = vmatpush1.bf16.msra.mxu0 %v235
    %1213 = vmatprep.subr.bf16.mxu0 %v191
    %1214 = vmatpush1.bf16.msra.mxu0 %v190
    %1215 = vmatprep.subr.bf16.mxu0 %v187
    %1216 = vmatpush1.bf16.msra.mxu0 %v186
    %1217 = vmatprep.subr.bf16.mxu0 %v183
    %1218 = vmatpush1.bf16.msra.mxu0 %v182
    %1219 = vmatprep.subr.bf16.mxu0 %v179
    %1220 = vmatpush1.bf16.msra.mxu0 %v178
    %1221 = vmatprep.subr.bf16.mxu0 0
    %1222 = vmatpush2.bf16.msra.mxu0 0
    %1223 = vmatprep.subr.bf16.mxu0 0
    %1224 = vmatpush2.bf16.msra.mxu0 0
    %1225 = vmatprep.subr.bf16.mxu0 0
    %1226 = vmatpush2.bf16.msra.mxu0 0
    %1227 = vmatprep.subr.bf16.mxu0 0
    %1228 = vmatpush2.bf16.msra.mxu0 0
    %1229 = vmatprep.subr.bf16.mxu0 0
    %1230 = vmatpush2.bf16.msra.mxu0 0
    %1231 = vmatprep.subr.bf16.mxu0 0
    %1232 = vmatpush2.bf16.msra.mxu0 0
    %1233 = vmatprep.subr.bf16.mxu0 0
    %1234 = vmatpush2.bf16.msra.mxu0 0
    %1235 = vmatprep.subr.bf16.mxu0 0
    %1236 = vmatpush2.bf16.msra.mxu0 0
    %1237 = vmatprep.mubr.bf16.mxu0 0
    %1238 = vmatmul.mubr.bf16.gmra.mxu0 %v1121
    %v1239 = vpop.f32.mrf.mxu0
    %v1240 = vadd.f32 0.0, %v1239
    %v1241 = vpop.f32.mrf.mxu0
    %v1242 = vadd.f32 0.0, %v1241
    %v1243 = vpop.f32.mrf.mxu0
    %v1244 = vadd.f32 0.0, %v1243
    %v1245 = vpop.f32.mrf.mxu0
    %v1246 = vadd.f32 0.0, %v1245
    %1247 = vmatprep.mubr.bf16.mxu0 0
    %1248 = vmatmul.mubr.bf16.gmra.mxu0 %v1124
    %v1249 = vpop.f32.mrf.mxu0
    %v1250 = vadd.f32 0.0, %v1249
    %v1251 = vpop.f32.mrf.mxu0
    %v1252 = vadd.f32 0.0, %v1251
    %v1253 = vpop.f32.mrf.mxu0
    %v1254 = vadd.f32 0.0, %v1253
    %v1255 = vpop.f32.mrf.mxu0
    %v1256 = vadd.f32 0.0, %v1255
    %1257 = vmatprep.mubr.bf16.mxu0 0
    %1258 = vmatmul.mubr.bf16.gmra.mxu0 %v1127
    %v1259 = vpop.f32.mrf.mxu0
    %v1260 = vadd.f32 0.0, %v1259
    %v1261 = vpop.f32.mrf.mxu0
    %v1262 = vadd.f32 0.0, %v1261
    %v1263 = vpop.f32.mrf.mxu0
    %v1264 = vadd.f32 0.0, %v1263
    %v1265 = vpop.f32.mrf.mxu0
    %v1266 = vadd.f32 0.0, %v1265
    %1267 = vmatprep.mubr.bf16.mxu0 0
    %1268 = vmatmul.mubr.bf16.gmra.mxu0 %v1130
    %v1269 = vpop.f32.mrf.mxu0
    %v1270 = vadd.f32 0.0, %v1269
    %v1271 = vpop.f32.mrf.mxu0
    %v1272 = vadd.f32 0.0, %v1271
    %v1273 = vpop.f32.mrf.mxu0
    %v1274 = vadd.f32 0.0, %v1273
    %v1275 = vpop.f32.mrf.mxu0
    %v1276 = vadd.f32 0.0, %v1275
    %1277 = vdwg.mxu0
    %1278 = vmatprep.subr.bf16.mxu0 0
    %1279 = vmatpush1.bf16.msra.mxu0 0
    %1280 = vmatprep.subr.bf16.mxu0 0
    %1281 = vmatpush1.bf16.msra.mxu0 0
    %1282 = vmatprep.subr.bf16.mxu0 0
    %1283 = vmatpush1.bf16.msra.mxu0 0
    %1284 = vmatprep.subr.bf16.mxu0 %v512
    %1285 = vmatpush1.bf16.msra.mxu0 %v509
    %1286 = vmatprep.subr.bf16.mxu0 %v473
    %1287 = vmatpush1.bf16.msra.mxu0 %v472
    %1288 = vmatprep.subr.bf16.mxu0 %v469
    %1289 = vmatpush1.bf16.msra.mxu0 %v468
    %1290 = vmatprep.subr.bf16.mxu0 %v465
    %1291 = vmatpush1.bf16.msra.mxu0 %v464
    %1292 = vmatprep.subr.bf16.mxu0 %v461
    %1293 = vmatpush1.bf16.msra.mxu0 %v460
    %1294 = vmatprep.subr.bf16.mxu0 0
    %1295 = vmatpush2.bf16.msra.mxu0 0
    %1296 = vmatprep.subr.bf16.mxu0 0
    %1297 = vmatpush2.bf16.msra.mxu0 0
    %1298 = vmatprep.subr.bf16.mxu0 0
    %1299 = vmatpush2.bf16.msra.mxu0 0
    %1300 = vmatprep.subr.bf16.mxu0 0
    %1301 = vmatpush2.bf16.msra.mxu0 0
    %1302 = vmatprep.subr.bf16.mxu0 0
    %1303 = vmatpush2.bf16.msra.mxu0 0
    %1304 = vmatprep.subr.bf16.mxu0 0
    %1305 = vmatpush2.bf16.msra.mxu0 0
    %1306 = vmatprep.subr.bf16.mxu0 0
    %1307 = vmatpush2.bf16.msra.mxu0 0
    %1308 = vmatprep.subr.bf16.mxu0 0
    %1309 = vmatpush2.bf16.msra.mxu0 0
    %1310 = vmatprep.mubr.bf16.mxu0 0
    %1311 = vmatmul.mubr.bf16.gmra.mxu0 %v805
    %v1312 = vpop.f32.mrf.mxu0
    %v1313 = vadd.f32 %v1167, %v1312
    %v1314 = vpop.f32.mrf.mxu0
    %v1315 = vadd.f32 %v1169, %v1314
    %v1316 = vpop.f32.mrf.mxu0
    %v1317 = vadd.f32 %v1171, %v1316
    %v1318 = vpop.f32.mrf.mxu0
    %v1319 = vadd.f32 %v1173, %v1318
    %1320 = vmatprep.mubr.bf16.mxu0 0
    %1321 = vmatmul.mubr.bf16.gmra.mxu0 %v808
    %v1322 = vpop.f32.mrf.mxu0
    %v1323 = vadd.f32 %v1177, %v1322
    %v1324 = vpop.f32.mrf.mxu0
    %v1325 = vadd.f32 %v1179, %v1324
    %v1326 = vpop.f32.mrf.mxu0
    %v1327 = vadd.f32 %v1181, %v1326
    %v1328 = vpop.f32.mrf.mxu0
    %v1329 = vadd.f32 %v1183, %v1328
    %1330 = vmatprep.mubr.bf16.mxu0 0
    %1331 = vmatmul.mubr.bf16.gmra.mxu0 %v811
    %v1332 = vpop.f32.mrf.mxu0
    %v1333 = vadd.f32 %v1187, %v1332
    %v1334 = vpop.f32.mrf.mxu0
    %v1335 = vadd.f32 %v1189, %v1334
    %v1336 = vpop.f32.mrf.mxu0
    %v1337 = vadd.f32 %v1191, %v1336
    %v1338 = vpop.f32.mrf.mxu0
    %v1339 = vadd.f32 %v1193, %v1338
    %1340 = vmatprep.mubr.bf16.mxu0 0
    %1341 = vmatmul.mubr.bf16.gmra.mxu0 %v814
    %v1342 = vpop.f32.mrf.mxu0
    %v1343 = vadd.f32 %v1197, %v1342
    %v1344 = vpop.f32.mrf.mxu0
    %v1345 = vadd.f32 %v1199, %v1344
    %v1346 = vpop.f32.mrf.mxu0
    %v1347 = vadd.f32 %v1201, %v1346
    %v1348 = vpop.f32.mrf.mxu0
    %v1349 = vadd.f32 %v1203, %v1348
    %1350 = vdwg.mxu0
    %1351 = vmatprep.subr.bf16.mxu0 0
    %1352 = vmatpush1.bf16.msra.mxu0 0
    %1353 = vmatprep.subr.bf16.mxu0 0
    %1354 = vmatpush1.bf16.msra.mxu0 0
    %1355 = vmatprep.subr.bf16.mxu0 0
    %1356 = vmatpush1.bf16.msra.mxu0 0
    %1357 = vmatprep.subr.bf16.mxu0 %v518
    %1358 = vmatpush1.bf16.msra.mxu0 %v515
    %1359 = vmatprep.subr.bf16.mxu0 %v475
    %1360 = vmatpush1.bf16.msra.mxu0 %v474
    %1361 = vmatprep.subr.bf16.mxu0 %v471
    %1362 = vmatpush1.bf16.msra.mxu0 %v470
    %1363 = vmatprep.subr.bf16.mxu0 %v467
    %1364 = vmatpush1.bf16.msra.mxu0 %v466
    %1365 = vmatprep.subr.bf16.mxu0 %v463
    %1366 = vmatpush1.bf16.msra.mxu0 %v462
    %1367 = vmatprep.subr.bf16.mxu0 0
    %1368 = vmatpush2.bf16.msra.mxu0 0
    %1369 = vmatprep.subr.bf16.mxu0 0
    %1370 = vmatpush2.bf16.msra.mxu0 0
    %1371 = vmatprep.subr.bf16.mxu0 0
    %1372 = vmatpush2.bf16.msra.mxu0 0
    %1373 = vmatprep.subr.bf16.mxu0 0
    %1374 = vmatpush2.bf16.msra.mxu0 0
    %1375 = vmatprep.subr.bf16.mxu0 0
    %1376 = vmatpush2.bf16.msra.mxu0 0
    %1377 = vmatprep.subr.bf16.mxu0 0
    %1378 = vmatpush2.bf16.msra.mxu0 0
    %1379 = vmatprep.subr.bf16.mxu0 0
    %1380 = vmatpush2.bf16.msra.mxu0 0
    %1381 = vmatprep.subr.bf16.mxu0 0
    %1382 = vmatpush2.bf16.msra.mxu0 0
    %1383 = vmatprep.mubr.bf16.mxu0 0
    %1384 = vmatmul.mubr.bf16.gmra.mxu0 %v805
    %v1385 = vpop.f32.mrf.mxu0
    %v1386 = vadd.f32 %v1240, %v1385
    %v1387 = vpop.f32.mrf.mxu0
    %v1388 = vadd.f32 %v1242, %v1387
    %v1389 = vpop.f32.mrf.mxu0
    %v1390 = vadd.f32 %v1244, %v1389
    %v1391 = vpop.f32.mrf.mxu0
    %v1392 = vadd.f32 %v1246, %v1391
    %1393 = vmatprep.mubr.bf16.mxu0 0
    %1394 = vmatmul.mubr.bf16.gmra.mxu0 %v808
    %v1395 = vpop.f32.mrf.mxu0
    %v1396 = vadd.f32 %v1250, %v1395
    %v1397 = vpop.f32.mrf.mxu0
    %v1398 = vadd.f32 %v1252, %v1397
    %v1399 = vpop.f32.mrf.mxu0
    %v1400 = vadd.f32 %v1254, %v1399
    %v1401 = vpop.f32.mrf.mxu0
    %v1402 = vadd.f32 %v1256, %v1401
    %1403 = vmatprep.mubr.bf16.mxu0 0
    %1404 = vmatmul.mubr.bf16.gmra.mxu0 %v811
    %v1405 = vpop.f32.mrf.mxu0
    %v1406 = vadd.f32 %v1260, %v1405
    %v1407 = vpop.f32.mrf.mxu0
    %v1408 = vadd.f32 %v1262, %v1407
    %v1409 = vpop.f32.mrf.mxu0
    %v1410 = vadd.f32 %v1264, %v1409
    %v1411 = vpop.f32.mrf.mxu0
    %v1412 = vadd.f32 %v1266, %v1411
    %1413 = vmatprep.mubr.bf16.mxu0 0
    %1414 = vmatmul.mubr.bf16.gmra.mxu0 %v814
    %v1415 = vpop.f32.mrf.mxu0
    %v1416 = vadd.f32 %v1270, %v1415
    %v1417 = vpop.f32.mrf.mxu0
    %v1418 = vadd.f32 %v1272, %v1417
    %v1419 = vpop.f32.mrf.mxu0
    %v1420 = vadd.f32 %v1274, %v1419
    %v1421 = vpop.f32.mrf.mxu0
    %v1422 = vadd.f32 %v1276, %v1421
    %1423 = vdwg.mxu0
    %s1424 = scalar_lea.vmem %s0, 160
    %v1425 = vld [vmem:[%s1424] sm:$0xf]
    %v1426 = vld [vmem:[%s1424 + $0x4] sm:$0xf]
    %v1427 = vld [vmem:[%s1424 + $0x8] sm:$0xf]
    %v1428 = vld [vmem:[%s1424 + $0xc] sm:$0xf]
    %v1429 = vld [vmem:[%s1424 + $0x10] sm:$0xf]
    %v1430 = vld [vmem:[%s1424 + $0x14] sm:$0xf]
    %v1431 = vld [vmem:[%s1424 + $0x18] sm:$0xf]
    %v1432 = vld [vmem:[%s1424 + $0x1c] sm:$0xf]
    %v1441 = vunpack.c.l.b16 %v1425
    %v1442 = vunpack.c.l.b16 %v1426
    %v1443 = vunpack.c.l.b16 %v1427
    %v1444 = vunpack.c.l.b16 %v1428
    %v1445 = vunpack.c.l.b16 %v1429
    %v1446 = vunpack.c.l.b16 %v1430
    %v1447 = vunpack.c.l.b16 %v1431
    %v1448 = vunpack.c.l.b16 %v1432
    %v1449 = vpack.c.b16 %v1442, %v1441
    %v1450 = vpack.c.b16 %v1444, %v1443
    %v1451 = vpack.c.b16 %v1446, %v1445
    %v1452 = vpack.c.b16 %v1448, %v1447
    %v1454 = vsel %vm212, %v1449, 0
    %v1457 = vsel %vm212, %v1450, 0
    %v1460 = vsel %vm212, %v1451, 0
    %v1463 = vsel %vm212, %v1452, 0
    %1465 = vmatprep.subr.bf16.mxu0 0
    %1466 = vmatpush1.bf16.msra.mxu0 0
    %1467 = vmatprep.subr.bf16.mxu0 0
    %1468 = vmatpush1.bf16.msra.mxu0 0
    %1469 = vmatprep.subr.bf16.mxu0 0
    %1470 = vmatpush1.bf16.msra.mxu0 0
    %1471 = vmatprep.subr.bf16.mxu0 %v820
    %1472 = vmatpush1.bf16.msra.mxu0 %v817
    %1473 = vmatprep.subr.bf16.mxu0 %v781
    %1474 = vmatpush1.bf16.msra.mxu0 %v780
    %1475 = vmatprep.subr.bf16.mxu0 %v777
    %1476 = vmatpush1.bf16.msra.mxu0 %v776
    %1477 = vmatprep.subr.bf16.mxu0 %v773
    %1478 = vmatpush1.bf16.msra.mxu0 %v772
    %1479 = vmatprep.subr.bf16.mxu0 %v769
    %1480 = vmatpush1.bf16.msra.mxu0 %v768
    %1481 = vmatprep.subr.bf16.mxu0 0
    %1482 = vmatpush2.bf16.msra.mxu0 0
    %1483 = vmatprep.subr.bf16.mxu0 0
    %1484 = vmatpush2.bf16.msra.mxu0 0
    %1485 = vmatprep.subr.bf16.mxu0 0
    %1486 = vmatpush2.bf16.msra.mxu0 0
    %1487 = vmatprep.subr.bf16.mxu0 0
    %1488 = vmatpush2.bf16.msra.mxu0 0
    %1489 = vmatprep.subr.bf16.mxu0 0
    %1490 = vmatpush2.bf16.msra.mxu0 0
    %1491 = vmatprep.subr.bf16.mxu0 0
    %1492 = vmatpush2.bf16.msra.mxu0 0
    %1493 = vmatprep.subr.bf16.mxu0 0
    %1494 = vmatpush2.bf16.msra.mxu0 0
    %1495 = vmatprep.subr.bf16.mxu0 0
    %1496 = vmatpush2.bf16.msra.mxu0 0
    %1497 = vmatprep.mubr.bf16.mxu0 0
    %1498 = vmatmul.mubr.bf16.gmra.mxu0 %v1454
    %v1499 = vpop.f32.mrf.mxu0
    %v1500 = vadd.f32 0.0, %v1499
    %v1501 = vpop.f32.mrf.mxu0
    %v1502 = vadd.f32 0.0, %v1501
    %v1503 = vpop.f32.mrf.mxu0
    %v1504 = vadd.f32 0.0, %v1503
    %v1505 = vpop.f32.mrf.mxu0
    %v1506 = vadd.f32 0.0, %v1505
    %1507 = vmatprep.mubr.bf16.mxu0 0
    %1508 = vmatmul.mubr.bf16.gmra.mxu0 %v1457
    %v1509 = vpop.f32.mrf.mxu0
    %v1510 = vadd.f32 0.0, %v1509
    %v1511 = vpop.f32.mrf.mxu0
    %v1512 = vadd.f32 0.0, %v1511
    %v1513 = vpop.f32.mrf.mxu0
    %v1514 = vadd.f32 0.0, %v1513
    %v1515 = vpop.f32.mrf.mxu0
    %v1516 = vadd.f32 0.0, %v1515
    %1517 = vmatprep.mubr.bf16.mxu0 0
    %1518 = vmatmul.mubr.bf16.gmra.mxu0 %v1460
    %v1519 = vpop.f32.mrf.mxu0
    %v1520 = vadd.f32 0.0, %v1519
    %v1521 = vpop.f32.mrf.mxu0
    %v1522 = vadd.f32 0.0, %v1521
    %v1523 = vpop.f32.mrf.mxu0
    %v1524 = vadd.f32 0.0, %v1523
    %v1525 = vpop.f32.mrf.mxu0
    %v1526 = vadd.f32 0.0, %v1525
    %1527 = vmatprep.mubr.bf16.mxu0 0
    %1528 = vmatmul.mubr.bf16.gmra.mxu0 %v1463
    %v1529 = vpop.f32.mrf.mxu0
    %v1530 = vadd.f32 0.0, %v1529
    %v1531 = vpop.f32.mrf.mxu0
    %v1532 = vadd.f32 0.0, %v1531
    %v1533 = vpop.f32.mrf.mxu0
    %v1534 = vadd.f32 0.0, %v1533
    %v1535 = vpop.f32.mrf.mxu0
    %v1536 = vadd.f32 0.0, %v1535
    %1537 = vdwg.mxu0
    %1538 = vmatprep.subr.bf16.mxu0 0
    %1539 = vmatpush1.bf16.msra.mxu0 0
    %1540 = vmatprep.subr.bf16.mxu0 0
    %1541 = vmatpush1.bf16.msra.mxu0 0
    %1542 = vmatprep.subr.bf16.mxu0 0
    %1543 = vmatpush1.bf16.msra.mxu0 0
    %1544 = vmatprep.subr.bf16.mxu0 %v826
    %1545 = vmatpush1.bf16.msra.mxu0 %v823
    %1546 = vmatprep.subr.bf16.mxu0 %v783
    %1547 = vmatpush1.bf16.msra.mxu0 %v782
    %1548 = vmatprep.subr.bf16.mxu0 %v779
    %1549 = vmatpush1.bf16.msra.mxu0 %v778
    %1550 = vmatprep.subr.bf16.mxu0 %v775
    %1551 = vmatpush1.bf16.msra.mxu0 %v774
    %1552 = vmatprep.subr.bf16.mxu0 %v771
    %1553 = vmatpush1.bf16.msra.mxu0 %v770
    %1554 = vmatprep.subr.bf16.mxu0 0
    %1555 = vmatpush2.bf16.msra.mxu0 0
    %1556 = vmatprep.subr.bf16.mxu0 0
    %1557 = vmatpush2.bf16.msra.mxu0 0
    %1558 = vmatprep.subr.bf16.mxu0 0
    %1559 = vmatpush2.bf16.msra.mxu0 0
    %1560 = vmatprep.subr.bf16.mxu0 0
    %1561 = vmatpush2.bf16.msra.mxu0 0
    %1562 = vmatprep.subr.bf16.mxu0 0
    %1563 = vmatpush2.bf16.msra.mxu0 0
    %1564 = vmatprep.subr.bf16.mxu0 0
    %1565 = vmatpush2.bf16.msra.mxu0 0
    %1566 = vmatprep.subr.bf16.mxu0 0
    %1567 = vmatpush2.bf16.msra.mxu0 0
    %1568 = vmatprep.subr.bf16.mxu0 0
    %1569 = vmatpush2.bf16.msra.mxu0 0
    %1570 = vmatprep.mubr.bf16.mxu0 0
    %1571 = vmatmul.mubr.bf16.gmra.mxu0 %v1454
    %v1572 = vpop.f32.mrf.mxu0
    %v1573 = vadd.f32 0.0, %v1572
    %v1574 = vpop.f32.mrf.mxu0
    %v1575 = vadd.f32 0.0, %v1574
    %v1576 = vpop.f32.mrf.mxu0
    %v1577 = vadd.f32 0.0, %v1576
    %v1578 = vpop.f32.mrf.mxu0
    %v1579 = vadd.f32 0.0, %v1578
    %1580 = vmatprep.mubr.bf16.mxu0 0
    %1581 = vmatmul.mubr.bf16.gmra.mxu0 %v1457
    %v1582 = vpop.f32.mrf.mxu0
    %v1583 = vadd.f32 0.0, %v1582
    %v1584 = vpop.f32.mrf.mxu0
    %v1585 = vadd.f32 0.0, %v1584
    %v1586 = vpop.f32.mrf.mxu0
    %v1587 = vadd.f32 0.0, %v1586
    %v1588 = vpop.f32.mrf.mxu0
    %v1589 = vadd.f32 0.0, %v1588
    %1590 = vmatprep.mubr.bf16.mxu0 0
    %1591 = vmatmul.mubr.bf16.gmra.mxu0 %v1460
    %v1592 = vpop.f32.mrf.mxu0
    %v1593 = vadd.f32 0.0, %v1592
    %v1594 = vpop.f32.mrf.mxu0
    %v1595 = vadd.f32 0.0, %v1594
    %v1596 = vpop.f32.mrf.mxu0
    %v1597 = vadd.f32 0.0, %v1596
    %v1598 = vpop.f32.mrf.mxu0
    %v1599 = vadd.f32 0.0, %v1598
    %1600 = vmatprep.mubr.bf16.mxu0 0
    %1601 = vmatmul.mubr.bf16.gmra.mxu0 %v1463
    %v1602 = vpop.f32.mrf.mxu0
    %v1603 = vadd.f32 0.0, %v1602
    %v1604 = vpop.f32.mrf.mxu0
    %v1605 = vadd.f32 0.0, %v1604
    %v1606 = vpop.f32.mrf.mxu0
    %v1607 = vadd.f32 0.0, %v1606
    %v1608 = vpop.f32.mrf.mxu0
    %v1609 = vadd.f32 0.0, %v1608
    %1610 = vdwg.mxu0
    %v1611 = vadd.f32 %v1313, %v1500
    %v1612 = vadd.f32 %v1315, %v1502
    %v1613 = vadd.f32 %v1386, %v1573
    %v1614 = vadd.f32 %v1388, %v1575
    %v1615 = vadd.f32 %v1317, %v1504
    %v1616 = vadd.f32 %v1319, %v1506
    %v1617 = vadd.f32 %v1390, %v1577
    %v1618 = vadd.f32 %v1392, %v1579
    %v1619 = vadd.f32 %v1323, %v1510
    %v1620 = vadd.f32 %v1325, %v1512
    %v1621 = vadd.f32 %v1396, %v1583
    %v1622 = vadd.f32 %v1398, %v1585
    %v1623 = vadd.f32 %v1327, %v1514
    %v1624 = vadd.f32 %v1329, %v1516
    %v1625 = vadd.f32 %v1400, %v1587
    %v1626 = vadd.f32 %v1402, %v1589
    %v1627 = vadd.f32 %v1333, %v1520
    %v1628 = vadd.f32 %v1335, %v1522
    %v1629 = vadd.f32 %v1406, %v1593
    %v1630 = vadd.f32 %v1408, %v1595
    %v1631 = vadd.f32 %v1337, %v1524
    %v1632 = vadd.f32 %v1339, %v1526
    %v1633 = vadd.f32 %v1410, %v1597
    %v1634 = vadd.f32 %v1412, %v1599
    %v1635 = vadd.f32 %v1343, %v1530
    %v1636 = vadd.f32 %v1345, %v1532
    %v1637 = vadd.f32 %v1416, %v1603
    %v1638 = vadd.f32 %v1418, %v1605
    %v1639 = vadd.f32 %v1347, %v1534
    %v1640 = vadd.f32 %v1349, %v1536
    %v1641 = vadd.f32 %v1420, %v1607
    %v1642 = vadd.f32 %v1422, %v1609
    %v1643 = vadd.f32 %v1611, %v1010
    %v1644 = vadd.f32 %v1612, %v1014
    %v1645 = vadd.f32 %v1613, %v1018
    %v1646 = vadd.f32 %v1614, %v1022
    %v1647 = vadd.f32 %v1615, %v1010
    %v1648 = vadd.f32 %v1616, %v1014
    %v1649 = vadd.f32 %v1617, %v1018
    %v1650 = vadd.f32 %v1618, %v1022
    %v1651 = vadd.f32 %v1619, %v1010
    %v1652 = vadd.f32 %v1620, %v1014
    %v1653 = vadd.f32 %v1621, %v1018
    %v1654 = vadd.f32 %v1622, %v1022
    %v1655 = vadd.f32 %v1623, %v1010
    %v1656 = vadd.f32 %v1624, %v1014
    %v1657 = vadd.f32 %v1625, %v1018
    %v1658 = vadd.f32 %v1626, %v1022
    %v1659 = vadd.f32 %v1627, %v1010
    %v1660 = vadd.f32 %v1628, %v1014
    %v1661 = vadd.f32 %v1629, %v1018
    %v1662 = vadd.f32 %v1630, %v1022
    %v1663 = vadd.f32 %v1631, %v1010
    %v1664 = vadd.f32 %v1632, %v1014
    %v1665 = vadd.f32 %v1633, %v1018
    %v1666 = vadd.f32 %v1634, %v1022
    %v1667 = vadd.f32 %v1635, %v1010
    %v1668 = vadd.f32 %v1636, %v1014
    %v1669 = vadd.f32 %v1637, %v1018
    %v1670 = vadd.f32 %v1638, %v1022
    %v1671 = vadd.f32 %v1639, %v1010
    %v1672 = vadd.f32 %v1640, %v1014
    %v1673 = vadd.f32 %v1641, %v1018
    %v1674 = vadd.f32 %v1642, %v1022
    %v1675 = vmax.f32 %v1643, 0.0
    %v1676 = vmax.f32 %v1644, 0.0
    %v1677 = vmax.f32 %v1645, 0.0
    %v1678 = vmax.f32 %v1646, 0.0
    %v1679 = vmax.f32 %v1647, 0.0
    %v1680 = vmax.f32 %v1648, 0.0
    %v1681 = vmax.f32 %v1649, 0.0
    %v1682 = vmax.f32 %v1650, 0.0
    %v1683 = vmax.f32 %v1651, 0.0
    %v1684 = vmax.f32 %v1652, 0.0
    %v1685 = vmax.f32 %v1653, 0.0
    %v1686 = vmax.f32 %v1654, 0.0
    %v1687 = vmax.f32 %v1655, 0.0
    %v1688 = vmax.f32 %v1656, 0.0
    %v1689 = vmax.f32 %v1657, 0.0
    %v1690 = vmax.f32 %v1658, 0.0
    %v1691 = vmax.f32 %v1659, 0.0
    %v1692 = vmax.f32 %v1660, 0.0
    %v1693 = vmax.f32 %v1661, 0.0
    %v1694 = vmax.f32 %v1662, 0.0
    %v1695 = vmax.f32 %v1663, 0.0
    %v1696 = vmax.f32 %v1664, 0.0
    %v1697 = vmax.f32 %v1665, 0.0
    %v1698 = vmax.f32 %v1666, 0.0
    %v1699 = vmax.f32 %v1667, 0.0
    %v1700 = vmax.f32 %v1668, 0.0
    %v1701 = vmax.f32 %v1669, 0.0
    %v1702 = vmax.f32 %v1670, 0.0
    %v1703 = vmax.f32 %v1671, 0.0
    %v1704 = vmax.f32 %v1672, 0.0
    %v1705 = vmax.f32 %v1673, 0.0
    %v1706 = vmax.f32 %v1674, 0.0
    %v1707 = vmax.f32 %v1059, %v1061
    %v1708 = vmax.f32 %v1060, %v1062
    %v1709 = vmax.f32 %v1063, %v1065
    %v1710 = vmax.f32 %v1064, %v1066
    %v1711 = vmax.f32 %v1067, %v1069
    %v1712 = vmax.f32 %v1068, %v1070
    %v1713 = vmax.f32 %v1071, %v1073
    %v1714 = vmax.f32 %v1072, %v1074
    %v1715 = vmax.f32 %v1075, %v1077
    %v1716 = vmax.f32 %v1076, %v1078
    %v1717 = vmax.f32 %v1079, %v1081
    %v1718 = vmax.f32 %v1080, %v1082
    %v1719 = vmax.f32 %v1083, %v1085
    %v1720 = vmax.f32 %v1084, %v1086
    %v1721 = vmax.f32 %v1087, %v1089
    %v1722 = vmax.f32 %v1088, %v1090
    %v1723 = vmax.f32 %v1675, %v1677
    %v1724 = vmax.f32 %v1676, %v1678
    %v1725 = vmax.f32 %v1679, %v1681
    %v1726 = vmax.f32 %v1680, %v1682
    %v1727 = vmax.f32 %v1683, %v1685
    %v1728 = vmax.f32 %v1684, %v1686
    %v1729 = vmax.f32 %v1687, %v1689
    %v1730 = vmax.f32 %v1688, %v1690
    %v1731 = vmax.f32 %v1691, %v1693
    %v1732 = vmax.f32 %v1692, %v1694
    %v1733 = vmax.f32 %v1695, %v1697
    %v1734 = vmax.f32 %v1696, %v1698
    %v1735 = vmax.f32 %v1699, %v1701
    %v1736 = vmax.f32 %v1700, %v1702
    %v1737 = vmax.f32 %v1703, %v1705
    %v1738 = vmax.f32 %v1704, %v1706
    %v1739 = vmax.f32 %v1707, %v1723
    %v1740 = vmax.f32 %v1708, %v1724
    %v1741 = vmax.f32 %v1709, %v1725
    %v1742 = vmax.f32 %v1710, %v1726
    %v1743 = vmax.f32 %v1711, %v1727
    %v1744 = vmax.f32 %v1712, %v1728
    %v1745 = vmax.f32 %v1713, %v1729
    %v1746 = vmax.f32 %v1714, %v1730
    %v1747 = vmax.f32 %v1715, %v1731
    %v1748 = vmax.f32 %v1716, %v1732
    %v1749 = vmax.f32 %v1717, %v1733
    %v1750 = vmax.f32 %v1718, %v1734
    %v1751 = vmax.f32 %v1719, %v1735
    %v1752 = vmax.f32 %v1720, %v1736
    %v1753 = vmax.f32 %v1721, %v1737
    %v1754 = vmax.f32 %v1722, %v1738
    %v1755 = vpack.c.bf16 %v1741, %v1739
    %v1756 = vpack.c.bf16 %v1742, %v1740
    %v1757 = vpack.c.bf16 %v1745, %v1743
    %v1758 = vpack.c.bf16 %v1746, %v1744
    %v1759 = vpack.c.bf16 %v1749, %v1747
    %v1760 = vpack.c.bf16 %v1750, %v1748
    %v1761 = vpack.c.bf16 %v1753, %v1751
    %v1762 = vpack.c.bf16 %v1754, %v1752
    %s1763 = scalar_lea.vmem %s0, 200
    %v1764 = vld [vmem:[%s1763] sm:$0xf]
    %v1765 = vld [vmem:[%s1763 + $0x4] sm:$0xf]
    %v1766 = vld [vmem:[%s1763 + $0x8] sm:$0xf]
    %v1767 = vld [vmem:[%s1763 + $0xc] sm:$0xf]
    %v1768 = vld [vmem:[%s1763 + $0x10] sm:$0xf]
    %v1769 = vld [vmem:[%s1763 + $0x14] sm:$0xf]
    %v1770 = vld [vmem:[%s1763 + $0x18] sm:$0xf]
    %v1771 = vld [vmem:[%s1763 + $0x1c] sm:$0xf]
    %v1780 = vunpack.c.l.b16 %v1764
    %v1781 = vunpack.c.l.b16 %v1765
    %v1782 = vunpack.c.l.b16 %v1766
    %v1783 = vunpack.c.l.b16 %v1767
    %v1784 = vunpack.c.l.b16 %v1768
    %v1785 = vunpack.c.l.b16 %v1769
    %v1786 = vunpack.c.l.b16 %v1770
    %v1787 = vunpack.c.l.b16 %v1771
    %v1788 = vpack.c.b16 %v1781, %v1780
    %v1789 = vpack.c.b16 %v1783, %v1782
    %v1790 = vpack.c.b16 %v1785, %v1784
    %v1791 = vpack.c.b16 %v1787, %v1786
    %v1793 = vsel %vm212, %v1788, 0
    %v1796 = vsel %vm212, %v1789, 0
    %v1799 = vsel %vm212, %v1790, 0
    %v1802 = vsel %vm212, %v1791, 0
    %1804 = vmatprep.subr.bf16.mxu0 0
    %1805 = vmatpush1.bf16.msra.mxu0 0
    %1806 = vmatprep.subr.bf16.mxu0 0
    %1807 = vmatpush1.bf16.msra.mxu0 0
    %1808 = vmatprep.subr.bf16.mxu0 0
    %1809 = vmatpush1.bf16.msra.mxu0 0
    %1810 = vmatprep.subr.bf16.mxu0 %v232
    %1811 = vmatpush1.bf16.msra.mxu0 %v229
    %1812 = vmatprep.subr.bf16.mxu0 %v189
    %1813 = vmatpush1.bf16.msra.mxu0 %v188
    %1814 = vmatprep.subr.bf16.mxu0 %v185
    %1815 = vmatpush1.bf16.msra.mxu0 %v184
    %1816 = vmatprep.subr.bf16.mxu0 %v181
    %1817 = vmatpush1.bf16.msra.mxu0 %v180
    %1818 = vmatprep.subr.bf16.mxu0 %v177
    %1819 = vmatpush1.bf16.msra.mxu0 %v176
    %1820 = vmatprep.subr.bf16.mxu0 0
    %1821 = vmatpush2.bf16.msra.mxu0 0
    %1822 = vmatprep.subr.bf16.mxu0 0
    %1823 = vmatpush2.bf16.msra.mxu0 0
    %1824 = vmatprep.subr.bf16.mxu0 0
    %1825 = vmatpush2.bf16.msra.mxu0 0
    %1826 = vmatprep.subr.bf16.mxu0 0
    %1827 = vmatpush2.bf16.msra.mxu0 0
    %1828 = vmatprep.subr.bf16.mxu0 0
    %1829 = vmatpush2.bf16.msra.mxu0 0
    %1830 = vmatprep.subr.bf16.mxu0 0
    %1831 = vmatpush2.bf16.msra.mxu0 0
    %1832 = vmatprep.subr.bf16.mxu0 0
    %1833 = vmatpush2.bf16.msra.mxu0 0
    %1834 = vmatprep.subr.bf16.mxu0 0
    %1835 = vmatpush2.bf16.msra.mxu0 0
    %1836 = vmatprep.mubr.bf16.mxu0 0
    %1837 = vmatmul.mubr.bf16.gmra.mxu0 %v1793
    %v1838 = vpop.f32.mrf.mxu0
    %v1839 = vadd.f32 0.0, %v1838
    %v1840 = vpop.f32.mrf.mxu0
    %v1841 = vadd.f32 0.0, %v1840
    %v1842 = vpop.f32.mrf.mxu0
    %v1843 = vadd.f32 0.0, %v1842
    %v1844 = vpop.f32.mrf.mxu0
    %v1845 = vadd.f32 0.0, %v1844
    %1846 = vmatprep.mubr.bf16.mxu0 0
    %1847 = vmatmul.mubr.bf16.gmra.mxu0 %v1796
    %v1848 = vpop.f32.mrf.mxu0
    %v1849 = vadd.f32 0.0, %v1848
    %v1850 = vpop.f32.mrf.mxu0
    %v1851 = vadd.f32 0.0, %v1850
    %v1852 = vpop.f32.mrf.mxu0
    %v1853 = vadd.f32 0.0, %v1852
    %v1854 = vpop.f32.mrf.mxu0
    %v1855 = vadd.f32 0.0, %v1854
    %1856 = vmatprep.mubr.bf16.mxu0 0
    %1857 = vmatmul.mubr.bf16.gmra.mxu0 %v1799
    %v1858 = vpop.f32.mrf.mxu0
    %v1859 = vadd.f32 0.0, %v1858
    %v1860 = vpop.f32.mrf.mxu0
    %v1861 = vadd.f32 0.0, %v1860
    %v1862 = vpop.f32.mrf.mxu0
    %v1863 = vadd.f32 0.0, %v1862
    %v1864 = vpop.f32.mrf.mxu0
    %v1865 = vadd.f32 0.0, %v1864
    %1866 = vmatprep.mubr.bf16.mxu0 0
    %1867 = vmatmul.mubr.bf16.gmra.mxu0 %v1802
    %v1868 = vpop.f32.mrf.mxu0
    %v1869 = vadd.f32 0.0, %v1868
    %v1870 = vpop.f32.mrf.mxu0
    %v1871 = vadd.f32 0.0, %v1870
    %v1872 = vpop.f32.mrf.mxu0
    %v1873 = vadd.f32 0.0, %v1872
    %v1874 = vpop.f32.mrf.mxu0
    %v1875 = vadd.f32 0.0, %v1874
    %1876 = vdwg.mxu0
    %1877 = vmatprep.subr.bf16.mxu0 0
    %1878 = vmatpush1.bf16.msra.mxu0 0
    %1879 = vmatprep.subr.bf16.mxu0 0
    %1880 = vmatpush1.bf16.msra.mxu0 0
    %1881 = vmatprep.subr.bf16.mxu0 0
    %1882 = vmatpush1.bf16.msra.mxu0 0
    %1883 = vmatprep.subr.bf16.mxu0 %v238
    %1884 = vmatpush1.bf16.msra.mxu0 %v235
    %1885 = vmatprep.subr.bf16.mxu0 %v191
    %1886 = vmatpush1.bf16.msra.mxu0 %v190
    %1887 = vmatprep.subr.bf16.mxu0 %v187
    %1888 = vmatpush1.bf16.msra.mxu0 %v186
    %1889 = vmatprep.subr.bf16.mxu0 %v183
    %1890 = vmatpush1.bf16.msra.mxu0 %v182
    %1891 = vmatprep.subr.bf16.mxu0 %v179
    %1892 = vmatpush1.bf16.msra.mxu0 %v178
    %1893 = vmatprep.subr.bf16.mxu0 0
    %1894 = vmatpush2.bf16.msra.mxu0 0
    %1895 = vmatprep.subr.bf16.mxu0 0
    %1896 = vmatpush2.bf16.msra.mxu0 0
    %1897 = vmatprep.subr.bf16.mxu0 0
    %1898 = vmatpush2.bf16.msra.mxu0 0
    %1899 = vmatprep.subr.bf16.mxu0 0
    %1900 = vmatpush2.bf16.msra.mxu0 0
    %1901 = vmatprep.subr.bf16.mxu0 0
    %1902 = vmatpush2.bf16.msra.mxu0 0
    %1903 = vmatprep.subr.bf16.mxu0 0
    %1904 = vmatpush2.bf16.msra.mxu0 0
    %1905 = vmatprep.subr.bf16.mxu0 0
    %1906 = vmatpush2.bf16.msra.mxu0 0
    %1907 = vmatprep.subr.bf16.mxu0 0
    %1908 = vmatpush2.bf16.msra.mxu0 0
    %1909 = vmatprep.mubr.bf16.mxu0 0
    %1910 = vmatmul.mubr.bf16.gmra.mxu0 %v1793
    %v1911 = vpop.f32.mrf.mxu0
    %v1912 = vadd.f32 0.0, %v1911
    %v1913 = vpop.f32.mrf.mxu0
    %v1914 = vadd.f32 0.0, %v1913
    %v1915 = vpop.f32.mrf.mxu0
    %v1916 = vadd.f32 0.0, %v1915
    %v1917 = vpop.f32.mrf.mxu0
    %v1918 = vadd.f32 0.0, %v1917
    %1919 = vmatprep.mubr.bf16.mxu0 0
    %1920 = vmatmul.mubr.bf16.gmra.mxu0 %v1796
    %v1921 = vpop.f32.mrf.mxu0
    %v1922 = vadd.f32 0.0, %v1921
    %v1923 = vpop.f32.mrf.mxu0
    %v1924 = vadd.f32 0.0, %v1923
    %v1925 = vpop.f32.mrf.mxu0
    %v1926 = vadd.f32 0.0, %v1925
    %v1927 = vpop.f32.mrf.mxu0
    %v1928 = vadd.f32 0.0, %v1927
    %1929 = vmatprep.mubr.bf16.mxu0 0
    %1930 = vmatmul.mubr.bf16.gmra.mxu0 %v1799
    %v1931 = vpop.f32.mrf.mxu0
    %v1932 = vadd.f32 0.0, %v1931
    %v1933 = vpop.f32.mrf.mxu0
    %v1934 = vadd.f32 0.0, %v1933
    %v1935 = vpop.f32.mrf.mxu0
    %v1936 = vadd.f32 0.0, %v1935
    %v1937 = vpop.f32.mrf.mxu0
    %v1938 = vadd.f32 0.0, %v1937
    %1939 = vmatprep.mubr.bf16.mxu0 0
    %1940 = vmatmul.mubr.bf16.gmra.mxu0 %v1802
    %v1941 = vpop.f32.mrf.mxu0
    %v1942 = vadd.f32 0.0, %v1941
    %v1943 = vpop.f32.mrf.mxu0
    %v1944 = vadd.f32 0.0, %v1943
    %v1945 = vpop.f32.mrf.mxu0
    %v1946 = vadd.f32 0.0, %v1945
    %v1947 = vpop.f32.mrf.mxu0
    %v1948 = vadd.f32 0.0, %v1947
    %1949 = vdwg.mxu0
    %1950 = vmatprep.subr.bf16.mxu0 0
    %1951 = vmatpush1.bf16.msra.mxu0 0
    %1952 = vmatprep.subr.bf16.mxu0 0
    %1953 = vmatpush1.bf16.msra.mxu0 0
    %1954 = vmatprep.subr.bf16.mxu0 0
    %1955 = vmatpush1.bf16.msra.mxu0 0
    %1956 = vmatprep.subr.bf16.mxu0 %v512
    %1957 = vmatpush1.bf16.msra.mxu0 %v509
    %1958 = vmatprep.subr.bf16.mxu0 %v473
    %1959 = vmatpush1.bf16.msra.mxu0 %v472
    %1960 = vmatprep.subr.bf16.mxu0 %v469
    %1961 = vmatpush1.bf16.msra.mxu0 %v468
    %1962 = vmatprep.subr.bf16.mxu0 %v465
    %1963 = vmatpush1.bf16.msra.mxu0 %v464
    %1964 = vmatprep.subr.bf16.mxu0 %v461
    %1965 = vmatpush1.bf16.msra.mxu0 %v460
    %1966 = vmatprep.subr.bf16.mxu0 0
    %1967 = vmatpush2.bf16.msra.mxu0 0
    %1968 = vmatprep.subr.bf16.mxu0 0
    %1969 = vmatpush2.bf16.msra.mxu0 0
    %1970 = vmatprep.subr.bf16.mxu0 0
    %1971 = vmatpush2.bf16.msra.mxu0 0
    %1972 = vmatprep.subr.bf16.mxu0 0
    %1973 = vmatpush2.bf16.msra.mxu0 0
    %1974 = vmatprep.subr.bf16.mxu0 0
    %1975 = vmatpush2.bf16.msra.mxu0 0
    %1976 = vmatprep.subr.bf16.mxu0 0
    %1977 = vmatpush2.bf16.msra.mxu0 0
    %1978 = vmatprep.subr.bf16.mxu0 0
    %1979 = vmatpush2.bf16.msra.mxu0 0
    %1980 = vmatprep.subr.bf16.mxu0 0
    %1981 = vmatpush2.bf16.msra.mxu0 0
    %1982 = vmatprep.mubr.bf16.mxu0 0
    %1983 = vmatmul.mubr.bf16.gmra.mxu0 %v1454
    %v1984 = vpop.f32.mrf.mxu0
    %v1985 = vadd.f32 %v1839, %v1984
    %v1986 = vpop.f32.mrf.mxu0
    %v1987 = vadd.f32 %v1841, %v1986
    %v1988 = vpop.f32.mrf.mxu0
    %v1989 = vadd.f32 %v1843, %v1988
    %v1990 = vpop.f32.mrf.mxu0
    %v1991 = vadd.f32 %v1845, %v1990
    %1992 = vmatprep.mubr.bf16.mxu0 0
    %1993 = vmatmul.mubr.bf16.gmra.mxu0 %v1457
    %v1994 = vpop.f32.mrf.mxu0
    %v1995 = vadd.f32 %v1849, %v1994
    %v1996 = vpop.f32.mrf.mxu0
    %v1997 = vadd.f32 %v1851, %v1996
    %v1998 = vpop.f32.mrf.mxu0
    %v1999 = vadd.f32 %v1853, %v1998
    %v2000 = vpop.f32.mrf.mxu0
    %v2001 = vadd.f32 %v1855, %v2000
    %2002 = vmatprep.mubr.bf16.mxu0 0
    %2003 = vmatmul.mubr.bf16.gmra.mxu0 %v1460
    %v2004 = vpop.f32.mrf.mxu0
    %v2005 = vadd.f32 %v1859, %v2004
    %v2006 = vpop.f32.mrf.mxu0
    %v2007 = vadd.f32 %v1861, %v2006
    %v2008 = vpop.f32.mrf.mxu0
    %v2009 = vadd.f32 %v1863, %v2008
    %v2010 = vpop.f32.mrf.mxu0
    %v2011 = vadd.f32 %v1865, %v2010
    %2012 = vmatprep.mubr.bf16.mxu0 0
    %2013 = vmatmul.mubr.bf16.gmra.mxu0 %v1463
    %v2014 = vpop.f32.mrf.mxu0
    %v2015 = vadd.f32 %v1869, %v2014
    %v2016 = vpop.f32.mrf.mxu0
    %v2017 = vadd.f32 %v1871, %v2016
    %v2018 = vpop.f32.mrf.mxu0
    %v2019 = vadd.f32 %v1873, %v2018
    %v2020 = vpop.f32.mrf.mxu0
    %v2021 = vadd.f32 %v1875, %v2020
    %2022 = vdwg.mxu0
    %2023 = vmatprep.subr.bf16.mxu0 0
    %2024 = vmatpush1.bf16.msra.mxu0 0
    %2025 = vmatprep.subr.bf16.mxu0 0
    %2026 = vmatpush1.bf16.msra.mxu0 0
    %2027 = vmatprep.subr.bf16.mxu0 0
    %2028 = vmatpush1.bf16.msra.mxu0 0
    %2029 = vmatprep.subr.bf16.mxu0 %v518
    %2030 = vmatpush1.bf16.msra.mxu0 %v515
    %2031 = vmatprep.subr.bf16.mxu0 %v475
    %2032 = vmatpush1.bf16.msra.mxu0 %v474
    %2033 = vmatprep.subr.bf16.mxu0 %v471
    %2034 = vmatpush1.bf16.msra.mxu0 %v470
    %2035 = vmatprep.subr.bf16.mxu0 %v467
    %2036 = vmatpush1.bf16.msra.mxu0 %v466
    %2037 = vmatprep.subr.bf16.mxu0 %v463
    %2038 = vmatpush1.bf16.msra.mxu0 %v462
    %2039 = vmatprep.subr.bf16.mxu0 0
    %2040 = vmatpush2.bf16.msra.mxu0 0
    %2041 = vmatprep.subr.bf16.mxu0 0
    %2042 = vmatpush2.bf16.msra.mxu0 0
    %2043 = vmatprep.subr.bf16.mxu0 0
    %2044 = vmatpush2.bf16.msra.mxu0 0
    %2045 = vmatprep.subr.bf16.mxu0 0
    %2046 = vmatpush2.bf16.msra.mxu0 0
    %2047 = vmatprep.subr.bf16.mxu0 0
    %2048 = vmatpush2.bf16.msra.mxu0 0
    %2049 = vmatprep.subr.bf16.mxu0 0
    %2050 = vmatpush2.bf16.msra.mxu0 0
    %2051 = vmatprep.subr.bf16.mxu0 0
    %2052 = vmatpush2.bf16.msra.mxu0 0
    %2053 = vmatprep.subr.bf16.mxu0 0
    %2054 = vmatpush2.bf16.msra.mxu0 0
    %2055 = vmatprep.mubr.bf16.mxu0 0
    %2056 = vmatmul.mubr.bf16.gmra.mxu0 %v1454
    %v2057 = vpop.f32.mrf.mxu0
    %v2058 = vadd.f32 %v1912, %v2057
    %v2059 = vpop.f32.mrf.mxu0
    %v2060 = vadd.f32 %v1914, %v2059
    %v2061 = vpop.f32.mrf.mxu0
    %v2062 = vadd.f32 %v1916, %v2061
    %v2063 = vpop.f32.mrf.mxu0
    %v2064 = vadd.f32 %v1918, %v2063
    %2065 = vmatprep.mubr.bf16.mxu0 0
    %2066 = vmatmul.mubr.bf16.gmra.mxu0 %v1457
    %v2067 = vpop.f32.mrf.mxu0
    %v2068 = vadd.f32 %v1922, %v2067
    %v2069 = vpop.f32.mrf.mxu0
    %v2070 = vadd.f32 %v1924, %v2069
    %v2071 = vpop.f32.mrf.mxu0
    %v2072 = vadd.f32 %v1926, %v2071
    %v2073 = vpop.f32.mrf.mxu0
    %v2074 = vadd.f32 %v1928, %v2073
    %2075 = vmatprep.mubr.bf16.mxu0 0
    %2076 = vmatmul.mubr.bf16.gmra.mxu0 %v1460
    %v2077 = vpop.f32.mrf.mxu0
    %v2078 = vadd.f32 %v1932, %v2077
    %v2079 = vpop.f32.mrf.mxu0
    %v2080 = vadd.f32 %v1934, %v2079
    %v2081 = vpop.f32.mrf.mxu0
    %v2082 = vadd.f32 %v1936, %v2081
    %v2083 = vpop.f32.mrf.mxu0
    %v2084 = vadd.f32 %v1938, %v2083
    %2085 = vmatprep.mubr.bf16.mxu0 0
    %2086 = vmatmul.mubr.bf16.gmra.mxu0 %v1463
    %v2087 = vpop.f32.mrf.mxu0
    %v2088 = vadd.f32 %v1942, %v2087
    %v2089 = vpop.f32.mrf.mxu0
    %v2090 = vadd.f32 %v1944, %v2089
    %v2091 = vpop.f32.mrf.mxu0
    %v2092 = vadd.f32 %v1946, %v2091
    %v2093 = vpop.f32.mrf.mxu0
    %v2094 = vadd.f32 %v1948, %v2093
    %2095 = vdwg.mxu0
    %s2096 = scalar_lea.vmem %s0, 240
    %v2097 = vld [vmem:[%s2096] sm:$0xf]
    %v2098 = vld [vmem:[%s2096 + $0x4] sm:$0xf]
    %v2099 = vld [vmem:[%s2096 + $0x8] sm:$0xf]
    %v2100 = vld [vmem:[%s2096 + $0xc] sm:$0xf]
    %v2101 = vld [vmem:[%s2096 + $0x10] sm:$0xf]
    %v2102 = vld [vmem:[%s2096 + $0x14] sm:$0xf]
    %v2103 = vld [vmem:[%s2096 + $0x18] sm:$0xf]
    %v2104 = vld [vmem:[%s2096 + $0x1c] sm:$0xf]
    %v2113 = vunpack.c.l.b16 %v2097
    %v2114 = vunpack.c.l.b16 %v2098
    %v2115 = vunpack.c.l.b16 %v2099
    %v2116 = vunpack.c.l.b16 %v2100
    %v2117 = vunpack.c.l.b16 %v2101
    %v2118 = vunpack.c.l.b16 %v2102
    %v2119 = vunpack.c.l.b16 %v2103
    %v2120 = vunpack.c.l.b16 %v2104
    %v2121 = vpack.c.b16 %v2114, %v2113
    %v2122 = vpack.c.b16 %v2116, %v2115
    %v2123 = vpack.c.b16 %v2118, %v2117
    %v2124 = vpack.c.b16 %v2120, %v2119
    %v2126 = vsel %vm212, %v2121, 0
    %v2129 = vsel %vm212, %v2122, 0
    %v2132 = vsel %vm212, %v2123, 0
    %v2135 = vsel %vm212, %v2124, 0
    %2137 = vmatprep.subr.bf16.mxu0 0
    %2138 = vmatpush1.bf16.msra.mxu0 0
    %2139 = vmatprep.subr.bf16.mxu0 0
    %2140 = vmatpush1.bf16.msra.mxu0 0
    %2141 = vmatprep.subr.bf16.mxu0 0
    %2142 = vmatpush1.bf16.msra.mxu0 0
    %2143 = vmatprep.subr.bf16.mxu0 %v820
    %2144 = vmatpush1.bf16.msra.mxu0 %v817
    %2145 = vmatprep.subr.bf16.mxu0 %v781
    %2146 = vmatpush1.bf16.msra.mxu0 %v780
    %2147 = vmatprep.subr.bf16.mxu0 %v777
    %2148 = vmatpush1.bf16.msra.mxu0 %v776
    %2149 = vmatprep.subr.bf16.mxu0 %v773
    %2150 = vmatpush1.bf16.msra.mxu0 %v772
    %2151 = vmatprep.subr.bf16.mxu0 %v769
    %2152 = vmatpush1.bf16.msra.mxu0 %v768
    %2153 = vmatprep.subr.bf16.mxu0 0
    %2154 = vmatpush2.bf16.msra.mxu0 0
    %2155 = vmatprep.subr.bf16.mxu0 0
    %2156 = vmatpush2.bf16.msra.mxu0 0
    %2157 = vmatprep.subr.bf16.mxu0 0
    %2158 = vmatpush2.bf16.msra.mxu0 0
    %2159 = vmatprep.subr.bf16.mxu0 0
    %2160 = vmatpush2.bf16.msra.mxu0 0
    %2161 = vmatprep.subr.bf16.mxu0 0
    %2162 = vmatpush2.bf16.msra.mxu0 0
    %2163 = vmatprep.subr.bf16.mxu0 0
    %2164 = vmatpush2.bf16.msra.mxu0 0
    %2165 = vmatprep.subr.bf16.mxu0 0
    %2166 = vmatpush2.bf16.msra.mxu0 0
    %2167 = vmatprep.subr.bf16.mxu0 0
    %2168 = vmatpush2.bf16.msra.mxu0 0
    %2169 = vmatprep.mubr.bf16.mxu0 0
    %2170 = vmatmul.mubr.bf16.gmra.mxu0 %v2126
    %v2171 = vpop.f32.mrf.mxu0
    %v2172 = vadd.f32 0.0, %v2171
    %v2173 = vpop.f32.mrf.mxu0
    %v2174 = vadd.f32 0.0, %v2173
    %v2175 = vpop.f32.mrf.mxu0
    %v2176 = vadd.f32 0.0, %v2175
    %v2177 = vpop.f32.mrf.mxu0
    %v2178 = vadd.f32 0.0, %v2177
    %2179 = vmatprep.mubr.bf16.mxu0 0
    %2180 = vmatmul.mubr.bf16.gmra.mxu0 %v2129
    %v2181 = vpop.f32.mrf.mxu0
    %v2182 = vadd.f32 0.0, %v2181
    %v2183 = vpop.f32.mrf.mxu0
    %v2184 = vadd.f32 0.0, %v2183
    %v2185 = vpop.f32.mrf.mxu0
    %v2186 = vadd.f32 0.0, %v2185
    %v2187 = vpop.f32.mrf.mxu0
    %v2188 = vadd.f32 0.0, %v2187
    %2189 = vmatprep.mubr.bf16.mxu0 0
    %2190 = vmatmul.mubr.bf16.gmra.mxu0 %v2132
    %v2191 = vpop.f32.mrf.mxu0
    %v2192 = vadd.f32 0.0, %v2191
    %v2193 = vpop.f32.mrf.mxu0
    %v2194 = vadd.f32 0.0, %v2193
    %v2195 = vpop.f32.mrf.mxu0
    %v2196 = vadd.f32 0.0, %v2195
    %v2197 = vpop.f32.mrf.mxu0
    %v2198 = vadd.f32 0.0, %v2197
    %2199 = vmatprep.mubr.bf16.mxu0 0
    %2200 = vmatmul.mubr.bf16.gmra.mxu0 %v2135
    %v2201 = vpop.f32.mrf.mxu0
    %v2202 = vadd.f32 0.0, %v2201
    %v2203 = vpop.f32.mrf.mxu0
    %v2204 = vadd.f32 0.0, %v2203
    %v2205 = vpop.f32.mrf.mxu0
    %v2206 = vadd.f32 0.0, %v2205
    %v2207 = vpop.f32.mrf.mxu0
    %v2208 = vadd.f32 0.0, %v2207
    %2209 = vdwg.mxu0
    %2210 = vmatprep.subr.bf16.mxu0 0
    %2211 = vmatpush1.bf16.msra.mxu0 0
    %2212 = vmatprep.subr.bf16.mxu0 0
    %2213 = vmatpush1.bf16.msra.mxu0 0
    %2214 = vmatprep.subr.bf16.mxu0 0
    %2215 = vmatpush1.bf16.msra.mxu0 0
    %2216 = vmatprep.subr.bf16.mxu0 %v826
    %2217 = vmatpush1.bf16.msra.mxu0 %v823
    %2218 = vmatprep.subr.bf16.mxu0 %v783
    %2219 = vmatpush1.bf16.msra.mxu0 %v782
    %2220 = vmatprep.subr.bf16.mxu0 %v779
    %2221 = vmatpush1.bf16.msra.mxu0 %v778
    %2222 = vmatprep.subr.bf16.mxu0 %v775
    %2223 = vmatpush1.bf16.msra.mxu0 %v774
    %2224 = vmatprep.subr.bf16.mxu0 %v771
    %2225 = vmatpush1.bf16.msra.mxu0 %v770
    %2226 = vmatprep.subr.bf16.mxu0 0
    %2227 = vmatpush2.bf16.msra.mxu0 0
    %2228 = vmatprep.subr.bf16.mxu0 0
    %2229 = vmatpush2.bf16.msra.mxu0 0
    %2230 = vmatprep.subr.bf16.mxu0 0
    %2231 = vmatpush2.bf16.msra.mxu0 0
    %2232 = vmatprep.subr.bf16.mxu0 0
    %2233 = vmatpush2.bf16.msra.mxu0 0
    %2234 = vmatprep.subr.bf16.mxu0 0
    %2235 = vmatpush2.bf16.msra.mxu0 0
    %2236 = vmatprep.subr.bf16.mxu0 0
    %2237 = vmatpush2.bf16.msra.mxu0 0
    %2238 = vmatprep.subr.bf16.mxu0 0
    %2239 = vmatpush2.bf16.msra.mxu0 0
    %2240 = vmatprep.subr.bf16.mxu0 0
    %2241 = vmatpush2.bf16.msra.mxu0 0
    %2242 = vmatprep.mubr.bf16.mxu0 0
    %2243 = vmatmul.mubr.bf16.gmra.mxu0 %v2126
    %v2244 = vpop.f32.mrf.mxu0
    %v2245 = vadd.f32 0.0, %v2244
    %v2246 = vpop.f32.mrf.mxu0
    %v2247 = vadd.f32 0.0, %v2246
    %v2248 = vpop.f32.mrf.mxu0
    %v2249 = vadd.f32 0.0, %v2248
    %v2250 = vpop.f32.mrf.mxu0
    %v2251 = vadd.f32 0.0, %v2250
    %2252 = vmatprep.mubr.bf16.mxu0 0
    %2253 = vmatmul.mubr.bf16.gmra.mxu0 %v2129
    %v2254 = vpop.f32.mrf.mxu0
    %v2255 = vadd.f32 0.0, %v2254
    %v2256 = vpop.f32.mrf.mxu0
    %v2257 = vadd.f32 0.0, %v2256
    %v2258 = vpop.f32.mrf.mxu0
    %v2259 = vadd.f32 0.0, %v2258
    %v2260 = vpop.f32.mrf.mxu0
    %v2261 = vadd.f32 0.0, %v2260
    %2262 = vmatprep.mubr.bf16.mxu0 0
    %2263 = vmatmul.mubr.bf16.gmra.mxu0 %v2132
    %v2264 = vpop.f32.mrf.mxu0
    %v2265 = vadd.f32 0.0, %v2264
    %v2266 = vpop.f32.mrf.mxu0
    %v2267 = vadd.f32 0.0, %v2266
    %v2268 = vpop.f32.mrf.mxu0
    %v2269 = vadd.f32 0.0, %v2268
    %v2270 = vpop.f32.mrf.mxu0
    %v2271 = vadd.f32 0.0, %v2270
    %2272 = vmatprep.mubr.bf16.mxu0 0
    %2273 = vmatmul.mubr.bf16.gmra.mxu0 %v2135
    %v2274 = vpop.f32.mrf.mxu0
    %v2275 = vadd.f32 0.0, %v2274
    %v2276 = vpop.f32.mrf.mxu0
    %v2277 = vadd.f32 0.0, %v2276
    %v2278 = vpop.f32.mrf.mxu0
    %v2279 = vadd.f32 0.0, %v2278
    %v2280 = vpop.f32.mrf.mxu0
    %v2281 = vadd.f32 0.0, %v2280
    %2282 = vdwg.mxu0
    %v2283 = vadd.f32 %v1985, %v2172
    %v2284 = vadd.f32 %v1987, %v2174
    %v2285 = vadd.f32 %v2058, %v2245
    %v2286 = vadd.f32 %v2060, %v2247
    %v2287 = vadd.f32 %v1989, %v2176
    %v2288 = vadd.f32 %v1991, %v2178
    %v2289 = vadd.f32 %v2062, %v2249
    %v2290 = vadd.f32 %v2064, %v2251
    %v2291 = vadd.f32 %v1995, %v2182
    %v2292 = vadd.f32 %v1997, %v2184
    %v2293 = vadd.f32 %v2068, %v2255
    %v2294 = vadd.f32 %v2070, %v2257
    %v2295 = vadd.f32 %v1999, %v2186
    %v2296 = vadd.f32 %v2001, %v2188
    %v2297 = vadd.f32 %v2072, %v2259
    %v2298 = vadd.f32 %v2074, %v2261
    %v2299 = vadd.f32 %v2005, %v2192
    %v2300 = vadd.f32 %v2007, %v2194
    %v2301 = vadd.f32 %v2078, %v2265
    %v2302 = vadd.f32 %v2080, %v2267
    %v2303 = vadd.f32 %v2009, %v2196
    %v2304 = vadd.f32 %v2011, %v2198
    %v2305 = vadd.f32 %v2082, %v2269
    %v2306 = vadd.f32 %v2084, %v2271
    %v2307 = vadd.f32 %v2015, %v2202
    %v2308 = vadd.f32 %v2017, %v2204
    %v2309 = vadd.f32 %v2088, %v2275
    %v2310 = vadd.f32 %v2090, %v2277
    %v2311 = vadd.f32 %v2019, %v2206
    %v2312 = vadd.f32 %v2021, %v2208
    %v2313 = vadd.f32 %v2092, %v2279
    %v2314 = vadd.f32 %v2094, %v2281
    %v2315 = vadd.f32 %v2283, %v1010
    %v2316 = vadd.f32 %v2284, %v1014
    %v2317 = vadd.f32 %v2285, %v1018
    %v2318 = vadd.f32 %v2286, %v1022
    %v2319 = vadd.f32 %v2287, %v1010
    %v2320 = vadd.f32 %v2288, %v1014
    %v2321 = vadd.f32 %v2289, %v1018
    %v2322 = vadd.f32 %v2290, %v1022
    %v2323 = vadd.f32 %v2291, %v1010
    %v2324 = vadd.f32 %v2292, %v1014
    %v2325 = vadd.f32 %v2293, %v1018
    %v2326 = vadd.f32 %v2294, %v1022
    %v2327 = vadd.f32 %v2295, %v1010
    %v2328 = vadd.f32 %v2296, %v1014
    %v2329 = vadd.f32 %v2297, %v1018
    %v2330 = vadd.f32 %v2298, %v1022
    %v2331 = vadd.f32 %v2299, %v1010
    %v2332 = vadd.f32 %v2300, %v1014
    %v2333 = vadd.f32 %v2301, %v1018
    %v2334 = vadd.f32 %v2302, %v1022
    %v2335 = vadd.f32 %v2303, %v1010
    %v2336 = vadd.f32 %v2304, %v1014
    %v2337 = vadd.f32 %v2305, %v1018
    %v2338 = vadd.f32 %v2306, %v1022
    %v2339 = vadd.f32 %v2307, %v1010
    %v2340 = vadd.f32 %v2308, %v1014
    %v2341 = vadd.f32 %v2309, %v1018
    %v2342 = vadd.f32 %v2310, %v1022
    %v2343 = vadd.f32 %v2311, %v1010
    %v2344 = vadd.f32 %v2312, %v1014
    %v2345 = vadd.f32 %v2313, %v1018
    %v2346 = vadd.f32 %v2314, %v1022
    %v2347 = vmax.f32 %v2315, 0.0
    %v2348 = vmax.f32 %v2316, 0.0
    %v2349 = vmax.f32 %v2317, 0.0
    %v2350 = vmax.f32 %v2318, 0.0
    %v2351 = vmax.f32 %v2319, 0.0
    %v2352 = vmax.f32 %v2320, 0.0
    %v2353 = vmax.f32 %v2321, 0.0
    %v2354 = vmax.f32 %v2322, 0.0
    %v2355 = vmax.f32 %v2323, 0.0
    %v2356 = vmax.f32 %v2324, 0.0
    %v2357 = vmax.f32 %v2325, 0.0
    %v2358 = vmax.f32 %v2326, 0.0
    %v2359 = vmax.f32 %v2327, 0.0
    %v2360 = vmax.f32 %v2328, 0.0
    %v2361 = vmax.f32 %v2329, 0.0
    %v2362 = vmax.f32 %v2330, 0.0
    %v2363 = vmax.f32 %v2331, 0.0
    %v2364 = vmax.f32 %v2332, 0.0
    %v2365 = vmax.f32 %v2333, 0.0
    %v2366 = vmax.f32 %v2334, 0.0
    %v2367 = vmax.f32 %v2335, 0.0
    %v2368 = vmax.f32 %v2336, 0.0
    %v2369 = vmax.f32 %v2337, 0.0
    %v2370 = vmax.f32 %v2338, 0.0
    %v2371 = vmax.f32 %v2339, 0.0
    %v2372 = vmax.f32 %v2340, 0.0
    %v2373 = vmax.f32 %v2341, 0.0
    %v2374 = vmax.f32 %v2342, 0.0
    %v2375 = vmax.f32 %v2343, 0.0
    %v2376 = vmax.f32 %v2344, 0.0
    %v2377 = vmax.f32 %v2345, 0.0
    %v2378 = vmax.f32 %v2346, 0.0
    %s2379 = scalar_lea.vmem %s0, 280
    %v2380 = vld [vmem:[%s2379] sm:$0xf]
    %v2381 = vld [vmem:[%s2379 + $0x4] sm:$0xf]
    %v2382 = vld [vmem:[%s2379 + $0x8] sm:$0xf]
    %v2383 = vld [vmem:[%s2379 + $0xc] sm:$0xf]
    %v2384 = vld [vmem:[%s2379 + $0x10] sm:$0xf]
    %v2385 = vld [vmem:[%s2379 + $0x14] sm:$0xf]
    %v2386 = vld [vmem:[%s2379 + $0x18] sm:$0xf]
    %v2387 = vld [vmem:[%s2379 + $0x1c] sm:$0xf]
    %v2396 = vunpack.c.l.b16 %v2380
    %v2397 = vunpack.c.l.b16 %v2381
    %v2398 = vunpack.c.l.b16 %v2382
    %v2399 = vunpack.c.l.b16 %v2383
    %v2400 = vunpack.c.l.b16 %v2384
    %v2401 = vunpack.c.l.b16 %v2385
    %v2402 = vunpack.c.l.b16 %v2386
    %v2403 = vunpack.c.l.b16 %v2387
    %v2404 = vpack.c.b16 %v2397, %v2396
    %v2405 = vpack.c.b16 %v2399, %v2398
    %v2406 = vpack.c.b16 %v2401, %v2400
    %v2407 = vpack.c.b16 %v2403, %v2402
    %v2409 = vsel %vm212, %v2404, 0
    %v2412 = vsel %vm212, %v2405, 0
    %v2415 = vsel %vm212, %v2406, 0
    %v2418 = vsel %vm212, %v2407, 0
    %2420 = vmatprep.subr.bf16.mxu0 0
    %2421 = vmatpush1.bf16.msra.mxu0 0
    %2422 = vmatprep.subr.bf16.mxu0 0
    %2423 = vmatpush1.bf16.msra.mxu0 0
    %2424 = vmatprep.subr.bf16.mxu0 0
    %2425 = vmatpush1.bf16.msra.mxu0 0
    %2426 = vmatprep.subr.bf16.mxu0 %v232
    %2427 = vmatpush1.bf16.msra.mxu0 %v229
    %2428 = vmatprep.subr.bf16.mxu0 %v189
    %2429 = vmatpush1.bf16.msra.mxu0 %v188
    %2430 = vmatprep.subr.bf16.mxu0 %v185
    %2431 = vmatpush1.bf16.msra.mxu0 %v184
    %2432 = vmatprep.subr.bf16.mxu0 %v181
    %2433 = vmatpush1.bf16.msra.mxu0 %v180
    %2434 = vmatprep.subr.bf16.mxu0 %v177
    %2435 = vmatpush1.bf16.msra.mxu0 %v176
    %2436 = vmatprep.subr.bf16.mxu0 0
    %2437 = vmatpush2.bf16.msra.mxu0 0
    %2438 = vmatprep.subr.bf16.mxu0 0
    %2439 = vmatpush2.bf16.msra.mxu0 0
    %2440 = vmatprep.subr.bf16.mxu0 0
    %2441 = vmatpush2.bf16.msra.mxu0 0
    %2442 = vmatprep.subr.bf16.mxu0 0
    %2443 = vmatpush2.bf16.msra.mxu0 0
    %2444 = vmatprep.subr.bf16.mxu0 0
    %2445 = vmatpush2.bf16.msra.mxu0 0
    %2446 = vmatprep.subr.bf16.mxu0 0
    %2447 = vmatpush2.bf16.msra.mxu0 0
    %2448 = vmatprep.subr.bf16.mxu0 0
    %2449 = vmatpush2.bf16.msra.mxu0 0
    %2450 = vmatprep.subr.bf16.mxu0 0
    %2451 = vmatpush2.bf16.msra.mxu0 0
    %2452 = vmatprep.mubr.bf16.mxu0 0
    %2453 = vmatmul.mubr.bf16.gmra.mxu0 %v2409
    %v2454 = vpop.f32.mrf.mxu0
    %v2455 = vadd.f32 0.0, %v2454
    %v2456 = vpop.f32.mrf.mxu0
    %v2457 = vadd.f32 0.0, %v2456
    %v2458 = vpop.f32.mrf.mxu0
    %v2459 = vadd.f32 0.0, %v2458
    %v2460 = vpop.f32.mrf.mxu0
    %v2461 = vadd.f32 0.0, %v2460
    %2462 = vmatprep.mubr.bf16.mxu0 0
    %2463 = vmatmul.mubr.bf16.gmra.mxu0 %v2412
    %v2464 = vpop.f32.mrf.mxu0
    %v2465 = vadd.f32 0.0, %v2464
    %v2466 = vpop.f32.mrf.mxu0
    %v2467 = vadd.f32 0.0, %v2466
    %v2468 = vpop.f32.mrf.mxu0
    %v2469 = vadd.f32 0.0, %v2468
    %v2470 = vpop.f32.mrf.mxu0
    %v2471 = vadd.f32 0.0, %v2470
    %2472 = vmatprep.mubr.bf16.mxu0 0
    %2473 = vmatmul.mubr.bf16.gmra.mxu0 %v2415
    %v2474 = vpop.f32.mrf.mxu0
    %v2475 = vadd.f32 0.0, %v2474
    %v2476 = vpop.f32.mrf.mxu0
    %v2477 = vadd.f32 0.0, %v2476
    %v2478 = vpop.f32.mrf.mxu0
    %v2479 = vadd.f32 0.0, %v2478
    %v2480 = vpop.f32.mrf.mxu0
    %v2481 = vadd.f32 0.0, %v2480
    %2482 = vmatprep.mubr.bf16.mxu0 0
    %2483 = vmatmul.mubr.bf16.gmra.mxu0 %v2418
    %v2484 = vpop.f32.mrf.mxu0
    %v2485 = vadd.f32 0.0, %v2484
    %v2486 = vpop.f32.mrf.mxu0
    %v2487 = vadd.f32 0.0, %v2486
    %v2488 = vpop.f32.mrf.mxu0
    %v2489 = vadd.f32 0.0, %v2488
    %v2490 = vpop.f32.mrf.mxu0
    %v2491 = vadd.f32 0.0, %v2490
    %2492 = vdwg.mxu0
    %2493 = vmatprep.subr.bf16.mxu0 0
    %2494 = vmatpush1.bf16.msra.mxu0 0
    %2495 = vmatprep.subr.bf16.mxu0 0
    %2496 = vmatpush1.bf16.msra.mxu0 0
    %2497 = vmatprep.subr.bf16.mxu0 0
    %2498 = vmatpush1.bf16.msra.mxu0 0
    %2499 = vmatprep.subr.bf16.mxu0 %v238
    %2500 = vmatpush1.bf16.msra.mxu0 %v235
    %2501 = vmatprep.subr.bf16.mxu0 %v191
    %2502 = vmatpush1.bf16.msra.mxu0 %v190
    %2503 = vmatprep.subr.bf16.mxu0 %v187
    %2504 = vmatpush1.bf16.msra.mxu0 %v186
    %2505 = vmatprep.subr.bf16.mxu0 %v183
    %2506 = vmatpush1.bf16.msra.mxu0 %v182
    %2507 = vmatprep.subr.bf16.mxu0 %v179
    %2508 = vmatpush1.bf16.msra.mxu0 %v178
    %2509 = vmatprep.subr.bf16.mxu0 0
    %2510 = vmatpush2.bf16.msra.mxu0 0
    %2511 = vmatprep.subr.bf16.mxu0 0
    %2512 = vmatpush2.bf16.msra.mxu0 0
    %2513 = vmatprep.subr.bf16.mxu0 0
    %2514 = vmatpush2.bf16.msra.mxu0 0
    %2515 = vmatprep.subr.bf16.mxu0 0
    %2516 = vmatpush2.bf16.msra.mxu0 0
    %2517 = vmatprep.subr.bf16.mxu0 0
    %2518 = vmatpush2.bf16.msra.mxu0 0
    %2519 = vmatprep.subr.bf16.mxu0 0
    %2520 = vmatpush2.bf16.msra.mxu0 0
    %2521 = vmatprep.subr.bf16.mxu0 0
    %2522 = vmatpush2.bf16.msra.mxu0 0
    %2523 = vmatprep.subr.bf16.mxu0 0
    %2524 = vmatpush2.bf16.msra.mxu0 0
    %2525 = vmatprep.mubr.bf16.mxu0 0
    %2526 = vmatmul.mubr.bf16.gmra.mxu0 %v2409
    %v2527 = vpop.f32.mrf.mxu0
    %v2528 = vadd.f32 0.0, %v2527
    %v2529 = vpop.f32.mrf.mxu0
    %v2530 = vadd.f32 0.0, %v2529
    %v2531 = vpop.f32.mrf.mxu0
    %v2532 = vadd.f32 0.0, %v2531
    %v2533 = vpop.f32.mrf.mxu0
    %v2534 = vadd.f32 0.0, %v2533
    %2535 = vmatprep.mubr.bf16.mxu0 0
    %2536 = vmatmul.mubr.bf16.gmra.mxu0 %v2412
    %v2537 = vpop.f32.mrf.mxu0
    %v2538 = vadd.f32 0.0, %v2537
    %v2539 = vpop.f32.mrf.mxu0
    %v2540 = vadd.f32 0.0, %v2539
    %v2541 = vpop.f32.mrf.mxu0
    %v2542 = vadd.f32 0.0, %v2541
    %v2543 = vpop.f32.mrf.mxu0
    %v2544 = vadd.f32 0.0, %v2543
    %2545 = vmatprep.mubr.bf16.mxu0 0
    %2546 = vmatmul.mubr.bf16.gmra.mxu0 %v2415
    %v2547 = vpop.f32.mrf.mxu0
    %v2548 = vadd.f32 0.0, %v2547
    %v2549 = vpop.f32.mrf.mxu0
    %v2550 = vadd.f32 0.0, %v2549
    %v2551 = vpop.f32.mrf.mxu0
    %v2552 = vadd.f32 0.0, %v2551
    %v2553 = vpop.f32.mrf.mxu0
    %v2554 = vadd.f32 0.0, %v2553
    %2555 = vmatprep.mubr.bf16.mxu0 0
    %2556 = vmatmul.mubr.bf16.gmra.mxu0 %v2418
    %v2557 = vpop.f32.mrf.mxu0
    %v2558 = vadd.f32 0.0, %v2557
    %v2559 = vpop.f32.mrf.mxu0
    %v2560 = vadd.f32 0.0, %v2559
    %v2561 = vpop.f32.mrf.mxu0
    %v2562 = vadd.f32 0.0, %v2561
    %v2563 = vpop.f32.mrf.mxu0
    %v2564 = vadd.f32 0.0, %v2563
    %2565 = vdwg.mxu0
    %2566 = vmatprep.subr.bf16.mxu0 0
    %2567 = vmatpush1.bf16.msra.mxu0 0
    %2568 = vmatprep.subr.bf16.mxu0 0
    %2569 = vmatpush1.bf16.msra.mxu0 0
    %2570 = vmatprep.subr.bf16.mxu0 0
    %2571 = vmatpush1.bf16.msra.mxu0 0
    %2572 = vmatprep.subr.bf16.mxu0 %v512
    %2573 = vmatpush1.bf16.msra.mxu0 %v509
    %2574 = vmatprep.subr.bf16.mxu0 %v473
    %2575 = vmatpush1.bf16.msra.mxu0 %v472
    %2576 = vmatprep.subr.bf16.mxu0 %v469
    %2577 = vmatpush1.bf16.msra.mxu0 %v468
    %2578 = vmatprep.subr.bf16.mxu0 %v465
    %2579 = vmatpush1.bf16.msra.mxu0 %v464
    %2580 = vmatprep.subr.bf16.mxu0 %v461
    %2581 = vmatpush1.bf16.msra.mxu0 %v460
    %2582 = vmatprep.subr.bf16.mxu0 0
    %2583 = vmatpush2.bf16.msra.mxu0 0
    %2584 = vmatprep.subr.bf16.mxu0 0
    %2585 = vmatpush2.bf16.msra.mxu0 0
    %2586 = vmatprep.subr.bf16.mxu0 0
    %2587 = vmatpush2.bf16.msra.mxu0 0
    %2588 = vmatprep.subr.bf16.mxu0 0
    %2589 = vmatpush2.bf16.msra.mxu0 0
    %2590 = vmatprep.subr.bf16.mxu0 0
    %2591 = vmatpush2.bf16.msra.mxu0 0
    %2592 = vmatprep.subr.bf16.mxu0 0
    %2593 = vmatpush2.bf16.msra.mxu0 0
    %2594 = vmatprep.subr.bf16.mxu0 0
    %2595 = vmatpush2.bf16.msra.mxu0 0
    %2596 = vmatprep.subr.bf16.mxu0 0
    %2597 = vmatpush2.bf16.msra.mxu0 0
    %2598 = vmatprep.mubr.bf16.mxu0 0
    %2599 = vmatmul.mubr.bf16.gmra.mxu0 %v2126
    %v2600 = vpop.f32.mrf.mxu0
    %v2601 = vadd.f32 %v2455, %v2600
    %v2602 = vpop.f32.mrf.mxu0
    %v2603 = vadd.f32 %v2457, %v2602
    %v2604 = vpop.f32.mrf.mxu0
    %v2605 = vadd.f32 %v2459, %v2604
    %v2606 = vpop.f32.mrf.mxu0
    %v2607 = vadd.f32 %v2461, %v2606
    %2608 = vmatprep.mubr.bf16.mxu0 0
    %2609 = vmatmul.mubr.bf16.gmra.mxu0 %v2129
    %v2610 = vpop.f32.mrf.mxu0
    %v2611 = vadd.f32 %v2465, %v2610
    %v2612 = vpop.f32.mrf.mxu0
    %v2613 = vadd.f32 %v2467, %v2612
    %v2614 = vpop.f32.mrf.mxu0
    %v2615 = vadd.f32 %v2469, %v2614
    %v2616 = vpop.f32.mrf.mxu0
    %v2617 = vadd.f32 %v2471, %v2616
    %2618 = vmatprep.mubr.bf16.mxu0 0
    %2619 = vmatmul.mubr.bf16.gmra.mxu0 %v2132
    %v2620 = vpop.f32.mrf.mxu0
    %v2621 = vadd.f32 %v2475, %v2620
    %v2622 = vpop.f32.mrf.mxu0
    %v2623 = vadd.f32 %v2477, %v2622
    %v2624 = vpop.f32.mrf.mxu0
    %v2625 = vadd.f32 %v2479, %v2624
    %v2626 = vpop.f32.mrf.mxu0
    %v2627 = vadd.f32 %v2481, %v2626
    %2628 = vmatprep.mubr.bf16.mxu0 0
    %2629 = vmatmul.mubr.bf16.gmra.mxu0 %v2135
    %v2630 = vpop.f32.mrf.mxu0
    %v2631 = vadd.f32 %v2485, %v2630
    %v2632 = vpop.f32.mrf.mxu0
    %v2633 = vadd.f32 %v2487, %v2632
    %v2634 = vpop.f32.mrf.mxu0
    %v2635 = vadd.f32 %v2489, %v2634
    %v2636 = vpop.f32.mrf.mxu0
    %v2637 = vadd.f32 %v2491, %v2636
    %2638 = vdwg.mxu0
    %2639 = vmatprep.subr.bf16.mxu0 0
    %2640 = vmatpush1.bf16.msra.mxu0 0
    %2641 = vmatprep.subr.bf16.mxu0 0
    %2642 = vmatpush1.bf16.msra.mxu0 0
    %2643 = vmatprep.subr.bf16.mxu0 0
    %2644 = vmatpush1.bf16.msra.mxu0 0
    %2645 = vmatprep.subr.bf16.mxu0 %v518
    %2646 = vmatpush1.bf16.msra.mxu0 %v515
    %2647 = vmatprep.subr.bf16.mxu0 %v475
    %2648 = vmatpush1.bf16.msra.mxu0 %v474
    %2649 = vmatprep.subr.bf16.mxu0 %v471
    %2650 = vmatpush1.bf16.msra.mxu0 %v470
    %2651 = vmatprep.subr.bf16.mxu0 %v467
    %2652 = vmatpush1.bf16.msra.mxu0 %v466
    %2653 = vmatprep.subr.bf16.mxu0 %v463
    %2654 = vmatpush1.bf16.msra.mxu0 %v462
    %2655 = vmatprep.subr.bf16.mxu0 0
    %2656 = vmatpush2.bf16.msra.mxu0 0
    %2657 = vmatprep.subr.bf16.mxu0 0
    %2658 = vmatpush2.bf16.msra.mxu0 0
    %2659 = vmatprep.subr.bf16.mxu0 0
    %2660 = vmatpush2.bf16.msra.mxu0 0
    %2661 = vmatprep.subr.bf16.mxu0 0
    %2662 = vmatpush2.bf16.msra.mxu0 0
    %2663 = vmatprep.subr.bf16.mxu0 0
    %2664 = vmatpush2.bf16.msra.mxu0 0
    %2665 = vmatprep.subr.bf16.mxu0 0
    %2666 = vmatpush2.bf16.msra.mxu0 0
    %2667 = vmatprep.subr.bf16.mxu0 0
    %2668 = vmatpush2.bf16.msra.mxu0 0
    %2669 = vmatprep.subr.bf16.mxu0 0
    %2670 = vmatpush2.bf16.msra.mxu0 0
    %2671 = vmatprep.mubr.bf16.mxu0 0
    %2672 = vmatmul.mubr.bf16.gmra.mxu0 %v2126
    %v2673 = vpop.f32.mrf.mxu0
    %v2674 = vadd.f32 %v2528, %v2673
    %v2675 = vpop.f32.mrf.mxu0
    %v2676 = vadd.f32 %v2530, %v2675
    %v2677 = vpop.f32.mrf.mxu0
    %v2678 = vadd.f32 %v2532, %v2677
    %v2679 = vpop.f32.mrf.mxu0
    %v2680 = vadd.f32 %v2534, %v2679
    %2681 = vmatprep.mubr.bf16.mxu0 0
    %2682 = vmatmul.mubr.bf16.gmra.mxu0 %v2129
    %v2683 = vpop.f32.mrf.mxu0
    %v2684 = vadd.f32 %v2538, %v2683
    %v2685 = vpop.f32.mrf.mxu0
    %v2686 = vadd.f32 %v2540, %v2685
    %v2687 = vpop.f32.mrf.mxu0
    %v2688 = vadd.f32 %v2542, %v2687
    %v2689 = vpop.f32.mrf.mxu0
    %v2690 = vadd.f32 %v2544, %v2689
    %2691 = vmatprep.mubr.bf16.mxu0 0
    %2692 = vmatmul.mubr.bf16.gmra.mxu0 %v2132
    %v2693 = vpop.f32.mrf.mxu0
    %v2694 = vadd.f32 %v2548, %v2693
    %v2695 = vpop.f32.mrf.mxu0
    %v2696 = vadd.f32 %v2550, %v2695
    %v2697 = vpop.f32.mrf.mxu0
    %v2698 = vadd.f32 %v2552, %v2697
    %v2699 = vpop.f32.mrf.mxu0
    %v2700 = vadd.f32 %v2554, %v2699
    %2701 = vmatprep.mubr.bf16.mxu0 0
    %2702 = vmatmul.mubr.bf16.gmra.mxu0 %v2135
    %v2703 = vpop.f32.mrf.mxu0
    %v2704 = vadd.f32 %v2558, %v2703
    %v2705 = vpop.f32.mrf.mxu0
    %v2706 = vadd.f32 %v2560, %v2705
    %v2707 = vpop.f32.mrf.mxu0
    %v2708 = vadd.f32 %v2562, %v2707
    %v2709 = vpop.f32.mrf.mxu0
    %v2710 = vadd.f32 %v2564, %v2709
    %2711 = vdwg.mxu0
    %s2712 = scalar_lea.vmem %s0, 320
    %v2713 = vld [vmem:[%s2712] sm:$0xf]
    %v2714 = vld [vmem:[%s2712 + $0x4] sm:$0xf]
    %v2715 = vld [vmem:[%s2712 + $0x8] sm:$0xf]
    %v2716 = vld [vmem:[%s2712 + $0xc] sm:$0xf]
    %v2717 = vld [vmem:[%s2712 + $0x10] sm:$0xf]
    %v2718 = vld [vmem:[%s2712 + $0x14] sm:$0xf]
    %v2719 = vld [vmem:[%s2712 + $0x18] sm:$0xf]
    %v2720 = vld [vmem:[%s2712 + $0x1c] sm:$0xf]
    %v2729 = vunpack.c.l.b16 %v2713
    %v2730 = vunpack.c.l.b16 %v2714
    %v2731 = vunpack.c.l.b16 %v2715
    %v2732 = vunpack.c.l.b16 %v2716
    %v2733 = vunpack.c.l.b16 %v2717
    %v2734 = vunpack.c.l.b16 %v2718
    %v2735 = vunpack.c.l.b16 %v2719
    %v2736 = vunpack.c.l.b16 %v2720
    %v2737 = vpack.c.b16 %v2730, %v2729
    %v2738 = vpack.c.b16 %v2732, %v2731
    %v2739 = vpack.c.b16 %v2734, %v2733
    %v2740 = vpack.c.b16 %v2736, %v2735
    %v2742 = vsel %vm212, %v2737, 0
    %v2745 = vsel %vm212, %v2738, 0
    %v2748 = vsel %vm212, %v2739, 0
    %v2751 = vsel %vm212, %v2740, 0
    %2753 = vmatprep.subr.bf16.mxu0 0
    %2754 = vmatpush1.bf16.msra.mxu0 0
    %2755 = vmatprep.subr.bf16.mxu0 0
    %2756 = vmatpush1.bf16.msra.mxu0 0
    %2757 = vmatprep.subr.bf16.mxu0 0
    %2758 = vmatpush1.bf16.msra.mxu0 0
    %2759 = vmatprep.subr.bf16.mxu0 %v820
    %2760 = vmatpush1.bf16.msra.mxu0 %v817
    %2761 = vmatprep.subr.bf16.mxu0 %v781
    %2762 = vmatpush1.bf16.msra.mxu0 %v780
    %2763 = vmatprep.subr.bf16.mxu0 %v777
    %2764 = vmatpush1.bf16.msra.mxu0 %v776
    %2765 = vmatprep.subr.bf16.mxu0 %v773
    %2766 = vmatpush1.bf16.msra.mxu0 %v772
    %2767 = vmatprep.subr.bf16.mxu0 %v769
    %2768 = vmatpush1.bf16.msra.mxu0 %v768
    %2769 = vmatprep.subr.bf16.mxu0 0
    %2770 = vmatpush2.bf16.msra.mxu0 0
    %2771 = vmatprep.subr.bf16.mxu0 0
    %2772 = vmatpush2.bf16.msra.mxu0 0
    %2773 = vmatprep.subr.bf16.mxu0 0
    %2774 = vmatpush2.bf16.msra.mxu0 0
    %2775 = vmatprep.subr.bf16.mxu0 0
    %2776 = vmatpush2.bf16.msra.mxu0 0
    %2777 = vmatprep.subr.bf16.mxu0 0
    %2778 = vmatpush2.bf16.msra.mxu0 0
    %2779 = vmatprep.subr.bf16.mxu0 0
    %2780 = vmatpush2.bf16.msra.mxu0 0
    %2781 = vmatprep.subr.bf16.mxu0 0
    %2782 = vmatpush2.bf16.msra.mxu0 0
    %2783 = vmatprep.subr.bf16.mxu0 0
    %2784 = vmatpush2.bf16.msra.mxu0 0
    %2785 = vmatprep.mubr.bf16.mxu0 0
    %2786 = vmatmul.mubr.bf16.gmra.mxu0 %v2742
    %v2787 = vpop.f32.mrf.mxu0
    %v2788 = vadd.f32 0.0, %v2787
    %v2789 = vpop.f32.mrf.mxu0
    %v2790 = vadd.f32 0.0, %v2789
    %v2791 = vpop.f32.mrf.mxu0
    %v2792 = vadd.f32 0.0, %v2791
    %v2793 = vpop.f32.mrf.mxu0
    %v2794 = vadd.f32 0.0, %v2793
    %2795 = vmatprep.mubr.bf16.mxu0 0
    %2796 = vmatmul.mubr.bf16.gmra.mxu0 %v2745
    %v2797 = vpop.f32.mrf.mxu0
    %v2798 = vadd.f32 0.0, %v2797
    %v2799 = vpop.f32.mrf.mxu0
    %v2800 = vadd.f32 0.0, %v2799
    %v2801 = vpop.f32.mrf.mxu0
    %v2802 = vadd.f32 0.0, %v2801
    %v2803 = vpop.f32.mrf.mxu0
    %v2804 = vadd.f32 0.0, %v2803
    %2805 = vmatprep.mubr.bf16.mxu0 0
    %2806 = vmatmul.mubr.bf16.gmra.mxu0 %v2748
    %v2807 = vpop.f32.mrf.mxu0
    %v2808 = vadd.f32 0.0, %v2807
    %v2809 = vpop.f32.mrf.mxu0
    %v2810 = vadd.f32 0.0, %v2809
    %v2811 = vpop.f32.mrf.mxu0
    %v2812 = vadd.f32 0.0, %v2811
    %v2813 = vpop.f32.mrf.mxu0
    %v2814 = vadd.f32 0.0, %v2813
    %2815 = vmatprep.mubr.bf16.mxu0 0
    %2816 = vmatmul.mubr.bf16.gmra.mxu0 %v2751
    %v2817 = vpop.f32.mrf.mxu0
    %v2818 = vadd.f32 0.0, %v2817
    %v2819 = vpop.f32.mrf.mxu0
    %v2820 = vadd.f32 0.0, %v2819
    %v2821 = vpop.f32.mrf.mxu0
    %v2822 = vadd.f32 0.0, %v2821
    %v2823 = vpop.f32.mrf.mxu0
    %v2824 = vadd.f32 0.0, %v2823
    %2825 = vdwg.mxu0
    %2826 = vmatprep.subr.bf16.mxu0 0
    %2827 = vmatpush1.bf16.msra.mxu0 0
    %2828 = vmatprep.subr.bf16.mxu0 0
    %2829 = vmatpush1.bf16.msra.mxu0 0
    %2830 = vmatprep.subr.bf16.mxu0 0
    %2831 = vmatpush1.bf16.msra.mxu0 0
    %2832 = vmatprep.subr.bf16.mxu0 %v826
    %2833 = vmatpush1.bf16.msra.mxu0 %v823
    %2834 = vmatprep.subr.bf16.mxu0 %v783
    %2835 = vmatpush1.bf16.msra.mxu0 %v782
    %2836 = vmatprep.subr.bf16.mxu0 %v779
    %2837 = vmatpush1.bf16.msra.mxu0 %v778
    %2838 = vmatprep.subr.bf16.mxu0 %v775
    %2839 = vmatpush1.bf16.msra.mxu0 %v774
    %2840 = vmatprep.subr.bf16.mxu0 %v771
    %2841 = vmatpush1.bf16.msra.mxu0 %v770
    %2842 = vmatprep.subr.bf16.mxu0 0
    %2843 = vmatpush2.bf16.msra.mxu0 0
    %2844 = vmatprep.subr.bf16.mxu0 0
    %2845 = vmatpush2.bf16.msra.mxu0 0
    %2846 = vmatprep.subr.bf16.mxu0 0
    %2847 = vmatpush2.bf16.msra.mxu0 0
    %2848 = vmatprep.subr.bf16.mxu0 0
    %2849 = vmatpush2.bf16.msra.mxu0 0
    %2850 = vmatprep.subr.bf16.mxu0 0
    %2851 = vmatpush2.bf16.msra.mxu0 0
    %2852 = vmatprep.subr.bf16.mxu0 0
    %2853 = vmatpush2.bf16.msra.mxu0 0
    %2854 = vmatprep.subr.bf16.mxu0 0
    %2855 = vmatpush2.bf16.msra.mxu0 0
    %2856 = vmatprep.subr.bf16.mxu0 0
    %2857 = vmatpush2.bf16.msra.mxu0 0
    %2858 = vmatprep.mubr.bf16.mxu0 0
    %2859 = vmatmul.mubr.bf16.gmra.mxu0 %v2742
    %v2860 = vpop.f32.mrf.mxu0
    %v2861 = vadd.f32 0.0, %v2860
    %v2862 = vpop.f32.mrf.mxu0
    %v2863 = vadd.f32 0.0, %v2862
    %v2864 = vpop.f32.mrf.mxu0
    %v2865 = vadd.f32 0.0, %v2864
    %v2866 = vpop.f32.mrf.mxu0
    %v2867 = vadd.f32 0.0, %v2866
    %2868 = vmatprep.mubr.bf16.mxu0 0
    %2869 = vmatmul.mubr.bf16.gmra.mxu0 %v2745
    %v2870 = vpop.f32.mrf.mxu0
    %v2871 = vadd.f32 0.0, %v2870
    %v2872 = vpop.f32.mrf.mxu0
    %v2873 = vadd.f32 0.0, %v2872
    %v2874 = vpop.f32.mrf.mxu0
    %v2875 = vadd.f32 0.0, %v2874
    %v2876 = vpop.f32.mrf.mxu0
    %v2877 = vadd.f32 0.0, %v2876
    %2878 = vmatprep.mubr.bf16.mxu0 0
    %2879 = vmatmul.mubr.bf16.gmra.mxu0 %v2748
    %v2880 = vpop.f32.mrf.mxu0
    %v2881 = vadd.f32 0.0, %v2880
    %v2882 = vpop.f32.mrf.mxu0
    %v2883 = vadd.f32 0.0, %v2882
    %v2884 = vpop.f32.mrf.mxu0
    %v2885 = vadd.f32 0.0, %v2884
    %v2886 = vpop.f32.mrf.mxu0
    %v2887 = vadd.f32 0.0, %v2886
    %2888 = vmatprep.mubr.bf16.mxu0 0
    %2889 = vmatmul.mubr.bf16.gmra.mxu0 %v2751
    %v2890 = vpop.f32.mrf.mxu0
    %v2891 = vadd.f32 0.0, %v2890
    %v2892 = vpop.f32.mrf.mxu0
    %v2893 = vadd.f32 0.0, %v2892
    %v2894 = vpop.f32.mrf.mxu0
    %v2895 = vadd.f32 0.0, %v2894
    %v2896 = vpop.f32.mrf.mxu0
    %v2897 = vadd.f32 0.0, %v2896
    %2898 = vdwg.mxu0
    %v2899 = vadd.f32 %v2601, %v2788
    %v2900 = vadd.f32 %v2603, %v2790
    %v2901 = vadd.f32 %v2674, %v2861
    %v2902 = vadd.f32 %v2676, %v2863
    %v2903 = vadd.f32 %v2605, %v2792
    %v2904 = vadd.f32 %v2607, %v2794
    %v2905 = vadd.f32 %v2678, %v2865
    %v2906 = vadd.f32 %v2680, %v2867
    %v2907 = vadd.f32 %v2611, %v2798
    %v2908 = vadd.f32 %v2613, %v2800
    %v2909 = vadd.f32 %v2684, %v2871
    %v2910 = vadd.f32 %v2686, %v2873
    %v2911 = vadd.f32 %v2615, %v2802
    %v2912 = vadd.f32 %v2617, %v2804
    %v2913 = vadd.f32 %v2688, %v2875
    %v2914 = vadd.f32 %v2690, %v2877
    %v2915 = vadd.f32 %v2621, %v2808
    %v2916 = vadd.f32 %v2623, %v2810
    %v2917 = vadd.f32 %v2694, %v2881
    %v2918 = vadd.f32 %v2696, %v2883
    %v2919 = vadd.f32 %v2625, %v2812
    %v2920 = vadd.f32 %v2627, %v2814
    %v2921 = vadd.f32 %v2698, %v2885
    %v2922 = vadd.f32 %v2700, %v2887
    %v2923 = vadd.f32 %v2631, %v2818
    %v2924 = vadd.f32 %v2633, %v2820
    %v2925 = vadd.f32 %v2704, %v2891
    %v2926 = vadd.f32 %v2706, %v2893
    %v2927 = vadd.f32 %v2635, %v2822
    %v2928 = vadd.f32 %v2637, %v2824
    %v2929 = vadd.f32 %v2708, %v2895
    %v2930 = vadd.f32 %v2710, %v2897
    %v2931 = vadd.f32 %v2899, %v1010
    %v2932 = vadd.f32 %v2900, %v1014
    %v2933 = vadd.f32 %v2901, %v1018
    %v2934 = vadd.f32 %v2902, %v1022
    %v2935 = vadd.f32 %v2903, %v1010
    %v2936 = vadd.f32 %v2904, %v1014
    %v2937 = vadd.f32 %v2905, %v1018
    %v2938 = vadd.f32 %v2906, %v1022
    %v2939 = vadd.f32 %v2907, %v1010
    %v2940 = vadd.f32 %v2908, %v1014
    %v2941 = vadd.f32 %v2909, %v1018
    %v2942 = vadd.f32 %v2910, %v1022
    %v2943 = vadd.f32 %v2911, %v1010
    %v2944 = vadd.f32 %v2912, %v1014
    %v2945 = vadd.f32 %v2913, %v1018
    %v2946 = vadd.f32 %v2914, %v1022
    %v2947 = vadd.f32 %v2915, %v1010
    %v2948 = vadd.f32 %v2916, %v1014
    %v2949 = vadd.f32 %v2917, %v1018
    %v2950 = vadd.f32 %v2918, %v1022
    %v2951 = vadd.f32 %v2919, %v1010
    %v2952 = vadd.f32 %v2920, %v1014
    %v2953 = vadd.f32 %v2921, %v1018
    %v2954 = vadd.f32 %v2922, %v1022
    %v2955 = vadd.f32 %v2923, %v1010
    %v2956 = vadd.f32 %v2924, %v1014
    %v2957 = vadd.f32 %v2925, %v1018
    %v2958 = vadd.f32 %v2926, %v1022
    %v2959 = vadd.f32 %v2927, %v1010
    %v2960 = vadd.f32 %v2928, %v1014
    %v2961 = vadd.f32 %v2929, %v1018
    %v2962 = vadd.f32 %v2930, %v1022
    %v2963 = vmax.f32 %v2931, 0.0
    %v2964 = vmax.f32 %v2932, 0.0
    %v2965 = vmax.f32 %v2933, 0.0
    %v2966 = vmax.f32 %v2934, 0.0
    %v2967 = vmax.f32 %v2935, 0.0
    %v2968 = vmax.f32 %v2936, 0.0
    %v2969 = vmax.f32 %v2937, 0.0
    %v2970 = vmax.f32 %v2938, 0.0
    %v2971 = vmax.f32 %v2939, 0.0
    %v2972 = vmax.f32 %v2940, 0.0
    %v2973 = vmax.f32 %v2941, 0.0
    %v2974 = vmax.f32 %v2942, 0.0
    %v2975 = vmax.f32 %v2943, 0.0
    %v2976 = vmax.f32 %v2944, 0.0
    %v2977 = vmax.f32 %v2945, 0.0
    %v2978 = vmax.f32 %v2946, 0.0
    %v2979 = vmax.f32 %v2947, 0.0
    %v2980 = vmax.f32 %v2948, 0.0
    %v2981 = vmax.f32 %v2949, 0.0
    %v2982 = vmax.f32 %v2950, 0.0
    %v2983 = vmax.f32 %v2951, 0.0
    %v2984 = vmax.f32 %v2952, 0.0
    %v2985 = vmax.f32 %v2953, 0.0
    %v2986 = vmax.f32 %v2954, 0.0
    %v2987 = vmax.f32 %v2955, 0.0
    %v2988 = vmax.f32 %v2956, 0.0
    %v2989 = vmax.f32 %v2957, 0.0
    %v2990 = vmax.f32 %v2958, 0.0
    %v2991 = vmax.f32 %v2959, 0.0
    %v2992 = vmax.f32 %v2960, 0.0
    %v2993 = vmax.f32 %v2961, 0.0
    %v2994 = vmax.f32 %v2962, 0.0
    %v2995 = vmax.f32 %v2347, %v2349
    %v2996 = vmax.f32 %v2348, %v2350
    %v2997 = vmax.f32 %v2351, %v2353
    %v2998 = vmax.f32 %v2352, %v2354
    %v2999 = vmax.f32 %v2355, %v2357
    %v3000 = vmax.f32 %v2356, %v2358
    %v3001 = vmax.f32 %v2359, %v2361
    %v3002 = vmax.f32 %v2360, %v2362
    %v3003 = vmax.f32 %v2363, %v2365
    %v3004 = vmax.f32 %v2364, %v2366
    %v3005 = vmax.f32 %v2367, %v2369
    %v3006 = vmax.f32 %v2368, %v2370
    %v3007 = vmax.f32 %v2371, %v2373
    %v3008 = vmax.f32 %v2372, %v2374
    %v3009 = vmax.f32 %v2375, %v2377
    %v3010 = vmax.f32 %v2376, %v2378
    %v3011 = vmax.f32 %v2963, %v2965
    %v3012 = vmax.f32 %v2964, %v2966
    %v3013 = vmax.f32 %v2967, %v2969
    %v3014 = vmax.f32 %v2968, %v2970
    %v3015 = vmax.f32 %v2971, %v2973
    %v3016 = vmax.f32 %v2972, %v2974
    %v3017 = vmax.f32 %v2975, %v2977
    %v3018 = vmax.f32 %v2976, %v2978
    %v3019 = vmax.f32 %v2979, %v2981
    %v3020 = vmax.f32 %v2980, %v2982
    %v3021 = vmax.f32 %v2983, %v2985
    %v3022 = vmax.f32 %v2984, %v2986
    %v3023 = vmax.f32 %v2987, %v2989
    %v3024 = vmax.f32 %v2988, %v2990
    %v3025 = vmax.f32 %v2991, %v2993
    %v3026 = vmax.f32 %v2992, %v2994
    %v3027 = vmax.f32 %v2995, %v3011
    %v3028 = vmax.f32 %v2996, %v3012
    %v3029 = vmax.f32 %v2997, %v3013
    %v3030 = vmax.f32 %v2998, %v3014
    %v3031 = vmax.f32 %v2999, %v3015
    %v3032 = vmax.f32 %v3000, %v3016
    %v3033 = vmax.f32 %v3001, %v3017
    %v3034 = vmax.f32 %v3002, %v3018
    %v3035 = vmax.f32 %v3003, %v3019
    %v3036 = vmax.f32 %v3004, %v3020
    %v3037 = vmax.f32 %v3005, %v3021
    %v3038 = vmax.f32 %v3006, %v3022
    %v3039 = vmax.f32 %v3007, %v3023
    %v3040 = vmax.f32 %v3008, %v3024
    %v3041 = vmax.f32 %v3009, %v3025
    %v3042 = vmax.f32 %v3010, %v3026
    %v3043 = vpack.c.bf16 %v3029, %v3027
    %v3044 = vpack.c.bf16 %v3030, %v3028
    %v3045 = vpack.c.bf16 %v3033, %v3031
    %v3046 = vpack.c.bf16 %v3034, %v3032
    %v3047 = vpack.c.bf16 %v3037, %v3035
    %v3048 = vpack.c.bf16 %v3038, %v3036
    %v3049 = vpack.c.bf16 %v3041, %v3039
    %v3050 = vpack.c.bf16 %v3042, %v3040
    %s3051 = scalar_lea.vmem %s0, 360
    %v3052 = vld [vmem:[%s3051] sm:$0xf]
    %v3053 = vld [vmem:[%s3051 + $0x4] sm:$0xf]
    %v3054 = vld [vmem:[%s3051 + $0x8] sm:$0xf]
    %v3055 = vld [vmem:[%s3051 + $0xc] sm:$0xf]
    %v3056 = vld [vmem:[%s3051 + $0x10] sm:$0xf]
    %v3057 = vld [vmem:[%s3051 + $0x14] sm:$0xf]
    %v3058 = vld [vmem:[%s3051 + $0x18] sm:$0xf]
    %v3059 = vld [vmem:[%s3051 + $0x1c] sm:$0xf]
    %v3068 = vunpack.c.l.b16 %v3052
    %v3069 = vunpack.c.l.b16 %v3053
    %v3070 = vunpack.c.l.b16 %v3054
    %v3071 = vunpack.c.l.b16 %v3055
    %v3072 = vunpack.c.l.b16 %v3056
    %v3073 = vunpack.c.l.b16 %v3057
    %v3074 = vunpack.c.l.b16 %v3058
    %v3075 = vunpack.c.l.b16 %v3059
    %v3076 = vpack.c.b16 %v3069, %v3068
    %v3077 = vpack.c.b16 %v3071, %v3070
    %v3078 = vpack.c.b16 %v3073, %v3072
    %v3079 = vpack.c.b16 %v3075, %v3074
    %v3081 = vsel %vm212, %v3076, 0
    %v3084 = vsel %vm212, %v3077, 0
    %v3087 = vsel %vm212, %v3078, 0
    %v3090 = vsel %vm212, %v3079, 0
    %3092 = vmatprep.subr.bf16.mxu0 0
    %3093 = vmatpush1.bf16.msra.mxu0 0
    %3094 = vmatprep.subr.bf16.mxu0 0
    %3095 = vmatpush1.bf16.msra.mxu0 0
    %3096 = vmatprep.subr.bf16.mxu0 0
    %3097 = vmatpush1.bf16.msra.mxu0 0
    %3098 = vmatprep.subr.bf16.mxu0 %v232
    %3099 = vmatpush1.bf16.msra.mxu0 %v229
    %3100 = vmatprep.subr.bf16.mxu0 %v189
    %3101 = vmatpush1.bf16.msra.mxu0 %v188
    %3102 = vmatprep.subr.bf16.mxu0 %v185
    %3103 = vmatpush1.bf16.msra.mxu0 %v184
    %3104 = vmatprep.subr.bf16.mxu0 %v181
    %3105 = vmatpush1.bf16.msra.mxu0 %v180
    %3106 = vmatprep.subr.bf16.mxu0 %v177
    %3107 = vmatpush1.bf16.msra.mxu0 %v176
    %3108 = vmatprep.subr.bf16.mxu0 0
    %3109 = vmatpush2.bf16.msra.mxu0 0
    %3110 = vmatprep.subr.bf16.mxu0 0
    %3111 = vmatpush2.bf16.msra.mxu0 0
    %3112 = vmatprep.subr.bf16.mxu0 0
    %3113 = vmatpush2.bf16.msra.mxu0 0
    %3114 = vmatprep.subr.bf16.mxu0 0
    %3115 = vmatpush2.bf16.msra.mxu0 0
    %3116 = vmatprep.subr.bf16.mxu0 0
    %3117 = vmatpush2.bf16.msra.mxu0 0
    %3118 = vmatprep.subr.bf16.mxu0 0
    %3119 = vmatpush2.bf16.msra.mxu0 0
    %3120 = vmatprep.subr.bf16.mxu0 0
    %3121 = vmatpush2.bf16.msra.mxu0 0
    %3122 = vmatprep.subr.bf16.mxu0 0
    %3123 = vmatpush2.bf16.msra.mxu0 0
    %3124 = vmatprep.mubr.bf16.mxu0 0
    %3125 = vmatmul.mubr.bf16.gmra.mxu0 %v3081
    %v3126 = vpop.f32.mrf.mxu0
    %v3127 = vadd.f32 0.0, %v3126
    %v3128 = vpop.f32.mrf.mxu0
    %v3129 = vadd.f32 0.0, %v3128
    %v3130 = vpop.f32.mrf.mxu0
    %v3131 = vadd.f32 0.0, %v3130
    %v3132 = vpop.f32.mrf.mxu0
    %v3133 = vadd.f32 0.0, %v3132
    %3134 = vmatprep.mubr.bf16.mxu0 0
    %3135 = vmatmul.mubr.bf16.gmra.mxu0 %v3084
    %v3136 = vpop.f32.mrf.mxu0
    %v3137 = vadd.f32 0.0, %v3136
    %v3138 = vpop.f32.mrf.mxu0
    %v3139 = vadd.f32 0.0, %v3138
    %v3140 = vpop.f32.mrf.mxu0
    %v3141 = vadd.f32 0.0, %v3140
    %v3142 = vpop.f32.mrf.mxu0
    %v3143 = vadd.f32 0.0, %v3142
    %3144 = vmatprep.mubr.bf16.mxu0 0
    %3145 = vmatmul.mubr.bf16.gmra.mxu0 %v3087
    %v3146 = vpop.f32.mrf.mxu0
    %v3147 = vadd.f32 0.0, %v3146
    %v3148 = vpop.f32.mrf.mxu0
    %v3149 = vadd.f32 0.0, %v3148
    %v3150 = vpop.f32.mrf.mxu0
    %v3151 = vadd.f32 0.0, %v3150
    %v3152 = vpop.f32.mrf.mxu0
    %v3153 = vadd.f32 0.0, %v3152
    %3154 = vmatprep.mubr.bf16.mxu0 0
    %3155 = vmatmul.mubr.bf16.gmra.mxu0 %v3090
    %v3156 = vpop.f32.mrf.mxu0
    %v3157 = vadd.f32 0.0, %v3156
    %v3158 = vpop.f32.mrf.mxu0
    %v3159 = vadd.f32 0.0, %v3158
    %v3160 = vpop.f32.mrf.mxu0
    %v3161 = vadd.f32 0.0, %v3160
    %v3162 = vpop.f32.mrf.mxu0
    %v3163 = vadd.f32 0.0, %v3162
    %3164 = vdwg.mxu0
    %3165 = vmatprep.subr.bf16.mxu0 0
    %3166 = vmatpush1.bf16.msra.mxu0 0
    %3167 = vmatprep.subr.bf16.mxu0 0
    %3168 = vmatpush1.bf16.msra.mxu0 0
    %3169 = vmatprep.subr.bf16.mxu0 0
    %3170 = vmatpush1.bf16.msra.mxu0 0
    %3171 = vmatprep.subr.bf16.mxu0 %v238
    %3172 = vmatpush1.bf16.msra.mxu0 %v235
    %3173 = vmatprep.subr.bf16.mxu0 %v191
    %3174 = vmatpush1.bf16.msra.mxu0 %v190
    %3175 = vmatprep.subr.bf16.mxu0 %v187
    %3176 = vmatpush1.bf16.msra.mxu0 %v186
    %3177 = vmatprep.subr.bf16.mxu0 %v183
    %3178 = vmatpush1.bf16.msra.mxu0 %v182
    %3179 = vmatprep.subr.bf16.mxu0 %v179
    %3180 = vmatpush1.bf16.msra.mxu0 %v178
    %3181 = vmatprep.subr.bf16.mxu0 0
    %3182 = vmatpush2.bf16.msra.mxu0 0
    %3183 = vmatprep.subr.bf16.mxu0 0
    %3184 = vmatpush2.bf16.msra.mxu0 0
    %3185 = vmatprep.subr.bf16.mxu0 0
    %3186 = vmatpush2.bf16.msra.mxu0 0
    %3187 = vmatprep.subr.bf16.mxu0 0
    %3188 = vmatpush2.bf16.msra.mxu0 0
    %3189 = vmatprep.subr.bf16.mxu0 0
    %3190 = vmatpush2.bf16.msra.mxu0 0
    %3191 = vmatprep.subr.bf16.mxu0 0
    %3192 = vmatpush2.bf16.msra.mxu0 0
    %3193 = vmatprep.subr.bf16.mxu0 0
    %3194 = vmatpush2.bf16.msra.mxu0 0
    %3195 = vmatprep.subr.bf16.mxu0 0
    %3196 = vmatpush2.bf16.msra.mxu0 0
    %3197 = vmatprep.mubr.bf16.mxu0 0
    %3198 = vmatmul.mubr.bf16.gmra.mxu0 %v3081
    %v3199 = vpop.f32.mrf.mxu0
    %v3200 = vadd.f32 0.0, %v3199
    %v3201 = vpop.f32.mrf.mxu0
    %v3202 = vadd.f32 0.0, %v3201
    %v3203 = vpop.f32.mrf.mxu0
    %v3204 = vadd.f32 0.0, %v3203
    %v3205 = vpop.f32.mrf.mxu0
    %v3206 = vadd.f32 0.0, %v3205
    %3207 = vmatprep.mubr.bf16.mxu0 0
    %3208 = vmatmul.mubr.bf16.gmra.mxu0 %v3084
    %v3209 = vpop.f32.mrf.mxu0
    %v3210 = vadd.f32 0.0, %v3209
    %v3211 = vpop.f32.mrf.mxu0
    %v3212 = vadd.f32 0.0, %v3211
    %v3213 = vpop.f32.mrf.mxu0
    %v3214 = vadd.f32 0.0, %v3213
    %v3215 = vpop.f32.mrf.mxu0
    %v3216 = vadd.f32 0.0, %v3215
    %3217 = vmatprep.mubr.bf16.mxu0 0
    %3218 = vmatmul.mubr.bf16.gmra.mxu0 %v3087
    %v3219 = vpop.f32.mrf.mxu0
    %v3220 = vadd.f32 0.0, %v3219
    %v3221 = vpop.f32.mrf.mxu0
    %v3222 = vadd.f32 0.0, %v3221
    %v3223 = vpop.f32.mrf.mxu0
    %v3224 = vadd.f32 0.0, %v3223
    %v3225 = vpop.f32.mrf.mxu0
    %v3226 = vadd.f32 0.0, %v3225
    %3227 = vmatprep.mubr.bf16.mxu0 0
    %3228 = vmatmul.mubr.bf16.gmra.mxu0 %v3090
    %v3229 = vpop.f32.mrf.mxu0
    %v3230 = vadd.f32 0.0, %v3229
    %v3231 = vpop.f32.mrf.mxu0
    %v3232 = vadd.f32 0.0, %v3231
    %v3233 = vpop.f32.mrf.mxu0
    %v3234 = vadd.f32 0.0, %v3233
    %v3235 = vpop.f32.mrf.mxu0
    %v3236 = vadd.f32 0.0, %v3235
    %3237 = vdwg.mxu0
    %3238 = vmatprep.subr.bf16.mxu0 0
    %3239 = vmatpush1.bf16.msra.mxu0 0
    %3240 = vmatprep.subr.bf16.mxu0 0
    %3241 = vmatpush1.bf16.msra.mxu0 0
    %3242 = vmatprep.subr.bf16.mxu0 0
    %3243 = vmatpush1.bf16.msra.mxu0 0
    %3244 = vmatprep.subr.bf16.mxu0 %v512
    %3245 = vmatpush1.bf16.msra.mxu0 %v509
    %3246 = vmatprep.subr.bf16.mxu0 %v473
    %3247 = vmatpush1.bf16.msra.mxu0 %v472
    %3248 = vmatprep.subr.bf16.mxu0 %v469
    %3249 = vmatpush1.bf16.msra.mxu0 %v468
    %3250 = vmatprep.subr.bf16.mxu0 %v465
    %3251 = vmatpush1.bf16.msra.mxu0 %v464
    %3252 = vmatprep.subr.bf16.mxu0 %v461
    %3253 = vmatpush1.bf16.msra.mxu0 %v460
    %3254 = vmatprep.subr.bf16.mxu0 0
    %3255 = vmatpush2.bf16.msra.mxu0 0
    %3256 = vmatprep.subr.bf16.mxu0 0
    %3257 = vmatpush2.bf16.msra.mxu0 0
    %3258 = vmatprep.subr.bf16.mxu0 0
    %3259 = vmatpush2.bf16.msra.mxu0 0
    %3260 = vmatprep.subr.bf16.mxu0 0
    %3261 = vmatpush2.bf16.msra.mxu0 0
    %3262 = vmatprep.subr.bf16.mxu0 0
    %3263 = vmatpush2.bf16.msra.mxu0 0
    %3264 = vmatprep.subr.bf16.mxu0 0
    %3265 = vmatpush2.bf16.msra.mxu0 0
    %3266 = vmatprep.subr.bf16.mxu0 0
    %3267 = vmatpush2.bf16.msra.mxu0 0
    %3268 = vmatprep.subr.bf16.mxu0 0
    %3269 = vmatpush2.bf16.msra.mxu0 0
    %3270 = vmatprep.mubr.bf16.mxu0 0
    %3271 = vmatmul.mubr.bf16.gmra.mxu0 %v2742
    %v3272 = vpop.f32.mrf.mxu0
    %v3273 = vadd.f32 %v3127, %v3272
    %v3274 = vpop.f32.mrf.mxu0
    %v3275 = vadd.f32 %v3129, %v3274
    %v3276 = vpop.f32.mrf.mxu0
    %v3277 = vadd.f32 %v3131, %v3276
    %v3278 = vpop.f32.mrf.mxu0
    %v3279 = vadd.f32 %v3133, %v3278
    %3280 = vmatprep.mubr.bf16.mxu0 0
    %3281 = vmatmul.mubr.bf16.gmra.mxu0 %v2745
    %v3282 = vpop.f32.mrf.mxu0
    %v3283 = vadd.f32 %v3137, %v3282
    %v3284 = vpop.f32.mrf.mxu0
    %v3285 = vadd.f32 %v3139, %v3284
    %v3286 = vpop.f32.mrf.mxu0
    %v3287 = vadd.f32 %v3141, %v3286
    %v3288 = vpop.f32.mrf.mxu0
    %v3289 = vadd.f32 %v3143, %v3288
    %3290 = vmatprep.mubr.bf16.mxu0 0
    %3291 = vmatmul.mubr.bf16.gmra.mxu0 %v2748
    %v3292 = vpop.f32.mrf.mxu0
    %v3293 = vadd.f32 %v3147, %v3292
    %v3294 = vpop.f32.mrf.mxu0
    %v3295 = vadd.f32 %v3149, %v3294
    %v3296 = vpop.f32.mrf.mxu0
    %v3297 = vadd.f32 %v3151, %v3296
    %v3298 = vpop.f32.mrf.mxu0
    %v3299 = vadd.f32 %v3153, %v3298
    %3300 = vmatprep.mubr.bf16.mxu0 0
    %3301 = vmatmul.mubr.bf16.gmra.mxu0 %v2751
    %v3302 = vpop.f32.mrf.mxu0
    %v3303 = vadd.f32 %v3157, %v3302
    %v3304 = vpop.f32.mrf.mxu0
    %v3305 = vadd.f32 %v3159, %v3304
    %v3306 = vpop.f32.mrf.mxu0
    %v3307 = vadd.f32 %v3161, %v3306
    %v3308 = vpop.f32.mrf.mxu0
    %v3309 = vadd.f32 %v3163, %v3308
    %3310 = vdwg.mxu0
    %3311 = vmatprep.subr.bf16.mxu0 0
    %3312 = vmatpush1.bf16.msra.mxu0 0
    %3313 = vmatprep.subr.bf16.mxu0 0
    %3314 = vmatpush1.bf16.msra.mxu0 0
    %3315 = vmatprep.subr.bf16.mxu0 0
    %3316 = vmatpush1.bf16.msra.mxu0 0
    %3317 = vmatprep.subr.bf16.mxu0 %v518
    %3318 = vmatpush1.bf16.msra.mxu0 %v515
    %3319 = vmatprep.subr.bf16.mxu0 %v475
    %3320 = vmatpush1.bf16.msra.mxu0 %v474
    %3321 = vmatprep.subr.bf16.mxu0 %v471
    %3322 = vmatpush1.bf16.msra.mxu0 %v470
    %3323 = vmatprep.subr.bf16.mxu0 %v467
    %3324 = vmatpush1.bf16.msra.mxu0 %v466
    %3325 = vmatprep.subr.bf16.mxu0 %v463
    %3326 = vmatpush1.bf16.msra.mxu0 %v462
    %3327 = vmatprep.subr.bf16.mxu0 0
    %3328 = vmatpush2.bf16.msra.mxu0 0
    %3329 = vmatprep.subr.bf16.mxu0 0
    %3330 = vmatpush2.bf16.msra.mxu0 0
    %3331 = vmatprep.subr.bf16.mxu0 0
    %3332 = vmatpush2.bf16.msra.mxu0 0
    %3333 = vmatprep.subr.bf16.mxu0 0
    %3334 = vmatpush2.bf16.msra.mxu0 0
    %3335 = vmatprep.subr.bf16.mxu0 0
    %3336 = vmatpush2.bf16.msra.mxu0 0
    %3337 = vmatprep.subr.bf16.mxu0 0
    %3338 = vmatpush2.bf16.msra.mxu0 0
    %3339 = vmatprep.subr.bf16.mxu0 0
    %3340 = vmatpush2.bf16.msra.mxu0 0
    %3341 = vmatprep.subr.bf16.mxu0 0
    %3342 = vmatpush2.bf16.msra.mxu0 0
    %3343 = vmatprep.mubr.bf16.mxu0 0
    %3344 = vmatmul.mubr.bf16.gmra.mxu0 %v2742
    %v3345 = vpop.f32.mrf.mxu0
    %v3346 = vadd.f32 %v3200, %v3345
    %v3347 = vpop.f32.mrf.mxu0
    %v3348 = vadd.f32 %v3202, %v3347
    %v3349 = vpop.f32.mrf.mxu0
    %v3350 = vadd.f32 %v3204, %v3349
    %v3351 = vpop.f32.mrf.mxu0
    %v3352 = vadd.f32 %v3206, %v3351
    %3353 = vmatprep.mubr.bf16.mxu0 0
    %3354 = vmatmul.mubr.bf16.gmra.mxu0 %v2745
    %v3355 = vpop.f32.mrf.mxu0
    %v3356 = vadd.f32 %v3210, %v3355
    %v3357 = vpop.f32.mrf.mxu0
    %v3358 = vadd.f32 %v3212, %v3357
    %v3359 = vpop.f32.mrf.mxu0
    %v3360 = vadd.f32 %v3214, %v3359
    %v3361 = vpop.f32.mrf.mxu0
    %v3362 = vadd.f32 %v3216, %v3361
    %3363 = vmatprep.mubr.bf16.mxu0 0
    %3364 = vmatmul.mubr.bf16.gmra.mxu0 %v2748
    %v3365 = vpop.f32.mrf.mxu0
    %v3366 = vadd.f32 %v3220, %v3365
    %v3367 = vpop.f32.mrf.mxu0
    %v3368 = vadd.f32 %v3222, %v3367
    %v3369 = vpop.f32.mrf.mxu0
    %v3370 = vadd.f32 %v3224, %v3369
    %v3371 = vpop.f32.mrf.mxu0
    %v3372 = vadd.f32 %v3226, %v3371
    %3373 = vmatprep.mubr.bf16.mxu0 0
    %3374 = vmatmul.mubr.bf16.gmra.mxu0 %v2751
    %v3375 = vpop.f32.mrf.mxu0
    %v3376 = vadd.f32 %v3230, %v3375
    %v3377 = vpop.f32.mrf.mxu0
    %v3378 = vadd.f32 %v3232, %v3377
    %v3379 = vpop.f32.mrf.mxu0
    %v3380 = vadd.f32 %v3234, %v3379
    %v3381 = vpop.f32.mrf.mxu0
    %v3382 = vadd.f32 %v3236, %v3381
    %3383 = vdwg.mxu0
    %s3384 = scalar_lea.vmem %s0, 400
    %v3385 = vld [vmem:[%s3384] sm:$0xf]
    %v3386 = vld [vmem:[%s3384 + $0x4] sm:$0xf]
    %v3387 = vld [vmem:[%s3384 + $0x8] sm:$0xf]
    %v3388 = vld [vmem:[%s3384 + $0xc] sm:$0xf]
    %v3389 = vld [vmem:[%s3384 + $0x10] sm:$0xf]
    %v3390 = vld [vmem:[%s3384 + $0x14] sm:$0xf]
    %v3391 = vld [vmem:[%s3384 + $0x18] sm:$0xf]
    %v3392 = vld [vmem:[%s3384 + $0x1c] sm:$0xf]
    %v3401 = vunpack.c.l.b16 %v3385
    %v3402 = vunpack.c.l.b16 %v3386
    %v3403 = vunpack.c.l.b16 %v3387
    %v3404 = vunpack.c.l.b16 %v3388
    %v3405 = vunpack.c.l.b16 %v3389
    %v3406 = vunpack.c.l.b16 %v3390
    %v3407 = vunpack.c.l.b16 %v3391
    %v3408 = vunpack.c.l.b16 %v3392
    %v3409 = vpack.c.b16 %v3402, %v3401
    %v3410 = vpack.c.b16 %v3404, %v3403
    %v3411 = vpack.c.b16 %v3406, %v3405
    %v3412 = vpack.c.b16 %v3408, %v3407
    %v3414 = vsel %vm212, %v3409, 0
    %v3417 = vsel %vm212, %v3410, 0
    %v3420 = vsel %vm212, %v3411, 0
    %v3423 = vsel %vm212, %v3412, 0
    %3425 = vmatprep.subr.bf16.mxu0 0
    %3426 = vmatpush1.bf16.msra.mxu0 0
    %3427 = vmatprep.subr.bf16.mxu0 0
    %3428 = vmatpush1.bf16.msra.mxu0 0
    %3429 = vmatprep.subr.bf16.mxu0 0
    %3430 = vmatpush1.bf16.msra.mxu0 0
    %3431 = vmatprep.subr.bf16.mxu0 %v820
    %3432 = vmatpush1.bf16.msra.mxu0 %v817
    %3433 = vmatprep.subr.bf16.mxu0 %v781
    %3434 = vmatpush1.bf16.msra.mxu0 %v780
    %3435 = vmatprep.subr.bf16.mxu0 %v777
    %3436 = vmatpush1.bf16.msra.mxu0 %v776
    %3437 = vmatprep.subr.bf16.mxu0 %v773
    %3438 = vmatpush1.bf16.msra.mxu0 %v772
    %3439 = vmatprep.subr.bf16.mxu0 %v769
    %3440 = vmatpush1.bf16.msra.mxu0 %v768
    %3441 = vmatprep.subr.bf16.mxu0 0
    %3442 = vmatpush2.bf16.msra.mxu0 0
    %3443 = vmatprep.subr.bf16.mxu0 0
    %3444 = vmatpush2.bf16.msra.mxu0 0
    %3445 = vmatprep.subr.bf16.mxu0 0
    %3446 = vmatpush2.bf16.msra.mxu0 0
    %3447 = vmatprep.subr.bf16.mxu0 0
    %3448 = vmatpush2.bf16.msra.mxu0 0
    %3449 = vmatprep.subr.bf16.mxu0 0
    %3450 = vmatpush2.bf16.msra.mxu0 0
    %3451 = vmatprep.subr.bf16.mxu0 0
    %3452 = vmatpush2.bf16.msra.mxu0 0
    %3453 = vmatprep.subr.bf16.mxu0 0
    %3454 = vmatpush2.bf16.msra.mxu0 0
    %3455 = vmatprep.subr.bf16.mxu0 0
    %3456 = vmatpush2.bf16.msra.mxu0 0
    %3457 = vmatprep.mubr.bf16.mxu0 0
    %3458 = vmatmul.mubr.bf16.gmra.mxu0 %v3414
    %v3459 = vpop.f32.mrf.mxu0
    %v3460 = vadd.f32 0.0, %v3459
    %v3461 = vpop.f32.mrf.mxu0
    %v3462 = vadd.f32 0.0, %v3461
    %v3463 = vpop.f32.mrf.mxu0
    %v3464 = vadd.f32 0.0, %v3463
    %v3465 = vpop.f32.mrf.mxu0
    %v3466 = vadd.f32 0.0, %v3465
    %3467 = vmatprep.mubr.bf16.mxu0 0
    %3468 = vmatmul.mubr.bf16.gmra.mxu0 %v3417
    %v3469 = vpop.f32.mrf.mxu0
    %v3470 = vadd.f32 0.0, %v3469
    %v3471 = vpop.f32.mrf.mxu0
    %v3472 = vadd.f32 0.0, %v3471
    %v3473 = vpop.f32.mrf.mxu0
    %v3474 = vadd.f32 0.0, %v3473
    %v3475 = vpop.f32.mrf.mxu0
    %v3476 = vadd.f32 0.0, %v3475
    %3477 = vmatprep.mubr.bf16.mxu0 0
    %3478 = vmatmul.mubr.bf16.gmra.mxu0 %v3420
    %v3479 = vpop.f32.mrf.mxu0
    %v3480 = vadd.f32 0.0, %v3479
    %v3481 = vpop.f32.mrf.mxu0
    %v3482 = vadd.f32 0.0, %v3481
    %v3483 = vpop.f32.mrf.mxu0
    %v3484 = vadd.f32 0.0, %v3483
    %v3485 = vpop.f32.mrf.mxu0
    %v3486 = vadd.f32 0.0, %v3485
    %3487 = vmatprep.mubr.bf16.mxu0 0
    %3488 = vmatmul.mubr.bf16.gmra.mxu0 %v3423
    %v3489 = vpop.f32.mrf.mxu0
    %v3490 = vadd.f32 0.0, %v3489
    %v3491 = vpop.f32.mrf.mxu0
    %v3492 = vadd.f32 0.0, %v3491
    %v3493 = vpop.f32.mrf.mxu0
    %v3494 = vadd.f32 0.0, %v3493
    %v3495 = vpop.f32.mrf.mxu0
    %v3496 = vadd.f32 0.0, %v3495
    %3497 = vdwg.mxu0
    %3498 = vmatprep.subr.bf16.mxu0 0
    %3499 = vmatpush1.bf16.msra.mxu0 0
    %3500 = vmatprep.subr.bf16.mxu0 0
    %3501 = vmatpush1.bf16.msra.mxu0 0
    %3502 = vmatprep.subr.bf16.mxu0 0
    %3503 = vmatpush1.bf16.msra.mxu0 0
    %3504 = vmatprep.subr.bf16.mxu0 %v826
    %3505 = vmatpush1.bf16.msra.mxu0 %v823
    %3506 = vmatprep.subr.bf16.mxu0 %v783
    %3507 = vmatpush1.bf16.msra.mxu0 %v782
    %3508 = vmatprep.subr.bf16.mxu0 %v779
    %3509 = vmatpush1.bf16.msra.mxu0 %v778
    %3510 = vmatprep.subr.bf16.mxu0 %v775
    %3511 = vmatpush1.bf16.msra.mxu0 %v774
    %3512 = vmatprep.subr.bf16.mxu0 %v771
    %3513 = vmatpush1.bf16.msra.mxu0 %v770
    %3514 = vmatprep.subr.bf16.mxu0 0
    %3515 = vmatpush2.bf16.msra.mxu0 0
    %3516 = vmatprep.subr.bf16.mxu0 0
    %3517 = vmatpush2.bf16.msra.mxu0 0
    %3518 = vmatprep.subr.bf16.mxu0 0
    %3519 = vmatpush2.bf16.msra.mxu0 0
    %3520 = vmatprep.subr.bf16.mxu0 0
    %3521 = vmatpush2.bf16.msra.mxu0 0
    %3522 = vmatprep.subr.bf16.mxu0 0
    %3523 = vmatpush2.bf16.msra.mxu0 0
    %3524 = vmatprep.subr.bf16.mxu0 0
    %3525 = vmatpush2.bf16.msra.mxu0 0
    %3526 = vmatprep.subr.bf16.mxu0 0
    %3527 = vmatpush2.bf16.msra.mxu0 0
    %3528 = vmatprep.subr.bf16.mxu0 0
    %3529 = vmatpush2.bf16.msra.mxu0 0
    %3530 = vmatprep.mubr.bf16.mxu0 0
    %3531 = vmatmul.mubr.bf16.gmra.mxu0 %v3414
    %v3532 = vpop.f32.mrf.mxu0
    %v3533 = vadd.f32 0.0, %v3532
    %v3534 = vpop.f32.mrf.mxu0
    %v3535 = vadd.f32 0.0, %v3534
    %v3536 = vpop.f32.mrf.mxu0
    %v3537 = vadd.f32 0.0, %v3536
    %v3538 = vpop.f32.mrf.mxu0
    %v3539 = vadd.f32 0.0, %v3538
    %3540 = vmatprep.mubr.bf16.mxu0 0
    %3541 = vmatmul.mubr.bf16.gmra.mxu0 %v3417
    %v3542 = vpop.f32.mrf.mxu0
    %v3543 = vadd.f32 0.0, %v3542
    %v3544 = vpop.f32.mrf.mxu0
    %v3545 = vadd.f32 0.0, %v3544
    %v3546 = vpop.f32.mrf.mxu0
    %v3547 = vadd.f32 0.0, %v3546
    %v3548 = vpop.f32.mrf.mxu0
    %v3549 = vadd.f32 0.0, %v3548
    %3550 = vmatprep.mubr.bf16.mxu0 0
    %3551 = vmatmul.mubr.bf16.gmra.mxu0 %v3420
    %v3552 = vpop.f32.mrf.mxu0
    %v3553 = vadd.f32 0.0, %v3552
    %v3554 = vpop.f32.mrf.mxu0
    %v3555 = vadd.f32 0.0, %v3554
    %v3556 = vpop.f32.mrf.mxu0
    %v3557 = vadd.f32 0.0, %v3556
    %v3558 = vpop.f32.mrf.mxu0
    %v3559 = vadd.f32 0.0, %v3558
    %3560 = vmatprep.mubr.bf16.mxu0 0
    %3561 = vmatmul.mubr.bf16.gmra.mxu0 %v3423
    %v3562 = vpop.f32.mrf.mxu0
    %v3563 = vadd.f32 0.0, %v3562
    %v3564 = vpop.f32.mrf.mxu0
    %v3565 = vadd.f32 0.0, %v3564
    %v3566 = vpop.f32.mrf.mxu0
    %v3567 = vadd.f32 0.0, %v3566
    %v3568 = vpop.f32.mrf.mxu0
    %v3569 = vadd.f32 0.0, %v3568
    %3570 = vdwg.mxu0
    %v3571 = vadd.f32 %v3273, %v3460
    %v3572 = vadd.f32 %v3275, %v3462
    %v3573 = vadd.f32 %v3346, %v3533
    %v3574 = vadd.f32 %v3348, %v3535
    %v3575 = vadd.f32 %v3277, %v3464
    %v3576 = vadd.f32 %v3279, %v3466
    %v3577 = vadd.f32 %v3350, %v3537
    %v3578 = vadd.f32 %v3352, %v3539
    %v3579 = vadd.f32 %v3283, %v3470
    %v3580 = vadd.f32 %v3285, %v3472
    %v3581 = vadd.f32 %v3356, %v3543
    %v3582 = vadd.f32 %v3358, %v3545
    %v3583 = vadd.f32 %v3287, %v3474
    %v3584 = vadd.f32 %v3289, %v3476
    %v3585 = vadd.f32 %v3360, %v3547
    %v3586 = vadd.f32 %v3362, %v3549
    %v3587 = vadd.f32 %v3293, %v3480
    %v3588 = vadd.f32 %v3295, %v3482
    %v3589 = vadd.f32 %v3366, %v3553
    %v3590 = vadd.f32 %v3368, %v3555
    %v3591 = vadd.f32 %v3297, %v3484
    %v3592 = vadd.f32 %v3299, %v3486
    %v3593 = vadd.f32 %v3370, %v3557
    %v3594 = vadd.f32 %v3372, %v3559
    %v3595 = vadd.f32 %v3303, %v3490
    %v3596 = vadd.f32 %v3305, %v3492
    %v3597 = vadd.f32 %v3376, %v3563
    %v3598 = vadd.f32 %v3378, %v3565
    %v3599 = vadd.f32 %v3307, %v3494
    %v3600 = vadd.f32 %v3309, %v3496
    %v3601 = vadd.f32 %v3380, %v3567
    %v3602 = vadd.f32 %v3382, %v3569
    %v3603 = vadd.f32 %v3571, %v1010
    %v3604 = vadd.f32 %v3572, %v1014
    %v3605 = vadd.f32 %v3573, %v1018
    %v3606 = vadd.f32 %v3574, %v1022
    %v3607 = vadd.f32 %v3575, %v1010
    %v3608 = vadd.f32 %v3576, %v1014
    %v3609 = vadd.f32 %v3577, %v1018
    %v3610 = vadd.f32 %v3578, %v1022
    %v3611 = vadd.f32 %v3579, %v1010
    %v3612 = vadd.f32 %v3580, %v1014
    %v3613 = vadd.f32 %v3581, %v1018
    %v3614 = vadd.f32 %v3582, %v1022
    %v3615 = vadd.f32 %v3583, %v1010
    %v3616 = vadd.f32 %v3584, %v1014
    %v3617 = vadd.f32 %v3585, %v1018
    %v3618 = vadd.f32 %v3586, %v1022
    %v3619 = vadd.f32 %v3587, %v1010
    %v3620 = vadd.f32 %v3588, %v1014
    %v3621 = vadd.f32 %v3589, %v1018
    %v3622 = vadd.f32 %v3590, %v1022
    %v3623 = vadd.f32 %v3591, %v1010
    %v3624 = vadd.f32 %v3592, %v1014
    %v3625 = vadd.f32 %v3593, %v1018
    %v3626 = vadd.f32 %v3594, %v1022
    %v3627 = vadd.f32 %v3595, %v1010
    %v3628 = vadd.f32 %v3596, %v1014
    %v3629 = vadd.f32 %v3597, %v1018
    %v3630 = vadd.f32 %v3598, %v1022
    %v3631 = vadd.f32 %v3599, %v1010
    %v3632 = vadd.f32 %v3600, %v1014
    %v3633 = vadd.f32 %v3601, %v1018
    %v3634 = vadd.f32 %v3602, %v1022
    %v3635 = vmax.f32 %v3603, 0.0
    %v3636 = vmax.f32 %v3604, 0.0
    %v3637 = vmax.f32 %v3605, 0.0
    %v3638 = vmax.f32 %v3606, 0.0
    %v3639 = vmax.f32 %v3607, 0.0
    %v3640 = vmax.f32 %v3608, 0.0
    %v3641 = vmax.f32 %v3609, 0.0
    %v3642 = vmax.f32 %v3610, 0.0
    %v3643 = vmax.f32 %v3611, 0.0
    %v3644 = vmax.f32 %v3612, 0.0
    %v3645 = vmax.f32 %v3613, 0.0
    %v3646 = vmax.f32 %v3614, 0.0
    %v3647 = vmax.f32 %v3615, 0.0
    %v3648 = vmax.f32 %v3616, 0.0
    %v3649 = vmax.f32 %v3617, 0.0
    %v3650 = vmax.f32 %v3618, 0.0
    %v3651 = vmax.f32 %v3619, 0.0
    %v3652 = vmax.f32 %v3620, 0.0
    %v3653 = vmax.f32 %v3621, 0.0
    %v3654 = vmax.f32 %v3622, 0.0
    %v3655 = vmax.f32 %v3623, 0.0
    %v3656 = vmax.f32 %v3624, 0.0
    %v3657 = vmax.f32 %v3625, 0.0
    %v3658 = vmax.f32 %v3626, 0.0
    %v3659 = vmax.f32 %v3627, 0.0
    %v3660 = vmax.f32 %v3628, 0.0
    %v3661 = vmax.f32 %v3629, 0.0
    %v3662 = vmax.f32 %v3630, 0.0
    %v3663 = vmax.f32 %v3631, 0.0
    %v3664 = vmax.f32 %v3632, 0.0
    %v3665 = vmax.f32 %v3633, 0.0
    %v3666 = vmax.f32 %v3634, 0.0
    %s3667 = scalar_lea.vmem %s0, 440
    %v3668 = vld [vmem:[%s3667] sm:$0xf]
    %v3669 = vld [vmem:[%s3667 + $0x4] sm:$0xf]
    %v3670 = vld [vmem:[%s3667 + $0x8] sm:$0xf]
    %v3671 = vld [vmem:[%s3667 + $0xc] sm:$0xf]
    %v3672 = vld [vmem:[%s3667 + $0x10] sm:$0xf]
    %v3673 = vld [vmem:[%s3667 + $0x14] sm:$0xf]
    %v3674 = vld [vmem:[%s3667 + $0x18] sm:$0xf]
    %v3675 = vld [vmem:[%s3667 + $0x1c] sm:$0xf]
    %v3684 = vunpack.c.l.b16 %v3668
    %v3685 = vunpack.c.l.b16 %v3669
    %v3686 = vunpack.c.l.b16 %v3670
    %v3687 = vunpack.c.l.b16 %v3671
    %v3688 = vunpack.c.l.b16 %v3672
    %v3689 = vunpack.c.l.b16 %v3673
    %v3690 = vunpack.c.l.b16 %v3674
    %v3691 = vunpack.c.l.b16 %v3675
    %v3692 = vpack.c.b16 %v3685, %v3684
    %v3693 = vpack.c.b16 %v3687, %v3686
    %v3694 = vpack.c.b16 %v3689, %v3688
    %v3695 = vpack.c.b16 %v3691, %v3690
    %v3697 = vsel %vm212, %v3692, 0
    %v3700 = vsel %vm212, %v3693, 0
    %v3703 = vsel %vm212, %v3694, 0
    %v3706 = vsel %vm212, %v3695, 0
    %3708 = vmatprep.subr.bf16.mxu0 0
    %3709 = vmatpush1.bf16.msra.mxu0 0
    %3710 = vmatprep.subr.bf16.mxu0 0
    %3711 = vmatpush1.bf16.msra.mxu0 0
    %3712 = vmatprep.subr.bf16.mxu0 0
    %3713 = vmatpush1.bf16.msra.mxu0 0
    %3714 = vmatprep.subr.bf16.mxu0 %v232
    %3715 = vmatpush1.bf16.msra.mxu0 %v229
    %3716 = vmatprep.subr.bf16.mxu0 %v189
    %3717 = vmatpush1.bf16.msra.mxu0 %v188
    %3718 = vmatprep.subr.bf16.mxu0 %v185
    %3719 = vmatpush1.bf16.msra.mxu0 %v184
    %3720 = vmatprep.subr.bf16.mxu0 %v181
    %3721 = vmatpush1.bf16.msra.mxu0 %v180
    %3722 = vmatprep.subr.bf16.mxu0 %v177
    %3723 = vmatpush1.bf16.msra.mxu0 %v176
    %3724 = vmatprep.subr.bf16.mxu0 0
    %3725 = vmatpush2.bf16.msra.mxu0 0
    %3726 = vmatprep.subr.bf16.mxu0 0
    %3727 = vmatpush2.bf16.msra.mxu0 0
    %3728 = vmatprep.subr.bf16.mxu0 0
    %3729 = vmatpush2.bf16.msra.mxu0 0
    %3730 = vmatprep.subr.bf16.mxu0 0
    %3731 = vmatpush2.bf16.msra.mxu0 0
    %3732 = vmatprep.subr.bf16.mxu0 0
    %3733 = vmatpush2.bf16.msra.mxu0 0
    %3734 = vmatprep.subr.bf16.mxu0 0
    %3735 = vmatpush2.bf16.msra.mxu0 0
    %3736 = vmatprep.subr.bf16.mxu0 0
    %3737 = vmatpush2.bf16.msra.mxu0 0
    %3738 = vmatprep.subr.bf16.mxu0 0
    %3739 = vmatpush2.bf16.msra.mxu0 0
    %3740 = vmatprep.mubr.bf16.mxu0 0
    %3741 = vmatmul.mubr.bf16.gmra.mxu0 %v3697
    %v3742 = vpop.f32.mrf.mxu0
    %v3743 = vadd.f32 0.0, %v3742
    %v3744 = vpop.f32.mrf.mxu0
    %v3745 = vadd.f32 0.0, %v3744
    %v3746 = vpop.f32.mrf.mxu0
    %v3747 = vadd.f32 0.0, %v3746
    %v3748 = vpop.f32.mrf.mxu0
    %v3749 = vadd.f32 0.0, %v3748
    %3750 = vmatprep.mubr.bf16.mxu0 0
    %3751 = vmatmul.mubr.bf16.gmra.mxu0 %v3700
    %v3752 = vpop.f32.mrf.mxu0
    %v3753 = vadd.f32 0.0, %v3752
    %v3754 = vpop.f32.mrf.mxu0
    %v3755 = vadd.f32 0.0, %v3754
    %v3756 = vpop.f32.mrf.mxu0
    %v3757 = vadd.f32 0.0, %v3756
    %v3758 = vpop.f32.mrf.mxu0
    %v3759 = vadd.f32 0.0, %v3758
    %3760 = vmatprep.mubr.bf16.mxu0 0
    %3761 = vmatmul.mubr.bf16.gmra.mxu0 %v3703
    %v3762 = vpop.f32.mrf.mxu0
    %v3763 = vadd.f32 0.0, %v3762
    %v3764 = vpop.f32.mrf.mxu0
    %v3765 = vadd.f32 0.0, %v3764
    %v3766 = vpop.f32.mrf.mxu0
    %v3767 = vadd.f32 0.0, %v3766
    %v3768 = vpop.f32.mrf.mxu0
    %v3769 = vadd.f32 0.0, %v3768
    %3770 = vmatprep.mubr.bf16.mxu0 0
    %3771 = vmatmul.mubr.bf16.gmra.mxu0 %v3706
    %v3772 = vpop.f32.mrf.mxu0
    %v3773 = vadd.f32 0.0, %v3772
    %v3774 = vpop.f32.mrf.mxu0
    %v3775 = vadd.f32 0.0, %v3774
    %v3776 = vpop.f32.mrf.mxu0
    %v3777 = vadd.f32 0.0, %v3776
    %v3778 = vpop.f32.mrf.mxu0
    %v3779 = vadd.f32 0.0, %v3778
    %3780 = vdwg.mxu0
    %3781 = vmatprep.subr.bf16.mxu0 0
    %3782 = vmatpush1.bf16.msra.mxu0 0
    %3783 = vmatprep.subr.bf16.mxu0 0
    %3784 = vmatpush1.bf16.msra.mxu0 0
    %3785 = vmatprep.subr.bf16.mxu0 0
    %3786 = vmatpush1.bf16.msra.mxu0 0
    %3787 = vmatprep.subr.bf16.mxu0 %v238
    %3788 = vmatpush1.bf16.msra.mxu0 %v235
    %3789 = vmatprep.subr.bf16.mxu0 %v191
    %3790 = vmatpush1.bf16.msra.mxu0 %v190
    %3791 = vmatprep.subr.bf16.mxu0 %v187
    %3792 = vmatpush1.bf16.msra.mxu0 %v186
    %3793 = vmatprep.subr.bf16.mxu0 %v183
    %3794 = vmatpush1.bf16.msra.mxu0 %v182
    %3795 = vmatprep.subr.bf16.mxu0 %v179
    %3796 = vmatpush1.bf16.msra.mxu0 %v178
    %3797 = vmatprep.subr.bf16.mxu0 0
    %3798 = vmatpush2.bf16.msra.mxu0 0
    %3799 = vmatprep.subr.bf16.mxu0 0
    %3800 = vmatpush2.bf16.msra.mxu0 0
    %3801 = vmatprep.subr.bf16.mxu0 0
    %3802 = vmatpush2.bf16.msra.mxu0 0
    %3803 = vmatprep.subr.bf16.mxu0 0
    %3804 = vmatpush2.bf16.msra.mxu0 0
    %3805 = vmatprep.subr.bf16.mxu0 0
    %3806 = vmatpush2.bf16.msra.mxu0 0
    %3807 = vmatprep.subr.bf16.mxu0 0
    %3808 = vmatpush2.bf16.msra.mxu0 0
    %3809 = vmatprep.subr.bf16.mxu0 0
    %3810 = vmatpush2.bf16.msra.mxu0 0
    %3811 = vmatprep.subr.bf16.mxu0 0
    %3812 = vmatpush2.bf16.msra.mxu0 0
    %3813 = vmatprep.mubr.bf16.mxu0 0
    %3814 = vmatmul.mubr.bf16.gmra.mxu0 %v3697
    %v3815 = vpop.f32.mrf.mxu0
    %v3816 = vadd.f32 0.0, %v3815
    %v3817 = vpop.f32.mrf.mxu0
    %v3818 = vadd.f32 0.0, %v3817
    %v3819 = vpop.f32.mrf.mxu0
    %v3820 = vadd.f32 0.0, %v3819
    %v3821 = vpop.f32.mrf.mxu0
    %v3822 = vadd.f32 0.0, %v3821
    %3823 = vmatprep.mubr.bf16.mxu0 0
    %3824 = vmatmul.mubr.bf16.gmra.mxu0 %v3700
    %v3825 = vpop.f32.mrf.mxu0
    %v3826 = vadd.f32 0.0, %v3825
    %v3827 = vpop.f32.mrf.mxu0
    %v3828 = vadd.f32 0.0, %v3827
    %v3829 = vpop.f32.mrf.mxu0
    %v3830 = vadd.f32 0.0, %v3829
    %v3831 = vpop.f32.mrf.mxu0
    %v3832 = vadd.f32 0.0, %v3831
    %3833 = vmatprep.mubr.bf16.mxu0 0
    %3834 = vmatmul.mubr.bf16.gmra.mxu0 %v3703
    %v3835 = vpop.f32.mrf.mxu0
    %v3836 = vadd.f32 0.0, %v3835
    %v3837 = vpop.f32.mrf.mxu0
    %v3838 = vadd.f32 0.0, %v3837
    %v3839 = vpop.f32.mrf.mxu0
    %v3840 = vadd.f32 0.0, %v3839
    %v3841 = vpop.f32.mrf.mxu0
    %v3842 = vadd.f32 0.0, %v3841
    %3843 = vmatprep.mubr.bf16.mxu0 0
    %3844 = vmatmul.mubr.bf16.gmra.mxu0 %v3706
    %v3845 = vpop.f32.mrf.mxu0
    %v3846 = vadd.f32 0.0, %v3845
    %v3847 = vpop.f32.mrf.mxu0
    %v3848 = vadd.f32 0.0, %v3847
    %v3849 = vpop.f32.mrf.mxu0
    %v3850 = vadd.f32 0.0, %v3849
    %v3851 = vpop.f32.mrf.mxu0
    %v3852 = vadd.f32 0.0, %v3851
    %3853 = vdwg.mxu0
    %3854 = vmatprep.subr.bf16.mxu0 0
    %3855 = vmatpush1.bf16.msra.mxu0 0
    %3856 = vmatprep.subr.bf16.mxu0 0
    %3857 = vmatpush1.bf16.msra.mxu0 0
    %3858 = vmatprep.subr.bf16.mxu0 0
    %3859 = vmatpush1.bf16.msra.mxu0 0
    %3860 = vmatprep.subr.bf16.mxu0 %v512
    %3861 = vmatpush1.bf16.msra.mxu0 %v509
    %3862 = vmatprep.subr.bf16.mxu0 %v473
    %3863 = vmatpush1.bf16.msra.mxu0 %v472
    %3864 = vmatprep.subr.bf16.mxu0 %v469
    %3865 = vmatpush1.bf16.msra.mxu0 %v468
    %3866 = vmatprep.subr.bf16.mxu0 %v465
    %3867 = vmatpush1.bf16.msra.mxu0 %v464
    %3868 = vmatprep.subr.bf16.mxu0 %v461
    %3869 = vmatpush1.bf16.msra.mxu0 %v460
    %3870 = vmatprep.subr.bf16.mxu0 0
    %3871 = vmatpush2.bf16.msra.mxu0 0
    %3872 = vmatprep.subr.bf16.mxu0 0
    %3873 = vmatpush2.bf16.msra.mxu0 0
    %3874 = vmatprep.subr.bf16.mxu0 0
    %3875 = vmatpush2.bf16.msra.mxu0 0
    %3876 = vmatprep.subr.bf16.mxu0 0
    %3877 = vmatpush2.bf16.msra.mxu0 0
    %3878 = vmatprep.subr.bf16.mxu0 0
    %3879 = vmatpush2.bf16.msra.mxu0 0
    %3880 = vmatprep.subr.bf16.mxu0 0
    %3881 = vmatpush2.bf16.msra.mxu0 0
    %3882 = vmatprep.subr.bf16.mxu0 0
    %3883 = vmatpush2.bf16.msra.mxu0 0
    %3884 = vmatprep.subr.bf16.mxu0 0
    %3885 = vmatpush2.bf16.msra.mxu0 0
    %3886 = vmatprep.mubr.bf16.mxu0 0
    %3887 = vmatmul.mubr.bf16.gmra.mxu0 %v3414
    %v3888 = vpop.f32.mrf.mxu0
    %v3889 = vadd.f32 %v3743, %v3888
    %v3890 = vpop.f32.mrf.mxu0
    %v3891 = vadd.f32 %v3745, %v3890
    %v3892 = vpop.f32.mrf.mxu0
    %v3893 = vadd.f32 %v3747, %v3892
    %v3894 = vpop.f32.mrf.mxu0
    %v3895 = vadd.f32 %v3749, %v3894
    %3896 = vmatprep.mubr.bf16.mxu0 0
    %3897 = vmatmul.mubr.bf16.gmra.mxu0 %v3417
    %v3898 = vpop.f32.mrf.mxu0
    %v3899 = vadd.f32 %v3753, %v3898
    %v3900 = vpop.f32.mrf.mxu0
    %v3901 = vadd.f32 %v3755, %v3900
    %v3902 = vpop.f32.mrf.mxu0
    %v3903 = vadd.f32 %v3757, %v3902
    %v3904 = vpop.f32.mrf.mxu0
    %v3905 = vadd.f32 %v3759, %v3904
    %3906 = vmatprep.mubr.bf16.mxu0 0
    %3907 = vmatmul.mubr.bf16.gmra.mxu0 %v3420
    %v3908 = vpop.f32.mrf.mxu0
    %v3909 = vadd.f32 %v3763, %v3908
    %v3910 = vpop.f32.mrf.mxu0
    %v3911 = vadd.f32 %v3765, %v3910
    %v3912 = vpop.f32.mrf.mxu0
    %v3913 = vadd.f32 %v3767, %v3912
    %v3914 = vpop.f32.mrf.mxu0
    %v3915 = vadd.f32 %v3769, %v3914
    %3916 = vmatprep.mubr.bf16.mxu0 0
    %3917 = vmatmul.mubr.bf16.gmra.mxu0 %v3423
    %v3918 = vpop.f32.mrf.mxu0
    %v3919 = vadd.f32 %v3773, %v3918
    %v3920 = vpop.f32.mrf.mxu0
    %v3921 = vadd.f32 %v3775, %v3920
    %v3922 = vpop.f32.mrf.mxu0
    %v3923 = vadd.f32 %v3777, %v3922
    %v3924 = vpop.f32.mrf.mxu0
    %v3925 = vadd.f32 %v3779, %v3924
    %3926 = vdwg.mxu0
    %3927 = vmatprep.subr.bf16.mxu0 0
    %3928 = vmatpush1.bf16.msra.mxu0 0
    %3929 = vmatprep.subr.bf16.mxu0 0
    %3930 = vmatpush1.bf16.msra.mxu0 0
    %3931 = vmatprep.subr.bf16.mxu0 0
    %3932 = vmatpush1.bf16.msra.mxu0 0
    %3933 = vmatprep.subr.bf16.mxu0 %v518
    %3934 = vmatpush1.bf16.msra.mxu0 %v515
    %3935 = vmatprep.subr.bf16.mxu0 %v475
    %3936 = vmatpush1.bf16.msra.mxu0 %v474
    %3937 = vmatprep.subr.bf16.mxu0 %v471
    %3938 = vmatpush1.bf16.msra.mxu0 %v470
    %3939 = vmatprep.subr.bf16.mxu0 %v467
    %3940 = vmatpush1.bf16.msra.mxu0 %v466
    %3941 = vmatprep.subr.bf16.mxu0 %v463
    %3942 = vmatpush1.bf16.msra.mxu0 %v462
    %3943 = vmatprep.subr.bf16.mxu0 0
    %3944 = vmatpush2.bf16.msra.mxu0 0
    %3945 = vmatprep.subr.bf16.mxu0 0
    %3946 = vmatpush2.bf16.msra.mxu0 0
    %3947 = vmatprep.subr.bf16.mxu0 0
    %3948 = vmatpush2.bf16.msra.mxu0 0
    %3949 = vmatprep.subr.bf16.mxu0 0
    %3950 = vmatpush2.bf16.msra.mxu0 0
    %3951 = vmatprep.subr.bf16.mxu0 0
    %3952 = vmatpush2.bf16.msra.mxu0 0
    %3953 = vmatprep.subr.bf16.mxu0 0
    %3954 = vmatpush2.bf16.msra.mxu0 0
    %3955 = vmatprep.subr.bf16.mxu0 0
    %3956 = vmatpush2.bf16.msra.mxu0 0
    %3957 = vmatprep.subr.bf16.mxu0 0
    %3958 = vmatpush2.bf16.msra.mxu0 0
    %3959 = vmatprep.mubr.bf16.mxu0 0
    %3960 = vmatmul.mubr.bf16.gmra.mxu0 %v3414
    %v3961 = vpop.f32.mrf.mxu0
    %v3962 = vadd.f32 %v3816, %v3961
    %v3963 = vpop.f32.mrf.mxu0
    %v3964 = vadd.f32 %v3818, %v3963
    %v3965 = vpop.f32.mrf.mxu0
    %v3966 = vadd.f32 %v3820, %v3965
    %v3967 = vpop.f32.mrf.mxu0
    %v3968 = vadd.f32 %v3822, %v3967
    %3969 = vmatprep.mubr.bf16.mxu0 0
    %3970 = vmatmul.mubr.bf16.gmra.mxu0 %v3417
    %v3971 = vpop.f32.mrf.mxu0
    %v3972 = vadd.f32 %v3826, %v3971
    %v3973 = vpop.f32.mrf.mxu0
    %v3974 = vadd.f32 %v3828, %v3973
    %v3975 = vpop.f32.mrf.mxu0
    %v3976 = vadd.f32 %v3830, %v3975
    %v3977 = vpop.f32.mrf.mxu0
    %v3978 = vadd.f32 %v3832, %v3977
    %3979 = vmatprep.mubr.bf16.mxu0 0
    %3980 = vmatmul.mubr.bf16.gmra.mxu0 %v3420
    %v3981 = vpop.f32.mrf.mxu0
    %v3982 = vadd.f32 %v3836, %v3981
    %v3983 = vpop.f32.mrf.mxu0
    %v3984 = vadd.f32 %v3838, %v3983
    %v3985 = vpop.f32.mrf.mxu0
    %v3986 = vadd.f32 %v3840, %v3985
    %v3987 = vpop.f32.mrf.mxu0
    %v3988 = vadd.f32 %v3842, %v3987
    %3989 = vmatprep.mubr.bf16.mxu0 0
    %3990 = vmatmul.mubr.bf16.gmra.mxu0 %v3423
    %v3991 = vpop.f32.mrf.mxu0
    %v3992 = vadd.f32 %v3846, %v3991
    %v3993 = vpop.f32.mrf.mxu0
    %v3994 = vadd.f32 %v3848, %v3993
    %v3995 = vpop.f32.mrf.mxu0
    %v3996 = vadd.f32 %v3850, %v3995
    %v3997 = vpop.f32.mrf.mxu0
    %v3998 = vadd.f32 %v3852, %v3997
    %3999 = vdwg.mxu0
    %s4000 = scalar_lea.vmem %s0, 480
    %v4001 = vld [vmem:[%s4000] sm:$0xf]
    %v4002 = vld [vmem:[%s4000 + $0x4] sm:$0xf]
    %v4003 = vld [vmem:[%s4000 + $0x8] sm:$0xf]
    %v4004 = vld [vmem:[%s4000 + $0xc] sm:$0xf]
    %v4005 = vld [vmem:[%s4000 + $0x10] sm:$0xf]
    %v4006 = vld [vmem:[%s4000 + $0x14] sm:$0xf]
    %v4007 = vld [vmem:[%s4000 + $0x18] sm:$0xf]
    %v4008 = vld [vmem:[%s4000 + $0x1c] sm:$0xf]
    %v4017 = vunpack.c.l.b16 %v4001
    %v4018 = vunpack.c.l.b16 %v4002
    %v4019 = vunpack.c.l.b16 %v4003
    %v4020 = vunpack.c.l.b16 %v4004
    %v4021 = vunpack.c.l.b16 %v4005
    %v4022 = vunpack.c.l.b16 %v4006
    %v4023 = vunpack.c.l.b16 %v4007
    %v4024 = vunpack.c.l.b16 %v4008
    %v4025 = vpack.c.b16 %v4018, %v4017
    %v4026 = vpack.c.b16 %v4020, %v4019
    %v4027 = vpack.c.b16 %v4022, %v4021
    %v4028 = vpack.c.b16 %v4024, %v4023
    %v4030 = vsel %vm212, %v4025, 0
    %v4033 = vsel %vm212, %v4026, 0
    %v4036 = vsel %vm212, %v4027, 0
    %v4039 = vsel %vm212, %v4028, 0
    %4041 = vmatprep.subr.bf16.mxu0 0
    %4042 = vmatpush1.bf16.msra.mxu0 0
    %4043 = vmatprep.subr.bf16.mxu0 0
    %4044 = vmatpush1.bf16.msra.mxu0 0
    %4045 = vmatprep.subr.bf16.mxu0 0
    %4046 = vmatpush1.bf16.msra.mxu0 0
    %4047 = vmatprep.subr.bf16.mxu0 %v820
    %4048 = vmatpush1.bf16.msra.mxu0 %v817
    %4049 = vmatprep.subr.bf16.mxu0 %v781
    %4050 = vmatpush1.bf16.msra.mxu0 %v780
    %4051 = vmatprep.subr.bf16.mxu0 %v777
    %4052 = vmatpush1.bf16.msra.mxu0 %v776
    %4053 = vmatprep.subr.bf16.mxu0 %v773
    %4054 = vmatpush1.bf16.msra.mxu0 %v772
    %4055 = vmatprep.subr.bf16.mxu0 %v769
    %4056 = vmatpush1.bf16.msra.mxu0 %v768
    %4057 = vmatprep.subr.bf16.mxu0 0
    %4058 = vmatpush2.bf16.msra.mxu0 0
    %4059 = vmatprep.subr.bf16.mxu0 0
    %4060 = vmatpush2.bf16.msra.mxu0 0
    %4061 = vmatprep.subr.bf16.mxu0 0
    %4062 = vmatpush2.bf16.msra.mxu0 0
    %4063 = vmatprep.subr.bf16.mxu0 0
    %4064 = vmatpush2.bf16.msra.mxu0 0
    %4065 = vmatprep.subr.bf16.mxu0 0
    %4066 = vmatpush2.bf16.msra.mxu0 0
    %4067 = vmatprep.subr.bf16.mxu0 0
    %4068 = vmatpush2.bf16.msra.mxu0 0
    %4069 = vmatprep.subr.bf16.mxu0 0
    %4070 = vmatpush2.bf16.msra.mxu0 0
    %4071 = vmatprep.subr.bf16.mxu0 0
    %4072 = vmatpush2.bf16.msra.mxu0 0
    %4073 = vmatprep.mubr.bf16.mxu0 0
    %4074 = vmatmul.mubr.bf16.gmra.mxu0 %v4030
    %v4075 = vpop.f32.mrf.mxu0
    %v4076 = vadd.f32 0.0, %v4075
    %v4077 = vpop.f32.mrf.mxu0
    %v4078 = vadd.f32 0.0, %v4077
    %v4079 = vpop.f32.mrf.mxu0
    %v4080 = vadd.f32 0.0, %v4079
    %v4081 = vpop.f32.mrf.mxu0
    %v4082 = vadd.f32 0.0, %v4081
    %4083 = vmatprep.mubr.bf16.mxu0 0
    %4084 = vmatmul.mubr.bf16.gmra.mxu0 %v4033
    %v4085 = vpop.f32.mrf.mxu0
    %v4086 = vadd.f32 0.0, %v4085
    %v4087 = vpop.f32.mrf.mxu0
    %v4088 = vadd.f32 0.0, %v4087
    %v4089 = vpop.f32.mrf.mxu0
    %v4090 = vadd.f32 0.0, %v4089
    %v4091 = vpop.f32.mrf.mxu0
    %v4092 = vadd.f32 0.0, %v4091
    %4093 = vmatprep.mubr.bf16.mxu0 0
    %4094 = vmatmul.mubr.bf16.gmra.mxu0 %v4036
    %v4095 = vpop.f32.mrf.mxu0
    %v4096 = vadd.f32 0.0, %v4095
    %v4097 = vpop.f32.mrf.mxu0
    %v4098 = vadd.f32 0.0, %v4097
    %v4099 = vpop.f32.mrf.mxu0
    %v4100 = vadd.f32 0.0, %v4099
    %v4101 = vpop.f32.mrf.mxu0
    %v4102 = vadd.f32 0.0, %v4101
    %4103 = vmatprep.mubr.bf16.mxu0 0
    %4104 = vmatmul.mubr.bf16.gmra.mxu0 %v4039
    %v4105 = vpop.f32.mrf.mxu0
    %v4106 = vadd.f32 0.0, %v4105
    %v4107 = vpop.f32.mrf.mxu0
    %v4108 = vadd.f32 0.0, %v4107
    %v4109 = vpop.f32.mrf.mxu0
    %v4110 = vadd.f32 0.0, %v4109
    %v4111 = vpop.f32.mrf.mxu0
    %v4112 = vadd.f32 0.0, %v4111
    %4113 = vdwg.mxu0
    %4114 = vmatprep.subr.bf16.mxu0 0
    %4115 = vmatpush1.bf16.msra.mxu0 0
    %4116 = vmatprep.subr.bf16.mxu0 0
    %4117 = vmatpush1.bf16.msra.mxu0 0
    %4118 = vmatprep.subr.bf16.mxu0 0
    %4119 = vmatpush1.bf16.msra.mxu0 0
    %4120 = vmatprep.subr.bf16.mxu0 %v826
    %4121 = vmatpush1.bf16.msra.mxu0 %v823
    %4122 = vmatprep.subr.bf16.mxu0 %v783
    %4123 = vmatpush1.bf16.msra.mxu0 %v782
    %4124 = vmatprep.subr.bf16.mxu0 %v779
    %4125 = vmatpush1.bf16.msra.mxu0 %v778
    %4126 = vmatprep.subr.bf16.mxu0 %v775
    %4127 = vmatpush1.bf16.msra.mxu0 %v774
    %4128 = vmatprep.subr.bf16.mxu0 %v771
    %4129 = vmatpush1.bf16.msra.mxu0 %v770
    %4130 = vmatprep.subr.bf16.mxu0 0
    %4131 = vmatpush2.bf16.msra.mxu0 0
    %4132 = vmatprep.subr.bf16.mxu0 0
    %4133 = vmatpush2.bf16.msra.mxu0 0
    %4134 = vmatprep.subr.bf16.mxu0 0
    %4135 = vmatpush2.bf16.msra.mxu0 0
    %4136 = vmatprep.subr.bf16.mxu0 0
    %4137 = vmatpush2.bf16.msra.mxu0 0
    %4138 = vmatprep.subr.bf16.mxu0 0
    %4139 = vmatpush2.bf16.msra.mxu0 0
    %4140 = vmatprep.subr.bf16.mxu0 0
    %4141 = vmatpush2.bf16.msra.mxu0 0
    %4142 = vmatprep.subr.bf16.mxu0 0
    %4143 = vmatpush2.bf16.msra.mxu0 0
    %4144 = vmatprep.subr.bf16.mxu0 0
    %4145 = vmatpush2.bf16.msra.mxu0 0
    %4146 = vmatprep.mubr.bf16.mxu0 0
    %4147 = vmatmul.mubr.bf16.gmra.mxu0 %v4030
    %v4148 = vpop.f32.mrf.mxu0
    %v4149 = vadd.f32 0.0, %v4148
    %v4150 = vpop.f32.mrf.mxu0
    %v4151 = vadd.f32 0.0, %v4150
    %v4152 = vpop.f32.mrf.mxu0
    %v4153 = vadd.f32 0.0, %v4152
    %v4154 = vpop.f32.mrf.mxu0
    %v4155 = vadd.f32 0.0, %v4154
    %4156 = vmatprep.mubr.bf16.mxu0 0
    %4157 = vmatmul.mubr.bf16.gmra.mxu0 %v4033
    %v4158 = vpop.f32.mrf.mxu0
    %v4159 = vadd.f32 0.0, %v4158
    %v4160 = vpop.f32.mrf.mxu0
    %v4161 = vadd.f32 0.0, %v4160
    %v4162 = vpop.f32.mrf.mxu0
    %v4163 = vadd.f32 0.0, %v4162
    %v4164 = vpop.f32.mrf.mxu0
    %v4165 = vadd.f32 0.0, %v4164
    %4166 = vmatprep.mubr.bf16.mxu0 0
    %4167 = vmatmul.mubr.bf16.gmra.mxu0 %v4036
    %v4168 = vpop.f32.mrf.mxu0
    %v4169 = vadd.f32 0.0, %v4168
    %v4170 = vpop.f32.mrf.mxu0
    %v4171 = vadd.f32 0.0, %v4170
    %v4172 = vpop.f32.mrf.mxu0
    %v4173 = vadd.f32 0.0, %v4172
    %v4174 = vpop.f32.mrf.mxu0
    %v4175 = vadd.f32 0.0, %v4174
    %4176 = vmatprep.mubr.bf16.mxu0 0
    %4177 = vmatmul.mubr.bf16.gmra.mxu0 %v4039
    %v4178 = vpop.f32.mrf.mxu0
    %v4179 = vadd.f32 0.0, %v4178
    %v4180 = vpop.f32.mrf.mxu0
    %v4181 = vadd.f32 0.0, %v4180
    %v4182 = vpop.f32.mrf.mxu0
    %v4183 = vadd.f32 0.0, %v4182
    %v4184 = vpop.f32.mrf.mxu0
    %v4185 = vadd.f32 0.0, %v4184
    %4186 = vdwg.mxu0
    %v4187 = vadd.f32 %v3889, %v4076
    %v4188 = vadd.f32 %v3891, %v4078
    %v4189 = vadd.f32 %v3962, %v4149
    %v4190 = vadd.f32 %v3964, %v4151
    %v4191 = vadd.f32 %v3893, %v4080
    %v4192 = vadd.f32 %v3895, %v4082
    %v4193 = vadd.f32 %v3966, %v4153
    %v4194 = vadd.f32 %v3968, %v4155
    %v4195 = vadd.f32 %v3899, %v4086
    %v4196 = vadd.f32 %v3901, %v4088
    %v4197 = vadd.f32 %v3972, %v4159
    %v4198 = vadd.f32 %v3974, %v4161
    %v4199 = vadd.f32 %v3903, %v4090
    %v4200 = vadd.f32 %v3905, %v4092
    %v4201 = vadd.f32 %v3976, %v4163
    %v4202 = vadd.f32 %v3978, %v4165
    %v4203 = vadd.f32 %v3909, %v4096
    %v4204 = vadd.f32 %v3911, %v4098
    %v4205 = vadd.f32 %v3982, %v4169
    %v4206 = vadd.f32 %v3984, %v4171
    %v4207 = vadd.f32 %v3913, %v4100
    %v4208 = vadd.f32 %v3915, %v4102
    %v4209 = vadd.f32 %v3986, %v4173
    %v4210 = vadd.f32 %v3988, %v4175
    %v4211 = vadd.f32 %v3919, %v4106
    %v4212 = vadd.f32 %v3921, %v4108
    %v4213 = vadd.f32 %v3992, %v4179
    %v4214 = vadd.f32 %v3994, %v4181
    %v4215 = vadd.f32 %v3923, %v4110
    %v4216 = vadd.f32 %v3925, %v4112
    %v4217 = vadd.f32 %v3996, %v4183
    %v4218 = vadd.f32 %v3998, %v4185
    %v4219 = vadd.f32 %v4187, %v1010
    %v4220 = vadd.f32 %v4188, %v1014
    %v4221 = vadd.f32 %v4189, %v1018
    %v4222 = vadd.f32 %v4190, %v1022
    %v4223 = vadd.f32 %v4191, %v1010
    %v4224 = vadd.f32 %v4192, %v1014
    %v4225 = vadd.f32 %v4193, %v1018
    %v4226 = vadd.f32 %v4194, %v1022
    %v4227 = vadd.f32 %v4195, %v1010
    %v4228 = vadd.f32 %v4196, %v1014
    %v4229 = vadd.f32 %v4197, %v1018
    %v4230 = vadd.f32 %v4198, %v1022
    %v4231 = vadd.f32 %v4199, %v1010
    %v4232 = vadd.f32 %v4200, %v1014
    %v4233 = vadd.f32 %v4201, %v1018
    %v4234 = vadd.f32 %v4202, %v1022
    %v4235 = vadd.f32 %v4203, %v1010
    %v4236 = vadd.f32 %v4204, %v1014
    %v4237 = vadd.f32 %v4205, %v1018
    %v4238 = vadd.f32 %v4206, %v1022
    %v4239 = vadd.f32 %v4207, %v1010
    %v4240 = vadd.f32 %v4208, %v1014
    %v4241 = vadd.f32 %v4209, %v1018
    %v4242 = vadd.f32 %v4210, %v1022
    %v4243 = vadd.f32 %v4211, %v1010
    %v4244 = vadd.f32 %v4212, %v1014
    %v4245 = vadd.f32 %v4213, %v1018
    %v4246 = vadd.f32 %v4214, %v1022
    %v4247 = vadd.f32 %v4215, %v1010
    %v4248 = vadd.f32 %v4216, %v1014
    %v4249 = vadd.f32 %v4217, %v1018
    %v4250 = vadd.f32 %v4218, %v1022
    %v4251 = vmax.f32 %v4219, 0.0
    %v4252 = vmax.f32 %v4220, 0.0
    %v4253 = vmax.f32 %v4221, 0.0
    %v4254 = vmax.f32 %v4222, 0.0
    %v4255 = vmax.f32 %v4223, 0.0
    %v4256 = vmax.f32 %v4224, 0.0
    %v4257 = vmax.f32 %v4225, 0.0
    %v4258 = vmax.f32 %v4226, 0.0
    %v4259 = vmax.f32 %v4227, 0.0
    %v4260 = vmax.f32 %v4228, 0.0
    %v4261 = vmax.f32 %v4229, 0.0
    %v4262 = vmax.f32 %v4230, 0.0
    %v4263 = vmax.f32 %v4231, 0.0
    %v4264 = vmax.f32 %v4232, 0.0
    %v4265 = vmax.f32 %v4233, 0.0
    %v4266 = vmax.f32 %v4234, 0.0
    %v4267 = vmax.f32 %v4235, 0.0
    %v4268 = vmax.f32 %v4236, 0.0
    %v4269 = vmax.f32 %v4237, 0.0
    %v4270 = vmax.f32 %v4238, 0.0
    %v4271 = vmax.f32 %v4239, 0.0
    %v4272 = vmax.f32 %v4240, 0.0
    %v4273 = vmax.f32 %v4241, 0.0
    %v4274 = vmax.f32 %v4242, 0.0
    %v4275 = vmax.f32 %v4243, 0.0
    %v4276 = vmax.f32 %v4244, 0.0
    %v4277 = vmax.f32 %v4245, 0.0
    %v4278 = vmax.f32 %v4246, 0.0
    %v4279 = vmax.f32 %v4247, 0.0
    %v4280 = vmax.f32 %v4248, 0.0
    %v4281 = vmax.f32 %v4249, 0.0
    %v4282 = vmax.f32 %v4250, 0.0
    %v4283 = vmax.f32 %v3635, %v3637
    %v4284 = vmax.f32 %v3636, %v3638
    %v4285 = vmax.f32 %v3639, %v3641
    %v4286 = vmax.f32 %v3640, %v3642
    %v4287 = vmax.f32 %v3643, %v3645
    %v4288 = vmax.f32 %v3644, %v3646
    %v4289 = vmax.f32 %v3647, %v3649
    %v4290 = vmax.f32 %v3648, %v3650
    %v4291 = vmax.f32 %v3651, %v3653
    %v4292 = vmax.f32 %v3652, %v3654
    %v4293 = vmax.f32 %v3655, %v3657
    %v4294 = vmax.f32 %v3656, %v3658
    %v4295 = vmax.f32 %v3659, %v3661
    %v4296 = vmax.f32 %v3660, %v3662
    %v4297 = vmax.f32 %v3663, %v3665
    %v4298 = vmax.f32 %v3664, %v3666
    %v4299 = vmax.f32 %v4251, %v4253
    %v4300 = vmax.f32 %v4252, %v4254
    %v4301 = vmax.f32 %v4255, %v4257
    %v4302 = vmax.f32 %v4256, %v4258
    %v4303 = vmax.f32 %v4259, %v4261
    %v4304 = vmax.f32 %v4260, %v4262
    %v4305 = vmax.f32 %v4263, %v4265
    %v4306 = vmax.f32 %v4264, %v4266
    %v4307 = vmax.f32 %v4267, %v4269
    %v4308 = vmax.f32 %v4268, %v4270
    %v4309 = vmax.f32 %v4271, %v4273
    %v4310 = vmax.f32 %v4272, %v4274
    %v4311 = vmax.f32 %v4275, %v4277
    %v4312 = vmax.f32 %v4276, %v4278
    %v4313 = vmax.f32 %v4279, %v4281
    %v4314 = vmax.f32 %v4280, %v4282
    %v4315 = vmax.f32 %v4283, %v4299
    %v4316 = vmax.f32 %v4284, %v4300
    %v4317 = vmax.f32 %v4285, %v4301
    %v4318 = vmax.f32 %v4286, %v4302
    %v4319 = vmax.f32 %v4287, %v4303
    %v4320 = vmax.f32 %v4288, %v4304
    %v4321 = vmax.f32 %v4289, %v4305
    %v4322 = vmax.f32 %v4290, %v4306
    %v4323 = vmax.f32 %v4291, %v4307
    %v4324 = vmax.f32 %v4292, %v4308
    %v4325 = vmax.f32 %v4293, %v4309
    %v4326 = vmax.f32 %v4294, %v4310
    %v4327 = vmax.f32 %v4295, %v4311
    %v4328 = vmax.f32 %v4296, %v4312
    %v4329 = vmax.f32 %v4297, %v4313
    %v4330 = vmax.f32 %v4298, %v4314
    %v4331 = vpack.c.bf16 %v4317, %v4315
    %v4332 = vpack.c.bf16 %v4318, %v4316
    %v4333 = vpack.c.bf16 %v4321, %v4319
    %v4334 = vpack.c.bf16 %v4322, %v4320
    %v4335 = vpack.c.bf16 %v4325, %v4323
    %v4336 = vpack.c.bf16 %v4326, %v4324
    %v4337 = vpack.c.bf16 %v4329, %v4327
    %v4338 = vpack.c.bf16 %v4330, %v4328
    %s4339 = scalar_lea.vmem %s0, 520
    %v4340 = vld [vmem:[%s4339] sm:$0xf]
    %v4341 = vld [vmem:[%s4339 + $0x4] sm:$0xf]
    %v4342 = vld [vmem:[%s4339 + $0x8] sm:$0xf]
    %v4343 = vld [vmem:[%s4339 + $0xc] sm:$0xf]
    %v4344 = vld [vmem:[%s4339 + $0x10] sm:$0xf]
    %v4345 = vld [vmem:[%s4339 + $0x14] sm:$0xf]
    %v4346 = vld [vmem:[%s4339 + $0x18] sm:$0xf]
    %v4347 = vld [vmem:[%s4339 + $0x1c] sm:$0xf]
    %v4356 = vunpack.c.l.b16 %v4340
    %v4357 = vunpack.c.l.b16 %v4341
    %v4358 = vunpack.c.l.b16 %v4342
    %v4359 = vunpack.c.l.b16 %v4343
    %v4360 = vunpack.c.l.b16 %v4344
    %v4361 = vunpack.c.l.b16 %v4345
    %v4362 = vunpack.c.l.b16 %v4346
    %v4363 = vunpack.c.l.b16 %v4347
    %v4364 = vpack.c.b16 %v4357, %v4356
    %v4365 = vpack.c.b16 %v4359, %v4358
    %v4366 = vpack.c.b16 %v4361, %v4360
    %v4367 = vpack.c.b16 %v4363, %v4362
    %v4369 = vsel %vm212, %v4364, 0
    %v4372 = vsel %vm212, %v4365, 0
    %v4375 = vsel %vm212, %v4366, 0
    %v4378 = vsel %vm212, %v4367, 0
    %4380 = vmatprep.subr.bf16.mxu0 0
    %4381 = vmatpush1.bf16.msra.mxu0 0
    %4382 = vmatprep.subr.bf16.mxu0 0
    %4383 = vmatpush1.bf16.msra.mxu0 0
    %4384 = vmatprep.subr.bf16.mxu0 0
    %4385 = vmatpush1.bf16.msra.mxu0 0
    %4386 = vmatprep.subr.bf16.mxu0 %v232
    %4387 = vmatpush1.bf16.msra.mxu0 %v229
    %4388 = vmatprep.subr.bf16.mxu0 %v189
    %4389 = vmatpush1.bf16.msra.mxu0 %v188
    %4390 = vmatprep.subr.bf16.mxu0 %v185
    %4391 = vmatpush1.bf16.msra.mxu0 %v184
    %4392 = vmatprep.subr.bf16.mxu0 %v181
    %4393 = vmatpush1.bf16.msra.mxu0 %v180
    %4394 = vmatprep.subr.bf16.mxu0 %v177
    %4395 = vmatpush1.bf16.msra.mxu0 %v176
    %4396 = vmatprep.subr.bf16.mxu0 0
    %4397 = vmatpush2.bf16.msra.mxu0 0
    %4398 = vmatprep.subr.bf16.mxu0 0
    %4399 = vmatpush2.bf16.msra.mxu0 0
    %4400 = vmatprep.subr.bf16.mxu0 0
    %4401 = vmatpush2.bf16.msra.mxu0 0
    %4402 = vmatprep.subr.bf16.mxu0 0
    %4403 = vmatpush2.bf16.msra.mxu0 0
    %4404 = vmatprep.subr.bf16.mxu0 0
    %4405 = vmatpush2.bf16.msra.mxu0 0
    %4406 = vmatprep.subr.bf16.mxu0 0
    %4407 = vmatpush2.bf16.msra.mxu0 0
    %4408 = vmatprep.subr.bf16.mxu0 0
    %4409 = vmatpush2.bf16.msra.mxu0 0
    %4410 = vmatprep.subr.bf16.mxu0 0
    %4411 = vmatpush2.bf16.msra.mxu0 0
    %4412 = vmatprep.mubr.bf16.mxu0 0
    %4413 = vmatmul.mubr.bf16.gmra.mxu0 %v4369
    %v4414 = vpop.f32.mrf.mxu0
    %v4415 = vadd.f32 0.0, %v4414
    %v4416 = vpop.f32.mrf.mxu0
    %v4417 = vadd.f32 0.0, %v4416
    %v4418 = vpop.f32.mrf.mxu0
    %v4419 = vadd.f32 0.0, %v4418
    %v4420 = vpop.f32.mrf.mxu0
    %v4421 = vadd.f32 0.0, %v4420
    %4422 = vmatprep.mubr.bf16.mxu0 0
    %4423 = vmatmul.mubr.bf16.gmra.mxu0 %v4372
    %v4424 = vpop.f32.mrf.mxu0
    %v4425 = vadd.f32 0.0, %v4424
    %v4426 = vpop.f32.mrf.mxu0
    %v4427 = vadd.f32 0.0, %v4426
    %v4428 = vpop.f32.mrf.mxu0
    %v4429 = vadd.f32 0.0, %v4428
    %v4430 = vpop.f32.mrf.mxu0
    %v4431 = vadd.f32 0.0, %v4430
    %4432 = vmatprep.mubr.bf16.mxu0 0
    %4433 = vmatmul.mubr.bf16.gmra.mxu0 %v4375
    %v4434 = vpop.f32.mrf.mxu0
    %v4435 = vadd.f32 0.0, %v4434
    %v4436 = vpop.f32.mrf.mxu0
    %v4437 = vadd.f32 0.0, %v4436
    %v4438 = vpop.f32.mrf.mxu0
    %v4439 = vadd.f32 0.0, %v4438
    %v4440 = vpop.f32.mrf.mxu0
    %v4441 = vadd.f32 0.0, %v4440
    %4442 = vmatprep.mubr.bf16.mxu0 0
    %4443 = vmatmul.mubr.bf16.gmra.mxu0 %v4378
    %v4444 = vpop.f32.mrf.mxu0
    %v4445 = vadd.f32 0.0, %v4444
    %v4446 = vpop.f32.mrf.mxu0
    %v4447 = vadd.f32 0.0, %v4446
    %v4448 = vpop.f32.mrf.mxu0
    %v4449 = vadd.f32 0.0, %v4448
    %v4450 = vpop.f32.mrf.mxu0
    %v4451 = vadd.f32 0.0, %v4450
    %4452 = vdwg.mxu0
    %4453 = vmatprep.subr.bf16.mxu0 0
    %4454 = vmatpush1.bf16.msra.mxu0 0
    %4455 = vmatprep.subr.bf16.mxu0 0
    %4456 = vmatpush1.bf16.msra.mxu0 0
    %4457 = vmatprep.subr.bf16.mxu0 0
    %4458 = vmatpush1.bf16.msra.mxu0 0
    %4459 = vmatprep.subr.bf16.mxu0 %v238
    %4460 = vmatpush1.bf16.msra.mxu0 %v235
    %4461 = vmatprep.subr.bf16.mxu0 %v191
    %4462 = vmatpush1.bf16.msra.mxu0 %v190
    %4463 = vmatprep.subr.bf16.mxu0 %v187
    %4464 = vmatpush1.bf16.msra.mxu0 %v186
    %4465 = vmatprep.subr.bf16.mxu0 %v183
    %4466 = vmatpush1.bf16.msra.mxu0 %v182
    %4467 = vmatprep.subr.bf16.mxu0 %v179
    %4468 = vmatpush1.bf16.msra.mxu0 %v178
    %4469 = vmatprep.subr.bf16.mxu0 0
    %4470 = vmatpush2.bf16.msra.mxu0 0
    %4471 = vmatprep.subr.bf16.mxu0 0
    %4472 = vmatpush2.bf16.msra.mxu0 0
    %4473 = vmatprep.subr.bf16.mxu0 0
    %4474 = vmatpush2.bf16.msra.mxu0 0
    %4475 = vmatprep.subr.bf16.mxu0 0
    %4476 = vmatpush2.bf16.msra.mxu0 0
    %4477 = vmatprep.subr.bf16.mxu0 0
    %4478 = vmatpush2.bf16.msra.mxu0 0
    %4479 = vmatprep.subr.bf16.mxu0 0
    %4480 = vmatpush2.bf16.msra.mxu0 0
    %4481 = vmatprep.subr.bf16.mxu0 0
    %4482 = vmatpush2.bf16.msra.mxu0 0
    %4483 = vmatprep.subr.bf16.mxu0 0
    %4484 = vmatpush2.bf16.msra.mxu0 0
    %4485 = vmatprep.mubr.bf16.mxu0 0
    %4486 = vmatmul.mubr.bf16.gmra.mxu0 %v4369
    %v4487 = vpop.f32.mrf.mxu0
    %v4488 = vadd.f32 0.0, %v4487
    %v4489 = vpop.f32.mrf.mxu0
    %v4490 = vadd.f32 0.0, %v4489
    %v4491 = vpop.f32.mrf.mxu0
    %v4492 = vadd.f32 0.0, %v4491
    %v4493 = vpop.f32.mrf.mxu0
    %v4494 = vadd.f32 0.0, %v4493
    %4495 = vmatprep.mubr.bf16.mxu0 0
    %4496 = vmatmul.mubr.bf16.gmra.mxu0 %v4372
    %v4497 = vpop.f32.mrf.mxu0
    %v4498 = vadd.f32 0.0, %v4497
    %v4499 = vpop.f32.mrf.mxu0
    %v4500 = vadd.f32 0.0, %v4499
    %v4501 = vpop.f32.mrf.mxu0
    %v4502 = vadd.f32 0.0, %v4501
    %v4503 = vpop.f32.mrf.mxu0
    %v4504 = vadd.f32 0.0, %v4503
    %4505 = vmatprep.mubr.bf16.mxu0 0
    %4506 = vmatmul.mubr.bf16.gmra.mxu0 %v4375
    %v4507 = vpop.f32.mrf.mxu0
    %v4508 = vadd.f32 0.0, %v4507
    %v4509 = vpop.f32.mrf.mxu0
    %v4510 = vadd.f32 0.0, %v4509
    %v4511 = vpop.f32.mrf.mxu0
    %v4512 = vadd.f32 0.0, %v4511
    %v4513 = vpop.f32.mrf.mxu0
    %v4514 = vadd.f32 0.0, %v4513
    %4515 = vmatprep.mubr.bf16.mxu0 0
    %4516 = vmatmul.mubr.bf16.gmra.mxu0 %v4378
    %v4517 = vpop.f32.mrf.mxu0
    %v4518 = vadd.f32 0.0, %v4517
    %v4519 = vpop.f32.mrf.mxu0
    %v4520 = vadd.f32 0.0, %v4519
    %v4521 = vpop.f32.mrf.mxu0
    %v4522 = vadd.f32 0.0, %v4521
    %v4523 = vpop.f32.mrf.mxu0
    %v4524 = vadd.f32 0.0, %v4523
    %4525 = vdwg.mxu0
    %4526 = vmatprep.subr.bf16.mxu0 0
    %4527 = vmatpush1.bf16.msra.mxu0 0
    %4528 = vmatprep.subr.bf16.mxu0 0
    %4529 = vmatpush1.bf16.msra.mxu0 0
    %4530 = vmatprep.subr.bf16.mxu0 0
    %4531 = vmatpush1.bf16.msra.mxu0 0
    %4532 = vmatprep.subr.bf16.mxu0 %v512
    %4533 = vmatpush1.bf16.msra.mxu0 %v509
    %4534 = vmatprep.subr.bf16.mxu0 %v473
    %4535 = vmatpush1.bf16.msra.mxu0 %v472
    %4536 = vmatprep.subr.bf16.mxu0 %v469
    %4537 = vmatpush1.bf16.msra.mxu0 %v468
    %4538 = vmatprep.subr.bf16.mxu0 %v465
    %4539 = vmatpush1.bf16.msra.mxu0 %v464
    %4540 = vmatprep.subr.bf16.mxu0 %v461
    %4541 = vmatpush1.bf16.msra.mxu0 %v460
    %4542 = vmatprep.subr.bf16.mxu0 0
    %4543 = vmatpush2.bf16.msra.mxu0 0
    %4544 = vmatprep.subr.bf16.mxu0 0
    %4545 = vmatpush2.bf16.msra.mxu0 0
    %4546 = vmatprep.subr.bf16.mxu0 0
    %4547 = vmatpush2.bf16.msra.mxu0 0
    %4548 = vmatprep.subr.bf16.mxu0 0
    %4549 = vmatpush2.bf16.msra.mxu0 0
    %4550 = vmatprep.subr.bf16.mxu0 0
    %4551 = vmatpush2.bf16.msra.mxu0 0
    %4552 = vmatprep.subr.bf16.mxu0 0
    %4553 = vmatpush2.bf16.msra.mxu0 0
    %4554 = vmatprep.subr.bf16.mxu0 0
    %4555 = vmatpush2.bf16.msra.mxu0 0
    %4556 = vmatprep.subr.bf16.mxu0 0
    %4557 = vmatpush2.bf16.msra.mxu0 0
    %4558 = vmatprep.mubr.bf16.mxu0 0
    %4559 = vmatmul.mubr.bf16.gmra.mxu0 %v4030
    %v4560 = vpop.f32.mrf.mxu0
    %v4561 = vadd.f32 %v4415, %v4560
    %v4562 = vpop.f32.mrf.mxu0
    %v4563 = vadd.f32 %v4417, %v4562
    %v4564 = vpop.f32.mrf.mxu0
    %v4565 = vadd.f32 %v4419, %v4564
    %v4566 = vpop.f32.mrf.mxu0
    %v4567 = vadd.f32 %v4421, %v4566
    %4568 = vmatprep.mubr.bf16.mxu0 0
    %4569 = vmatmul.mubr.bf16.gmra.mxu0 %v4033
    %v4570 = vpop.f32.mrf.mxu0
    %v4571 = vadd.f32 %v4425, %v4570
    %v4572 = vpop.f32.mrf.mxu0
    %v4573 = vadd.f32 %v4427, %v4572
    %v4574 = vpop.f32.mrf.mxu0
    %v4575 = vadd.f32 %v4429, %v4574
    %v4576 = vpop.f32.mrf.mxu0
    %v4577 = vadd.f32 %v4431, %v4576
    %4578 = vmatprep.mubr.bf16.mxu0 0
    %4579 = vmatmul.mubr.bf16.gmra.mxu0 %v4036
    %v4580 = vpop.f32.mrf.mxu0
    %v4581 = vadd.f32 %v4435, %v4580
    %v4582 = vpop.f32.mrf.mxu0
    %v4583 = vadd.f32 %v4437, %v4582
    %v4584 = vpop.f32.mrf.mxu0
    %v4585 = vadd.f32 %v4439, %v4584
    %v4586 = vpop.f32.mrf.mxu0
    %v4587 = vadd.f32 %v4441, %v4586
    %4588 = vmatprep.mubr.bf16.mxu0 0
    %4589 = vmatmul.mubr.bf16.gmra.mxu0 %v4039
    %v4590 = vpop.f32.mrf.mxu0
    %v4591 = vadd.f32 %v4445, %v4590
    %v4592 = vpop.f32.mrf.mxu0
    %v4593 = vadd.f32 %v4447, %v4592
    %v4594 = vpop.f32.mrf.mxu0
    %v4595 = vadd.f32 %v4449, %v4594
    %v4596 = vpop.f32.mrf.mxu0
    %v4597 = vadd.f32 %v4451, %v4596
    %4598 = vdwg.mxu0
    %4599 = vmatprep.subr.bf16.mxu0 0
    %4600 = vmatpush1.bf16.msra.mxu0 0
    %4601 = vmatprep.subr.bf16.mxu0 0
    %4602 = vmatpush1.bf16.msra.mxu0 0
    %4603 = vmatprep.subr.bf16.mxu0 0
    %4604 = vmatpush1.bf16.msra.mxu0 0
    %4605 = vmatprep.subr.bf16.mxu0 %v518
    %4606 = vmatpush1.bf16.msra.mxu0 %v515
    %4607 = vmatprep.subr.bf16.mxu0 %v475
    %4608 = vmatpush1.bf16.msra.mxu0 %v474
    %4609 = vmatprep.subr.bf16.mxu0 %v471
    %4610 = vmatpush1.bf16.msra.mxu0 %v470
    %4611 = vmatprep.subr.bf16.mxu0 %v467
    %4612 = vmatpush1.bf16.msra.mxu0 %v466
    %4613 = vmatprep.subr.bf16.mxu0 %v463
    %4614 = vmatpush1.bf16.msra.mxu0 %v462
    %4615 = vmatprep.subr.bf16.mxu0 0
    %4616 = vmatpush2.bf16.msra.mxu0 0
    %4617 = vmatprep.subr.bf16.mxu0 0
    %4618 = vmatpush2.bf16.msra.mxu0 0
    %4619 = vmatprep.subr.bf16.mxu0 0
    %4620 = vmatpush2.bf16.msra.mxu0 0
    %4621 = vmatprep.subr.bf16.mxu0 0
    %4622 = vmatpush2.bf16.msra.mxu0 0
    %4623 = vmatprep.subr.bf16.mxu0 0
    %4624 = vmatpush2.bf16.msra.mxu0 0
    %4625 = vmatprep.subr.bf16.mxu0 0
    %4626 = vmatpush2.bf16.msra.mxu0 0
    %4627 = vmatprep.subr.bf16.mxu0 0
    %4628 = vmatpush2.bf16.msra.mxu0 0
    %4629 = vmatprep.subr.bf16.mxu0 0
    %4630 = vmatpush2.bf16.msra.mxu0 0
    %4631 = vmatprep.mubr.bf16.mxu0 0
    %4632 = vmatmul.mubr.bf16.gmra.mxu0 %v4030
    %v4633 = vpop.f32.mrf.mxu0
    %v4634 = vadd.f32 %v4488, %v4633
    %v4635 = vpop.f32.mrf.mxu0
    %v4636 = vadd.f32 %v4490, %v4635
    %v4637 = vpop.f32.mrf.mxu0
    %v4638 = vadd.f32 %v4492, %v4637
    %v4639 = vpop.f32.mrf.mxu0
    %v4640 = vadd.f32 %v4494, %v4639
    %4641 = vmatprep.mubr.bf16.mxu0 0
    %4642 = vmatmul.mubr.bf16.gmra.mxu0 %v4033
    %v4643 = vpop.f32.mrf.mxu0
    %v4644 = vadd.f32 %v4498, %v4643
    %v4645 = vpop.f32.mrf.mxu0
    %v4646 = vadd.f32 %v4500, %v4645
    %v4647 = vpop.f32.mrf.mxu0
    %v4648 = vadd.f32 %v4502, %v4647
    %v4649 = vpop.f32.mrf.mxu0
    %v4650 = vadd.f32 %v4504, %v4649
    %4651 = vmatprep.mubr.bf16.mxu0 0
    %4652 = vmatmul.mubr.bf16.gmra.mxu0 %v4036
    %v4653 = vpop.f32.mrf.mxu0
    %v4654 = vadd.f32 %v4508, %v4653
    %v4655 = vpop.f32.mrf.mxu0
    %v4656 = vadd.f32 %v4510, %v4655
    %v4657 = vpop.f32.mrf.mxu0
    %v4658 = vadd.f32 %v4512, %v4657
    %v4659 = vpop.f32.mrf.mxu0
    %v4660 = vadd.f32 %v4514, %v4659
    %4661 = vmatprep.mubr.bf16.mxu0 0
    %4662 = vmatmul.mubr.bf16.gmra.mxu0 %v4039
    %v4663 = vpop.f32.mrf.mxu0
    %v4664 = vadd.f32 %v4518, %v4663
    %v4665 = vpop.f32.mrf.mxu0
    %v4666 = vadd.f32 %v4520, %v4665
    %v4667 = vpop.f32.mrf.mxu0
    %v4668 = vadd.f32 %v4522, %v4667
    %v4669 = vpop.f32.mrf.mxu0
    %v4670 = vadd.f32 %v4524, %v4669
    %4671 = vdwg.mxu0
    %s4672 = scalar_lea.vmem %s0, 560
    %v4673 = vld [vmem:[%s4672] sm:$0xf]
    %v4674 = vld [vmem:[%s4672 + $0x4] sm:$0xf]
    %v4675 = vld [vmem:[%s4672 + $0x8] sm:$0xf]
    %v4676 = vld [vmem:[%s4672 + $0xc] sm:$0xf]
    %v4677 = vld [vmem:[%s4672 + $0x10] sm:$0xf]
    %v4678 = vld [vmem:[%s4672 + $0x14] sm:$0xf]
    %v4679 = vld [vmem:[%s4672 + $0x18] sm:$0xf]
    %v4680 = vld [vmem:[%s4672 + $0x1c] sm:$0xf]
    %v4689 = vunpack.c.l.b16 %v4673
    %v4690 = vunpack.c.l.b16 %v4674
    %v4691 = vunpack.c.l.b16 %v4675
    %v4692 = vunpack.c.l.b16 %v4676
    %v4693 = vunpack.c.l.b16 %v4677
    %v4694 = vunpack.c.l.b16 %v4678
    %v4695 = vunpack.c.l.b16 %v4679
    %v4696 = vunpack.c.l.b16 %v4680
    %v4697 = vpack.c.b16 %v4690, %v4689
    %v4698 = vpack.c.b16 %v4692, %v4691
    %v4699 = vpack.c.b16 %v4694, %v4693
    %v4700 = vpack.c.b16 %v4696, %v4695
    %v4702 = vsel %vm212, %v4697, 0
    %v4705 = vsel %vm212, %v4698, 0
    %v4708 = vsel %vm212, %v4699, 0
    %v4711 = vsel %vm212, %v4700, 0
    %4713 = vmatprep.subr.bf16.mxu0 0
    %4714 = vmatpush1.bf16.msra.mxu0 0
    %4715 = vmatprep.subr.bf16.mxu0 0
    %4716 = vmatpush1.bf16.msra.mxu0 0
    %4717 = vmatprep.subr.bf16.mxu0 0
    %4718 = vmatpush1.bf16.msra.mxu0 0
    %4719 = vmatprep.subr.bf16.mxu0 %v820
    %4720 = vmatpush1.bf16.msra.mxu0 %v817
    %4721 = vmatprep.subr.bf16.mxu0 %v781
    %4722 = vmatpush1.bf16.msra.mxu0 %v780
    %4723 = vmatprep.subr.bf16.mxu0 %v777
    %4724 = vmatpush1.bf16.msra.mxu0 %v776
    %4725 = vmatprep.subr.bf16.mxu0 %v773
    %4726 = vmatpush1.bf16.msra.mxu0 %v772
    %4727 = vmatprep.subr.bf16.mxu0 %v769
    %4728 = vmatpush1.bf16.msra.mxu0 %v768
    %4729 = vmatprep.subr.bf16.mxu0 0
    %4730 = vmatpush2.bf16.msra.mxu0 0
    %4731 = vmatprep.subr.bf16.mxu0 0
    %4732 = vmatpush2.bf16.msra.mxu0 0
    %4733 = vmatprep.subr.bf16.mxu0 0
    %4734 = vmatpush2.bf16.msra.mxu0 0
    %4735 = vmatprep.subr.bf16.mxu0 0
    %4736 = vmatpush2.bf16.msra.mxu0 0
    %4737 = vmatprep.subr.bf16.mxu0 0
    %4738 = vmatpush2.bf16.msra.mxu0 0
    %4739 = vmatprep.subr.bf16.mxu0 0
    %4740 = vmatpush2.bf16.msra.mxu0 0
    %4741 = vmatprep.subr.bf16.mxu0 0
    %4742 = vmatpush2.bf16.msra.mxu0 0
    %4743 = vmatprep.subr.bf16.mxu0 0
    %4744 = vmatpush2.bf16.msra.mxu0 0
    %4745 = vmatprep.mubr.bf16.mxu0 0
    %4746 = vmatmul.mubr.bf16.gmra.mxu0 %v4702
    %v4747 = vpop.f32.mrf.mxu0
    %v4748 = vadd.f32 0.0, %v4747
    %v4749 = vpop.f32.mrf.mxu0
    %v4750 = vadd.f32 0.0, %v4749
    %v4751 = vpop.f32.mrf.mxu0
    %v4752 = vadd.f32 0.0, %v4751
    %v4753 = vpop.f32.mrf.mxu0
    %v4754 = vadd.f32 0.0, %v4753
    %4755 = vmatprep.mubr.bf16.mxu0 0
    %4756 = vmatmul.mubr.bf16.gmra.mxu0 %v4705
    %v4757 = vpop.f32.mrf.mxu0
    %v4758 = vadd.f32 0.0, %v4757
    %v4759 = vpop.f32.mrf.mxu0
    %v4760 = vadd.f32 0.0, %v4759
    %v4761 = vpop.f32.mrf.mxu0
    %v4762 = vadd.f32 0.0, %v4761
    %v4763 = vpop.f32.mrf.mxu0
    %v4764 = vadd.f32 0.0, %v4763
    %4765 = vmatprep.mubr.bf16.mxu0 0
    %4766 = vmatmul.mubr.bf16.gmra.mxu0 %v4708
    %v4767 = vpop.f32.mrf.mxu0
    %v4768 = vadd.f32 0.0, %v4767
    %v4769 = vpop.f32.mrf.mxu0
    %v4770 = vadd.f32 0.0, %v4769
    %v4771 = vpop.f32.mrf.mxu0
    %v4772 = vadd.f32 0.0, %v4771
    %v4773 = vpop.f32.mrf.mxu0
    %v4774 = vadd.f32 0.0, %v4773
    %4775 = vmatprep.mubr.bf16.mxu0 0
    %4776 = vmatmul.mubr.bf16.gmra.mxu0 %v4711
    %v4777 = vpop.f32.mrf.mxu0
    %v4778 = vadd.f32 0.0, %v4777
    %v4779 = vpop.f32.mrf.mxu0
    %v4780 = vadd.f32 0.0, %v4779
    %v4781 = vpop.f32.mrf.mxu0
    %v4782 = vadd.f32 0.0, %v4781
    %v4783 = vpop.f32.mrf.mxu0
    %v4784 = vadd.f32 0.0, %v4783
    %4785 = vdwg.mxu0
    %4786 = vmatprep.subr.bf16.mxu0 0
    %4787 = vmatpush1.bf16.msra.mxu0 0
    %4788 = vmatprep.subr.bf16.mxu0 0
    %4789 = vmatpush1.bf16.msra.mxu0 0
    %4790 = vmatprep.subr.bf16.mxu0 0
    %4791 = vmatpush1.bf16.msra.mxu0 0
    %4792 = vmatprep.subr.bf16.mxu0 %v826
    %4793 = vmatpush1.bf16.msra.mxu0 %v823
    %4794 = vmatprep.subr.bf16.mxu0 %v783
    %4795 = vmatpush1.bf16.msra.mxu0 %v782
    %4796 = vmatprep.subr.bf16.mxu0 %v779
    %4797 = vmatpush1.bf16.msra.mxu0 %v778
    %4798 = vmatprep.subr.bf16.mxu0 %v775
    %4799 = vmatpush1.bf16.msra.mxu0 %v774
    %4800 = vmatprep.subr.bf16.mxu0 %v771
    %4801 = vmatpush1.bf16.msra.mxu0 %v770
    %4802 = vmatprep.subr.bf16.mxu0 0
    %4803 = vmatpush2.bf16.msra.mxu0 0
    %4804 = vmatprep.subr.bf16.mxu0 0
    %4805 = vmatpush2.bf16.msra.mxu0 0
    %4806 = vmatprep.subr.bf16.mxu0 0
    %4807 = vmatpush2.bf16.msra.mxu0 0
    %4808 = vmatprep.subr.bf16.mxu0 0
    %4809 = vmatpush2.bf16.msra.mxu0 0
    %4810 = vmatprep.subr.bf16.mxu0 0
    %4811 = vmatpush2.bf16.msra.mxu0 0
    %4812 = vmatprep.subr.bf16.mxu0 0
    %4813 = vmatpush2.bf16.msra.mxu0 0
    %4814 = vmatprep.subr.bf16.mxu0 0
    %4815 = vmatpush2.bf16.msra.mxu0 0
    %4816 = vmatprep.subr.bf16.mxu0 0
    %4817 = vmatpush2.bf16.msra.mxu0 0
    %4818 = vmatprep.mubr.bf16.mxu0 0
    %4819 = vmatmul.mubr.bf16.gmra.mxu0 %v4702
    %v4820 = vpop.f32.mrf.mxu0
    %v4821 = vadd.f32 0.0, %v4820
    %v4822 = vpop.f32.mrf.mxu0
    %v4823 = vadd.f32 0.0, %v4822
    %v4824 = vpop.f32.mrf.mxu0
    %v4825 = vadd.f32 0.0, %v4824
    %v4826 = vpop.f32.mrf.mxu0
    %v4827 = vadd.f32 0.0, %v4826
    %4828 = vmatprep.mubr.bf16.mxu0 0
    %4829 = vmatmul.mubr.bf16.gmra.mxu0 %v4705
    %v4830 = vpop.f32.mrf.mxu0
    %v4831 = vadd.f32 0.0, %v4830
    %v4832 = vpop.f32.mrf.mxu0
    %v4833 = vadd.f32 0.0, %v4832
    %v4834 = vpop.f32.mrf.mxu0
    %v4835 = vadd.f32 0.0, %v4834
    %v4836 = vpop.f32.mrf.mxu0
    %v4837 = vadd.f32 0.0, %v4836
    %4838 = vmatprep.mubr.bf16.mxu0 0
    %4839 = vmatmul.mubr.bf16.gmra.mxu0 %v4708
    %v4840 = vpop.f32.mrf.mxu0
    %v4841 = vadd.f32 0.0, %v4840
    %v4842 = vpop.f32.mrf.mxu0
    %v4843 = vadd.f32 0.0, %v4842
    %v4844 = vpop.f32.mrf.mxu0
    %v4845 = vadd.f32 0.0, %v4844
    %v4846 = vpop.f32.mrf.mxu0
    %v4847 = vadd.f32 0.0, %v4846
    %4848 = vmatprep.mubr.bf16.mxu0 0
    %4849 = vmatmul.mubr.bf16.gmra.mxu0 %v4711
    %v4850 = vpop.f32.mrf.mxu0
    %v4851 = vadd.f32 0.0, %v4850
    %v4852 = vpop.f32.mrf.mxu0
    %v4853 = vadd.f32 0.0, %v4852
    %v4854 = vpop.f32.mrf.mxu0
    %v4855 = vadd.f32 0.0, %v4854
    %v4856 = vpop.f32.mrf.mxu0
    %v4857 = vadd.f32 0.0, %v4856
    %4858 = vdwg.mxu0
    %v4859 = vadd.f32 %v4561, %v4748
    %v4860 = vadd.f32 %v4563, %v4750
    %v4861 = vadd.f32 %v4634, %v4821
    %v4862 = vadd.f32 %v4636, %v4823
    %v4863 = vadd.f32 %v4565, %v4752
    %v4864 = vadd.f32 %v4567, %v4754
    %v4865 = vadd.f32 %v4638, %v4825
    %v4866 = vadd.f32 %v4640, %v4827
    %v4867 = vadd.f32 %v4571, %v4758
    %v4868 = vadd.f32 %v4573, %v4760
    %v4869 = vadd.f32 %v4644, %v4831
    %v4870 = vadd.f32 %v4646, %v4833
    %v4871 = vadd.f32 %v4575, %v4762
    %v4872 = vadd.f32 %v4577, %v4764
    %v4873 = vadd.f32 %v4648, %v4835
    %v4874 = vadd.f32 %v4650, %v4837
    %v4875 = vadd.f32 %v4581, %v4768
    %v4876 = vadd.f32 %v4583, %v4770
    %v4877 = vadd.f32 %v4654, %v4841
    %v4878 = vadd.f32 %v4656, %v4843
    %v4879 = vadd.f32 %v4585, %v4772
    %v4880 = vadd.f32 %v4587, %v4774
    %v4881 = vadd.f32 %v4658, %v4845
    %v4882 = vadd.f32 %v4660, %v4847
    %v4883 = vadd.f32 %v4591, %v4778
    %v4884 = vadd.f32 %v4593, %v4780
    %v4885 = vadd.f32 %v4664, %v4851
    %v4886 = vadd.f32 %v4666, %v4853
    %v4887 = vadd.f32 %v4595, %v4782
    %v4888 = vadd.f32 %v4597, %v4784
    %v4889 = vadd.f32 %v4668, %v4855
    %v4890 = vadd.f32 %v4670, %v4857
    %v4891 = vadd.f32 %v4859, %v1010
    %v4892 = vadd.f32 %v4860, %v1014
    %v4893 = vadd.f32 %v4861, %v1018
    %v4894 = vadd.f32 %v4862, %v1022
    %v4895 = vadd.f32 %v4863, %v1010
    %v4896 = vadd.f32 %v4864, %v1014
    %v4897 = vadd.f32 %v4865, %v1018
    %v4898 = vadd.f32 %v4866, %v1022
    %v4899 = vadd.f32 %v4867, %v1010
    %v4900 = vadd.f32 %v4868, %v1014
    %v4901 = vadd.f32 %v4869, %v1018
    %v4902 = vadd.f32 %v4870, %v1022
    %v4903 = vadd.f32 %v4871, %v1010
    %v4904 = vadd.f32 %v4872, %v1014
    %v4905 = vadd.f32 %v4873, %v1018
    %v4906 = vadd.f32 %v4874, %v1022
    %v4907 = vadd.f32 %v4875, %v1010
    %v4908 = vadd.f32 %v4876, %v1014
    %v4909 = vadd.f32 %v4877, %v1018
    %v4910 = vadd.f32 %v4878, %v1022
    %v4911 = vadd.f32 %v4879, %v1010
    %v4912 = vadd.f32 %v4880, %v1014
    %v4913 = vadd.f32 %v4881, %v1018
    %v4914 = vadd.f32 %v4882, %v1022
    %v4915 = vadd.f32 %v4883, %v1010
    %v4916 = vadd.f32 %v4884, %v1014
    %v4917 = vadd.f32 %v4885, %v1018
    %v4918 = vadd.f32 %v4886, %v1022
    %v4919 = vadd.f32 %v4887, %v1010
    %v4920 = vadd.f32 %v4888, %v1014
    %v4921 = vadd.f32 %v4889, %v1018
    %v4922 = vadd.f32 %v4890, %v1022
    %v4923 = vmax.f32 %v4891, 0.0
    %v4924 = vmax.f32 %v4892, 0.0
    %v4925 = vmax.f32 %v4893, 0.0
    %v4926 = vmax.f32 %v4894, 0.0
    %v4927 = vmax.f32 %v4895, 0.0
    %v4928 = vmax.f32 %v4896, 0.0
    %v4929 = vmax.f32 %v4897, 0.0
    %v4930 = vmax.f32 %v4898, 0.0
    %v4931 = vmax.f32 %v4899, 0.0
    %v4932 = vmax.f32 %v4900, 0.0
    %v4933 = vmax.f32 %v4901, 0.0
    %v4934 = vmax.f32 %v4902, 0.0
    %v4935 = vmax.f32 %v4903, 0.0
    %v4936 = vmax.f32 %v4904, 0.0
    %v4937 = vmax.f32 %v4905, 0.0
    %v4938 = vmax.f32 %v4906, 0.0
    %v4939 = vmax.f32 %v4907, 0.0
    %v4940 = vmax.f32 %v4908, 0.0
    %v4941 = vmax.f32 %v4909, 0.0
    %v4942 = vmax.f32 %v4910, 0.0
    %v4943 = vmax.f32 %v4911, 0.0
    %v4944 = vmax.f32 %v4912, 0.0
    %v4945 = vmax.f32 %v4913, 0.0
    %v4946 = vmax.f32 %v4914, 0.0
    %v4947 = vmax.f32 %v4915, 0.0
    %v4948 = vmax.f32 %v4916, 0.0
    %v4949 = vmax.f32 %v4917, 0.0
    %v4950 = vmax.f32 %v4918, 0.0
    %v4951 = vmax.f32 %v4919, 0.0
    %v4952 = vmax.f32 %v4920, 0.0
    %v4953 = vmax.f32 %v4921, 0.0
    %v4954 = vmax.f32 %v4922, 0.0
    %s4955 = scalar_lea.vmem %s0, 600
    %v4956 = vld [vmem:[%s4955] sm:$0xf]
    %v4957 = vld [vmem:[%s4955 + $0x4] sm:$0xf]
    %v4958 = vld [vmem:[%s4955 + $0x8] sm:$0xf]
    %v4959 = vld [vmem:[%s4955 + $0xc] sm:$0xf]
    %v4960 = vld [vmem:[%s4955 + $0x10] sm:$0xf]
    %v4961 = vld [vmem:[%s4955 + $0x14] sm:$0xf]
    %v4962 = vld [vmem:[%s4955 + $0x18] sm:$0xf]
    %v4963 = vld [vmem:[%s4955 + $0x1c] sm:$0xf]
    %v4972 = vunpack.c.l.b16 %v4956
    %v4973 = vunpack.c.l.b16 %v4957
    %v4974 = vunpack.c.l.b16 %v4958
    %v4975 = vunpack.c.l.b16 %v4959
    %v4976 = vunpack.c.l.b16 %v4960
    %v4977 = vunpack.c.l.b16 %v4961
    %v4978 = vunpack.c.l.b16 %v4962
    %v4979 = vunpack.c.l.b16 %v4963
    %v4980 = vpack.c.b16 %v4973, %v4972
    %v4981 = vpack.c.b16 %v4975, %v4974
    %v4982 = vpack.c.b16 %v4977, %v4976
    %v4983 = vpack.c.b16 %v4979, %v4978
    %v4985 = vsel %vm212, %v4980, 0
    %v4988 = vsel %vm212, %v4981, 0
    %v4991 = vsel %vm212, %v4982, 0
    %v4994 = vsel %vm212, %v4983, 0
    %4996 = vmatprep.subr.bf16.mxu0 0
    %4997 = vmatpush1.bf16.msra.mxu0 0
    %4998 = vmatprep.subr.bf16.mxu0 0
    %4999 = vmatpush1.bf16.msra.mxu0 0
    %5000 = vmatprep.subr.bf16.mxu0 0
    %5001 = vmatpush1.bf16.msra.mxu0 0
    %5002 = vmatprep.subr.bf16.mxu0 %v232
    %5003 = vmatpush1.bf16.msra.mxu0 %v229
    %5004 = vmatprep.subr.bf16.mxu0 %v189
    %5005 = vmatpush1.bf16.msra.mxu0 %v188
    %5006 = vmatprep.subr.bf16.mxu0 %v185
    %5007 = vmatpush1.bf16.msra.mxu0 %v184
    %5008 = vmatprep.subr.bf16.mxu0 %v181
    %5009 = vmatpush1.bf16.msra.mxu0 %v180
    %5010 = vmatprep.subr.bf16.mxu0 %v177
    %5011 = vmatpush1.bf16.msra.mxu0 %v176
    %5012 = vmatprep.subr.bf16.mxu0 0
    %5013 = vmatpush2.bf16.msra.mxu0 0
    %5014 = vmatprep.subr.bf16.mxu0 0
    %5015 = vmatpush2.bf16.msra.mxu0 0
    %5016 = vmatprep.subr.bf16.mxu0 0
    %5017 = vmatpush2.bf16.msra.mxu0 0
    %5018 = vmatprep.subr.bf16.mxu0 0
    %5019 = vmatpush2.bf16.msra.mxu0 0
    %5020 = vmatprep.subr.bf16.mxu0 0
    %5021 = vmatpush2.bf16.msra.mxu0 0
    %5022 = vmatprep.subr.bf16.mxu0 0
    %5023 = vmatpush2.bf16.msra.mxu0 0
    %5024 = vmatprep.subr.bf16.mxu0 0
    %5025 = vmatpush2.bf16.msra.mxu0 0
    %5026 = vmatprep.subr.bf16.mxu0 0
    %5027 = vmatpush2.bf16.msra.mxu0 0
    %5028 = vmatprep.mubr.bf16.mxu0 0
    %5029 = vmatmul.mubr.bf16.gmra.mxu0 %v4985
    %v5030 = vpop.f32.mrf.mxu0
    %v5031 = vadd.f32 0.0, %v5030
    %v5032 = vpop.f32.mrf.mxu0
    %v5033 = vadd.f32 0.0, %v5032
    %v5034 = vpop.f32.mrf.mxu0
    %v5035 = vadd.f32 0.0, %v5034
    %v5036 = vpop.f32.mrf.mxu0
    %v5037 = vadd.f32 0.0, %v5036
    %5038 = vmatprep.mubr.bf16.mxu0 0
    %5039 = vmatmul.mubr.bf16.gmra.mxu0 %v4988
    %v5040 = vpop.f32.mrf.mxu0
    %v5041 = vadd.f32 0.0, %v5040
    %v5042 = vpop.f32.mrf.mxu0
    %v5043 = vadd.f32 0.0, %v5042
    %v5044 = vpop.f32.mrf.mxu0
    %v5045 = vadd.f32 0.0, %v5044
    %v5046 = vpop.f32.mrf.mxu0
    %v5047 = vadd.f32 0.0, %v5046
    %5048 = vmatprep.mubr.bf16.mxu0 0
    %5049 = vmatmul.mubr.bf16.gmra.mxu0 %v4991
    %v5050 = vpop.f32.mrf.mxu0
    %v5051 = vadd.f32 0.0, %v5050
    %v5052 = vpop.f32.mrf.mxu0
    %v5053 = vadd.f32 0.0, %v5052
    %v5054 = vpop.f32.mrf.mxu0
    %v5055 = vadd.f32 0.0, %v5054
    %v5056 = vpop.f32.mrf.mxu0
    %v5057 = vadd.f32 0.0, %v5056
    %5058 = vmatprep.mubr.bf16.mxu0 0
    %5059 = vmatmul.mubr.bf16.gmra.mxu0 %v4994
    %v5060 = vpop.f32.mrf.mxu0
    %v5061 = vadd.f32 0.0, %v5060
    %v5062 = vpop.f32.mrf.mxu0
    %v5063 = vadd.f32 0.0, %v5062
    %v5064 = vpop.f32.mrf.mxu0
    %v5065 = vadd.f32 0.0, %v5064
    %v5066 = vpop.f32.mrf.mxu0
    %v5067 = vadd.f32 0.0, %v5066
    %5068 = vdwg.mxu0
    %5069 = vmatprep.subr.bf16.mxu0 0
    %5070 = vmatpush1.bf16.msra.mxu0 0
    %5071 = vmatprep.subr.bf16.mxu0 0
    %5072 = vmatpush1.bf16.msra.mxu0 0
    %5073 = vmatprep.subr.bf16.mxu0 0
    %5074 = vmatpush1.bf16.msra.mxu0 0
    %5075 = vmatprep.subr.bf16.mxu0 %v238
    %5076 = vmatpush1.bf16.msra.mxu0 %v235
    %5077 = vmatprep.subr.bf16.mxu0 %v191
    %5078 = vmatpush1.bf16.msra.mxu0 %v190
    %5079 = vmatprep.subr.bf16.mxu0 %v187
    %5080 = vmatpush1.bf16.msra.mxu0 %v186
    %5081 = vmatprep.subr.bf16.mxu0 %v183
    %5082 = vmatpush1.bf16.msra.mxu0 %v182
    %5083 = vmatprep.subr.bf16.mxu0 %v179
    %5084 = vmatpush1.bf16.msra.mxu0 %v178
    %5085 = vmatprep.subr.bf16.mxu0 0
    %5086 = vmatpush2.bf16.msra.mxu0 0
    %5087 = vmatprep.subr.bf16.mxu0 0
    %5088 = vmatpush2.bf16.msra.mxu0 0
    %5089 = vmatprep.subr.bf16.mxu0 0
    %5090 = vmatpush2.bf16.msra.mxu0 0
    %5091 = vmatprep.subr.bf16.mxu0 0
    %5092 = vmatpush2.bf16.msra.mxu0 0
    %5093 = vmatprep.subr.bf16.mxu0 0
    %5094 = vmatpush2.bf16.msra.mxu0 0
    %5095 = vmatprep.subr.bf16.mxu0 0
    %5096 = vmatpush2.bf16.msra.mxu0 0
    %5097 = vmatprep.subr.bf16.mxu0 0
    %5098 = vmatpush2.bf16.msra.mxu0 0
    %5099 = vmatprep.subr.bf16.mxu0 0
    %5100 = vmatpush2.bf16.msra.mxu0 0
    %5101 = vmatprep.mubr.bf16.mxu0 0
    %5102 = vmatmul.mubr.bf16.gmra.mxu0 %v4985
    %v5103 = vpop.f32.mrf.mxu0
    %v5104 = vadd.f32 0.0, %v5103
    %v5105 = vpop.f32.mrf.mxu0
    %v5106 = vadd.f32 0.0, %v5105
    %v5107 = vpop.f32.mrf.mxu0
    %v5108 = vadd.f32 0.0, %v5107
    %v5109 = vpop.f32.mrf.mxu0
    %v5110 = vadd.f32 0.0, %v5109
    %5111 = vmatprep.mubr.bf16.mxu0 0
    %5112 = vmatmul.mubr.bf16.gmra.mxu0 %v4988
    %v5113 = vpop.f32.mrf.mxu0
    %v5114 = vadd.f32 0.0, %v5113
    %v5115 = vpop.f32.mrf.mxu0
    %v5116 = vadd.f32 0.0, %v5115
    %v5117 = vpop.f32.mrf.mxu0
    %v5118 = vadd.f32 0.0, %v5117
    %v5119 = vpop.f32.mrf.mxu0
    %v5120 = vadd.f32 0.0, %v5119
    %5121 = vmatprep.mubr.bf16.mxu0 0
    %5122 = vmatmul.mubr.bf16.gmra.mxu0 %v4991
    %v5123 = vpop.f32.mrf.mxu0
    %v5124 = vadd.f32 0.0, %v5123
    %v5125 = vpop.f32.mrf.mxu0
    %v5126 = vadd.f32 0.0, %v5125
    %v5127 = vpop.f32.mrf.mxu0
    %v5128 = vadd.f32 0.0, %v5127
    %v5129 = vpop.f32.mrf.mxu0
    %v5130 = vadd.f32 0.0, %v5129
    %5131 = vmatprep.mubr.bf16.mxu0 0
    %5132 = vmatmul.mubr.bf16.gmra.mxu0 %v4994
    %v5133 = vpop.f32.mrf.mxu0
    %v5134 = vadd.f32 0.0, %v5133
    %v5135 = vpop.f32.mrf.mxu0
    %v5136 = vadd.f32 0.0, %v5135
    %v5137 = vpop.f32.mrf.mxu0
    %v5138 = vadd.f32 0.0, %v5137
    %v5139 = vpop.f32.mrf.mxu0
    %v5140 = vadd.f32 0.0, %v5139
    %5141 = vdwg.mxu0
    %5142 = vmatprep.subr.bf16.mxu0 0
    %5143 = vmatpush1.bf16.msra.mxu0 0
    %5144 = vmatprep.subr.bf16.mxu0 0
    %5145 = vmatpush1.bf16.msra.mxu0 0
    %5146 = vmatprep.subr.bf16.mxu0 0
    %5147 = vmatpush1.bf16.msra.mxu0 0
    %5148 = vmatprep.subr.bf16.mxu0 %v512
    %5149 = vmatpush1.bf16.msra.mxu0 %v509
    %5150 = vmatprep.subr.bf16.mxu0 %v473
    %5151 = vmatpush1.bf16.msra.mxu0 %v472
    %5152 = vmatprep.subr.bf16.mxu0 %v469
    %5153 = vmatpush1.bf16.msra.mxu0 %v468
    %5154 = vmatprep.subr.bf16.mxu0 %v465
    %5155 = vmatpush1.bf16.msra.mxu0 %v464
    %5156 = vmatprep.subr.bf16.mxu0 %v461
    %5157 = vmatpush1.bf16.msra.mxu0 %v460
    %5158 = vmatprep.subr.bf16.mxu0 0
    %5159 = vmatpush2.bf16.msra.mxu0 0
    %5160 = vmatprep.subr.bf16.mxu0 0
    %5161 = vmatpush2.bf16.msra.mxu0 0
    %5162 = vmatprep.subr.bf16.mxu0 0
    %5163 = vmatpush2.bf16.msra.mxu0 0
    %5164 = vmatprep.subr.bf16.mxu0 0
    %5165 = vmatpush2.bf16.msra.mxu0 0
    %5166 = vmatprep.subr.bf16.mxu0 0
    %5167 = vmatpush2.bf16.msra.mxu0 0
    %5168 = vmatprep.subr.bf16.mxu0 0
    %5169 = vmatpush2.bf16.msra.mxu0 0
    %5170 = vmatprep.subr.bf16.mxu0 0
    %5171 = vmatpush2.bf16.msra.mxu0 0
    %5172 = vmatprep.subr.bf16.mxu0 0
    %5173 = vmatpush2.bf16.msra.mxu0 0
    %5174 = vmatprep.mubr.bf16.mxu0 0
    %5175 = vmatmul.mubr.bf16.gmra.mxu0 %v4702
    %v5176 = vpop.f32.mrf.mxu0
    %v5177 = vadd.f32 %v5031, %v5176
    %v5178 = vpop.f32.mrf.mxu0
    %v5179 = vadd.f32 %v5033, %v5178
    %v5180 = vpop.f32.mrf.mxu0
    %v5181 = vadd.f32 %v5035, %v5180
    %v5182 = vpop.f32.mrf.mxu0
    %v5183 = vadd.f32 %v5037, %v5182
    %5184 = vmatprep.mubr.bf16.mxu0 0
    %5185 = vmatmul.mubr.bf16.gmra.mxu0 %v4705
    %v5186 = vpop.f32.mrf.mxu0
    %v5187 = vadd.f32 %v5041, %v5186
    %v5188 = vpop.f32.mrf.mxu0
    %v5189 = vadd.f32 %v5043, %v5188
    %v5190 = vpop.f32.mrf.mxu0
    %v5191 = vadd.f32 %v5045, %v5190
    %v5192 = vpop.f32.mrf.mxu0
    %v5193 = vadd.f32 %v5047, %v5192
    %5194 = vmatprep.mubr.bf16.mxu0 0
    %5195 = vmatmul.mubr.bf16.gmra.mxu0 %v4708
    %v5196 = vpop.f32.mrf.mxu0
    %v5197 = vadd.f32 %v5051, %v5196
    %v5198 = vpop.f32.mrf.mxu0
    %v5199 = vadd.f32 %v5053, %v5198
    %v5200 = vpop.f32.mrf.mxu0
    %v5201 = vadd.f32 %v5055, %v5200
    %v5202 = vpop.f32.mrf.mxu0
    %v5203 = vadd.f32 %v5057, %v5202
    %5204 = vmatprep.mubr.bf16.mxu0 0
    %5205 = vmatmul.mubr.bf16.gmra.mxu0 %v4711
    %v5206 = vpop.f32.mrf.mxu0
    %v5207 = vadd.f32 %v5061, %v5206
    %v5208 = vpop.f32.mrf.mxu0
    %v5209 = vadd.f32 %v5063, %v5208
    %v5210 = vpop.f32.mrf.mxu0
    %v5211 = vadd.f32 %v5065, %v5210
    %v5212 = vpop.f32.mrf.mxu0
    %v5213 = vadd.f32 %v5067, %v5212
    %5214 = vdwg.mxu0
    %5215 = vmatprep.subr.bf16.mxu0 0
    %5216 = vmatpush1.bf16.msra.mxu0 0
    %5217 = vmatprep.subr.bf16.mxu0 0
    %5218 = vmatpush1.bf16.msra.mxu0 0
    %5219 = vmatprep.subr.bf16.mxu0 0
    %5220 = vmatpush1.bf16.msra.mxu0 0
    %5221 = vmatprep.subr.bf16.mxu0 %v518
    %5222 = vmatpush1.bf16.msra.mxu0 %v515
    %5223 = vmatprep.subr.bf16.mxu0 %v475
    %5224 = vmatpush1.bf16.msra.mxu0 %v474
    %5225 = vmatprep.subr.bf16.mxu0 %v471
    %5226 = vmatpush1.bf16.msra.mxu0 %v470
    %5227 = vmatprep.subr.bf16.mxu0 %v467
    %5228 = vmatpush1.bf16.msra.mxu0 %v466
    %5229 = vmatprep.subr.bf16.mxu0 %v463
    %5230 = vmatpush1.bf16.msra.mxu0 %v462
    %5231 = vmatprep.subr.bf16.mxu0 0
    %5232 = vmatpush2.bf16.msra.mxu0 0
    %5233 = vmatprep.subr.bf16.mxu0 0
    %5234 = vmatpush2.bf16.msra.mxu0 0
    %5235 = vmatprep.subr.bf16.mxu0 0
    %5236 = vmatpush2.bf16.msra.mxu0 0
    %5237 = vmatprep.subr.bf16.mxu0 0
    %5238 = vmatpush2.bf16.msra.mxu0 0
    %5239 = vmatprep.subr.bf16.mxu0 0
    %5240 = vmatpush2.bf16.msra.mxu0 0
    %5241 = vmatprep.subr.bf16.mxu0 0
    %5242 = vmatpush2.bf16.msra.mxu0 0
    %5243 = vmatprep.subr.bf16.mxu0 0
    %5244 = vmatpush2.bf16.msra.mxu0 0
    %5245 = vmatprep.subr.bf16.mxu0 0
    %5246 = vmatpush2.bf16.msra.mxu0 0
    %5247 = vmatprep.mubr.bf16.mxu0 0
    %5248 = vmatmul.mubr.bf16.gmra.mxu0 %v4702
    %v5249 = vpop.f32.mrf.mxu0
    %v5250 = vadd.f32 %v5104, %v5249
    %v5251 = vpop.f32.mrf.mxu0
    %v5252 = vadd.f32 %v5106, %v5251
    %v5253 = vpop.f32.mrf.mxu0
    %v5254 = vadd.f32 %v5108, %v5253
    %v5255 = vpop.f32.mrf.mxu0
    %v5256 = vadd.f32 %v5110, %v5255
    %5257 = vmatprep.mubr.bf16.mxu0 0
    %5258 = vmatmul.mubr.bf16.gmra.mxu0 %v4705
    %v5259 = vpop.f32.mrf.mxu0
    %v5260 = vadd.f32 %v5114, %v5259
    %v5261 = vpop.f32.mrf.mxu0
    %v5262 = vadd.f32 %v5116, %v5261
    %v5263 = vpop.f32.mrf.mxu0
    %v5264 = vadd.f32 %v5118, %v5263
    %v5265 = vpop.f32.mrf.mxu0
    %v5266 = vadd.f32 %v5120, %v5265
    %5267 = vmatprep.mubr.bf16.mxu0 0
    %5268 = vmatmul.mubr.bf16.gmra.mxu0 %v4708
    %v5269 = vpop.f32.mrf.mxu0
    %v5270 = vadd.f32 %v5124, %v5269
    %v5271 = vpop.f32.mrf.mxu0
    %v5272 = vadd.f32 %v5126, %v5271
    %v5273 = vpop.f32.mrf.mxu0
    %v5274 = vadd.f32 %v5128, %v5273
    %v5275 = vpop.f32.mrf.mxu0
    %v5276 = vadd.f32 %v5130, %v5275
    %5277 = vmatprep.mubr.bf16.mxu0 0
    %5278 = vmatmul.mubr.bf16.gmra.mxu0 %v4711
    %v5279 = vpop.f32.mrf.mxu0
    %v5280 = vadd.f32 %v5134, %v5279
    %v5281 = vpop.f32.mrf.mxu0
    %v5282 = vadd.f32 %v5136, %v5281
    %v5283 = vpop.f32.mrf.mxu0
    %v5284 = vadd.f32 %v5138, %v5283
    %v5285 = vpop.f32.mrf.mxu0
    %v5286 = vadd.f32 %v5140, %v5285
    %5287 = vdwg.mxu0
    %v5288 = vld [vmem:[%s0 + $0x8] sm:$0xf]
    %v5289 = vld [vmem:[%s0 + $0xc] sm:$0xf]
    %v5290 = vld [vmem:[%s0 + $0x10] sm:$0xf]
    %v5291 = vld [vmem:[%s0 + $0x14] sm:$0xf]
    %v5292 = vld [vmem:[%s0 + $0x18] sm:$0xf]
    %v5293 = vld [vmem:[%s0 + $0x1c] sm:$0xf]
    %v5294 = vld [vmem:[%s0 + $0x20] sm:$0xf]
    %v5295 = vld [vmem:[%s0 + $0x24] sm:$0xf]
    %v5304 = vunpack.c.l.b16 %v5288
    %v5305 = vunpack.c.l.b16 %v5289
    %v5306 = vunpack.c.l.b16 %v5290
    %v5307 = vunpack.c.l.b16 %v5291
    %v5308 = vunpack.c.l.b16 %v5292
    %v5309 = vunpack.c.l.b16 %v5293
    %v5310 = vunpack.c.l.b16 %v5294
    %v5311 = vunpack.c.l.b16 %v5295
    %v5312 = vpack.c.b16 %v5305, %v5304
    %v5313 = vpack.c.b16 %v5307, %v5306
    %v5314 = vpack.c.b16 %v5309, %v5308
    %v5315 = vpack.c.b16 %v5311, %v5310
    %v5317 = vsel %vm212, %v5312, 0
    %v5320 = vsel %vm212, %v5313, 0
    %v5323 = vsel %vm212, %v5314, 0
    %v5326 = vsel %vm212, %v5315, 0
    %5328 = vmatprep.subr.bf16.mxu0 0
    %5329 = vmatpush1.bf16.msra.mxu0 0
    %5330 = vmatprep.subr.bf16.mxu0 0
    %5331 = vmatpush1.bf16.msra.mxu0 0
    %5332 = vmatprep.subr.bf16.mxu0 0
    %5333 = vmatpush1.bf16.msra.mxu0 0
    %5334 = vmatprep.subr.bf16.mxu0 %v820
    %5335 = vmatpush1.bf16.msra.mxu0 %v817
    %5336 = vmatprep.subr.bf16.mxu0 %v781
    %5337 = vmatpush1.bf16.msra.mxu0 %v780
    %5338 = vmatprep.subr.bf16.mxu0 %v777
    %5339 = vmatpush1.bf16.msra.mxu0 %v776
    %5340 = vmatprep.subr.bf16.mxu0 %v773
    %5341 = vmatpush1.bf16.msra.mxu0 %v772
    %5342 = vmatprep.subr.bf16.mxu0 %v769
    %5343 = vmatpush1.bf16.msra.mxu0 %v768
    %5344 = vmatprep.subr.bf16.mxu0 0
    %5345 = vmatpush2.bf16.msra.mxu0 0
    %5346 = vmatprep.subr.bf16.mxu0 0
    %5347 = vmatpush2.bf16.msra.mxu0 0
    %5348 = vmatprep.subr.bf16.mxu0 0
    %5349 = vmatpush2.bf16.msra.mxu0 0
    %5350 = vmatprep.subr.bf16.mxu0 0
    %5351 = vmatpush2.bf16.msra.mxu0 0
    %5352 = vmatprep.subr.bf16.mxu0 0
    %5353 = vmatpush2.bf16.msra.mxu0 0
    %5354 = vmatprep.subr.bf16.mxu0 0
    %5355 = vmatpush2.bf16.msra.mxu0 0
    %5356 = vmatprep.subr.bf16.mxu0 0
    %5357 = vmatpush2.bf16.msra.mxu0 0
    %5358 = vmatprep.subr.bf16.mxu0 0
    %5359 = vmatpush2.bf16.msra.mxu0 0
    %5360 = vmatprep.mubr.bf16.mxu0 0
    %5361 = vmatmul.mubr.bf16.gmra.mxu0 %v5317
    %v5362 = vpop.f32.mrf.mxu0
    %v5363 = vadd.f32 0.0, %v5362
    %v5364 = vpop.f32.mrf.mxu0
    %v5365 = vadd.f32 0.0, %v5364
    %v5366 = vpop.f32.mrf.mxu0
    %v5367 = vadd.f32 0.0, %v5366
    %v5368 = vpop.f32.mrf.mxu0
    %v5369 = vadd.f32 0.0, %v5368
    %5370 = vmatprep.mubr.bf16.mxu0 0
    %5371 = vmatmul.mubr.bf16.gmra.mxu0 %v5320
    %v5372 = vpop.f32.mrf.mxu0
    %v5373 = vadd.f32 0.0, %v5372
    %v5374 = vpop.f32.mrf.mxu0
    %v5375 = vadd.f32 0.0, %v5374
    %v5376 = vpop.f32.mrf.mxu0
    %v5377 = vadd.f32 0.0, %v5376
    %v5378 = vpop.f32.mrf.mxu0
    %v5379 = vadd.f32 0.0, %v5378
    %5380 = vmatprep.mubr.bf16.mxu0 0
    %5381 = vmatmul.mubr.bf16.gmra.mxu0 %v5323
    %v5382 = vpop.f32.mrf.mxu0
    %v5383 = vadd.f32 0.0, %v5382
    %v5384 = vpop.f32.mrf.mxu0
    %v5385 = vadd.f32 0.0, %v5384
    %v5386 = vpop.f32.mrf.mxu0
    %v5387 = vadd.f32 0.0, %v5386
    %v5388 = vpop.f32.mrf.mxu0
    %v5389 = vadd.f32 0.0, %v5388
    %5390 = vmatprep.mubr.bf16.mxu0 0
    %5391 = vmatmul.mubr.bf16.gmra.mxu0 %v5326
    %v5392 = vpop.f32.mrf.mxu0
    %v5393 = vadd.f32 0.0, %v5392
    %v5394 = vpop.f32.mrf.mxu0
    %v5395 = vadd.f32 0.0, %v5394
    %v5396 = vpop.f32.mrf.mxu0
    %v5397 = vadd.f32 0.0, %v5396
    %v5398 = vpop.f32.mrf.mxu0
    %v5399 = vadd.f32 0.0, %v5398
    %5400 = vdwg.mxu0
    %5401 = vmatprep.subr.bf16.mxu0 0
    %5402 = vmatpush1.bf16.msra.mxu0 0
    %5403 = vmatprep.subr.bf16.mxu0 0
    %5404 = vmatpush1.bf16.msra.mxu0 0
    %5405 = vmatprep.subr.bf16.mxu0 0
    %5406 = vmatpush1.bf16.msra.mxu0 0
    %5407 = vmatprep.subr.bf16.mxu0 %v826
    %5408 = vmatpush1.bf16.msra.mxu0 %v823
    %5409 = vmatprep.subr.bf16.mxu0 %v783
    %5410 = vmatpush1.bf16.msra.mxu0 %v782
    %5411 = vmatprep.subr.bf16.mxu0 %v779
    %5412 = vmatpush1.bf16.msra.mxu0 %v778
    %5413 = vmatprep.subr.bf16.mxu0 %v775
    %5414 = vmatpush1.bf16.msra.mxu0 %v774
    %5415 = vmatprep.subr.bf16.mxu0 %v771
    %5416 = vmatpush1.bf16.msra.mxu0 %v770
    %5417 = vmatprep.subr.bf16.mxu0 0
    %5418 = vmatpush2.bf16.msra.mxu0 0
    %5419 = vmatprep.subr.bf16.mxu0 0
    %5420 = vmatpush2.bf16.msra.mxu0 0
    %5421 = vmatprep.subr.bf16.mxu0 0
    %5422 = vmatpush2.bf16.msra.mxu0 0
    %5423 = vmatprep.subr.bf16.mxu0 0
    %5424 = vmatpush2.bf16.msra.mxu0 0
    %5425 = vmatprep.subr.bf16.mxu0 0
    %5426 = vmatpush2.bf16.msra.mxu0 0
    %5427 = vmatprep.subr.bf16.mxu0 0
    %5428 = vmatpush2.bf16.msra.mxu0 0
    %5429 = vmatprep.subr.bf16.mxu0 0
    %5430 = vmatpush2.bf16.msra.mxu0 0
    %5431 = vmatprep.subr.bf16.mxu0 0
    %5432 = vmatpush2.bf16.msra.mxu0 0
    %5433 = vmatprep.mubr.bf16.mxu0 0
    %5434 = vmatmul.mubr.bf16.gmra.mxu0 %v5317
    %v5435 = vpop.f32.mrf.mxu0
    %v5436 = vadd.f32 0.0, %v5435
    %v5437 = vpop.f32.mrf.mxu0
    %v5438 = vadd.f32 0.0, %v5437
    %v5439 = vpop.f32.mrf.mxu0
    %v5440 = vadd.f32 0.0, %v5439
    %v5441 = vpop.f32.mrf.mxu0
    %v5442 = vadd.f32 0.0, %v5441
    %5443 = vmatprep.mubr.bf16.mxu0 0
    %5444 = vmatmul.mubr.bf16.gmra.mxu0 %v5320
    %v5445 = vpop.f32.mrf.mxu0
    %v5446 = vadd.f32 0.0, %v5445
    %v5447 = vpop.f32.mrf.mxu0
    %v5448 = vadd.f32 0.0, %v5447
    %v5449 = vpop.f32.mrf.mxu0
    %v5450 = vadd.f32 0.0, %v5449
    %v5451 = vpop.f32.mrf.mxu0
    %v5452 = vadd.f32 0.0, %v5451
    %5453 = vmatprep.mubr.bf16.mxu0 0
    %5454 = vmatmul.mubr.bf16.gmra.mxu0 %v5323
    %v5455 = vpop.f32.mrf.mxu0
    %v5456 = vadd.f32 0.0, %v5455
    %v5457 = vpop.f32.mrf.mxu0
    %v5458 = vadd.f32 0.0, %v5457
    %v5459 = vpop.f32.mrf.mxu0
    %v5460 = vadd.f32 0.0, %v5459
    %v5461 = vpop.f32.mrf.mxu0
    %v5462 = vadd.f32 0.0, %v5461
    %5463 = vmatprep.mubr.bf16.mxu0 0
    %5464 = vmatmul.mubr.bf16.gmra.mxu0 %v5326
    %v5465 = vpop.f32.mrf.mxu0
    %v5466 = vadd.f32 0.0, %v5465
    %v5467 = vpop.f32.mrf.mxu0
    %v5468 = vadd.f32 0.0, %v5467
    %v5469 = vpop.f32.mrf.mxu0
    %v5470 = vadd.f32 0.0, %v5469
    %v5471 = vpop.f32.mrf.mxu0
    %v5472 = vadd.f32 0.0, %v5471
    %5473 = vdwg.mxu0
    %v5474 = vadd.f32 %v5177, %v5363
    %v5475 = vadd.f32 %v5179, %v5365
    %v5476 = vadd.f32 %v5250, %v5436
    %v5477 = vadd.f32 %v5252, %v5438
    %v5478 = vadd.f32 %v5181, %v5367
    %v5479 = vadd.f32 %v5183, %v5369
    %v5480 = vadd.f32 %v5254, %v5440
    %v5481 = vadd.f32 %v5256, %v5442
    %v5482 = vadd.f32 %v5187, %v5373
    %v5483 = vadd.f32 %v5189, %v5375
    %v5484 = vadd.f32 %v5260, %v5446
    %v5485 = vadd.f32 %v5262, %v5448
    %v5486 = vadd.f32 %v5191, %v5377
    %v5487 = vadd.f32 %v5193, %v5379
    %v5488 = vadd.f32 %v5264, %v5450
    %v5489 = vadd.f32 %v5266, %v5452
    %v5490 = vadd.f32 %v5197, %v5383
    %v5491 = vadd.f32 %v5199, %v5385
    %v5492 = vadd.f32 %v5270, %v5456
    %v5493 = vadd.f32 %v5272, %v5458
    %v5494 = vadd.f32 %v5201, %v5387
    %v5495 = vadd.f32 %v5203, %v5389
    %v5496 = vadd.f32 %v5274, %v5460
    %v5497 = vadd.f32 %v5276, %v5462
    %v5498 = vadd.f32 %v5207, %v5393
    %v5499 = vadd.f32 %v5209, %v5395
    %v5500 = vadd.f32 %v5280, %v5466
    %v5501 = vadd.f32 %v5282, %v5468
    %v5502 = vadd.f32 %v5211, %v5397
    %v5503 = vadd.f32 %v5213, %v5399
    %v5504 = vadd.f32 %v5284, %v5470
    %v5505 = vadd.f32 %v5286, %v5472
    %v5506 = vadd.f32 %v5474, %v1010
    %v5507 = vadd.f32 %v5475, %v1014
    %v5508 = vadd.f32 %v5476, %v1018
    %v5509 = vadd.f32 %v5477, %v1022
    %v5510 = vadd.f32 %v5478, %v1010
    %v5511 = vadd.f32 %v5479, %v1014
    %v5512 = vadd.f32 %v5480, %v1018
    %v5513 = vadd.f32 %v5481, %v1022
    %v5514 = vadd.f32 %v5482, %v1010
    %v5515 = vadd.f32 %v5483, %v1014
    %v5516 = vadd.f32 %v5484, %v1018
    %v5517 = vadd.f32 %v5485, %v1022
    %v5518 = vadd.f32 %v5486, %v1010
    %v5519 = vadd.f32 %v5487, %v1014
    %v5520 = vadd.f32 %v5488, %v1018
    %v5521 = vadd.f32 %v5489, %v1022
    %v5522 = vadd.f32 %v5490, %v1010
    %v5523 = vadd.f32 %v5491, %v1014
    %v5524 = vadd.f32 %v5492, %v1018
    %v5525 = vadd.f32 %v5493, %v1022
    %v5526 = vadd.f32 %v5494, %v1010
    %v5527 = vadd.f32 %v5495, %v1014
    %v5528 = vadd.f32 %v5496, %v1018
    %v5529 = vadd.f32 %v5497, %v1022
    %v5530 = vadd.f32 %v5498, %v1010
    %v5531 = vadd.f32 %v5499, %v1014
    %v5532 = vadd.f32 %v5500, %v1018
    %v5533 = vadd.f32 %v5501, %v1022
    %v5534 = vadd.f32 %v5502, %v1010
    %v5535 = vadd.f32 %v5503, %v1014
    %v5536 = vadd.f32 %v5504, %v1018
    %v5537 = vadd.f32 %v5505, %v1022
    %v5538 = vmax.f32 %v5506, 0.0
    %v5539 = vmax.f32 %v5507, 0.0
    %v5540 = vmax.f32 %v5508, 0.0
    %v5541 = vmax.f32 %v5509, 0.0
    %v5542 = vmax.f32 %v5510, 0.0
    %v5543 = vmax.f32 %v5511, 0.0
    %v5544 = vmax.f32 %v5512, 0.0
    %v5545 = vmax.f32 %v5513, 0.0
    %v5546 = vmax.f32 %v5514, 0.0
    %v5547 = vmax.f32 %v5515, 0.0
    %v5548 = vmax.f32 %v5516, 0.0
    %v5549 = vmax.f32 %v5517, 0.0
    %v5550 = vmax.f32 %v5518, 0.0
    %v5551 = vmax.f32 %v5519, 0.0
    %v5552 = vmax.f32 %v5520, 0.0
    %v5553 = vmax.f32 %v5521, 0.0
    %v5554 = vmax.f32 %v5522, 0.0
    %v5555 = vmax.f32 %v5523, 0.0
    %v5556 = vmax.f32 %v5524, 0.0
    %v5557 = vmax.f32 %v5525, 0.0
    %v5558 = vmax.f32 %v5526, 0.0
    %v5559 = vmax.f32 %v5527, 0.0
    %v5560 = vmax.f32 %v5528, 0.0
    %v5561 = vmax.f32 %v5529, 0.0
    %v5562 = vmax.f32 %v5530, 0.0
    %v5563 = vmax.f32 %v5531, 0.0
    %v5564 = vmax.f32 %v5532, 0.0
    %v5565 = vmax.f32 %v5533, 0.0
    %v5566 = vmax.f32 %v5534, 0.0
    %v5567 = vmax.f32 %v5535, 0.0
    %v5568 = vmax.f32 %v5536, 0.0
    %v5569 = vmax.f32 %v5537, 0.0
    %v5570 = vmax.f32 %v4923, %v4925
    %v5571 = vmax.f32 %v4924, %v4926
    %v5572 = vmax.f32 %v4927, %v4929
    %v5573 = vmax.f32 %v4928, %v4930
    %v5574 = vmax.f32 %v4931, %v4933
    %v5575 = vmax.f32 %v4932, %v4934
    %v5576 = vmax.f32 %v4935, %v4937
    %v5577 = vmax.f32 %v4936, %v4938
    %v5578 = vmax.f32 %v4939, %v4941
    %v5579 = vmax.f32 %v4940, %v4942
    %v5580 = vmax.f32 %v4943, %v4945
    %v5581 = vmax.f32 %v4944, %v4946
    %v5582 = vmax.f32 %v4947, %v4949
    %v5583 = vmax.f32 %v4948, %v4950
    %v5584 = vmax.f32 %v4951, %v4953
    %v5585 = vmax.f32 %v4952, %v4954
    %v5586 = vmax.f32 %v5538, %v5540
    %v5587 = vmax.f32 %v5539, %v5541
    %v5588 = vmax.f32 %v5542, %v5544
    %v5589 = vmax.f32 %v5543, %v5545
    %v5590 = vmax.f32 %v5546, %v5548
    %v5591 = vmax.f32 %v5547, %v5549
    %v5592 = vmax.f32 %v5550, %v5552
    %v5593 = vmax.f32 %v5551, %v5553
    %v5594 = vmax.f32 %v5554, %v5556
    %v5595 = vmax.f32 %v5555, %v5557
    %v5596 = vmax.f32 %v5558, %v5560
    %v5597 = vmax.f32 %v5559, %v5561
    %v5598 = vmax.f32 %v5562, %v5564
    %v5599 = vmax.f32 %v5563, %v5565
    %v5600 = vmax.f32 %v5566, %v5568
    %v5601 = vmax.f32 %v5567, %v5569
    %v5602 = vmax.f32 %v5570, %v5586
    %v5603 = vmax.f32 %v5571, %v5587
    %v5604 = vmax.f32 %v5572, %v5588
    %v5605 = vmax.f32 %v5573, %v5589
    %v5606 = vmax.f32 %v5574, %v5590
    %v5607 = vmax.f32 %v5575, %v5591
    %v5608 = vmax.f32 %v5576, %v5592
    %v5609 = vmax.f32 %v5577, %v5593
    %v5610 = vmax.f32 %v5578, %v5594
    %v5611 = vmax.f32 %v5579, %v5595
    %v5612 = vmax.f32 %v5580, %v5596
    %v5613 = vmax.f32 %v5581, %v5597
    %v5614 = vmax.f32 %v5582, %v5598
    %v5615 = vmax.f32 %v5583, %v5599
    %v5616 = vmax.f32 %v5584, %v5600
    %v5617 = vmax.f32 %v5585, %v5601
    %v5618 = vpack.c.bf16 %v5604, %v5602
    %v5619 = vpack.c.bf16 %v5605, %v5603
    %v5620 = vpack.c.bf16 %v5608, %v5606
    %v5621 = vpack.c.bf16 %v5609, %v5607
    %v5622 = vpack.c.bf16 %v5612, %v5610
    %v5623 = vpack.c.bf16 %v5613, %v5611
    %v5624 = vpack.c.bf16 %v5616, %v5614
    %v5625 = vpack.c.bf16 %v5617, %v5615
    %v5626 = vld [vmem:[%s4] sm:$0x3]
    %s5627 = scalar_lea.vmem %s3, 256
    %v5628 = vld [vmem:[%s5627] sm:$0xff]
    %v5629 = vld [vmem:[%s5627 + $0x8] sm:$0xff]
    %v5630 = vld [vmem:[%s5627 + $0x10] sm:$0xff]
    %v5631 = vld [vmem:[%s5627 + $0x18] sm:$0xff]
    %v5632 = vld [vmem:[%s5627 + $0x20] sm:$0xff]
    %v5633 = vld [vmem:[%s5627 + $0x28] sm:$0xff]
    %v5634 = vld [vmem:[%s5627 + $0x30] sm:$0xff]
    %v5635 = vld [vmem:[%s5627 + $0x38] sm:$0xff]
    %v5636 = vld [vmem:[%s5627 + $0x40] sm:$0xff]
    %v5637 = vld [vmem:[%s5627 + $0x48] sm:$0xff]
    %v5638 = vld [vmem:[%s5627 + $0x50] sm:$0xff]
    %v5639 = vld [vmem:[%s5627 + $0x58] sm:$0xff]
    %v5640 = vld [vmem:[%s5627 + $0x60] sm:$0xff]
    %v5641 = vld [vmem:[%s5627 + $0x68] sm:$0xff]
    %v5642 = vld [vmem:[%s5627 + $0x70] sm:$0xff]
    %v5643 = vld [vmem:[%s5627 + $0x78] sm:$0xff]
    %v5644 = vld [vmem:[%s5627 + $0x80] sm:$0xff]
    %v5645 = vld [vmem:[%s5627 + $0x88] sm:$0xff]
    %v5646 = vld [vmem:[%s5627 + $0x90] sm:$0xff]
    %v5647 = vld [vmem:[%s5627 + $0x98] sm:$0xff]
    %v5648 = vld [vmem:[%s5627 + $0xa0] sm:$0xff]
    %v5649 = vld [vmem:[%s5627 + $0xa8] sm:$0xff]
    %v5650 = vld [vmem:[%s5627 + $0xb0] sm:$0xff]
    %v5651 = vld [vmem:[%s5627 + $0xb8] sm:$0xff]
    %v5652 = vld [vmem:[%s5627 + $0xc0] sm:$0xff]
    %v5653 = vld [vmem:[%s5627 + $0xc8] sm:$0xff]
    %v5654 = vld [vmem:[%s5627 + $0xd0] sm:$0xff]
    %v5655 = vld [vmem:[%s5627 + $0xd8] sm:$0xff]
    %v5656 = vld [vmem:[%s5627 + $0xe0] sm:$0xff]
    %v5657 = vld [vmem:[%s5627 + $0xe8] sm:$0xff]
    %v5658 = vld [vmem:[%s5627 + $0xf0] sm:$0xff]
    %v5659 = vld [vmem:[%s5627 + $0xf8] sm:$0xff]
    %s5660 = scalar_lea.vmem %s3, 512
    %v5661 = vld [vmem:[%s5660] sm:$0xff]
    %v5662 = vld [vmem:[%s5660 + $0x8] sm:$0xff]
    %v5663 = vld [vmem:[%s5660 + $0x10] sm:$0xff]
    %v5664 = vld [vmem:[%s5660 + $0x18] sm:$0xff]
    %v5665 = vld [vmem:[%s5660 + $0x20] sm:$0xff]
    %v5666 = vld [vmem:[%s5660 + $0x28] sm:$0xff]
    %v5667 = vld [vmem:[%s5660 + $0x30] sm:$0xff]
    %v5668 = vld [vmem:[%s5660 + $0x38] sm:$0xff]
    %v5669 = vld [vmem:[%s5660 + $0x40] sm:$0xff]
    %v5670 = vld [vmem:[%s5660 + $0x48] sm:$0xff]
    %v5671 = vld [vmem:[%s5660 + $0x50] sm:$0xff]
    %v5672 = vld [vmem:[%s5660 + $0x58] sm:$0xff]
    %v5673 = vld [vmem:[%s5660 + $0x60] sm:$0xff]
    %v5674 = vld [vmem:[%s5660 + $0x68] sm:$0xff]
    %v5675 = vld [vmem:[%s5660 + $0x70] sm:$0xff]
    %v5676 = vld [vmem:[%s5660 + $0x78] sm:$0xff]
    %v5677 = vld [vmem:[%s5660 + $0x80] sm:$0xff]
    %v5678 = vld [vmem:[%s5660 + $0x88] sm:$0xff]
    %v5679 = vld [vmem:[%s5660 + $0x90] sm:$0xff]
    %v5680 = vld [vmem:[%s5660 + $0x98] sm:$0xff]
    %v5681 = vld [vmem:[%s5660 + $0xa0] sm:$0xff]
    %v5682 = vld [vmem:[%s5660 + $0xa8] sm:$0xff]
    %v5683 = vld [vmem:[%s5660 + $0xb0] sm:$0xff]
    %v5684 = vld [vmem:[%s5660 + $0xb8] sm:$0xff]
    %v5685 = vld [vmem:[%s5660 + $0xc0] sm:$0xff]
    %v5686 = vld [vmem:[%s5660 + $0xc8] sm:$0xff]
    %v5687 = vld [vmem:[%s5660 + $0xd0] sm:$0xff]
    %v5688 = vld [vmem:[%s5660 + $0xd8] sm:$0xff]
    %v5689 = vld [vmem:[%s5660 + $0xe0] sm:$0xff]
    %v5690 = vld [vmem:[%s5660 + $0xe8] sm:$0xff]
    %v5691 = vld [vmem:[%s5660 + $0xf0] sm:$0xff]
    %v5692 = vld [vmem:[%s5660 + $0xf8] sm:$0xff]
    %v5725 = vunpack.c.l.b16 %v5661
    %v5726 = vunpack.c.h.b16 %v5661
    %v5727 = vunpack.c.l.b16 %v5662
    %v5728 = vunpack.c.h.b16 %v5662
    %v5729 = vunpack.c.l.b16 %v5663
    %v5730 = vunpack.c.h.b16 %v5663
    %v5731 = vunpack.c.l.b16 %v5664
    %v5732 = vunpack.c.h.b16 %v5664
    %v5733 = vunpack.c.l.b16 %v5665
    %v5734 = vunpack.c.h.b16 %v5665
    %v5735 = vunpack.c.l.b16 %v5666
    %v5736 = vunpack.c.h.b16 %v5666
    %v5737 = vunpack.c.l.b16 %v5667
    %v5738 = vunpack.c.h.b16 %v5667
    %v5739 = vunpack.c.l.b16 %v5668
    %v5740 = vunpack.c.h.b16 %v5668
    %v5741 = vunpack.c.l.b16 %v5669
    %v5742 = vunpack.c.h.b16 %v5669
    %v5743 = vunpack.c.l.b16 %v5670
    %v5744 = vunpack.c.h.b16 %v5670
    %v5745 = vunpack.c.l.b16 %v5671
    %v5746 = vunpack.c.h.b16 %v5671
    %v5747 = vunpack.c.l.b16 %v5672
    %v5748 = vunpack.c.h.b16 %v5672
    %v5749 = vunpack.c.l.b16 %v5673
    %v5750 = vunpack.c.h.b16 %v5673
    %v5751 = vunpack.c.l.b16 %v5674
    %v5752 = vunpack.c.h.b16 %v5674
    %v5753 = vunpack.c.l.b16 %v5675
    %v5754 = vunpack.c.h.b16 %v5675
    %v5755 = vunpack.c.l.b16 %v5676
    %v5756 = vunpack.c.h.b16 %v5676
    %v5757 = vunpack.c.l.b16 %v5677
    %v5758 = vunpack.c.h.b16 %v5677
    %v5759 = vunpack.c.l.b16 %v5678
    %v5760 = vunpack.c.h.b16 %v5678
    %v5761 = vunpack.c.l.b16 %v5679
    %v5762 = vunpack.c.h.b16 %v5679
    %v5763 = vunpack.c.l.b16 %v5680
    %v5764 = vunpack.c.h.b16 %v5680
    %v5765 = vunpack.c.l.b16 %v5681
    %v5766 = vunpack.c.h.b16 %v5681
    %v5767 = vunpack.c.l.b16 %v5682
    %v5768 = vunpack.c.h.b16 %v5682
    %v5769 = vunpack.c.l.b16 %v5683
    %v5770 = vunpack.c.h.b16 %v5683
    %v5771 = vunpack.c.l.b16 %v5684
    %v5772 = vunpack.c.h.b16 %v5684
    %v5773 = vunpack.c.l.b16 %v5685
    %v5774 = vunpack.c.h.b16 %v5685
    %v5775 = vunpack.c.l.b16 %v5686
    %v5776 = vunpack.c.h.b16 %v5686
    %v5777 = vunpack.c.l.b16 %v5687
    %v5778 = vunpack.c.h.b16 %v5687
    %v5779 = vunpack.c.l.b16 %v5688
    %v5780 = vunpack.c.h.b16 %v5688
    %v5781 = vunpack.c.l.b16 %v5689
    %v5782 = vunpack.c.h.b16 %v5689
    %v5783 = vunpack.c.l.b16 %v5690
    %v5784 = vunpack.c.h.b16 %v5690
    %v5785 = vunpack.c.l.b16 %v5691
    %v5786 = vunpack.c.h.b16 %v5691
    %v5787 = vunpack.c.l.b16 %v5692
    %v5788 = vunpack.c.h.b16 %v5692
    %v5789 = vpack.c.b16 %v5727, %v5725
    %v5790 = vpack.c.b16 %v5728, %v5726
    %v5791 = vpack.c.b16 %v5731, %v5729
    %v5792 = vpack.c.b16 %v5732, %v5730
    %v5793 = vpack.c.b16 %v5735, %v5733
    %v5794 = vpack.c.b16 %v5736, %v5734
    %v5795 = vpack.c.b16 %v5739, %v5737
    %v5796 = vpack.c.b16 %v5740, %v5738
    %v5797 = vpack.c.b16 %v5743, %v5741
    %v5798 = vpack.c.b16 %v5744, %v5742
    %v5799 = vpack.c.b16 %v5747, %v5745
    %v5800 = vpack.c.b16 %v5748, %v5746
    %v5801 = vpack.c.b16 %v5751, %v5749
    %v5802 = vpack.c.b16 %v5752, %v5750
    %v5803 = vpack.c.b16 %v5755, %v5753
    %v5804 = vpack.c.b16 %v5756, %v5754
    %v5805 = vpack.c.b16 %v5759, %v5757
    %v5806 = vpack.c.b16 %v5760, %v5758
    %v5807 = vpack.c.b16 %v5763, %v5761
    %v5808 = vpack.c.b16 %v5764, %v5762
    %v5809 = vpack.c.b16 %v5767, %v5765
    %v5810 = vpack.c.b16 %v5768, %v5766
    %v5811 = vpack.c.b16 %v5771, %v5769
    %v5812 = vpack.c.b16 %v5772, %v5770
    %v5813 = vpack.c.b16 %v5775, %v5773
    %v5814 = vpack.c.b16 %v5776, %v5774
    %v5815 = vpack.c.b16 %v5779, %v5777
    %v5816 = vpack.c.b16 %v5780, %v5778
    %v5817 = vpack.c.b16 %v5783, %v5781
    %v5818 = vpack.c.b16 %v5784, %v5782
    %v5819 = vpack.c.b16 %v5787, %v5785
    %v5820 = vpack.c.b16 %v5788, %v5786
    %5853 = vmatprep.subr.bf16.mxu0 %v5804
    %5854 = vmatpush1.bf16.msra.mxu0 %v5803
    %5855 = vmatprep.subr.bf16.mxu0 %v5802
    %5856 = vmatpush1.bf16.msra.mxu0 %v5801
    %5857 = vmatprep.subr.bf16.mxu0 %v5800
    %5858 = vmatpush1.bf16.msra.mxu0 %v5799
    %5859 = vmatprep.subr.bf16.mxu0 %v5798
    %5860 = vmatpush1.bf16.msra.mxu0 %v5797
    %5861 = vmatprep.subr.bf16.mxu0 %v5796
    %5862 = vmatpush1.bf16.msra.mxu0 %v5795
    %5863 = vmatprep.subr.bf16.mxu0 %v5794
    %5864 = vmatpush1.bf16.msra.mxu0 %v5793
    %5865 = vmatprep.subr.bf16.mxu0 %v5792
    %5866 = vmatpush1.bf16.msra.mxu0 %v5791
    %5867 = vmatprep.subr.bf16.mxu0 %v5790
    %5868 = vmatpush1.bf16.msra.mxu0 %v5789
    %5869 = vmatprep.subr.bf16.mxu0 %v5820
    %5870 = vmatpush2.bf16.msra.mxu0 %v5819
    %5871 = vmatprep.subr.bf16.mxu0 %v5818
    %5872 = vmatpush2.bf16.msra.mxu0 %v5817
    %5873 = vmatprep.subr.bf16.mxu0 %v5816
    %5874 = vmatpush2.bf16.msra.mxu0 %v5815
    %5875 = vmatprep.subr.bf16.mxu0 %v5814
    %5876 = vmatpush2.bf16.msra.mxu0 %v5813
    %5877 = vmatprep.subr.bf16.mxu0 %v5812
    %5878 = vmatpush2.bf16.msra.mxu0 %v5811
    %5879 = vmatprep.subr.bf16.mxu0 %v5810
    %5880 = vmatpush2.bf16.msra.mxu0 %v5809
    %5881 = vmatprep.subr.bf16.mxu0 %v5808
    %5882 = vmatpush2.bf16.msra.mxu0 %v5807
    %5883 = vmatprep.subr.bf16.mxu0 %v5806
    %5884 = vmatpush2.bf16.msra.mxu0 %v5805
    %5885 = vmatprep.mubr.bf16.mxu0 %v3044
    %5886 = vmatmul.mubr.bf16.gmra.mxu0 %v3043
    %v5887 = vpop.f32.mrf.mxu0
    %v5888 = vadd.f32 0.0, %v5887
    %v5889 = vpop.f32.mrf.mxu0
    %v5890 = vadd.f32 0.0, %v5889
    %v5891 = vpop.f32.mrf.mxu0
    %v5892 = vadd.f32 0.0, %v5891
    %v5893 = vpop.f32.mrf.mxu0
    %v5894 = vadd.f32 0.0, %v5893
    %5895 = vmatprep.mubr.bf16.mxu0 %v3046
    %5896 = vmatmul.mubr.bf16.gmra.mxu0 %v3045
    %v5897 = vpop.f32.mrf.mxu0
    %v5898 = vadd.f32 0.0, %v5897
    %v5899 = vpop.f32.mrf.mxu0
    %v5900 = vadd.f32 0.0, %v5899
    %v5901 = vpop.f32.mrf.mxu0
    %v5902 = vadd.f32 0.0, %v5901
    %v5903 = vpop.f32.mrf.mxu0
    %v5904 = vadd.f32 0.0, %v5903
    %5905 = vmatprep.mubr.bf16.mxu0 %v3048
    %5906 = vmatmul.mubr.bf16.gmra.mxu0 %v3047
    %v5907 = vpop.f32.mrf.mxu0
    %v5908 = vadd.f32 0.0, %v5907
    %v5909 = vpop.f32.mrf.mxu0
    %v5910 = vadd.f32 0.0, %v5909
    %v5911 = vpop.f32.mrf.mxu0
    %v5912 = vadd.f32 0.0, %v5911
    %v5913 = vpop.f32.mrf.mxu0
    %v5914 = vadd.f32 0.0, %v5913
    %5915 = vmatprep.mubr.bf16.mxu0 %v3050
    %5916 = vmatmul.mubr.bf16.gmra.mxu0 %v3049
    %v5917 = vpop.f32.mrf.mxu0
    %v5918 = vadd.f32 0.0, %v5917
    %v5919 = vpop.f32.mrf.mxu0
    %v5920 = vadd.f32 0.0, %v5919
    %v5921 = vpop.f32.mrf.mxu0
    %v5922 = vadd.f32 0.0, %v5921
    %v5923 = vpop.f32.mrf.mxu0
    %v5924 = vadd.f32 0.0, %v5923
    %5925 = vdwg.mxu0
    %v5958 = vunpack.c.l.b16 %v5628
    %v5959 = vunpack.c.h.b16 %v5628
    %v5960 = vunpack.c.l.b16 %v5629
    %v5961 = vunpack.c.h.b16 %v5629
    %v5962 = vunpack.c.l.b16 %v5630
    %v5963 = vunpack.c.h.b16 %v5630
    %v5964 = vunpack.c.l.b16 %v5631
    %v5965 = vunpack.c.h.b16 %v5631
    %v5966 = vunpack.c.l.b16 %v5632
    %v5967 = vunpack.c.h.b16 %v5632
    %v5968 = vunpack.c.l.b16 %v5633
    %v5969 = vunpack.c.h.b16 %v5633
    %v5970 = vunpack.c.l.b16 %v5634
    %v5971 = vunpack.c.h.b16 %v5634
    %v5972 = vunpack.c.l.b16 %v5635
    %v5973 = vunpack.c.h.b16 %v5635
    %v5974 = vunpack.c.l.b16 %v5636
    %v5975 = vunpack.c.h.b16 %v5636
    %v5976 = vunpack.c.l.b16 %v5637
    %v5977 = vunpack.c.h.b16 %v5637
    %v5978 = vunpack.c.l.b16 %v5638
    %v5979 = vunpack.c.h.b16 %v5638
    %v5980 = vunpack.c.l.b16 %v5639
    %v5981 = vunpack.c.h.b16 %v5639
    %v5982 = vunpack.c.l.b16 %v5640
    %v5983 = vunpack.c.h.b16 %v5640
    %v5984 = vunpack.c.l.b16 %v5641
    %v5985 = vunpack.c.h.b16 %v5641
    %v5986 = vunpack.c.l.b16 %v5642
    %v5987 = vunpack.c.h.b16 %v5642
    %v5988 = vunpack.c.l.b16 %v5643
    %v5989 = vunpack.c.h.b16 %v5643
    %v5990 = vunpack.c.l.b16 %v5644
    %v5991 = vunpack.c.h.b16 %v5644
    %v5992 = vunpack.c.l.b16 %v5645
    %v5993 = vunpack.c.h.b16 %v5645
    %v5994 = vunpack.c.l.b16 %v5646
    %v5995 = vunpack.c.h.b16 %v5646
    %v5996 = vunpack.c.l.b16 %v5647
    %v5997 = vunpack.c.h.b16 %v5647
    %v5998 = vunpack.c.l.b16 %v5648
    %v5999 = vunpack.c.h.b16 %v5648
    %v6000 = vunpack.c.l.b16 %v5649
    %v6001 = vunpack.c.h.b16 %v5649
    %v6002 = vunpack.c.l.b16 %v5650
    %v6003 = vunpack.c.h.b16 %v5650
    %v6004 = vunpack.c.l.b16 %v5651
    %v6005 = vunpack.c.h.b16 %v5651
    %v6006 = vunpack.c.l.b16 %v5652
    %v6007 = vunpack.c.h.b16 %v5652
    %v6008 = vunpack.c.l.b16 %v5653
    %v6009 = vunpack.c.h.b16 %v5653
    %v6010 = vunpack.c.l.b16 %v5654
    %v6011 = vunpack.c.h.b16 %v5654
    %v6012 = vunpack.c.l.b16 %v5655
    %v6013 = vunpack.c.h.b16 %v5655
    %v6014 = vunpack.c.l.b16 %v5656
    %v6015 = vunpack.c.h.b16 %v5656
    %v6016 = vunpack.c.l.b16 %v5657
    %v6017 = vunpack.c.h.b16 %v5657
    %v6018 = vunpack.c.l.b16 %v5658
    %v6019 = vunpack.c.h.b16 %v5658
    %v6020 = vunpack.c.l.b16 %v5659
    %v6021 = vunpack.c.h.b16 %v5659
    %v6022 = vpack.c.b16 %v5960, %v5958
    %v6023 = vpack.c.b16 %v5961, %v5959
    %v6024 = vpack.c.b16 %v5964, %v5962
    %v6025 = vpack.c.b16 %v5965, %v5963
    %v6026 = vpack.c.b16 %v5968, %v5966
    %v6027 = vpack.c.b16 %v5969, %v5967
    %v6028 = vpack.c.b16 %v5972, %v5970
    %v6029 = vpack.c.b16 %v5973, %v5971
    %v6030 = vpack.c.b16 %v5976, %v5974
    %v6031 = vpack.c.b16 %v5977, %v5975
    %v6032 = vpack.c.b16 %v5980, %v5978
    %v6033 = vpack.c.b16 %v5981, %v5979
    %v6034 = vpack.c.b16 %v5984, %v5982
    %v6035 = vpack.c.b16 %v5985, %v5983
    %v6036 = vpack.c.b16 %v5988, %v5986
    %v6037 = vpack.c.b16 %v5989, %v5987
    %v6038 = vpack.c.b16 %v5992, %v5990
    %v6039 = vpack.c.b16 %v5993, %v5991
    %v6040 = vpack.c.b16 %v5996, %v5994
    %v6041 = vpack.c.b16 %v5997, %v5995
    %v6042 = vpack.c.b16 %v6000, %v5998
    %v6043 = vpack.c.b16 %v6001, %v5999
    %v6044 = vpack.c.b16 %v6004, %v6002
    %v6045 = vpack.c.b16 %v6005, %v6003
    %v6046 = vpack.c.b16 %v6008, %v6006
    %v6047 = vpack.c.b16 %v6009, %v6007
    %v6048 = vpack.c.b16 %v6012, %v6010
    %v6049 = vpack.c.b16 %v6013, %v6011
    %v6050 = vpack.c.b16 %v6016, %v6014
    %v6051 = vpack.c.b16 %v6017, %v6015
    %v6052 = vpack.c.b16 %v6020, %v6018
    %v6053 = vpack.c.b16 %v6021, %v6019
    %6086 = vmatprep.subr.bf16.mxu0 %v6037
    %6087 = vmatpush1.bf16.msra.mxu0 %v6036
    %6088 = vmatprep.subr.bf16.mxu0 %v6035
    %6089 = vmatpush1.bf16.msra.mxu0 %v6034
    %6090 = vmatprep.subr.bf16.mxu0 %v6033
    %6091 = vmatpush1.bf16.msra.mxu0 %v6032
    %6092 = vmatprep.subr.bf16.mxu0 %v6031
    %6093 = vmatpush1.bf16.msra.mxu0 %v6030
    %6094 = vmatprep.subr.bf16.mxu0 %v6029
    %6095 = vmatpush1.bf16.msra.mxu0 %v6028
    %6096 = vmatprep.subr.bf16.mxu0 %v6027
    %6097 = vmatpush1.bf16.msra.mxu0 %v6026
    %6098 = vmatprep.subr.bf16.mxu0 %v6025
    %6099 = vmatpush1.bf16.msra.mxu0 %v6024
    %6100 = vmatprep.subr.bf16.mxu0 %v6023
    %6101 = vmatpush1.bf16.msra.mxu0 %v6022
    %6102 = vmatprep.subr.bf16.mxu0 %v6053
    %6103 = vmatpush2.bf16.msra.mxu0 %v6052
    %6104 = vmatprep.subr.bf16.mxu0 %v6051
    %6105 = vmatpush2.bf16.msra.mxu0 %v6050
    %6106 = vmatprep.subr.bf16.mxu0 %v6049
    %6107 = vmatpush2.bf16.msra.mxu0 %v6048
    %6108 = vmatprep.subr.bf16.mxu0 %v6047
    %6109 = vmatpush2.bf16.msra.mxu0 %v6046
    %6110 = vmatprep.subr.bf16.mxu0 %v6045
    %6111 = vmatpush2.bf16.msra.mxu0 %v6044
    %6112 = vmatprep.subr.bf16.mxu0 %v6043
    %6113 = vmatpush2.bf16.msra.mxu0 %v6042
    %6114 = vmatprep.subr.bf16.mxu0 %v6041
    %6115 = vmatpush2.bf16.msra.mxu0 %v6040
    %6116 = vmatprep.subr.bf16.mxu0 %v6039
    %6117 = vmatpush2.bf16.msra.mxu0 %v6038
    %6118 = vmatprep.mubr.bf16.mxu0 %v1756
    %6119 = vmatmul.mubr.bf16.gmra.mxu0 %v1755
    %v6120 = vpop.f32.mrf.mxu0
    %v6121 = vadd.f32 %v5888, %v6120
    %v6122 = vpop.f32.mrf.mxu0
    %v6123 = vadd.f32 %v5890, %v6122
    %v6124 = vpop.f32.mrf.mxu0
    %v6125 = vadd.f32 %v5892, %v6124
    %v6126 = vpop.f32.mrf.mxu0
    %v6127 = vadd.f32 %v5894, %v6126
    %6128 = vmatprep.mubr.bf16.mxu0 %v1758
    %6129 = vmatmul.mubr.bf16.gmra.mxu0 %v1757
    %v6130 = vpop.f32.mrf.mxu0
    %v6131 = vadd.f32 %v5898, %v6130
    %v6132 = vpop.f32.mrf.mxu0
    %v6133 = vadd.f32 %v5900, %v6132
    %v6134 = vpop.f32.mrf.mxu0
    %v6135 = vadd.f32 %v5902, %v6134
    %v6136 = vpop.f32.mrf.mxu0
    %v6137 = vadd.f32 %v5904, %v6136
    %6138 = vmatprep.mubr.bf16.mxu0 %v1760
    %6139 = vmatmul.mubr.bf16.gmra.mxu0 %v1759
    %v6140 = vpop.f32.mrf.mxu0
    %v6141 = vadd.f32 %v5908, %v6140
    %v6142 = vpop.f32.mrf.mxu0
    %v6143 = vadd.f32 %v5910, %v6142
    %v6144 = vpop.f32.mrf.mxu0
    %v6145 = vadd.f32 %v5912, %v6144
    %v6146 = vpop.f32.mrf.mxu0
    %v6147 = vadd.f32 %v5914, %v6146
    %6148 = vmatprep.mubr.bf16.mxu0 %v1762
    %6149 = vmatmul.mubr.bf16.gmra.mxu0 %v1761
    %v6150 = vpop.f32.mrf.mxu0
    %v6151 = vadd.f32 %v5918, %v6150
    %v6152 = vpop.f32.mrf.mxu0
    %v6153 = vadd.f32 %v5920, %v6152
    %v6154 = vpop.f32.mrf.mxu0
    %v6155 = vadd.f32 %v5922, %v6154
    %v6156 = vpop.f32.mrf.mxu0
    %v6157 = vadd.f32 %v5924, %v6156
    %6158 = vdwg.mxu0
    %v6160 = vlaneseq
    %v6161 = vshrl.u32 %v6160, 7
    %v6162 = vsub.s32 0, %v6161
    %v6163 = vrot.slane %v5626, %v6162
    %v6164 = vlaneseq
    %v6165 = vshrl.u32 %v6164, 7
    %v6166 = vsub.s32 1, %v6165
    %v6167 = vrot.slane %v5626, %v6166
    %v6170 = vadd.f32 %v6121, %v6163
    %v6171 = vadd.f32 %v6123, %v6167
    %v6172 = vadd.f32 %v6125, %v6163
    %v6173 = vadd.f32 %v6127, %v6167
    %v6174 = vadd.f32 %v6131, %v6163
    %v6175 = vadd.f32 %v6133, %v6167
    %v6176 = vadd.f32 %v6135, %v6163
    %v6177 = vadd.f32 %v6137, %v6167
    %v6178 = vadd.f32 %v6141, %v6163
    %v6179 = vadd.f32 %v6143, %v6167
    %v6180 = vadd.f32 %v6145, %v6163
    %v6181 = vadd.f32 %v6147, %v6167
    %v6182 = vadd.f32 %v6151, %v6163
    %v6183 = vadd.f32 %v6153, %v6167
    %v6184 = vadd.f32 %v6155, %v6163
    %v6185 = vadd.f32 %v6157, %v6167
    %6186 = vst [vmem:[#allocation2] sm:$0xff] %v6170
    %6187 = vst [vmem:[#allocation2 + $0x8] sm:$0xff] %v6171
    %6188 = vst [vmem:[#allocation2 + $0x10] sm:$0xff] %v6172
    %6189 = vst [vmem:[#allocation2 + $0x18] sm:$0xff] %v6173
    %6190 = vst [vmem:[#allocation2 + $0x20] sm:$0xff] %v6174
    %6191 = vst [vmem:[#allocation2 + $0x28] sm:$0xff] %v6175
    %6192 = vst [vmem:[#allocation2 + $0x30] sm:$0xff] %v6176
    %6193 = vst [vmem:[#allocation2 + $0x38] sm:$0xff] %v6177
    %6194 = vst [vmem:[#allocation2 + $0x40] sm:$0xff] %v6178
    %6195 = vst [vmem:[#allocation2 + $0x48] sm:$0xff] %v6179
    %6196 = vst [vmem:[#allocation2 + $0x50] sm:$0xff] %v6180
    %6197 = vst [vmem:[#allocation2 + $0x58] sm:$0xff] %v6181
    %6198 = vst [vmem:[#allocation2 + $0x60] sm:$0xff] %v6182
    %6199 = vst [vmem:[#allocation2 + $0x68] sm:$0xff] %v6183
    %6200 = vst [vmem:[#allocation2 + $0x70] sm:$0xff] %v6184
    %6201 = vst [vmem:[#allocation2 + $0x78] sm:$0xff] %v6185
    %v6202 = vld [vmem:[%s3] sm:$0xff]
    %v6203 = vld [vmem:[%s3 + $0x8] sm:$0xff]
    %v6204 = vld [vmem:[%s3 + $0x10] sm:$0xff]
    %v6205 = vld [vmem:[%s3 + $0x18] sm:$0xff]
    %v6206 = vld [vmem:[%s3 + $0x20] sm:$0xff]
    %v6207 = vld [vmem:[%s3 + $0x28] sm:$0xff]
    %v6208 = vld [vmem:[%s3 + $0x30] sm:$0xff]
    %v6209 = vld [vmem:[%s3 + $0x38] sm:$0xff]
    %v6210 = vld [vmem:[%s3 + $0x40] sm:$0xff]
    %v6211 = vld [vmem:[%s3 + $0x48] sm:$0xff]
    %v6212 = vld [vmem:[%s3 + $0x50] sm:$0xff]
    %v6213 = vld [vmem:[%s3 + $0x58] sm:$0xff]
    %v6214 = vld [vmem:[%s3 + $0x60] sm:$0xff]
    %v6215 = vld [vmem:[%s3 + $0x68] sm:$0xff]
    %v6216 = vld [vmem:[%s3 + $0x70] sm:$0xff]
    %v6217 = vld [vmem:[%s3 + $0x78] sm:$0xff]
    %v6218 = vld [vmem:[%s3 + $0x80] sm:$0xff]
    %v6219 = vld [vmem:[%s3 + $0x88] sm:$0xff]
    %v6220 = vld [vmem:[%s3 + $0x90] sm:$0xff]
    %v6221 = vld [vmem:[%s3 + $0x98] sm:$0xff]
    %v6222 = vld [vmem:[%s3 + $0xa0] sm:$0xff]
    %v6223 = vld [vmem:[%s3 + $0xa8] sm:$0xff]
    %v6224 = vld [vmem:[%s3 + $0xb0] sm:$0xff]
    %v6225 = vld [vmem:[%s3 + $0xb8] sm:$0xff]
    %v6226 = vld [vmem:[%s3 + $0xc0] sm:$0xff]
    %v6227 = vld [vmem:[%s3 + $0xc8] sm:$0xff]
    %v6228 = vld [vmem:[%s3 + $0xd0] sm:$0xff]
    %v6229 = vld [vmem:[%s3 + $0xd8] sm:$0xff]
    %v6230 = vld [vmem:[%s3 + $0xe0] sm:$0xff]
    %v6231 = vld [vmem:[%s3 + $0xe8] sm:$0xff]
    %v6232 = vld [vmem:[%s3 + $0xf0] sm:$0xff]
    %v6233 = vld [vmem:[%s3 + $0xf8] sm:$0xff]
    %v6266 = vunpack.c.l.b16 %v6202
    %v6267 = vunpack.c.h.b16 %v6202
    %v6268 = vunpack.c.l.b16 %v6203
    %v6269 = vunpack.c.h.b16 %v6203
    %v6270 = vunpack.c.l.b16 %v6204
    %v6271 = vunpack.c.h.b16 %v6204
    %v6272 = vunpack.c.l.b16 %v6205
    %v6273 = vunpack.c.h.b16 %v6205
    %v6274 = vunpack.c.l.b16 %v6206
    %v6275 = vunpack.c.h.b16 %v6206
    %v6276 = vunpack.c.l.b16 %v6207
    %v6277 = vunpack.c.h.b16 %v6207
    %v6278 = vunpack.c.l.b16 %v6208
    %v6279 = vunpack.c.h.b16 %v6208
    %v6280 = vunpack.c.l.b16 %v6209
    %v6281 = vunpack.c.h.b16 %v6209
    %v6282 = vunpack.c.l.b16 %v6210
    %v6283 = vunpack.c.h.b16 %v6210
    %v6284 = vunpack.c.l.b16 %v6211
    %v6285 = vunpack.c.h.b16 %v6211
    %v6286 = vunpack.c.l.b16 %v6212
    %v6287 = vunpack.c.h.b16 %v6212
    %v6288 = vunpack.c.l.b16 %v6213
    %v6289 = vunpack.c.h.b16 %v6213
    %v6290 = vunpack.c.l.b16 %v6214
    %v6291 = vunpack.c.h.b16 %v6214
    %v6292 = vunpack.c.l.b16 %v6215
    %v6293 = vunpack.c.h.b16 %v6215
    %v6294 = vunpack.c.l.b16 %v6216
    %v6295 = vunpack.c.h.b16 %v6216
    %v6296 = vunpack.c.l.b16 %v6217
    %v6297 = vunpack.c.h.b16 %v6217
    %v6298 = vunpack.c.l.b16 %v6218
    %v6299 = vunpack.c.h.b16 %v6218
    %v6300 = vunpack.c.l.b16 %v6219
    %v6301 = vunpack.c.h.b16 %v6219
    %v6302 = vunpack.c.l.b16 %v6220
    %v6303 = vunpack.c.h.b16 %v6220
    %v6304 = vunpack.c.l.b16 %v6221
    %v6305 = vunpack.c.h.b16 %v6221
    %v6306 = vunpack.c.l.b16 %v6222
    %v6307 = vunpack.c.h.b16 %v6222
    %v6308 = vunpack.c.l.b16 %v6223
    %v6309 = vunpack.c.h.b16 %v6223
    %v6310 = vunpack.c.l.b16 %v6224
    %v6311 = vunpack.c.h.b16 %v6224
    %v6312 = vunpack.c.l.b16 %v6225
    %v6313 = vunpack.c.h.b16 %v6225
    %v6314 = vunpack.c.l.b16 %v6226
    %v6315 = vunpack.c.h.b16 %v6226
    %v6316 = vunpack.c.l.b16 %v6227
    %v6317 = vunpack.c.h.b16 %v6227
    %v6318 = vunpack.c.l.b16 %v6228
    %v6319 = vunpack.c.h.b16 %v6228
    %v6320 = vunpack.c.l.b16 %v6229
    %v6321 = vunpack.c.h.b16 %v6229
    %v6322 = vunpack.c.l.b16 %v6230
    %v6323 = vunpack.c.h.b16 %v6230
    %v6324 = vunpack.c.l.b16 %v6231
    %v6325 = vunpack.c.h.b16 %v6231
    %v6326 = vunpack.c.l.b16 %v6232
    %v6327 = vunpack.c.h.b16 %v6232
    %v6328 = vunpack.c.l.b16 %v6233
    %v6329 = vunpack.c.h.b16 %v6233
    %v6330 = vpack.c.b16 %v6268, %v6266
    %v6331 = vpack.c.b16 %v6269, %v6267
    %v6332 = vpack.c.b16 %v6272, %v6270
    %v6333 = vpack.c.b16 %v6273, %v6271
    %v6334 = vpack.c.b16 %v6276, %v6274
    %v6335 = vpack.c.b16 %v6277, %v6275
    %v6336 = vpack.c.b16 %v6280, %v6278
    %v6337 = vpack.c.b16 %v6281, %v6279
    %v6338 = vpack.c.b16 %v6284, %v6282
    %v6339 = vpack.c.b16 %v6285, %v6283
    %v6340 = vpack.c.b16 %v6288, %v6286
    %v6341 = vpack.c.b16 %v6289, %v6287
    %v6342 = vpack.c.b16 %v6292, %v6290
    %v6343 = vpack.c.b16 %v6293, %v6291
    %v6344 = vpack.c.b16 %v6296, %v6294
    %v6345 = vpack.c.b16 %v6297, %v6295
    %v6346 = vpack.c.b16 %v6300, %v6298
    %v6347 = vpack.c.b16 %v6301, %v6299
    %v6348 = vpack.c.b16 %v6304, %v6302
    %v6349 = vpack.c.b16 %v6305, %v6303
    %v6350 = vpack.c.b16 %v6308, %v6306
    %v6351 = vpack.c.b16 %v6309, %v6307
    %v6352 = vpack.c.b16 %v6312, %v6310
    %v6353 = vpack.c.b16 %v6313, %v6311
    %v6354 = vpack.c.b16 %v6316, %v6314
    %v6355 = vpack.c.b16 %v6317, %v6315
    %v6356 = vpack.c.b16 %v6320, %v6318
    %v6357 = vpack.c.b16 %v6321, %v6319
    %v6358 = vpack.c.b16 %v6324, %v6322
    %v6359 = vpack.c.b16 %v6325, %v6323
    %v6360 = vpack.c.b16 %v6328, %v6326
    %v6361 = vpack.c.b16 %v6329, %v6327
    %6394 = vmatprep.subr.bf16.mxu0 %v6345
    %6395 = vmatpush1.bf16.msra.mxu0 %v6344
    %6396 = vmatprep.subr.bf16.mxu0 %v6343
    %6397 = vmatpush1.bf16.msra.mxu0 %v6342
    %6398 = vmatprep.subr.bf16.mxu0 %v6341
    %6399 = vmatpush1.bf16.msra.mxu0 %v6340
    %6400 = vmatprep.subr.bf16.mxu0 %v6339
    %6401 = vmatpush1.bf16.msra.mxu0 %v6338
    %6402 = vmatprep.subr.bf16.mxu0 %v6337
    %6403 = vmatpush1.bf16.msra.mxu0 %v6336
    %6404 = vmatprep.subr.bf16.mxu0 %v6335
    %6405 = vmatpush1.bf16.msra.mxu0 %v6334
    %6406 = vmatprep.subr.bf16.mxu0 %v6333
    %6407 = vmatpush1.bf16.msra.mxu0 %v6332
    %6408 = vmatprep.subr.bf16.mxu0 %v6331
    %6409 = vmatpush1.bf16.msra.mxu0 %v6330
    %6410 = vmatprep.subr.bf16.mxu0 %v6361
    %6411 = vmatpush2.bf16.msra.mxu0 %v6360
    %6412 = vmatprep.subr.bf16.mxu0 %v6359
    %6413 = vmatpush2.bf16.msra.mxu0 %v6358
    %6414 = vmatprep.subr.bf16.mxu0 %v6357
    %6415 = vmatpush2.bf16.msra.mxu0 %v6356
    %6416 = vmatprep.subr.bf16.mxu0 %v6355
    %6417 = vmatpush2.bf16.msra.mxu0 %v6354
    %6418 = vmatprep.subr.bf16.mxu0 %v6353
    %6419 = vmatpush2.bf16.msra.mxu0 %v6352
    %6420 = vmatprep.subr.bf16.mxu0 %v6351
    %6421 = vmatpush2.bf16.msra.mxu0 %v6350
    %6422 = vmatprep.subr.bf16.mxu0 %v6349
    %6423 = vmatpush2.bf16.msra.mxu0 %v6348
    %6424 = vmatprep.subr.bf16.mxu0 %v6347
    %6425 = vmatpush2.bf16.msra.mxu0 %v6346
    %6426 = vmatprep.mubr.bf16.mxu0 %v5619
    %6427 = vmatmul.mubr.bf16.gmra.mxu0 %v5618
    %v6428 = vpop.f32.mrf.mxu0
    %v6429 = vadd.f32 0.0, %v6428
    %v6430 = vpop.f32.mrf.mxu0
    %v6431 = vadd.f32 0.0, %v6430
    %v6432 = vpop.f32.mrf.mxu0
    %v6433 = vadd.f32 0.0, %v6432
    %v6434 = vpop.f32.mrf.mxu0
    %v6435 = vadd.f32 0.0, %v6434
    %6436 = vmatprep.mubr.bf16.mxu0 %v5621
    %6437 = vmatmul.mubr.bf16.gmra.mxu0 %v5620
    %v6438 = vpop.f32.mrf.mxu0
    %v6439 = vadd.f32 0.0, %v6438
    %v6440 = vpop.f32.mrf.mxu0
    %v6441 = vadd.f32 0.0, %v6440
    %v6442 = vpop.f32.mrf.mxu0
    %v6443 = vadd.f32 0.0, %v6442
    %v6444 = vpop.f32.mrf.mxu0
    %v6445 = vadd.f32 0.0, %v6444
    %6446 = vmatprep.mubr.bf16.mxu0 %v5623
    %6447 = vmatmul.mubr.bf16.gmra.mxu0 %v5622
    %v6448 = vpop.f32.mrf.mxu0
    %v6449 = vadd.f32 0.0, %v6448
    %v6450 = vpop.f32.mrf.mxu0
    %v6451 = vadd.f32 0.0, %v6450
    %v6452 = vpop.f32.mrf.mxu0
    %v6453 = vadd.f32 0.0, %v6452
    %v6454 = vpop.f32.mrf.mxu0
    %v6455 = vadd.f32 0.0, %v6454
    %6456 = vdwg.mxu0
    %v6457 = vld [vmem:[#allocation2 + $0x20] sm:$0xff]
    %v6458 = vld [vmem:[#allocation2 + $0x28] sm:$0xff]
    %v6459 = vld [vmem:[#allocation2 + $0x30] sm:$0xff]
    %v6460 = vld [vmem:[#allocation2 + $0x38] sm:$0xff]
    %v6461 = vld [vmem:[#allocation2 + $0x40] sm:$0xff]
    %v6462 = vld [vmem:[#allocation2 + $0x48] sm:$0xff]
    %v6463 = vld [vmem:[#allocation2 + $0x50] sm:$0xff]
    %v6464 = vld [vmem:[#allocation2 + $0x58] sm:$0xff]
    %v6465 = vld [vmem:[#allocation2 + $0x60] sm:$0xff]
    %v6466 = vld [vmem:[#allocation2 + $0x68] sm:$0xff]
    %v6467 = vld [vmem:[#allocation2 + $0x70] sm:$0xff]
    %v6468 = vld [vmem:[#allocation2 + $0x78] sm:$0xff]
    %v6469 = vadd.f32 %v6457, %v6429
    %v6470 = vadd.f32 %v6458, %v6431
    %v6471 = vadd.f32 %v6459, %v6433
    %v6472 = vadd.f32 %v6460, %v6435
    %v6473 = vadd.f32 %v6461, %v6439
    %v6474 = vadd.f32 %v6462, %v6441
    %v6475 = vadd.f32 %v6463, %v6443
    %v6476 = vadd.f32 %v6464, %v6445
    %v6477 = vadd.f32 %v6465, %v6449
    %v6478 = vadd.f32 %v6466, %v6451
    %v6479 = vadd.f32 %v6467, %v6453
    %v6480 = vadd.f32 %v6468, %v6455
    %6481 = vst [vmem:[#allocation2 + $0x20] sm:$0xff] %v6469
    %6482 = vst [vmem:[#allocation2 + $0x28] sm:$0xff] %v6470
    %6483 = vst [vmem:[#allocation2 + $0x30] sm:$0xff] %v6471
    %6484 = vst [vmem:[#allocation2 + $0x38] sm:$0xff] %v6472
    %6485 = vst [vmem:[#allocation2 + $0x40] sm:$0xff] %v6473
    %6486 = vst [vmem:[#allocation2 + $0x48] sm:$0xff] %v6474
    %6487 = vst [vmem:[#allocation2 + $0x50] sm:$0xff] %v6475
    %6488 = vst [vmem:[#allocation2 + $0x58] sm:$0xff] %v6476
    %6489 = vst [vmem:[#allocation2 + $0x60] sm:$0xff] %v6477
    %6490 = vst [vmem:[#allocation2 + $0x68] sm:$0xff] %v6478
    %6491 = vst [vmem:[#allocation2 + $0x70] sm:$0xff] %v6479
    %6492 = vst [vmem:[#allocation2 + $0x78] sm:$0xff] %v6480
    %v6493 = vld [vmem:[#allocation2] sm:$0xff]
    %v6494 = vld [vmem:[#allocation2 + $0x8] sm:$0xff]
    %v6495 = vld [vmem:[#allocation2 + $0x10] sm:$0xff]
    %v6496 = vld [vmem:[#allocation2 + $0x18] sm:$0xff]
    %v6497 = vld [vmem:[#allocation2 + $0x20] sm:$0xff]
    %v6498 = vld [vmem:[#allocation2 + $0x28] sm:$0xff]
    %v6499 = vld [vmem:[#allocation2 + $0x30] sm:$0xff]
    %v6500 = vld [vmem:[#allocation2 + $0x38] sm:$0xff]
    %v6501 = vld [vmem:[#allocation2 + $0x40] sm:$0xff]
    %v6502 = vld [vmem:[#allocation2 + $0x48] sm:$0xff]
    %v6503 = vld [vmem:[#allocation2 + $0x50] sm:$0xff]
    %v6504 = vld [vmem:[#allocation2 + $0x58] sm:$0xff]
    %v6505 = vld [vmem:[#allocation2 + $0x60] sm:$0xff]
    %v6506 = vld [vmem:[#allocation2 + $0x68] sm:$0xff]
    %v6507 = vld [vmem:[#allocation2 + $0x70] sm:$0xff]
    %v6508 = vld [vmem:[#allocation2 + $0x78] sm:$0xff]
    %v6509 = vmax.f32 %v6493, 0.0
    %v6510 = vmax.f32 %v6494, 0.0
    %v6511 = vmax.f32 %v6495, 0.0
    %v6512 = vmax.f32 %v6496, 0.0
    %v6513 = vmax.f32 %v6497, 0.0
    %v6514 = vmax.f32 %v6498, 0.0
    %v6515 = vmax.f32 %v6499, 0.0
    %v6516 = vmax.f32 %v6500, 0.0
    %v6517 = vmax.f32 %v6501, 0.0
    %v6518 = vmax.f32 %v6502, 0.0
    %v6519 = vmax.f32 %v6503, 0.0
    %v6520 = vmax.f32 %v6504, 0.0
    %v6521 = vmax.f32 %v6505, 0.0
    %v6522 = vmax.f32 %v6506, 0.0
    %v6523 = vmax.f32 %v6507, 0.0
    %v6524 = vmax.f32 %v6508, 0.0
    %v6525 = vld [vmem:[%s3] sm:$0xff]
    %v6526 = vld [vmem:[%s3 + $0x8] sm:$0xff]
    %v6527 = vld [vmem:[%s3 + $0x10] sm:$0xff]
    %v6528 = vld [vmem:[%s3 + $0x18] sm:$0xff]
    %v6529 = vld [vmem:[%s3 + $0x20] sm:$0xff]
    %v6530 = vld [vmem:[%s3 + $0x28] sm:$0xff]
    %v6531 = vld [vmem:[%s3 + $0x30] sm:$0xff]
    %v6532 = vld [vmem:[%s3 + $0x38] sm:$0xff]
    %v6533 = vld [vmem:[%s3 + $0x40] sm:$0xff]
    %v6534 = vld [vmem:[%s3 + $0x48] sm:$0xff]
    %v6535 = vld [vmem:[%s3 + $0x50] sm:$0xff]
    %v6536 = vld [vmem:[%s3 + $0x58] sm:$0xff]
    %v6537 = vld [vmem:[%s3 + $0x60] sm:$0xff]
    %v6538 = vld [vmem:[%s3 + $0x68] sm:$0xff]
    %v6539 = vld [vmem:[%s3 + $0x70] sm:$0xff]
    %v6540 = vld [vmem:[%s3 + $0x78] sm:$0xff]
    %v6541 = vld [vmem:[%s3 + $0x80] sm:$0xff]
    %v6542 = vld [vmem:[%s3 + $0x88] sm:$0xff]
    %v6543 = vld [vmem:[%s3 + $0x90] sm:$0xff]
    %v6544 = vld [vmem:[%s3 + $0x98] sm:$0xff]
    %v6545 = vld [vmem:[%s3 + $0xa0] sm:$0xff]
    %v6546 = vld [vmem:[%s3 + $0xa8] sm:$0xff]
    %v6547 = vld [vmem:[%s3 + $0xb0] sm:$0xff]
    %v6548 = vld [vmem:[%s3 + $0xb8] sm:$0xff]
    %v6549 = vld [vmem:[%s3 + $0xc0] sm:$0xff]
    %v6550 = vld [vmem:[%s3 + $0xc8] sm:$0xff]
    %v6551 = vld [vmem:[%s3 + $0xd0] sm:$0xff]
    %v6552 = vld [vmem:[%s3 + $0xd8] sm:$0xff]
    %v6553 = vld [vmem:[%s3 + $0xe0] sm:$0xff]
    %v6554 = vld [vmem:[%s3 + $0xe8] sm:$0xff]
    %v6555 = vld [vmem:[%s3 + $0xf0] sm:$0xff]
    %v6556 = vld [vmem:[%s3 + $0xf8] sm:$0xff]
    %v6557 = vld [vmem:[%s5627] sm:$0xff]
    %v6558 = vld [vmem:[%s5627 + $0x8] sm:$0xff]
    %v6559 = vld [vmem:[%s5627 + $0x10] sm:$0xff]
    %v6560 = vld [vmem:[%s5627 + $0x18] sm:$0xff]
    %v6561 = vld [vmem:[%s5627 + $0x20] sm:$0xff]
    %v6562 = vld [vmem:[%s5627 + $0x28] sm:$0xff]
    %v6563 = vld [vmem:[%s5627 + $0x30] sm:$0xff]
    %v6564 = vld [vmem:[%s5627 + $0x38] sm:$0xff]
    %v6565 = vld [vmem:[%s5627 + $0x40] sm:$0xff]
    %v6566 = vld [vmem:[%s5627 + $0x48] sm:$0xff]
    %v6567 = vld [vmem:[%s5627 + $0x50] sm:$0xff]
    %v6568 = vld [vmem:[%s5627 + $0x58] sm:$0xff]
    %v6569 = vld [vmem:[%s5627 + $0x60] sm:$0xff]
    %v6570 = vld [vmem:[%s5627 + $0x68] sm:$0xff]
    %v6571 = vld [vmem:[%s5627 + $0x70] sm:$0xff]
    %v6572 = vld [vmem:[%s5627 + $0x78] sm:$0xff]
    %v6573 = vld [vmem:[%s5627 + $0x80] sm:$0xff]
    %v6574 = vld [vmem:[%s5627 + $0x88] sm:$0xff]
    %v6575 = vld [vmem:[%s5627 + $0x90] sm:$0xff]
    %v6576 = vld [vmem:[%s5627 + $0x98] sm:$0xff]
    %v6577 = vld [vmem:[%s5627 + $0xa0] sm:$0xff]
    %v6578 = vld [vmem:[%s5627 + $0xa8] sm:$0xff]
    %v6579 = vld [vmem:[%s5627 + $0xb0] sm:$0xff]
    %v6580 = vld [vmem:[%s5627 + $0xb8] sm:$0xff]
    %v6581 = vld [vmem:[%s5627 + $0xc0] sm:$0xff]
    %v6582 = vld [vmem:[%s5627 + $0xc8] sm:$0xff]
    %v6583 = vld [vmem:[%s5627 + $0xd0] sm:$0xff]
    %v6584 = vld [vmem:[%s5627 + $0xd8] sm:$0xff]
    %v6585 = vld [vmem:[%s5627 + $0xe0] sm:$0xff]
    %v6586 = vld [vmem:[%s5627 + $0xe8] sm:$0xff]
    %v6587 = vld [vmem:[%s5627 + $0xf0] sm:$0xff]
    %v6588 = vld [vmem:[%s5627 + $0xf8] sm:$0xff]
    %v6621 = vunpack.c.l.b16 %v6557
    %v6622 = vunpack.c.h.b16 %v6557
    %v6623 = vunpack.c.l.b16 %v6558
    %v6624 = vunpack.c.h.b16 %v6558
    %v6625 = vunpack.c.l.b16 %v6559
    %v6626 = vunpack.c.h.b16 %v6559
    %v6627 = vunpack.c.l.b16 %v6560
    %v6628 = vunpack.c.h.b16 %v6560
    %v6629 = vunpack.c.l.b16 %v6561
    %v6630 = vunpack.c.h.b16 %v6561
    %v6631 = vunpack.c.l.b16 %v6562
    %v6632 = vunpack.c.h.b16 %v6562
    %v6633 = vunpack.c.l.b16 %v6563
    %v6634 = vunpack.c.h.b16 %v6563
    %v6635 = vunpack.c.l.b16 %v6564
    %v6636 = vunpack.c.h.b16 %v6564
    %v6637 = vunpack.c.l.b16 %v6565
    %v6638 = vunpack.c.h.b16 %v6565
    %v6639 = vunpack.c.l.b16 %v6566
    %v6640 = vunpack.c.h.b16 %v6566
    %v6641 = vunpack.c.l.b16 %v6567
    %v6642 = vunpack.c.h.b16 %v6567
    %v6643 = vunpack.c.l.b16 %v6568
    %v6644 = vunpack.c.h.b16 %v6568
    %v6645 = vunpack.c.l.b16 %v6569
    %v6646 = vunpack.c.h.b16 %v6569
    %v6647 = vunpack.c.l.b16 %v6570
    %v6648 = vunpack.c.h.b16 %v6570
    %v6649 = vunpack.c.l.b16 %v6571
    %v6650 = vunpack.c.h.b16 %v6571
    %v6651 = vunpack.c.l.b16 %v6572
    %v6652 = vunpack.c.h.b16 %v6572
    %v6653 = vunpack.c.l.b16 %v6573
    %v6654 = vunpack.c.h.b16 %v6573
    %v6655 = vunpack.c.l.b16 %v6574
    %v6656 = vunpack.c.h.b16 %v6574
    %v6657 = vunpack.c.l.b16 %v6575
    %v6658 = vunpack.c.h.b16 %v6575
    %v6659 = vunpack.c.l.b16 %v6576
    %v6660 = vunpack.c.h.b16 %v6576
    %v6661 = vunpack.c.l.b16 %v6577
    %v6662 = vunpack.c.h.b16 %v6577
    %v6663 = vunpack.c.l.b16 %v6578
    %v6664 = vunpack.c.h.b16 %v6578
    %v6665 = vunpack.c.l.b16 %v6579
    %v6666 = vunpack.c.h.b16 %v6579
    %v6667 = vunpack.c.l.b16 %v6580
    %v6668 = vunpack.c.h.b16 %v6580
    %v6669 = vunpack.c.l.b16 %v6581
    %v6670 = vunpack.c.h.b16 %v6581
    %v6671 = vunpack.c.l.b16 %v6582
    %v6672 = vunpack.c.h.b16 %v6582
    %v6673 = vunpack.c.l.b16 %v6583
    %v6674 = vunpack.c.h.b16 %v6583
    %v6675 = vunpack.c.l.b16 %v6584
    %v6676 = vunpack.c.h.b16 %v6584
    %v6677 = vunpack.c.l.b16 %v6585
    %v6678 = vunpack.c.h.b16 %v6585
    %v6679 = vunpack.c.l.b16 %v6586
    %v6680 = vunpack.c.h.b16 %v6586
    %v6681 = vunpack.c.l.b16 %v6587
    %v6682 = vunpack.c.h.b16 %v6587
    %v6683 = vunpack.c.l.b16 %v6588
    %v6684 = vunpack.c.h.b16 %v6588
    %v6685 = vpack.c.b16 %v6623, %v6621
    %v6686 = vpack.c.b16 %v6624, %v6622
    %v6687 = vpack.c.b16 %v6627, %v6625
    %v6688 = vpack.c.b16 %v6628, %v6626
    %v6689 = vpack.c.b16 %v6631, %v6629
    %v6690 = vpack.c.b16 %v6632, %v6630
    %v6691 = vpack.c.b16 %v6635, %v6633
    %v6692 = vpack.c.b16 %v6636, %v6634
    %v6693 = vpack.c.b16 %v6639, %v6637
    %v6694 = vpack.c.b16 %v6640, %v6638
    %v6695 = vpack.c.b16 %v6643, %v6641
    %v6696 = vpack.c.b16 %v6644, %v6642
    %v6697 = vpack.c.b16 %v6647, %v6645
    %v6698 = vpack.c.b16 %v6648, %v6646
    %v6699 = vpack.c.b16 %v6651, %v6649
    %v6700 = vpack.c.b16 %v6652, %v6650
    %v6701 = vpack.c.b16 %v6655, %v6653
    %v6702 = vpack.c.b16 %v6656, %v6654
    %v6703 = vpack.c.b16 %v6659, %v6657
    %v6704 = vpack.c.b16 %v6660, %v6658
    %v6705 = vpack.c.b16 %v6663, %v6661
    %v6706 = vpack.c.b16 %v6664, %v6662
    %v6707 = vpack.c.b16 %v6667, %v6665
    %v6708 = vpack.c.b16 %v6668, %v6666
    %v6709 = vpack.c.b16 %v6671, %v6669
    %v6710 = vpack.c.b16 %v6672, %v6670
    %v6711 = vpack.c.b16 %v6675, %v6673
    %v6712 = vpack.c.b16 %v6676, %v6674
    %v6713 = vpack.c.b16 %v6679, %v6677
    %v6714 = vpack.c.b16 %v6680, %v6678
    %v6715 = vpack.c.b16 %v6683, %v6681
    %v6716 = vpack.c.b16 %v6684, %v6682
    %6749 = vmatprep.subr.bf16.mxu0 %v6700
    %6750 = vmatpush1.bf16.msra.mxu0 %v6699
    %6751 = vmatprep.subr.bf16.mxu0 %v6698
    %6752 = vmatpush1.bf16.msra.mxu0 %v6697
    %6753 = vmatprep.subr.bf16.mxu0 %v6696
    %6754 = vmatpush1.bf16.msra.mxu0 %v6695
    %6755 = vmatprep.subr.bf16.mxu0 %v6694
    %6756 = vmatpush1.bf16.msra.mxu0 %v6693
    %6757 = vmatprep.subr.bf16.mxu0 %v6692
    %6758 = vmatpush1.bf16.msra.mxu0 %v6691
    %6759 = vmatprep.subr.bf16.mxu0 %v6690
    %6760 = vmatpush1.bf16.msra.mxu0 %v6689
    %6761 = vmatprep.subr.bf16.mxu0 %v6688
    %6762 = vmatpush1.bf16.msra.mxu0 %v6687
    %6763 = vmatprep.subr.bf16.mxu0 %v6686
    %6764 = vmatpush1.bf16.msra.mxu0 %v6685
    %6765 = vmatprep.subr.bf16.mxu0 %v6716
    %6766 = vmatpush2.bf16.msra.mxu0 %v6715
    %6767 = vmatprep.subr.bf16.mxu0 %v6714
    %6768 = vmatpush2.bf16.msra.mxu0 %v6713
    %6769 = vmatprep.subr.bf16.mxu0 %v6712
    %6770 = vmatpush2.bf16.msra.mxu0 %v6711
    %6771 = vmatprep.subr.bf16.mxu0 %v6710
    %6772 = vmatpush2.bf16.msra.mxu0 %v6709
    %6773 = vmatprep.subr.bf16.mxu0 %v6708
    %6774 = vmatpush2.bf16.msra.mxu0 %v6707
    %6775 = vmatprep.subr.bf16.mxu0 %v6706
    %6776 = vmatpush2.bf16.msra.mxu0 %v6705
    %6777 = vmatprep.subr.bf16.mxu0 %v6704
    %6778 = vmatpush2.bf16.msra.mxu0 %v6703
    %6779 = vmatprep.subr.bf16.mxu0 %v6702
    %6780 = vmatpush2.bf16.msra.mxu0 %v6701
    %6781 = vmatprep.mubr.bf16.mxu0 %v4332
    %6782 = vmatmul.mubr.bf16.gmra.mxu0 %v4331
    %v6783 = vpop.f32.mrf.mxu0
    %v6784 = vadd.f32 0.0, %v6783
    %v6785 = vpop.f32.mrf.mxu0
    %v6786 = vadd.f32 0.0, %v6785
    %v6787 = vpop.f32.mrf.mxu0
    %v6788 = vadd.f32 0.0, %v6787
    %v6789 = vpop.f32.mrf.mxu0
    %v6790 = vadd.f32 0.0, %v6789
    %6791 = vmatprep.mubr.bf16.mxu0 %v4334
    %6792 = vmatmul.mubr.bf16.gmra.mxu0 %v4333
    %v6793 = vpop.f32.mrf.mxu0
    %v6794 = vadd.f32 0.0, %v6793
    %v6795 = vpop.f32.mrf.mxu0
    %v6796 = vadd.f32 0.0, %v6795
    %v6797 = vpop.f32.mrf.mxu0
    %v6798 = vadd.f32 0.0, %v6797
    %v6799 = vpop.f32.mrf.mxu0
    %v6800 = vadd.f32 0.0, %v6799
    %6801 = vmatprep.mubr.bf16.mxu0 %v4336
    %6802 = vmatmul.mubr.bf16.gmra.mxu0 %v4335
    %v6803 = vpop.f32.mrf.mxu0
    %v6804 = vadd.f32 0.0, %v6803
    %v6805 = vpop.f32.mrf.mxu0
    %v6806 = vadd.f32 0.0, %v6805
    %v6807 = vpop.f32.mrf.mxu0
    %v6808 = vadd.f32 0.0, %v6807
    %v6809 = vpop.f32.mrf.mxu0
    %v6810 = vadd.f32 0.0, %v6809
    %6811 = vmatprep.mubr.bf16.mxu0 %v4338
    %6812 = vmatmul.mubr.bf16.gmra.mxu0 %v4337
    %v6813 = vpop.f32.mrf.mxu0
    %v6814 = vadd.f32 0.0, %v6813
    %v6815 = vpop.f32.mrf.mxu0
    %v6816 = vadd.f32 0.0, %v6815
    %v6817 = vpop.f32.mrf.mxu0
    %v6818 = vadd.f32 0.0, %v6817
    %v6819 = vpop.f32.mrf.mxu0
    %v6820 = vadd.f32 0.0, %v6819
    %6821 = vdwg.mxu0
    %v6854 = vunpack.c.l.b16 %v6525
    %v6855 = vunpack.c.h.b16 %v6525
    %v6856 = vunpack.c.l.b16 %v6526
    %v6857 = vunpack.c.h.b16 %v6526
    %v6858 = vunpack.c.l.b16 %v6527
    %v6859 = vunpack.c.h.b16 %v6527
    %v6860 = vunpack.c.l.b16 %v6528
    %v6861 = vunpack.c.h.b16 %v6528
    %v6862 = vunpack.c.l.b16 %v6529
    %v6863 = vunpack.c.h.b16 %v6529
    %v6864 = vunpack.c.l.b16 %v6530
    %v6865 = vunpack.c.h.b16 %v6530
    %v6866 = vunpack.c.l.b16 %v6531
    %v6867 = vunpack.c.h.b16 %v6531
    %v6868 = vunpack.c.l.b16 %v6532
    %v6869 = vunpack.c.h.b16 %v6532
    %v6870 = vunpack.c.l.b16 %v6533
    %v6871 = vunpack.c.h.b16 %v6533
    %v6872 = vunpack.c.l.b16 %v6534
    %v6873 = vunpack.c.h.b16 %v6534
    %v6874 = vunpack.c.l.b16 %v6535
    %v6875 = vunpack.c.h.b16 %v6535
    %v6876 = vunpack.c.l.b16 %v6536
    %v6877 = vunpack.c.h.b16 %v6536
    %v6878 = vunpack.c.l.b16 %v6537
    %v6879 = vunpack.c.h.b16 %v6537
    %v6880 = vunpack.c.l.b16 %v6538
    %v6881 = vunpack.c.h.b16 %v6538
    %v6882 = vunpack.c.l.b16 %v6539
    %v6883 = vunpack.c.h.b16 %v6539
    %v6884 = vunpack.c.l.b16 %v6540
    %v6885 = vunpack.c.h.b16 %v6540
    %v6886 = vunpack.c.l.b16 %v6541
    %v6887 = vunpack.c.h.b16 %v6541
    %v6888 = vunpack.c.l.b16 %v6542
    %v6889 = vunpack.c.h.b16 %v6542
    %v6890 = vunpack.c.l.b16 %v6543
    %v6891 = vunpack.c.h.b16 %v6543
    %v6892 = vunpack.c.l.b16 %v6544
    %v6893 = vunpack.c.h.b16 %v6544
    %v6894 = vunpack.c.l.b16 %v6545
    %v6895 = vunpack.c.h.b16 %v6545
    %v6896 = vunpack.c.l.b16 %v6546
    %v6897 = vunpack.c.h.b16 %v6546
    %v6898 = vunpack.c.l.b16 %v6547
    %v6899 = vunpack.c.h.b16 %v6547
    %v6900 = vunpack.c.l.b16 %v6548
    %v6901 = vunpack.c.h.b16 %v6548
    %v6902 = vunpack.c.l.b16 %v6549
    %v6903 = vunpack.c.h.b16 %v6549
    %v6904 = vunpack.c.l.b16 %v6550
    %v6905 = vunpack.c.h.b16 %v6550
    %v6906 = vunpack.c.l.b16 %v6551
    %v6907 = vunpack.c.h.b16 %v6551
    %v6908 = vunpack.c.l.b16 %v6552
    %v6909 = vunpack.c.h.b16 %v6552
    %v6910 = vunpack.c.l.b16 %v6553
    %v6911 = vunpack.c.h.b16 %v6553
    %v6912 = vunpack.c.l.b16 %v6554
    %v6913 = vunpack.c.h.b16 %v6554
    %v6914 = vunpack.c.l.b16 %v6555
    %v6915 = vunpack.c.h.b16 %v6555
    %v6916 = vunpack.c.l.b16 %v6556
    %v6917 = vunpack.c.h.b16 %v6556
    %v6918 = vpack.c.b16 %v6856, %v6854
    %v6919 = vpack.c.b16 %v6857, %v6855
    %v6920 = vpack.c.b16 %v6860, %v6858
    %v6921 = vpack.c.b16 %v6861, %v6859
    %v6922 = vpack.c.b16 %v6864, %v6862
    %v6923 = vpack.c.b16 %v6865, %v6863
    %v6924 = vpack.c.b16 %v6868, %v6866
    %v6925 = vpack.c.b16 %v6869, %v6867
    %v6926 = vpack.c.b16 %v6872, %v6870
    %v6927 = vpack.c.b16 %v6873, %v6871
    %v6928 = vpack.c.b16 %v6876, %v6874
    %v6929 = vpack.c.b16 %v6877, %v6875
    %v6930 = vpack.c.b16 %v6880, %v6878
    %v6931 = vpack.c.b16 %v6881, %v6879
    %v6932 = vpack.c.b16 %v6884, %v6882
    %v6933 = vpack.c.b16 %v6885, %v6883
    %v6934 = vpack.c.b16 %v6888, %v6886
    %v6935 = vpack.c.b16 %v6889, %v6887
    %v6936 = vpack.c.b16 %v6892, %v6890
    %v6937 = vpack.c.b16 %v6893, %v6891
    %v6938 = vpack.c.b16 %v6896, %v6894
    %v6939 = vpack.c.b16 %v6897, %v6895
    %v6940 = vpack.c.b16 %v6900, %v6898
    %v6941 = vpack.c.b16 %v6901, %v6899
    %v6942 = vpack.c.b16 %v6904, %v6902
    %v6943 = vpack.c.b16 %v6905, %v6903
    %v6944 = vpack.c.b16 %v6908, %v6906
    %v6945 = vpack.c.b16 %v6909, %v6907
    %v6946 = vpack.c.b16 %v6912, %v6910
    %v6947 = vpack.c.b16 %v6913, %v6911
    %v6948 = vpack.c.b16 %v6916, %v6914
    %v6949 = vpack.c.b16 %v6917, %v6915
    %6982 = vmatprep.subr.bf16.mxu0 %v6933
    %6983 = vmatpush1.bf16.msra.mxu0 %v6932
    %6984 = vmatprep.subr.bf16.mxu0 %v6931
    %6985 = vmatpush1.bf16.msra.mxu0 %v6930
    %6986 = vmatprep.subr.bf16.mxu0 %v6929
    %6987 = vmatpush1.bf16.msra.mxu0 %v6928
    %6988 = vmatprep.subr.bf16.mxu0 %v6927
    %6989 = vmatpush1.bf16.msra.mxu0 %v6926
    %6990 = vmatprep.subr.bf16.mxu0 %v6925
    %6991 = vmatpush1.bf16.msra.mxu0 %v6924
    %6992 = vmatprep.subr.bf16.mxu0 %v6923
    %6993 = vmatpush1.bf16.msra.mxu0 %v6922
    %6994 = vmatprep.subr.bf16.mxu0 %v6921
    %6995 = vmatpush1.bf16.msra.mxu0 %v6920
    %6996 = vmatprep.subr.bf16.mxu0 %v6919
    %6997 = vmatpush1.bf16.msra.mxu0 %v6918
    %6998 = vmatprep.subr.bf16.mxu0 %v6949
    %6999 = vmatpush2.bf16.msra.mxu0 %v6948
    %7000 = vmatprep.subr.bf16.mxu0 %v6947
    %7001 = vmatpush2.bf16.msra.mxu0 %v6946
    %7002 = vmatprep.subr.bf16.mxu0 %v6945
    %7003 = vmatpush2.bf16.msra.mxu0 %v6944
    %7004 = vmatprep.subr.bf16.mxu0 %v6943
    %7005 = vmatpush2.bf16.msra.mxu0 %v6942
    %7006 = vmatprep.subr.bf16.mxu0 %v6941
    %7007 = vmatpush2.bf16.msra.mxu0 %v6940
    %7008 = vmatprep.subr.bf16.mxu0 %v6939
    %7009 = vmatpush2.bf16.msra.mxu0 %v6938
    %7010 = vmatprep.subr.bf16.mxu0 %v6937
    %7011 = vmatpush2.bf16.msra.mxu0 %v6936
    %7012 = vmatprep.subr.bf16.mxu0 %v6935
    %7013 = vmatpush2.bf16.msra.mxu0 %v6934
    %7014 = vmatprep.mubr.bf16.mxu0 %v3044
    %7015 = vmatmul.mubr.bf16.gmra.mxu0 %v3043
    %v7016 = vpop.f32.mrf.mxu0
    %v7017 = vadd.f32 %v6784, %v7016
    %v7018 = vpop.f32.mrf.mxu0
    %v7019 = vadd.f32 %v6786, %v7018
    %v7020 = vpop.f32.mrf.mxu0
    %v7021 = vadd.f32 %v6788, %v7020
    %v7022 = vpop.f32.mrf.mxu0
    %v7023 = vadd.f32 %v6790, %v7022
    %7024 = vmatprep.mubr.bf16.mxu0 %v3046
    %7025 = vmatmul.mubr.bf16.gmra.mxu0 %v3045
    %v7026 = vpop.f32.mrf.mxu0
    %v7027 = vadd.f32 %v6794, %v7026
    %v7028 = vpop.f32.mrf.mxu0
    %v7029 = vadd.f32 %v6796, %v7028
    %v7030 = vpop.f32.mrf.mxu0
    %v7031 = vadd.f32 %v6798, %v7030
    %v7032 = vpop.f32.mrf.mxu0
    %v7033 = vadd.f32 %v6800, %v7032
    %7034 = vmatprep.mubr.bf16.mxu0 %v3048
    %7035 = vmatmul.mubr.bf16.gmra.mxu0 %v3047
    %v7036 = vpop.f32.mrf.mxu0
    %v7037 = vadd.f32 %v6804, %v7036
    %v7038 = vpop.f32.mrf.mxu0
    %v7039 = vadd.f32 %v6806, %v7038
    %v7040 = vpop.f32.mrf.mxu0
    %v7041 = vadd.f32 %v6808, %v7040
    %v7042 = vpop.f32.mrf.mxu0
    %v7043 = vadd.f32 %v6810, %v7042
    %7044 = vmatprep.mubr.bf16.mxu0 %v3050
    %7045 = vmatmul.mubr.bf16.gmra.mxu0 %v3049
    %v7046 = vpop.f32.mrf.mxu0
    %v7047 = vadd.f32 %v6814, %v7046
    %v7048 = vpop.f32.mrf.mxu0
    %v7049 = vadd.f32 %v6816, %v7048
    %v7050 = vpop.f32.mrf.mxu0
    %v7051 = vadd.f32 %v6818, %v7050
    %v7052 = vpop.f32.mrf.mxu0
    %v7053 = vadd.f32 %v6820, %v7052
    %7054 = vdwg.mxu0
    %v7055 = vld [vmem:[%s5660] sm:$0xff]
    %v7056 = vld [vmem:[%s5660 + $0x8] sm:$0xff]
    %v7057 = vld [vmem:[%s5660 + $0x10] sm:$0xff]
    %v7058 = vld [vmem:[%s5660 + $0x18] sm:$0xff]
    %v7059 = vld [vmem:[%s5660 + $0x20] sm:$0xff]
    %v7060 = vld [vmem:[%s5660 + $0x28] sm:$0xff]
    %v7061 = vld [vmem:[%s5660 + $0x30] sm:$0xff]
    %v7062 = vld [vmem:[%s5660 + $0x38] sm:$0xff]
    %v7063 = vld [vmem:[%s5660 + $0x40] sm:$0xff]
    %v7064 = vld [vmem:[%s5660 + $0x48] sm:$0xff]
    %v7065 = vld [vmem:[%s5660 + $0x50] sm:$0xff]
    %v7066 = vld [vmem:[%s5660 + $0x58] sm:$0xff]
    %v7067 = vld [vmem:[%s5660 + $0x60] sm:$0xff]
    %v7068 = vld [vmem:[%s5660 + $0x68] sm:$0xff]
    %v7069 = vld [vmem:[%s5660 + $0x70] sm:$0xff]
    %v7070 = vld [vmem:[%s5660 + $0x78] sm:$0xff]
    %v7071 = vld [vmem:[%s5660 + $0x80] sm:$0xff]
    %v7072 = vld [vmem:[%s5660 + $0x88] sm:$0xff]
    %v7073 = vld [vmem:[%s5660 + $0x90] sm:$0xff]
    %v7074 = vld [vmem:[%s5660 + $0x98] sm:$0xff]
    %v7075 = vld [vmem:[%s5660 + $0xa0] sm:$0xff]
    %v7076 = vld [vmem:[%s5660 + $0xa8] sm:$0xff]
    %v7077 = vld [vmem:[%s5660 + $0xb0] sm:$0xff]
    %v7078 = vld [vmem:[%s5660 + $0xb8] sm:$0xff]
    %v7079 = vld [vmem:[%s5660 + $0xc0] sm:$0xff]
    %v7080 = vld [vmem:[%s5660 + $0xc8] sm:$0xff]
    %v7081 = vld [vmem:[%s5660 + $0xd0] sm:$0xff]
    %v7082 = vld [vmem:[%s5660 + $0xd8] sm:$0xff]
    %v7083 = vld [vmem:[%s5660 + $0xe0] sm:$0xff]
    %v7084 = vld [vmem:[%s5660 + $0xe8] sm:$0xff]
    %v7085 = vld [vmem:[%s5660 + $0xf0] sm:$0xff]
    %v7086 = vld [vmem:[%s5660 + $0xf8] sm:$0xff]
    %v7119 = vunpack.c.l.b16 %v7055
    %v7120 = vunpack.c.h.b16 %v7055
    %v7121 = vunpack.c.l.b16 %v7056
    %v7122 = vunpack.c.h.b16 %v7056
    %v7123 = vunpack.c.l.b16 %v7057
    %v7124 = vunpack.c.h.b16 %v7057
    %v7125 = vunpack.c.l.b16 %v7058
    %v7126 = vunpack.c.h.b16 %v7058
    %v7127 = vunpack.c.l.b16 %v7059
    %v7128 = vunpack.c.h.b16 %v7059
    %v7129 = vunpack.c.l.b16 %v7060
    %v7130 = vunpack.c.h.b16 %v7060
    %v7131 = vunpack.c.l.b16 %v7061
    %v7132 = vunpack.c.h.b16 %v7061
    %v7133 = vunpack.c.l.b16 %v7062
    %v7134 = vunpack.c.h.b16 %v7062
    %v7135 = vunpack.c.l.b16 %v7063
    %v7136 = vunpack.c.h.b16 %v7063
    %v7137 = vunpack.c.l.b16 %v7064
    %v7138 = vunpack.c.h.b16 %v7064
    %v7139 = vunpack.c.l.b16 %v7065
    %v7140 = vunpack.c.h.b16 %v7065
    %v7141 = vunpack.c.l.b16 %v7066
    %v7142 = vunpack.c.h.b16 %v7066
    %v7143 = vunpack.c.l.b16 %v7067
    %v7144 = vunpack.c.h.b16 %v7067
    %v7145 = vunpack.c.l.b16 %v7068
    %v7146 = vunpack.c.h.b16 %v7068
    %v7147 = vunpack.c.l.b16 %v7069
    %v7148 = vunpack.c.h.b16 %v7069
    %v7149 = vunpack.c.l.b16 %v7070
    %v7150 = vunpack.c.h.b16 %v7070
    %v7151 = vunpack.c.l.b16 %v7071
    %v7152 = vunpack.c.h.b16 %v7071
    %v7153 = vunpack.c.l.b16 %v7072
    %v7154 = vunpack.c.h.b16 %v7072
    %v7155 = vunpack.c.l.b16 %v7073
    %v7156 = vunpack.c.h.b16 %v7073
    %v7157 = vunpack.c.l.b16 %v7074
    %v7158 = vunpack.c.h.b16 %v7074
    %v7159 = vunpack.c.l.b16 %v7075
    %v7160 = vunpack.c.h.b16 %v7075
    %v7161 = vunpack.c.l.b16 %v7076
    %v7162 = vunpack.c.h.b16 %v7076
    %v7163 = vunpack.c.l.b16 %v7077
    %v7164 = vunpack.c.h.b16 %v7077
    %v7165 = vunpack.c.l.b16 %v7078
    %v7166 = vunpack.c.h.b16 %v7078
    %v7167 = vunpack.c.l.b16 %v7079
    %v7168 = vunpack.c.h.b16 %v7079
    %v7169 = vunpack.c.l.b16 %v7080
    %v7170 = vunpack.c.h.b16 %v7080
    %v7171 = vunpack.c.l.b16 %v7081
    %v7172 = vunpack.c.h.b16 %v7081
    %v7173 = vunpack.c.l.b16 %v7082
    %v7174 = vunpack.c.h.b16 %v7082
    %v7175 = vunpack.c.l.b16 %v7083
    %v7176 = vunpack.c.h.b16 %v7083
    %v7177 = vunpack.c.l.b16 %v7084
    %v7178 = vunpack.c.h.b16 %v7084
    %v7179 = vunpack.c.l.b16 %v7085
    %v7180 = vunpack.c.h.b16 %v7085
    %v7181 = vunpack.c.l.b16 %v7086
    %v7182 = vunpack.c.h.b16 %v7086
    %v7183 = vpack.c.b16 %v7121, %v7119
    %v7184 = vpack.c.b16 %v7122, %v7120
    %v7185 = vpack.c.b16 %v7125, %v7123
    %v7186 = vpack.c.b16 %v7126, %v7124
    %v7187 = vpack.c.b16 %v7129, %v7127
    %v7188 = vpack.c.b16 %v7130, %v7128
    %v7189 = vpack.c.b16 %v7133, %v7131
    %v7190 = vpack.c.b16 %v7134, %v7132
    %v7191 = vpack.c.b16 %v7137, %v7135
    %v7192 = vpack.c.b16 %v7138, %v7136
    %v7193 = vpack.c.b16 %v7141, %v7139
    %v7194 = vpack.c.b16 %v7142, %v7140
    %v7195 = vpack.c.b16 %v7145, %v7143
    %v7196 = vpack.c.b16 %v7146, %v7144
    %v7197 = vpack.c.b16 %v7149, %v7147
    %v7198 = vpack.c.b16 %v7150, %v7148
    %v7199 = vpack.c.b16 %v7153, %v7151
    %v7200 = vpack.c.b16 %v7154, %v7152
    %v7201 = vpack.c.b16 %v7157, %v7155
    %v7202 = vpack.c.b16 %v7158, %v7156
    %v7203 = vpack.c.b16 %v7161, %v7159
    %v7204 = vpack.c.b16 %v7162, %v7160
    %v7205 = vpack.c.b16 %v7165, %v7163
    %v7206 = vpack.c.b16 %v7166, %v7164
    %v7207 = vpack.c.b16 %v7169, %v7167
    %v7208 = vpack.c.b16 %v7170, %v7168
    %v7209 = vpack.c.b16 %v7173, %v7171
    %v7210 = vpack.c.b16 %v7174, %v7172
    %v7211 = vpack.c.b16 %v7177, %v7175
    %v7212 = vpack.c.b16 %v7178, %v7176
    %v7213 = vpack.c.b16 %v7181, %v7179
    %v7214 = vpack.c.b16 %v7182, %v7180
    %7247 = vmatprep.subr.bf16.mxu0 %v7198
    %7248 = vmatpush1.bf16.msra.mxu0 %v7197
    %7249 = vmatprep.subr.bf16.mxu0 %v7196
    %7250 = vmatpush1.bf16.msra.mxu0 %v7195
    %7251 = vmatprep.subr.bf16.mxu0 %v7194
    %7252 = vmatpush1.bf16.msra.mxu0 %v7193
    %7253 = vmatprep.subr.bf16.mxu0 %v7192
    %7254 = vmatpush1.bf16.msra.mxu0 %v7191
    %7255 = vmatprep.subr.bf16.mxu0 %v7190
    %7256 = vmatpush1.bf16.msra.mxu0 %v7189
    %7257 = vmatprep.subr.bf16.mxu0 %v7188
    %7258 = vmatpush1.bf16.msra.mxu0 %v7187
    %7259 = vmatprep.subr.bf16.mxu0 %v7186
    %7260 = vmatpush1.bf16.msra.mxu0 %v7185
    %7261 = vmatprep.subr.bf16.mxu0 %v7184
    %7262 = vmatpush1.bf16.msra.mxu0 %v7183
    %7263 = vmatprep.subr.bf16.mxu0 %v7214
    %7264 = vmatpush2.bf16.msra.mxu0 %v7213
    %7265 = vmatprep.subr.bf16.mxu0 %v7212
    %7266 = vmatpush2.bf16.msra.mxu0 %v7211
    %7267 = vmatprep.subr.bf16.mxu0 %v7210
    %7268 = vmatpush2.bf16.msra.mxu0 %v7209
    %7269 = vmatprep.subr.bf16.mxu0 %v7208
    %7270 = vmatpush2.bf16.msra.mxu0 %v7207
    %7271 = vmatprep.subr.bf16.mxu0 %v7206
    %7272 = vmatpush2.bf16.msra.mxu0 %v7205
    %7273 = vmatprep.subr.bf16.mxu0 %v7204
    %7274 = vmatpush2.bf16.msra.mxu0 %v7203
    %7275 = vmatprep.subr.bf16.mxu0 %v7202
    %7276 = vmatpush2.bf16.msra.mxu0 %v7201
    %7277 = vmatprep.subr.bf16.mxu0 %v7200
    %7278 = vmatpush2.bf16.msra.mxu0 %v7199
    %7279 = vmatprep.mubr.bf16.mxu0 %v5619
    %7280 = vmatmul.mubr.bf16.gmra.mxu0 %v5618
    %v7281 = vpop.f32.mrf.mxu0
    %v7282 = vadd.f32 0.0, %v7281
    %v7283 = vpop.f32.mrf.mxu0
    %v7284 = vadd.f32 0.0, %v7283
    %v7285 = vpop.f32.mrf.mxu0
    %v7286 = vadd.f32 0.0, %v7285
    %v7287 = vpop.f32.mrf.mxu0
    %v7288 = vadd.f32 0.0, %v7287
    %7289 = vmatprep.mubr.bf16.mxu0 %v5621
    %7290 = vmatmul.mubr.bf16.gmra.mxu0 %v5620
    %v7291 = vpop.f32.mrf.mxu0
    %v7292 = vadd.f32 0.0, %v7291
    %v7293 = vpop.f32.mrf.mxu0
    %v7294 = vadd.f32 0.0, %v7293
    %v7295 = vpop.f32.mrf.mxu0
    %v7296 = vadd.f32 0.0, %v7295
    %v7297 = vpop.f32.mrf.mxu0
    %v7298 = vadd.f32 0.0, %v7297
    %7299 = vmatprep.mubr.bf16.mxu0 %v5623
    %7300 = vmatmul.mubr.bf16.gmra.mxu0 %v5622
    %v7301 = vpop.f32.mrf.mxu0
    %v7302 = vadd.f32 0.0, %v7301
    %v7303 = vpop.f32.mrf.mxu0
    %v7304 = vadd.f32 0.0, %v7303
    %v7305 = vpop.f32.mrf.mxu0
    %v7306 = vadd.f32 0.0, %v7305
    %v7307 = vpop.f32.mrf.mxu0
    %v7308 = vadd.f32 0.0, %v7307
    %7309 = vmatprep.mubr.bf16.mxu0 %v5625
    %7310 = vmatmul.mubr.bf16.gmra.mxu0 %v5624
    %v7311 = vpop.f32.mrf.mxu0
    %v7312 = vadd.f32 0.0, %v7311
    %v7313 = vpop.f32.mrf.mxu0
    %v7314 = vadd.f32 0.0, %v7313
    %v7315 = vpop.f32.mrf.mxu0
    %v7316 = vadd.f32 0.0, %v7315
    %v7317 = vpop.f32.mrf.mxu0
    %v7318 = vadd.f32 0.0, %v7317
    %7319 = vdwg.mxu0
    %v7320 = vadd.f32 %v7017, %v7282
    %v7321 = vadd.f32 %v7019, %v7284
    %v7322 = vadd.f32 %v7021, %v7286
    %v7323 = vadd.f32 %v7023, %v7288
    %v7324 = vadd.f32 %v7027, %v7292
    %v7325 = vadd.f32 %v7029, %v7294
    %v7326 = vadd.f32 %v7031, %v7296
    %v7327 = vadd.f32 %v7033, %v7298
    %v7328 = vadd.f32 %v7037, %v7302
    %v7329 = vadd.f32 %v7039, %v7304
    %v7330 = vadd.f32 %v7041, %v7306
    %v7331 = vadd.f32 %v7043, %v7308
    %v7332 = vadd.f32 %v7047, %v7312
    %v7333 = vadd.f32 %v7049, %v7314
    %v7334 = vadd.f32 %v7051, %v7316
    %v7335 = vadd.f32 %v7053, %v7318
    %v7336 = vadd.f32 %v7320, %v6163
    %v7337 = vadd.f32 %v7321, %v6167
    %v7338 = vadd.f32 %v7322, %v6163
    %v7339 = vadd.f32 %v7323, %v6167
    %v7340 = vadd.f32 %v7324, %v6163
    %v7341 = vadd.f32 %v7325, %v6167
    %v7342 = vadd.f32 %v7326, %v6163
    %v7343 = vadd.f32 %v7327, %v6167
    %v7344 = vadd.f32 %v7328, %v6163
    %v7345 = vadd.f32 %v7329, %v6167
    %v7346 = vadd.f32 %v7330, %v6163
    %v7347 = vadd.f32 %v7331, %v6167
    %v7348 = vadd.f32 %v7332, %v6163
    %v7349 = vadd.f32 %v7333, %v6167
    %v7350 = vadd.f32 %v7334, %v6163
    %v7351 = vadd.f32 %v7335, %v6167
    %v7352 = vmax.f32 %v7336, 0.0
    %v7353 = vmax.f32 %v7337, 0.0
    %v7354 = vmax.f32 %v7338, 0.0
    %v7355 = vmax.f32 %v7339, 0.0
    %v7356 = vmax.f32 %v7340, 0.0
    %v7357 = vmax.f32 %v7341, 0.0
    %v7358 = vmax.f32 %v7342, 0.0
    %v7359 = vmax.f32 %v7343, 0.0
    %v7360 = vmax.f32 %v7344, 0.0
    %v7361 = vmax.f32 %v7345, 0.0
    %v7362 = vmax.f32 %v7346, 0.0
    %v7363 = vmax.f32 %v7347, 0.0
    %v7364 = vmax.f32 %v7348, 0.0
    %v7365 = vmax.f32 %v7349, 0.0
    %v7366 = vmax.f32 %v7350, 0.0
    %v7367 = vmax.f32 %v7351, 0.0
    %v7368 = vmax.f32 %v6509, %v6510
    %v7369 = vmax.f32 %v6511, %v6512
    %v7370 = vmax.f32 %v6513, %v6514
    %v7371 = vmax.f32 %v6515, %v6516
    %v7372 = vmax.f32 %v6517, %v6518
    %v7373 = vmax.f32 %v6519, %v6520
    %v7374 = vmax.f32 %v6521, %v6522
    %v7375 = vmax.f32 %v6523, %v6524
    %v7376 = vmax.f32 %v7352, %v7353
    %v7377 = vmax.f32 %v7354, %v7355
    %v7378 = vmax.f32 %v7356, %v7357
    %v7379 = vmax.f32 %v7358, %v7359
    %v7380 = vmax.f32 %v7360, %v7361
    %v7381 = vmax.f32 %v7362, %v7363
    %v7382 = vmax.f32 %v7364, %v7365
    %v7383 = vmax.f32 %v7366, %v7367
    %v7384 = vmax.f32 %v7368, %v7376
    %v7385 = vmax.f32 %v7369, %v7377
    %v7386 = vmax.f32 %v7370, %v7378
    %v7387 = vmax.f32 %v7371, %v7379
    %v7388 = vmax.f32 %v7372, %v7380
    %v7389 = vmax.f32 %v7373, %v7381
    %v7390 = vmax.f32 %v7374, %v7382
    %v7391 = vmax.f32 %v7375, %v7383
    %v7392 = vpack.c.bf16 %v7385, %v7384
    %v7393 = vpack.c.bf16 %v7387, %v7386
    %v7394 = vpack.c.bf16 %v7389, %v7388
    %v7395 = vpack.c.bf16 %v7391, %v7390
    %v7396 = vld [vmem:[%s6] sm:$0xf]
    %v7397 = vld [vmem:[%s5] sm:$0xff]
    %v7398 = vld [vmem:[%s5 + $0x8] sm:$0xff]
    %v7399 = vld [vmem:[%s5 + $0x10] sm:$0xff]
    %v7400 = vld [vmem:[%s5 + $0x18] sm:$0xff]
    %v7401 = vld [vmem:[%s5 + $0x20] sm:$0xff]
    %v7402 = vld [vmem:[%s5 + $0x28] sm:$0xff]
    %v7403 = vld [vmem:[%s5 + $0x30] sm:$0xff]
    %v7404 = vld [vmem:[%s5 + $0x38] sm:$0xff]
    %v7405 = vld [vmem:[%s5 + $0x40] sm:$0xff]
    %v7406 = vld [vmem:[%s5 + $0x48] sm:$0xff]
    %v7407 = vld [vmem:[%s5 + $0x50] sm:$0xff]
    %v7408 = vld [vmem:[%s5 + $0x58] sm:$0xff]
    %v7409 = vld [vmem:[%s5 + $0x60] sm:$0xff]
    %v7410 = vld [vmem:[%s5 + $0x68] sm:$0xff]
    %v7411 = vld [vmem:[%s5 + $0x70] sm:$0xff]
    %v7412 = vld [vmem:[%s5 + $0x78] sm:$0xff]
    %v7413 = vld [vmem:[%s5 + $0x80] sm:$0xff]
    %v7414 = vld [vmem:[%s5 + $0x88] sm:$0xff]
    %v7415 = vld [vmem:[%s5 + $0x90] sm:$0xff]
    %v7416 = vld [vmem:[%s5 + $0x98] sm:$0xff]
    %v7417 = vld [vmem:[%s5 + $0xa0] sm:$0xff]
    %v7418 = vld [vmem:[%s5 + $0xa8] sm:$0xff]
    %v7419 = vld [vmem:[%s5 + $0xb0] sm:$0xff]
    %v7420 = vld [vmem:[%s5 + $0xb8] sm:$0xff]
    %v7421 = vld [vmem:[%s5 + $0xc0] sm:$0xff]
    %v7422 = vld [vmem:[%s5 + $0xc8] sm:$0xff]
    %v7423 = vld [vmem:[%s5 + $0xd0] sm:$0xff]
    %v7424 = vld [vmem:[%s5 + $0xd8] sm:$0xff]
    %v7425 = vld [vmem:[%s5 + $0xe0] sm:$0xff]
    %v7426 = vld [vmem:[%s5 + $0xe8] sm:$0xff]
    %v7427 = vld [vmem:[%s5 + $0xf0] sm:$0xff]
    %v7428 = vld [vmem:[%s5 + $0xf8] sm:$0xff]
    %v7461 = vunpack.c.l.b16 %v7397
    %v7462 = vunpack.c.h.b16 %v7397
    %v7463 = vunpack.c.l.b16 %v7398
    %v7464 = vunpack.c.h.b16 %v7398
    %v7465 = vunpack.c.l.b16 %v7399
    %v7466 = vunpack.c.h.b16 %v7399
    %v7467 = vunpack.c.l.b16 %v7400
    %v7468 = vunpack.c.h.b16 %v7400
    %v7469 = vunpack.c.l.b16 %v7401
    %v7470 = vunpack.c.h.b16 %v7401
    %v7471 = vunpack.c.l.b16 %v7402
    %v7472 = vunpack.c.h.b16 %v7402
    %v7473 = vunpack.c.l.b16 %v7403
    %v7474 = vunpack.c.h.b16 %v7403
    %v7475 = vunpack.c.l.b16 %v7404
    %v7476 = vunpack.c.h.b16 %v7404
    %v7477 = vunpack.c.l.b16 %v7405
    %v7478 = vunpack.c.h.b16 %v7405
    %v7479 = vunpack.c.l.b16 %v7406
    %v7480 = vunpack.c.h.b16 %v7406
    %v7481 = vunpack.c.l.b16 %v7407
    %v7482 = vunpack.c.h.b16 %v7407
    %v7483 = vunpack.c.l.b16 %v7408
    %v7484 = vunpack.c.h.b16 %v7408
    %v7485 = vunpack.c.l.b16 %v7409
    %v7486 = vunpack.c.h.b16 %v7409
    %v7487 = vunpack.c.l.b16 %v7410
    %v7488 = vunpack.c.h.b16 %v7410
    %v7489 = vunpack.c.l.b16 %v7411
    %v7490 = vunpack.c.h.b16 %v7411
    %v7491 = vunpack.c.l.b16 %v7412
    %v7492 = vunpack.c.h.b16 %v7412
    %v7493 = vunpack.c.l.b16 %v7413
    %v7494 = vunpack.c.h.b16 %v7413
    %v7495 = vunpack.c.l.b16 %v7414
    %v7496 = vunpack.c.h.b16 %v7414
    %v7497 = vunpack.c.l.b16 %v7415
    %v7498 = vunpack.c.h.b16 %v7415
    %v7499 = vunpack.c.l.b16 %v7416
    %v7500 = vunpack.c.h.b16 %v7416
    %v7501 = vunpack.c.l.b16 %v7417
    %v7502 = vunpack.c.h.b16 %v7417
    %v7503 = vunpack.c.l.b16 %v7418
    %v7504 = vunpack.c.h.b16 %v7418
    %v7505 = vunpack.c.l.b16 %v7419
    %v7506 = vunpack.c.h.b16 %v7419
    %v7507 = vunpack.c.l.b16 %v7420
    %v7508 = vunpack.c.h.b16 %v7420
    %v7509 = vunpack.c.l.b16 %v7421
    %v7510 = vunpack.c.h.b16 %v7421
    %v7511 = vunpack.c.l.b16 %v7422
    %v7512 = vunpack.c.h.b16 %v7422
    %v7513 = vunpack.c.l.b16 %v7423
    %v7514 = vunpack.c.h.b16 %v7423
    %v7515 = vunpack.c.l.b16 %v7424
    %v7516 = vunpack.c.h.b16 %v7424
    %v7517 = vunpack.c.l.b16 %v7425
    %v7518 = vunpack.c.h.b16 %v7425
    %v7519 = vunpack.c.l.b16 %v7426
    %v7520 = vunpack.c.h.b16 %v7426
    %v7521 = vunpack.c.l.b16 %v7427
    %v7522 = vunpack.c.h.b16 %v7427
    %v7523 = vunpack.c.l.b16 %v7428
    %v7524 = vunpack.c.h.b16 %v7428
    %v7525 = vpack.c.b16 %v7465, %v7461
    %v7526 = vpack.c.b16 %v7466, %v7462
    %v7527 = vpack.c.b16 %v7467, %v7463
    %v7528 = vpack.c.b16 %v7468, %v7464
    %v7529 = vpack.c.b16 %v7473, %v7469
    %v7530 = vpack.c.b16 %v7474, %v7470
    %v7531 = vpack.c.b16 %v7475, %v7471
    %v7532 = vpack.c.b16 %v7476, %v7472
    %v7533 = vpack.c.b16 %v7481, %v7477
    %v7534 = vpack.c.b16 %v7482, %v7478
    %v7535 = vpack.c.b16 %v7483, %v7479
    %v7536 = vpack.c.b16 %v7484, %v7480
    %v7537 = vpack.c.b16 %v7489, %v7485
    %v7538 = vpack.c.b16 %v7490, %v7486
    %v7539 = vpack.c.b16 %v7491, %v7487
    %v7540 = vpack.c.b16 %v7492, %v7488
    %v7541 = vpack.c.b16 %v7497, %v7493
    %v7542 = vpack.c.b16 %v7498, %v7494
    %v7543 = vpack.c.b16 %v7499, %v7495
    %v7544 = vpack.c.b16 %v7500, %v7496
    %v7545 = vpack.c.b16 %v7505, %v7501
    %v7546 = vpack.c.b16 %v7506, %v7502
    %v7547 = vpack.c.b16 %v7507, %v7503
    %v7548 = vpack.c.b16 %v7508, %v7504
    %v7549 = vpack.c.b16 %v7513, %v7509
    %v7550 = vpack.c.b16 %v7514, %v7510
    %v7551 = vpack.c.b16 %v7515, %v7511
    %v7552 = vpack.c.b16 %v7516, %v7512
    %v7553 = vpack.c.b16 %v7521, %v7517
    %v7554 = vpack.c.b16 %v7522, %v7518
    %v7555 = vpack.c.b16 %v7523, %v7519
    %v7556 = vpack.c.b16 %v7524, %v7520
    %7589 = vmatprep.subr.bf16.mxu0 %v7554
    %7590 = vmatpush1.bf16.msra.mxu0 %v7553
    %7591 = vmatprep.subr.bf16.mxu0 %v7550
    %7592 = vmatpush1.bf16.msra.mxu0 %v7549
    %7593 = vmatprep.subr.bf16.mxu0 %v7546
    %7594 = vmatpush1.bf16.msra.mxu0 %v7545
    %7595 = vmatprep.subr.bf16.mxu0 %v7542
    %7596 = vmatpush1.bf16.msra.mxu0 %v7541
    %7597 = vmatprep.subr.bf16.mxu0 %v7538
    %7598 = vmatpush1.bf16.msra.mxu0 %v7537
    %7599 = vmatprep.subr.bf16.mxu0 %v7534
    %7600 = vmatpush1.bf16.msra.mxu0 %v7533
    %7601 = vmatprep.subr.bf16.mxu0 %v7530
    %7602 = vmatpush1.bf16.msra.mxu0 %v7529
    %7603 = vmatprep.subr.bf16.mxu0 %v7526
    %7604 = vmatpush1.bf16.msra.mxu0 %v7525
    %7605 = vmatprep.subr.bf16.mxu0 0
    %7606 = vmatpush2.bf16.msra.mxu0 0
    %7607 = vmatprep.subr.bf16.mxu0 0
    %7608 = vmatpush2.bf16.msra.mxu0 0
    %7609 = vmatprep.subr.bf16.mxu0 0
    %7610 = vmatpush2.bf16.msra.mxu0 0
    %7611 = vmatprep.subr.bf16.mxu0 0
    %7612 = vmatpush2.bf16.msra.mxu0 0
    %7613 = vmatprep.subr.bf16.mxu0 0
    %7614 = vmatpush2.bf16.msra.mxu0 0
    %7615 = vmatprep.subr.bf16.mxu0 0
    %7616 = vmatpush2.bf16.msra.mxu0 0
    %7617 = vmatprep.subr.bf16.mxu0 0
    %7618 = vmatpush2.bf16.msra.mxu0 0
    %7619 = vmatprep.subr.bf16.mxu0 0
    %7620 = vmatpush2.bf16.msra.mxu0 0
    %7621 = vmatprep.mubr.bf16.mxu0 0
    %7622 = vmatmul.mubr.bf16.gmra.mxu0 %v7392
    %v7623 = vpop.f32.mrf.mxu0
    %v7624 = vadd.f32 0.0, %v7623
    %v7625 = vpop.f32.mrf.mxu0
    %v7626 = vadd.f32 0.0, %v7625
    %v7627 = vpop.f32.mrf.mxu0
    %v7628 = vadd.f32 0.0, %v7627
    %v7629 = vpop.f32.mrf.mxu0
    %v7630 = vadd.f32 0.0, %v7629
    %7631 = vdwg.mxu0
    %7632 = vmatprep.subr.bf16.mxu0 %v7556
    %7633 = vmatpush1.bf16.msra.mxu0 %v7555
    %7634 = vmatprep.subr.bf16.mxu0 %v7552
    %7635 = vmatpush1.bf16.msra.mxu0 %v7551
    %7636 = vmatprep.subr.bf16.mxu0 %v7548
    %7637 = vmatpush1.bf16.msra.mxu0 %v7547
    %7638 = vmatprep.subr.bf16.mxu0 %v7544
    %7639 = vmatpush1.bf16.msra.mxu0 %v7543
    %7640 = vmatprep.subr.bf16.mxu0 %v7540
    %7641 = vmatpush1.bf16.msra.mxu0 %v7539
    %7642 = vmatprep.subr.bf16.mxu0 %v7536
    %7643 = vmatpush1.bf16.msra.mxu0 %v7535
    %7644 = vmatprep.subr.bf16.mxu0 %v7532
    %7645 = vmatpush1.bf16.msra.mxu0 %v7531
    %7646 = vmatprep.subr.bf16.mxu0 %v7528
    %7647 = vmatpush1.bf16.msra.mxu0 %v7527
    %7648 = vmatprep.subr.bf16.mxu0 0
    %7649 = vmatpush2.bf16.msra.mxu0 0
    %7650 = vmatprep.subr.bf16.mxu0 0
    %7651 = vmatpush2.bf16.msra.mxu0 0
    %7652 = vmatprep.subr.bf16.mxu0 0
    %7653 = vmatpush2.bf16.msra.mxu0 0
    %7654 = vmatprep.subr.bf16.mxu0 0
    %7655 = vmatpush2.bf16.msra.mxu0 0
    %7656 = vmatprep.subr.bf16.mxu0 0
    %7657 = vmatpush2.bf16.msra.mxu0 0
    %7658 = vmatprep.subr.bf16.mxu0 0
    %7659 = vmatpush2.bf16.msra.mxu0 0
    %7660 = vmatprep.subr.bf16.mxu0 0
    %7661 = vmatpush2.bf16.msra.mxu0 0
    %7662 = vmatprep.subr.bf16.mxu0 0
    %7663 = vmatpush2.bf16.msra.mxu0 0
    %7664 = vmatprep.mubr.bf16.mxu0 0
    %7665 = vmatmul.mubr.bf16.gmra.mxu0 %v7392
    %v7666 = vpop.f32.mrf.mxu0
    %v7667 = vadd.f32 0.0, %v7666
    %v7668 = vpop.f32.mrf.mxu0
    %v7669 = vadd.f32 0.0, %v7668
    %v7670 = vpop.f32.mrf.mxu0
    %v7671 = vadd.f32 0.0, %v7670
    %v7672 = vpop.f32.mrf.mxu0
    %v7673 = vadd.f32 0.0, %v7672
    %7674 = vdwg.mxu0
    %v7676 = vlaneseq
    %v7677 = vshrl.u32 %v7676, 7
    %v7678 = vsub.s32 0, %v7677
    %v7679 = vrot.slane %v7396, %v7678
    %v7680 = vlaneseq
    %v7681 = vshrl.u32 %v7680, 7
    %v7682 = vsub.s32 1, %v7681
    %v7683 = vrot.slane %v7396, %v7682
    %v7684 = vlaneseq
    %v7685 = vshrl.u32 %v7684, 7
    %v7686 = vsub.s32 2, %v7685
    %v7687 = vrot.slane %v7396, %v7686
    %v7688 = vlaneseq
    %v7689 = vshrl.u32 %v7688, 7
    %v7690 = vsub.s32 3, %v7689
    %v7691 = vrot.slane %v7396, %v7690
    %v7696 = vadd.f32 %v7679, %v7624
    %v7697 = vadd.f32 %v7683, %v7626
    %v7698 = vadd.f32 %v7687, %v7667
    %v7699 = vadd.f32 %v7691, %v7669
    %v7700 = vadd.f32 %v7679, %v7628
    %v7701 = vadd.f32 %v7683, %v7630
    %v7702 = vadd.f32 %v7687, %v7671
    %v7703 = vadd.f32 %v7691, %v7673
    %s7704 = scalar_lea.vmem %s5, 256
    %v7705 = vld [vmem:[%s7704] sm:$0xff]
    %v7706 = vld [vmem:[%s7704 + $0x8] sm:$0xff]
    %v7707 = vld [vmem:[%s7704 + $0x10] sm:$0xff]
    %v7708 = vld [vmem:[%s7704 + $0x18] sm:$0xff]
    %v7709 = vld [vmem:[%s7704 + $0x20] sm:$0xff]
    %v7710 = vld [vmem:[%s7704 + $0x28] sm:$0xff]
    %v7711 = vld [vmem:[%s7704 + $0x30] sm:$0xff]
    %v7712 = vld [vmem:[%s7704 + $0x38] sm:$0xff]
    %v7713 = vld [vmem:[%s7704 + $0x40] sm:$0xff]
    %v7714 = vld [vmem:[%s7704 + $0x48] sm:$0xff]
    %v7715 = vld [vmem:[%s7704 + $0x50] sm:$0xff]
    %v7716 = vld [vmem:[%s7704 + $0x58] sm:$0xff]
    %v7717 = vld [vmem:[%s7704 + $0x60] sm:$0xff]
    %v7718 = vld [vmem:[%s7704 + $0x68] sm:$0xff]
    %v7719 = vld [vmem:[%s7704 + $0x70] sm:$0xff]
    %v7720 = vld [vmem:[%s7704 + $0x78] sm:$0xff]
    %v7721 = vld [vmem:[%s7704 + $0x80] sm:$0xff]
    %v7722 = vld [vmem:[%s7704 + $0x88] sm:$0xff]
    %v7723 = vld [vmem:[%s7704 + $0x90] sm:$0xff]
    %v7724 = vld [vmem:[%s7704 + $0x98] sm:$0xff]
    %v7725 = vld [vmem:[%s7704 + $0xa0] sm:$0xff]
    %v7726 = vld [vmem:[%s7704 + $0xa8] sm:$0xff]
    %v7727 = vld [vmem:[%s7704 + $0xb0] sm:$0xff]
    %v7728 = vld [vmem:[%s7704 + $0xb8] sm:$0xff]
    %v7729 = vld [vmem:[%s7704 + $0xc0] sm:$0xff]
    %v7730 = vld [vmem:[%s7704 + $0xc8] sm:$0xff]
    %v7731 = vld [vmem:[%s7704 + $0xd0] sm:$0xff]
    %v7732 = vld [vmem:[%s7704 + $0xd8] sm:$0xff]
    %v7733 = vld [vmem:[%s7704 + $0xe0] sm:$0xff]
    %v7734 = vld [vmem:[%s7704 + $0xe8] sm:$0xff]
    %v7735 = vld [vmem:[%s7704 + $0xf0] sm:$0xff]
    %v7736 = vld [vmem:[%s7704 + $0xf8] sm:$0xff]
    %v7769 = vunpack.c.l.b16 %v7705
    %v7770 = vunpack.c.h.b16 %v7705
    %v7771 = vunpack.c.l.b16 %v7706
    %v7772 = vunpack.c.h.b16 %v7706
    %v7773 = vunpack.c.l.b16 %v7707
    %v7774 = vunpack.c.h.b16 %v7707
    %v7775 = vunpack.c.l.b16 %v7708
    %v7776 = vunpack.c.h.b16 %v7708
    %v7777 = vunpack.c.l.b16 %v7709
    %v7778 = vunpack.c.h.b16 %v7709
    %v7779 = vunpack.c.l.b16 %v7710
    %v7780 = vunpack.c.h.b16 %v7710
    %v7781 = vunpack.c.l.b16 %v7711
    %v7782 = vunpack.c.h.b16 %v7711
    %v7783 = vunpack.c.l.b16 %v7712
    %v7784 = vunpack.c.h.b16 %v7712
    %v7785 = vunpack.c.l.b16 %v7713
    %v7786 = vunpack.c.h.b16 %v7713
    %v7787 = vunpack.c.l.b16 %v7714
    %v7788 = vunpack.c.h.b16 %v7714
    %v7789 = vunpack.c.l.b16 %v7715
    %v7790 = vunpack.c.h.b16 %v7715
    %v7791 = vunpack.c.l.b16 %v7716
    %v7792 = vunpack.c.h.b16 %v7716
    %v7793 = vunpack.c.l.b16 %v7717
    %v7794 = vunpack.c.h.b16 %v7717
    %v7795 = vunpack.c.l.b16 %v7718
    %v7796 = vunpack.c.h.b16 %v7718
    %v7797 = vunpack.c.l.b16 %v7719
    %v7798 = vunpack.c.h.b16 %v7719
    %v7799 = vunpack.c.l.b16 %v7720
    %v7800 = vunpack.c.h.b16 %v7720
    %v7801 = vunpack.c.l.b16 %v7721
    %v7802 = vunpack.c.h.b16 %v7721
    %v7803 = vunpack.c.l.b16 %v7722
    %v7804 = vunpack.c.h.b16 %v7722
    %v7805 = vunpack.c.l.b16 %v7723
    %v7806 = vunpack.c.h.b16 %v7723
    %v7807 = vunpack.c.l.b16 %v7724
    %v7808 = vunpack.c.h.b16 %v7724
    %v7809 = vunpack.c.l.b16 %v7725
    %v7810 = vunpack.c.h.b16 %v7725
    %v7811 = vunpack.c.l.b16 %v7726
    %v7812 = vunpack.c.h.b16 %v7726
    %v7813 = vunpack.c.l.b16 %v7727
    %v7814 = vunpack.c.h.b16 %v7727
    %v7815 = vunpack.c.l.b16 %v7728
    %v7816 = vunpack.c.h.b16 %v7728
    %v7817 = vunpack.c.l.b16 %v7729
    %v7818 = vunpack.c.h.b16 %v7729
    %v7819 = vunpack.c.l.b16 %v7730
    %v7820 = vunpack.c.h.b16 %v7730
    %v7821 = vunpack.c.l.b16 %v7731
    %v7822 = vunpack.c.h.b16 %v7731
    %v7823 = vunpack.c.l.b16 %v7732
    %v7824 = vunpack.c.h.b16 %v7732
    %v7825 = vunpack.c.l.b16 %v7733
    %v7826 = vunpack.c.h.b16 %v7733
    %v7827 = vunpack.c.l.b16 %v7734
    %v7828 = vunpack.c.h.b16 %v7734
    %v7829 = vunpack.c.l.b16 %v7735
    %v7830 = vunpack.c.h.b16 %v7735
    %v7831 = vunpack.c.l.b16 %v7736
    %v7832 = vunpack.c.h.b16 %v7736
    %v7833 = vpack.c.b16 %v7773, %v7769
    %v7834 = vpack.c.b16 %v7774, %v7770
    %v7835 = vpack.c.b16 %v7775, %v7771
    %v7836 = vpack.c.b16 %v7776, %v7772
    %v7837 = vpack.c.b16 %v7781, %v7777
    %v7838 = vpack.c.b16 %v7782, %v7778
    %v7839 = vpack.c.b16 %v7783, %v7779
    %v7840 = vpack.c.b16 %v7784, %v7780
    %v7841 = vpack.c.b16 %v7789, %v7785
    %v7842 = vpack.c.b16 %v7790, %v7786
    %v7843 = vpack.c.b16 %v7791, %v7787
    %v7844 = vpack.c.b16 %v7792, %v7788
    %v7845 = vpack.c.b16 %v7797, %v7793
    %v7846 = vpack.c.b16 %v7798, %v7794
    %v7847 = vpack.c.b16 %v7799, %v7795
    %v7848 = vpack.c.b16 %v7800, %v7796
    %v7849 = vpack.c.b16 %v7805, %v7801
    %v7850 = vpack.c.b16 %v7806, %v7802
    %v7851 = vpack.c.b16 %v7807, %v7803
    %v7852 = vpack.c.b16 %v7808, %v7804
    %v7853 = vpack.c.b16 %v7813, %v7809
    %v7854 = vpack.c.b16 %v7814, %v7810
    %v7855 = vpack.c.b16 %v7815, %v7811
    %v7856 = vpack.c.b16 %v7816, %v7812
    %v7857 = vpack.c.b16 %v7821, %v7817
    %v7858 = vpack.c.b16 %v7822, %v7818
    %v7859 = vpack.c.b16 %v7823, %v7819
    %v7860 = vpack.c.b16 %v7824, %v7820
    %v7861 = vpack.c.b16 %v7829, %v7825
    %v7862 = vpack.c.b16 %v7830, %v7826
    %v7863 = vpack.c.b16 %v7831, %v7827
    %v7864 = vpack.c.b16 %v7832, %v7828
    %7897 = vmatprep.subr.bf16.mxu0 %v7862
    %7898 = vmatpush1.bf16.msra.mxu0 %v7861
    %7899 = vmatprep.subr.bf16.mxu0 %v7858
    %7900 = vmatpush1.bf16.msra.mxu0 %v7857
    %7901 = vmatprep.subr.bf16.mxu0 %v7854
    %7902 = vmatpush1.bf16.msra.mxu0 %v7853
    %7903 = vmatprep.subr.bf16.mxu0 %v7850
    %7904 = vmatpush1.bf16.msra.mxu0 %v7849
    %7905 = vmatprep.subr.bf16.mxu0 %v7846
    %7906 = vmatpush1.bf16.msra.mxu0 %v7845
    %7907 = vmatprep.subr.bf16.mxu0 %v7842
    %7908 = vmatpush1.bf16.msra.mxu0 %v7841
    %7909 = vmatprep.subr.bf16.mxu0 %v7838
    %7910 = vmatpush1.bf16.msra.mxu0 %v7837
    %7911 = vmatprep.subr.bf16.mxu0 %v7834
    %7912 = vmatpush1.bf16.msra.mxu0 %v7833
    %7913 = vmatprep.subr.bf16.mxu0 0
    %7914 = vmatpush2.bf16.msra.mxu0 0
    %7915 = vmatprep.subr.bf16.mxu0 0
    %7916 = vmatpush2.bf16.msra.mxu0 0
    %7917 = vmatprep.subr.bf16.mxu0 0
    %7918 = vmatpush2.bf16.msra.mxu0 0
    %7919 = vmatprep.subr.bf16.mxu0 0
    %7920 = vmatpush2.bf16.msra.mxu0 0
    %7921 = vmatprep.subr.bf16.mxu0 0
    %7922 = vmatpush2.bf16.msra.mxu0 0
    %7923 = vmatprep.subr.bf16.mxu0 0
    %7924 = vmatpush2.bf16.msra.mxu0 0
    %7925 = vmatprep.subr.bf16.mxu0 0
    %7926 = vmatpush2.bf16.msra.mxu0 0
    %7927 = vmatprep.subr.bf16.mxu0 0
    %7928 = vmatpush2.bf16.msra.mxu0 0
    %7929 = vmatprep.mubr.bf16.mxu0 0
    %7930 = vmatmul.mubr.bf16.gmra.mxu0 %v7393
    %v7931 = vpop.f32.mrf.mxu0
    %v7932 = vadd.f32 0.0, %v7931
    %v7933 = vpop.f32.mrf.mxu0
    %v7934 = vadd.f32 0.0, %v7933
    %v7935 = vpop.f32.mrf.mxu0
    %v7936 = vadd.f32 0.0, %v7935
    %v7937 = vpop.f32.mrf.mxu0
    %v7938 = vadd.f32 0.0, %v7937
    %7939 = vdwg.mxu0
    %7940 = vmatprep.subr.bf16.mxu0 %v7864
    %7941 = vmatpush1.bf16.msra.mxu0 %v7863
    %7942 = vmatprep.subr.bf16.mxu0 %v7860
    %7943 = vmatpush1.bf16.msra.mxu0 %v7859
    %7944 = vmatprep.subr.bf16.mxu0 %v7856
    %7945 = vmatpush1.bf16.msra.mxu0 %v7855
    %7946 = vmatprep.subr.bf16.mxu0 %v7852
    %7947 = vmatpush1.bf16.msra.mxu0 %v7851
    %7948 = vmatprep.subr.bf16.mxu0 %v7848
    %7949 = vmatpush1.bf16.msra.mxu0 %v7847
    %7950 = vmatprep.subr.bf16.mxu0 %v7844
    %7951 = vmatpush1.bf16.msra.mxu0 %v7843
    %7952 = vmatprep.subr.bf16.mxu0 %v7840
    %7953 = vmatpush1.bf16.msra.mxu0 %v7839
    %7954 = vmatprep.subr.bf16.mxu0 %v7836
    %7955 = vmatpush1.bf16.msra.mxu0 %v7835
    %7956 = vmatprep.subr.bf16.mxu0 0
    %7957 = vmatpush2.bf16.msra.mxu0 0
    %7958 = vmatprep.subr.bf16.mxu0 0
    %7959 = vmatpush2.bf16.msra.mxu0 0
    %7960 = vmatprep.subr.bf16.mxu0 0
    %7961 = vmatpush2.bf16.msra.mxu0 0
    %7962 = vmatprep.subr.bf16.mxu0 0
    %7963 = vmatpush2.bf16.msra.mxu0 0
    %7964 = vmatprep.subr.bf16.mxu0 0
    %7965 = vmatpush2.bf16.msra.mxu0 0
    %7966 = vmatprep.subr.bf16.mxu0 0
    %7967 = vmatpush2.bf16.msra.mxu0 0
    %7968 = vmatprep.subr.bf16.mxu0 0
    %7969 = vmatpush2.bf16.msra.mxu0 0
    %7970 = vmatprep.subr.bf16.mxu0 0
    %7971 = vmatpush2.bf16.msra.mxu0 0
    %7972 = vmatprep.mubr.bf16.mxu0 0
    %7973 = vmatmul.mubr.bf16.gmra.mxu0 %v7393
    %v7974 = vpop.f32.mrf.mxu0
    %v7975 = vadd.f32 0.0, %v7974
    %v7976 = vpop.f32.mrf.mxu0
    %v7977 = vadd.f32 0.0, %v7976
    %v7978 = vpop.f32.mrf.mxu0
    %v7979 = vadd.f32 0.0, %v7978
    %v7980 = vpop.f32.mrf.mxu0
    %v7981 = vadd.f32 0.0, %v7980
    %7982 = vdwg.mxu0
    %v7983 = vadd.f32 %v7696, %v7932
    %v7984 = vadd.f32 %v7697, %v7934
    %v7985 = vadd.f32 %v7698, %v7975
    %v7986 = vadd.f32 %v7699, %v7977
    %v7987 = vadd.f32 %v7700, %v7936
    %v7988 = vadd.f32 %v7701, %v7938
    %v7989 = vadd.f32 %v7702, %v7979
    %v7990 = vadd.f32 %v7703, %v7981
    %s7991 = scalar_lea.vmem %s5, 512
    %v7992 = vld [vmem:[%s7991] sm:$0xff]
    %v7993 = vld [vmem:[%s7991 + $0x8] sm:$0xff]
    %v7994 = vld [vmem:[%s7991 + $0x10] sm:$0xff]
    %v7995 = vld [vmem:[%s7991 + $0x18] sm:$0xff]
    %v7996 = vld [vmem:[%s7991 + $0x20] sm:$0xff]
    %v7997 = vld [vmem:[%s7991 + $0x28] sm:$0xff]
    %v7998 = vld [vmem:[%s7991 + $0x30] sm:$0xff]
    %v7999 = vld [vmem:[%s7991 + $0x38] sm:$0xff]
    %v8000 = vld [vmem:[%s7991 + $0x40] sm:$0xff]
    %v8001 = vld [vmem:[%s7991 + $0x48] sm:$0xff]
    %v8002 = vld [vmem:[%s7991 + $0x50] sm:$0xff]
    %v8003 = vld [vmem:[%s7991 + $0x58] sm:$0xff]
    %v8004 = vld [vmem:[%s7991 + $0x60] sm:$0xff]
    %v8005 = vld [vmem:[%s7991 + $0x68] sm:$0xff]
    %v8006 = vld [vmem:[%s7991 + $0x70] sm:$0xff]
    %v8007 = vld [vmem:[%s7991 + $0x78] sm:$0xff]
    %v8008 = vld [vmem:[%s7991 + $0x80] sm:$0xff]
    %v8009 = vld [vmem:[%s7991 + $0x88] sm:$0xff]
    %v8010 = vld [vmem:[%s7991 + $0x90] sm:$0xff]
    %v8011 = vld [vmem:[%s7991 + $0x98] sm:$0xff]
    %v8012 = vld [vmem:[%s7991 + $0xa0] sm:$0xff]
    %v8013 = vld [vmem:[%s7991 + $0xa8] sm:$0xff]
    %v8014 = vld [vmem:[%s7991 + $0xb0] sm:$0xff]
    %v8015 = vld [vmem:[%s7991 + $0xb8] sm:$0xff]
    %v8016 = vld [vmem:[%s7991 + $0xc0] sm:$0xff]
    %v8017 = vld [vmem:[%s7991 + $0xc8] sm:$0xff]
    %v8018 = vld [vmem:[%s7991 + $0xd0] sm:$0xff]
    %v8019 = vld [vmem:[%s7991 + $0xd8] sm:$0xff]
    %v8020 = vld [vmem:[%s7991 + $0xe0] sm:$0xff]
    %v8021 = vld [vmem:[%s7991 + $0xe8] sm:$0xff]
    %v8022 = vld [vmem:[%s7991 + $0xf0] sm:$0xff]
    %v8023 = vld [vmem:[%s7991 + $0xf8] sm:$0xff]
    %v8056 = vunpack.c.l.b16 %v7992
    %v8057 = vunpack.c.h.b16 %v7992
    %v8058 = vunpack.c.l.b16 %v7993
    %v8059 = vunpack.c.h.b16 %v7993
    %v8060 = vunpack.c.l.b16 %v7994
    %v8061 = vunpack.c.h.b16 %v7994
    %v8062 = vunpack.c.l.b16 %v7995
    %v8063 = vunpack.c.h.b16 %v7995
    %v8064 = vunpack.c.l.b16 %v7996
    %v8065 = vunpack.c.h.b16 %v7996
    %v8066 = vunpack.c.l.b16 %v7997
    %v8067 = vunpack.c.h.b16 %v7997
    %v8068 = vunpack.c.l.b16 %v7998
    %v8069 = vunpack.c.h.b16 %v7998
    %v8070 = vunpack.c.l.b16 %v7999
    %v8071 = vunpack.c.h.b16 %v7999
    %v8072 = vunpack.c.l.b16 %v8000
    %v8073 = vunpack.c.h.b16 %v8000
    %v8074 = vunpack.c.l.b16 %v8001
    %v8075 = vunpack.c.h.b16 %v8001
    %v8076 = vunpack.c.l.b16 %v8002
    %v8077 = vunpack.c.h.b16 %v8002
    %v8078 = vunpack.c.l.b16 %v8003
    %v8079 = vunpack.c.h.b16 %v8003
    %v8080 = vunpack.c.l.b16 %v8004
    %v8081 = vunpack.c.h.b16 %v8004
    %v8082 = vunpack.c.l.b16 %v8005
    %v8083 = vunpack.c.h.b16 %v8005
    %v8084 = vunpack.c.l.b16 %v8006
    %v8085 = vunpack.c.h.b16 %v8006
    %v8086 = vunpack.c.l.b16 %v8007
    %v8087 = vunpack.c.h.b16 %v8007
    %v8088 = vunpack.c.l.b16 %v8008
    %v8089 = vunpack.c.h.b16 %v8008
    %v8090 = vunpack.c.l.b16 %v8009
    %v8091 = vunpack.c.h.b16 %v8009
    %v8092 = vunpack.c.l.b16 %v8010
    %v8093 = vunpack.c.h.b16 %v8010
    %v8094 = vunpack.c.l.b16 %v8011
    %v8095 = vunpack.c.h.b16 %v8011
    %v8096 = vunpack.c.l.b16 %v8012
    %v8097 = vunpack.c.h.b16 %v8012
    %v8098 = vunpack.c.l.b16 %v8013
    %v8099 = vunpack.c.h.b16 %v8013
    %v8100 = vunpack.c.l.b16 %v8014
    %v8101 = vunpack.c.h.b16 %v8014
    %v8102 = vunpack.c.l.b16 %v8015
    %v8103 = vunpack.c.h.b16 %v8015
    %v8104 = vunpack.c.l.b16 %v8016
    %v8105 = vunpack.c.h.b16 %v8016
    %v8106 = vunpack.c.l.b16 %v8017
    %v8107 = vunpack.c.h.b16 %v8017
    %v8108 = vunpack.c.l.b16 %v8018
    %v8109 = vunpack.c.h.b16 %v8018
    %v8110 = vunpack.c.l.b16 %v8019
    %v8111 = vunpack.c.h.b16 %v8019
    %v8112 = vunpack.c.l.b16 %v8020
    %v8113 = vunpack.c.h.b16 %v8020
    %v8114 = vunpack.c.l.b16 %v8021
    %v8115 = vunpack.c.h.b16 %v8021
    %v8116 = vunpack.c.l.b16 %v8022
    %v8117 = vunpack.c.h.b16 %v8022
    %v8118 = vunpack.c.l.b16 %v8023
    %v8119 = vunpack.c.h.b16 %v8023
    %v8120 = vpack.c.b16 %v8060, %v8056
    %v8121 = vpack.c.b16 %v8061, %v8057
    %v8122 = vpack.c.b16 %v8062, %v8058
    %v8123 = vpack.c.b16 %v8063, %v8059
    %v8124 = vpack.c.b16 %v8068, %v8064
    %v8125 = vpack.c.b16 %v8069, %v8065
    %v8126 = vpack.c.b16 %v8070, %v8066
    %v8127 = vpack.c.b16 %v8071, %v8067
    %v8128 = vpack.c.b16 %v8076, %v8072
    %v8129 = vpack.c.b16 %v8077, %v8073
    %v8130 = vpack.c.b16 %v8078, %v8074
    %v8131 = vpack.c.b16 %v8079, %v8075
    %v8132 = vpack.c.b16 %v8084, %v8080
    %v8133 = vpack.c.b16 %v8085, %v8081
    %v8134 = vpack.c.b16 %v8086, %v8082
    %v8135 = vpack.c.b16 %v8087, %v8083
    %v8136 = vpack.c.b16 %v8092, %v8088
    %v8137 = vpack.c.b16 %v8093, %v8089
    %v8138 = vpack.c.b16 %v8094, %v8090
    %v8139 = vpack.c.b16 %v8095, %v8091
    %v8140 = vpack.c.b16 %v8100, %v8096
    %v8141 = vpack.c.b16 %v8101, %v8097
    %v8142 = vpack.c.b16 %v8102, %v8098
    %v8143 = vpack.c.b16 %v8103, %v8099
    %v8144 = vpack.c.b16 %v8108, %v8104
    %v8145 = vpack.c.b16 %v8109, %v8105
    %v8146 = vpack.c.b16 %v8110, %v8106
    %v8147 = vpack.c.b16 %v8111, %v8107
    %v8148 = vpack.c.b16 %v8116, %v8112
    %v8149 = vpack.c.b16 %v8117, %v8113
    %v8150 = vpack.c.b16 %v8118, %v8114
    %v8151 = vpack.c.b16 %v8119, %v8115
    %8184 = vmatprep.subr.bf16.mxu0 %v8149
    %8185 = vmatpush1.bf16.msra.mxu0 %v8148
    %8186 = vmatprep.subr.bf16.mxu0 %v8145
    %8187 = vmatpush1.bf16.msra.mxu0 %v8144
    %8188 = vmatprep.subr.bf16.mxu0 %v8141
    %8189 = vmatpush1.bf16.msra.mxu0 %v8140
    %8190 = vmatprep.subr.bf16.mxu0 %v8137
    %8191 = vmatpush1.bf16.msra.mxu0 %v8136
    %8192 = vmatprep.subr.bf16.mxu0 %v8133
    %8193 = vmatpush1.bf16.msra.mxu0 %v8132
    %8194 = vmatprep.subr.bf16.mxu0 %v8129
    %8195 = vmatpush1.bf16.msra.mxu0 %v8128
    %8196 = vmatprep.subr.bf16.mxu0 %v8125
    %8197 = vmatpush1.bf16.msra.mxu0 %v8124
    %8198 = vmatprep.subr.bf16.mxu0 %v8121
    %8199 = vmatpush1.bf16.msra.mxu0 %v8120
    %8200 = vmatprep.subr.bf16.mxu0 0
    %8201 = vmatpush2.bf16.msra.mxu0 0
    %8202 = vmatprep.subr.bf16.mxu0 0
    %8203 = vmatpush2.bf16.msra.mxu0 0
    %8204 = vmatprep.subr.bf16.mxu0 0
    %8205 = vmatpush2.bf16.msra.mxu0 0
    %8206 = vmatprep.subr.bf16.mxu0 0
    %8207 = vmatpush2.bf16.msra.mxu0 0
    %8208 = vmatprep.subr.bf16.mxu0 0
    %8209 = vmatpush2.bf16.msra.mxu0 0
    %8210 = vmatprep.subr.bf16.mxu0 0
    %8211 = vmatpush2.bf16.msra.mxu0 0
    %8212 = vmatprep.subr.bf16.mxu0 0
    %8213 = vmatpush2.bf16.msra.mxu0 0
    %8214 = vmatprep.subr.bf16.mxu0 0
    %8215 = vmatpush2.bf16.msra.mxu0 0
    %8216 = vmatprep.mubr.bf16.mxu0 0
    %8217 = vmatmul.mubr.bf16.gmra.mxu0 %v7394
    %v8218 = vpop.f32.mrf.mxu0
    %v8219 = vadd.f32 0.0, %v8218
    %v8220 = vpop.f32.mrf.mxu0
    %v8221 = vadd.f32 0.0, %v8220
    %v8222 = vpop.f32.mrf.mxu0
    %v8223 = vadd.f32 0.0, %v8222
    %v8224 = vpop.f32.mrf.mxu0
    %v8225 = vadd.f32 0.0, %v8224
    %8226 = vdwg.mxu0
    %8227 = vmatprep.subr.bf16.mxu0 %v8151
    %8228 = vmatpush1.bf16.msra.mxu0 %v8150
    %8229 = vmatprep.subr.bf16.mxu0 %v8147
    %8230 = vmatpush1.bf16.msra.mxu0 %v8146
    %8231 = vmatprep.subr.bf16.mxu0 %v8143
    %8232 = vmatpush1.bf16.msra.mxu0 %v8142
    %8233 = vmatprep.subr.bf16.mxu0 %v8139
    %8234 = vmatpush1.bf16.msra.mxu0 %v8138
    %8235 = vmatprep.subr.bf16.mxu0 %v8135
    %8236 = vmatpush1.bf16.msra.mxu0 %v8134
    %8237 = vmatprep.subr.bf16.mxu0 %v8131
    %8238 = vmatpush1.bf16.msra.mxu0 %v8130
    %8239 = vmatprep.subr.bf16.mxu0 %v8127
    %8240 = vmatpush1.bf16.msra.mxu0 %v8126
    %8241 = vmatprep.subr.bf16.mxu0 %v8123
    %8242 = vmatpush1.bf16.msra.mxu0 %v8122
    %8243 = vmatprep.subr.bf16.mxu0 0
    %8244 = vmatpush2.bf16.msra.mxu0 0
    %8245 = vmatprep.subr.bf16.mxu0 0
    %8246 = vmatpush2.bf16.msra.mxu0 0
    %8247 = vmatprep.subr.bf16.mxu0 0
    %8248 = vmatpush2.bf16.msra.mxu0 0
    %8249 = vmatprep.subr.bf16.mxu0 0
    %8250 = vmatpush2.bf16.msra.mxu0 0
    %8251 = vmatprep.subr.bf16.mxu0 0
    %8252 = vmatpush2.bf16.msra.mxu0 0
    %8253 = vmatprep.subr.bf16.mxu0 0
    %8254 = vmatpush2.bf16.msra.mxu0 0
    %8255 = vmatprep.subr.bf16.mxu0 0
    %8256 = vmatpush2.bf16.msra.mxu0 0
    %8257 = vmatprep.subr.bf16.mxu0 0
    %8258 = vmatpush2.bf16.msra.mxu0 0
    %8259 = vmatprep.mubr.bf16.mxu0 0
    %8260 = vmatmul.mubr.bf16.gmra.mxu0 %v7394
    %v8261 = vpop.f32.mrf.mxu0
    %v8262 = vadd.f32 0.0, %v8261
    %v8263 = vpop.f32.mrf.mxu0
    %v8264 = vadd.f32 0.0, %v8263
    %v8265 = vpop.f32.mrf.mxu0
    %v8266 = vadd.f32 0.0, %v8265
    %v8267 = vpop.f32.mrf.mxu0
    %v8268 = vadd.f32 0.0, %v8267
    %8269 = vdwg.mxu0
    %v8270 = vadd.f32 %v7983, %v8219
    %v8271 = vadd.f32 %v7984, %v8221
    %v8272 = vadd.f32 %v7985, %v8262
    %v8273 = vadd.f32 %v7986, %v8264
    %v8274 = vadd.f32 %v7987, %v8223
    %v8275 = vadd.f32 %v7988, %v8225
    %v8276 = vadd.f32 %v7989, %v8266
    %v8277 = vadd.f32 %v7990, %v8268
    %s8278 = scalar_lea.vmem %s5, 768
    %v8279 = vld [vmem:[%s8278] sm:$0xff]
    %v8280 = vld [vmem:[%s8278 + $0x8] sm:$0xff]
    %v8281 = vld [vmem:[%s8278 + $0x10] sm:$0xff]
    %v8282 = vld [vmem:[%s8278 + $0x18] sm:$0xff]
    %v8283 = vld [vmem:[%s8278 + $0x20] sm:$0xff]
    %v8284 = vld [vmem:[%s8278 + $0x28] sm:$0xff]
    %v8285 = vld [vmem:[%s8278 + $0x30] sm:$0xff]
    %v8286 = vld [vmem:[%s8278 + $0x38] sm:$0xff]
    %v8287 = vld [vmem:[%s8278 + $0x40] sm:$0xff]
    %v8288 = vld [vmem:[%s8278 + $0x48] sm:$0xff]
    %v8289 = vld [vmem:[%s8278 + $0x50] sm:$0xff]
    %v8290 = vld [vmem:[%s8278 + $0x58] sm:$0xff]
    %v8291 = vld [vmem:[%s8278 + $0x60] sm:$0xff]
    %v8292 = vld [vmem:[%s8278 + $0x68] sm:$0xff]
    %v8293 = vld [vmem:[%s8278 + $0x70] sm:$0xff]
    %v8294 = vld [vmem:[%s8278 + $0x78] sm:$0xff]
    %v8295 = vld [vmem:[%s8278 + $0x80] sm:$0xff]
    %v8296 = vld [vmem:[%s8278 + $0x88] sm:$0xff]
    %v8297 = vld [vmem:[%s8278 + $0x90] sm:$0xff]
    %v8298 = vld [vmem:[%s8278 + $0x98] sm:$0xff]
    %v8299 = vld [vmem:[%s8278 + $0xa0] sm:$0xff]
    %v8300 = vld [vmem:[%s8278 + $0xa8] sm:$0xff]
    %v8301 = vld [vmem:[%s8278 + $0xb0] sm:$0xff]
    %v8302 = vld [vmem:[%s8278 + $0xb8] sm:$0xff]
    %v8303 = vld [vmem:[%s8278 + $0xc0] sm:$0xff]
    %v8304 = vld [vmem:[%s8278 + $0xc8] sm:$0xff]
    %v8305 = vld [vmem:[%s8278 + $0xd0] sm:$0xff]
    %v8306 = vld [vmem:[%s8278 + $0xd8] sm:$0xff]
    %v8307 = vld [vmem:[%s8278 + $0xe0] sm:$0xff]
    %v8308 = vld [vmem:[%s8278 + $0xe8] sm:$0xff]
    %v8309 = vld [vmem:[%s8278 + $0xf0] sm:$0xff]
    %v8310 = vld [vmem:[%s8278 + $0xf8] sm:$0xff]
    %v8343 = vunpack.c.l.b16 %v8279
    %v8344 = vunpack.c.h.b16 %v8279
    %v8345 = vunpack.c.l.b16 %v8280
    %v8346 = vunpack.c.h.b16 %v8280
    %v8347 = vunpack.c.l.b16 %v8281
    %v8348 = vunpack.c.h.b16 %v8281
    %v8349 = vunpack.c.l.b16 %v8282
    %v8350 = vunpack.c.h.b16 %v8282
    %v8351 = vunpack.c.l.b16 %v8283
    %v8352 = vunpack.c.h.b16 %v8283
    %v8353 = vunpack.c.l.b16 %v8284
    %v8354 = vunpack.c.h.b16 %v8284
    %v8355 = vunpack.c.l.b16 %v8285
    %v8356 = vunpack.c.h.b16 %v8285
    %v8357 = vunpack.c.l.b16 %v8286
    %v8358 = vunpack.c.h.b16 %v8286
    %v8359 = vunpack.c.l.b16 %v8287
    %v8360 = vunpack.c.h.b16 %v8287
    %v8361 = vunpack.c.l.b16 %v8288
    %v8362 = vunpack.c.h.b16 %v8288
    %v8363 = vunpack.c.l.b16 %v8289
    %v8364 = vunpack.c.h.b16 %v8289
    %v8365 = vunpack.c.l.b16 %v8290
    %v8366 = vunpack.c.h.b16 %v8290
    %v8367 = vunpack.c.l.b16 %v8291
    %v8368 = vunpack.c.h.b16 %v8291
    %v8369 = vunpack.c.l.b16 %v8292
    %v8370 = vunpack.c.h.b16 %v8292
    %v8371 = vunpack.c.l.b16 %v8293
    %v8372 = vunpack.c.h.b16 %v8293
    %v8373 = vunpack.c.l.b16 %v8294
    %v8374 = vunpack.c.h.b16 %v8294
    %v8375 = vunpack.c.l.b16 %v8295
    %v8376 = vunpack.c.h.b16 %v8295
    %v8377 = vunpack.c.l.b16 %v8296
    %v8378 = vunpack.c.h.b16 %v8296
    %v8379 = vunpack.c.l.b16 %v8297
    %v8380 = vunpack.c.h.b16 %v8297
    %v8381 = vunpack.c.l.b16 %v8298
    %v8382 = vunpack.c.h.b16 %v8298
    %v8383 = vunpack.c.l.b16 %v8299
    %v8384 = vunpack.c.h.b16 %v8299
    %v8385 = vunpack.c.l.b16 %v8300
    %v8386 = vunpack.c.h.b16 %v8300
    %v8387 = vunpack.c.l.b16 %v8301
    %v8388 = vunpack.c.h.b16 %v8301
    %v8389 = vunpack.c.l.b16 %v8302
    %v8390 = vunpack.c.h.b16 %v8302
    %v8391 = vunpack.c.l.b16 %v8303
    %v8392 = vunpack.c.h.b16 %v8303
    %v8393 = vunpack.c.l.b16 %v8304
    %v8394 = vunpack.c.h.b16 %v8304
    %v8395 = vunpack.c.l.b16 %v8305
    %v8396 = vunpack.c.h.b16 %v8305
    %v8397 = vunpack.c.l.b16 %v8306
    %v8398 = vunpack.c.h.b16 %v8306
    %v8399 = vunpack.c.l.b16 %v8307
    %v8400 = vunpack.c.h.b16 %v8307
    %v8401 = vunpack.c.l.b16 %v8308
    %v8402 = vunpack.c.h.b16 %v8308
    %v8403 = vunpack.c.l.b16 %v8309
    %v8404 = vunpack.c.h.b16 %v8309
    %v8405 = vunpack.c.l.b16 %v8310
    %v8406 = vunpack.c.h.b16 %v8310
    %v8407 = vpack.c.b16 %v8347, %v8343
    %v8408 = vpack.c.b16 %v8348, %v8344
    %v8409 = vpack.c.b16 %v8349, %v8345
    %v8410 = vpack.c.b16 %v8350, %v8346
    %v8411 = vpack.c.b16 %v8355, %v8351
    %v8412 = vpack.c.b16 %v8356, %v8352
    %v8413 = vpack.c.b16 %v8357, %v8353
    %v8414 = vpack.c.b16 %v8358, %v8354
    %v8415 = vpack.c.b16 %v8363, %v8359
    %v8416 = vpack.c.b16 %v8364, %v8360
    %v8417 = vpack.c.b16 %v8365, %v8361
    %v8418 = vpack.c.b16 %v8366, %v8362
    %v8419 = vpack.c.b16 %v8371, %v8367
    %v8420 = vpack.c.b16 %v8372, %v8368
    %v8421 = vpack.c.b16 %v8373, %v8369
    %v8422 = vpack.c.b16 %v8374, %v8370
    %v8423 = vpack.c.b16 %v8379, %v8375
    %v8424 = vpack.c.b16 %v8380, %v8376
    %v8425 = vpack.c.b16 %v8381, %v8377
    %v8426 = vpack.c.b16 %v8382, %v8378
    %v8427 = vpack.c.b16 %v8387, %v8383
    %v8428 = vpack.c.b16 %v8388, %v8384
    %v8429 = vpack.c.b16 %v8389, %v8385
    %v8430 = vpack.c.b16 %v8390, %v8386
    %v8431 = vpack.c.b16 %v8395, %v8391
    %v8432 = vpack.c.b16 %v8396, %v8392
    %v8433 = vpack.c.b16 %v8397, %v8393
    %v8434 = vpack.c.b16 %v8398, %v8394
    %v8435 = vpack.c.b16 %v8403, %v8399
    %v8436 = vpack.c.b16 %v8404, %v8400
    %v8437 = vpack.c.b16 %v8405, %v8401
    %v8438 = vpack.c.b16 %v8406, %v8402
    %8471 = vmatprep.subr.bf16.mxu0 %v8436
    %8472 = vmatpush1.bf16.msra.mxu0 %v8435
    %8473 = vmatprep.subr.bf16.mxu0 %v8432
    %8474 = vmatpush1.bf16.msra.mxu0 %v8431
    %8475 = vmatprep.subr.bf16.mxu0 %v8428
    %8476 = vmatpush1.bf16.msra.mxu0 %v8427
    %8477 = vmatprep.subr.bf16.mxu0 %v8424
    %8478 = vmatpush1.bf16.msra.mxu0 %v8423
    %8479 = vmatprep.subr.bf16.mxu0 %v8420
    %8480 = vmatpush1.bf16.msra.mxu0 %v8419
    %8481 = vmatprep.subr.bf16.mxu0 %v8416
    %8482 = vmatpush1.bf16.msra.mxu0 %v8415
    %8483 = vmatprep.subr.bf16.mxu0 %v8412
    %8484 = vmatpush1.bf16.msra.mxu0 %v8411
    %8485 = vmatprep.subr.bf16.mxu0 %v8408
    %8486 = vmatpush1.bf16.msra.mxu0 %v8407
    %8487 = vmatprep.subr.bf16.mxu0 0
    %8488 = vmatpush2.bf16.msra.mxu0 0
    %8489 = vmatprep.subr.bf16.mxu0 0
    %8490 = vmatpush2.bf16.msra.mxu0 0
    %8491 = vmatprep.subr.bf16.mxu0 0
    %8492 = vmatpush2.bf16.msra.mxu0 0
    %8493 = vmatprep.subr.bf16.mxu0 0
    %8494 = vmatpush2.bf16.msra.mxu0 0
    %8495 = vmatprep.subr.bf16.mxu0 0
    %8496 = vmatpush2.bf16.msra.mxu0 0
    %8497 = vmatprep.subr.bf16.mxu0 0
    %8498 = vmatpush2.bf16.msra.mxu0 0
    %8499 = vmatprep.subr.bf16.mxu0 0
    %8500 = vmatpush2.bf16.msra.mxu0 0
    %8501 = vmatprep.subr.bf16.mxu0 0
    %8502 = vmatpush2.bf16.msra.mxu0 0
    %8503 = vmatprep.mubr.bf16.mxu0 0
    %8504 = vmatmul.mubr.bf16.gmra.mxu0 %v7395
    %v8505 = vpop.f32.mrf.mxu0
    %v8506 = vadd.f32 0.0, %v8505
    %v8507 = vpop.f32.mrf.mxu0
    %v8508 = vadd.f32 0.0, %v8507
    %v8509 = vpop.f32.mrf.mxu0
    %v8510 = vadd.f32 0.0, %v8509
    %v8511 = vpop.f32.mrf.mxu0
    %v8512 = vadd.f32 0.0, %v8511
    %8513 = vdwg.mxu0
    %8514 = vmatprep.subr.bf16.mxu0 %v8438
    %8515 = vmatpush1.bf16.msra.mxu0 %v8437
    %8516 = vmatprep.subr.bf16.mxu0 %v8434
    %8517 = vmatpush1.bf16.msra.mxu0 %v8433
    %8518 = vmatprep.subr.bf16.mxu0 %v8430
    %8519 = vmatpush1.bf16.msra.mxu0 %v8429
    %8520 = vmatprep.subr.bf16.mxu0 %v8426
    %8521 = vmatpush1.bf16.msra.mxu0 %v8425
    %8522 = vmatprep.subr.bf16.mxu0 %v8422
    %8523 = vmatpush1.bf16.msra.mxu0 %v8421
    %8524 = vmatprep.subr.bf16.mxu0 %v8418
    %8525 = vmatpush1.bf16.msra.mxu0 %v8417
    %8526 = vmatprep.subr.bf16.mxu0 %v8414
    %8527 = vmatpush1.bf16.msra.mxu0 %v8413
    %8528 = vmatprep.subr.bf16.mxu0 %v8410
    %8529 = vmatpush1.bf16.msra.mxu0 %v8409
    %8530 = vmatprep.subr.bf16.mxu0 0
    %8531 = vmatpush2.bf16.msra.mxu0 0
    %8532 = vmatprep.subr.bf16.mxu0 0
    %8533 = vmatpush2.bf16.msra.mxu0 0
    %8534 = vmatprep.subr.bf16.mxu0 0
    %8535 = vmatpush2.bf16.msra.mxu0 0
    %8536 = vmatprep.subr.bf16.mxu0 0
    %8537 = vmatpush2.bf16.msra.mxu0 0
    %8538 = vmatprep.subr.bf16.mxu0 0
    %8539 = vmatpush2.bf16.msra.mxu0 0
    %8540 = vmatprep.subr.bf16.mxu0 0
    %8541 = vmatpush2.bf16.msra.mxu0 0
    %8542 = vmatprep.subr.bf16.mxu0 0
    %8543 = vmatpush2.bf16.msra.mxu0 0
    %8544 = vmatprep.subr.bf16.mxu0 0
    %8545 = vmatpush2.bf16.msra.mxu0 0
    %8546 = vmatprep.mubr.bf16.mxu0 0
    %8547 = vmatmul.mubr.bf16.gmra.mxu0 %v7395
    %v8548 = vpop.f32.mrf.mxu0
    %v8549 = vadd.f32 0.0, %v8548
    %v8550 = vpop.f32.mrf.mxu0
    %v8551 = vadd.f32 0.0, %v8550
    %v8552 = vpop.f32.mrf.mxu0
    %v8553 = vadd.f32 0.0, %v8552
    %v8554 = vpop.f32.mrf.mxu0
    %v8555 = vadd.f32 0.0, %v8554
    %8556 = vdwg.mxu0
    %v8557 = vadd.f32 %v8270, %v8506
    %v8558 = vadd.f32 %v8271, %v8508
    %v8559 = vadd.f32 %v8272, %v8549
    %v8560 = vadd.f32 %v8273, %v8551
    %v8561 = vadd.f32 %v8274, %v8510
    %v8562 = vadd.f32 %v8275, %v8512
    %v8563 = vadd.f32 %v8276, %v8553
    %v8564 = vadd.f32 %v8277, %v8555
    %v8565 = vmax.f32 %v8557, 0.0
    %v8566 = vmax.f32 %v8558, 0.0
    %v8567 = vmax.f32 %v8559, 0.0
    %v8568 = vmax.f32 %v8560, 0.0
    %v8569 = vmax.f32 %v8561, 0.0
    %v8570 = vmax.f32 %v8562, 0.0
    %v8571 = vmax.f32 %v8563, 0.0
    %v8572 = vmax.f32 %v8564, 0.0
    %v8573 = vpack.c.bf16 %v8569, %v8565
    %v8574 = vpack.c.bf16 %v8570, %v8566
    %v8575 = vpack.c.bf16 %v8571, %v8567
    %v8576 = vpack.c.bf16 %v8572, %v8568
    %v8577 = vld [vmem:[%s7] sm:$0xf]
    %v8578 = vld [vmem:[%s7 + $0x4] sm:$0xf]
    %v8579 = vld [vmem:[%s7 + $0x8] sm:$0xf]
    %v8580 = vld [vmem:[%s7 + $0xc] sm:$0xf]
    %v8581 = vld [vmem:[%s7 + $0x10] sm:$0xf]
    %v8582 = vld [vmem:[%s7 + $0x14] sm:$0xf]
    %v8583 = vld [vmem:[%s7 + $0x18] sm:$0xf]
    %v8584 = vld [vmem:[%s7 + $0x1c] sm:$0xf]
    %v8585 = vld [vmem:[%s7 + $0x20] sm:$0xf]
    %v8586 = vld [vmem:[%s7 + $0x24] sm:$0xf]
    %v8587 = vld [vmem:[%s7 + $0x28] sm:$0xf]
    %v8588 = vld [vmem:[%s7 + $0x2c] sm:$0xf]
    %v8589 = vld [vmem:[%s7 + $0x30] sm:$0xf]
    %v8590 = vld [vmem:[%s7 + $0x34] sm:$0xf]
    %v8591 = vld [vmem:[%s7 + $0x38] sm:$0xf]
    %v8592 = vld [vmem:[%s7 + $0x3c] sm:$0xf]
    %v8593 = vld [vmem:[%s7 + $0x40] sm:$0xf]
    %v8594 = vld [vmem:[%s7 + $0x44] sm:$0xf]
    %v8595 = vld [vmem:[%s7 + $0x48] sm:$0xf]
    %v8596 = vld [vmem:[%s7 + $0x4c] sm:$0xf]
    %v8597 = vld [vmem:[%s7 + $0x50] sm:$0xf]
    %v8598 = vld [vmem:[%s7 + $0x54] sm:$0xf]
    %v8599 = vld [vmem:[%s7 + $0x58] sm:$0xf]
    %v8600 = vld [vmem:[%s7 + $0x5c] sm:$0xf]
    %v8601 = vld [vmem:[%s7 + $0x60] sm:$0xf]
    %v8602 = vld [vmem:[%s7 + $0x64] sm:$0xf]
    %v8603 = vld [vmem:[%s7 + $0x68] sm:$0xf]
    %v8604 = vld [vmem:[%s7 + $0x6c] sm:$0xf]
    %v8605 = vld [vmem:[%s7 + $0x70] sm:$0xf]
    %v8606 = vld [vmem:[%s7 + $0x74] sm:$0xf]
    %v8607 = vld [vmem:[%s7 + $0x78] sm:$0xf]
    %v8608 = vld [vmem:[%s7 + $0x7c] sm:$0xf]
    %v8609 = vld [vmem:[%s7 + $0x80] sm:$0xf]
    %v8610 = vld [vmem:[%s7 + $0x84] sm:$0xf]
    %v8611 = vld [vmem:[%s7 + $0x88] sm:$0xf]
    %v8612 = vld [vmem:[%s7 + $0x8c] sm:$0xf]
    %v8613 = vld [vmem:[%s7 + $0x90] sm:$0xf]
    %v8614 = vld [vmem:[%s7 + $0x94] sm:$0xf]
    %v8615 = vld [vmem:[%s7 + $0x98] sm:$0xf]
    %v8616 = vld [vmem:[%s7 + $0x9c] sm:$0xf]
    %v8617 = vld [vmem:[%s7 + $0xa0] sm:$0xf]
    %v8618 = vld [vmem:[%s7 + $0xa4] sm:$0xf]
    %v8619 = vld [vmem:[%s7 + $0xa8] sm:$0xf]
    %v8620 = vld [vmem:[%s7 + $0xac] sm:$0xf]
    %v8621 = vld [vmem:[%s7 + $0xb0] sm:$0xf]
    %v8622 = vld [vmem:[%s7 + $0xb4] sm:$0xf]
    %v8623 = vld [vmem:[%s7 + $0xb8] sm:$0xf]
    %v8624 = vld [vmem:[%s7 + $0xbc] sm:$0xf]
    %v8625 = vld [vmem:[%s7 + $0xc0] sm:$0xf]
    %v8626 = vld [vmem:[%s7 + $0xc4] sm:$0xf]
    %v8627 = vld [vmem:[%s7 + $0xc8] sm:$0xf]
    %v8628 = vld [vmem:[%s7 + $0xcc] sm:$0xf]
    %v8629 = vld [vmem:[%s7 + $0xd0] sm:$0xf]
    %v8630 = vld [vmem:[%s7 + $0xd4] sm:$0xf]
    %v8631 = vld [vmem:[%s7 + $0xd8] sm:$0xf]
    %v8632 = vld [vmem:[%s7 + $0xdc] sm:$0xf]
    %v8633 = vld [vmem:[%s7 + $0xe0] sm:$0xf]
    %v8634 = vld [vmem:[%s7 + $0xe4] sm:$0xf]
    %v8635 = vld [vmem:[%s7 + $0xe8] sm:$0xf]
    %v8636 = vld [vmem:[%s7 + $0xec] sm:$0xf]
    %v8637 = vld [vmem:[%s7 + $0xf0] sm:$0xf]
    %v8638 = vld [vmem:[%s7 + $0xf4] sm:$0xf]
    %v8639 = vld [vmem:[%s7 + $0xf8] sm:$0xf]
    %v8640 = vld [vmem:[%s7 + $0xfc] sm:$0xf]
    %v8641 = vld [vmem:[%s8] sm:$0x1]
    %v8643 = vlaneseq
    %v8644 = vshrl.u32 %v8643, 7
    %v8645 = vsub.s32 0, %v8644
    %v8646 = vrot.slane %v8641, %v8645
    %v8712 = vunpack.c.l.b16 %v8577
    %v8713 = vunpack.c.l.b16 %v8578
    %v8714 = vunpack.c.l.b16 %v8579
    %v8715 = vunpack.c.l.b16 %v8580
    %v8716 = vunpack.c.l.b16 %v8581
    %v8717 = vunpack.c.l.b16 %v8582
    %v8718 = vunpack.c.l.b16 %v8583
    %v8719 = vunpack.c.l.b16 %v8584
    %v8720 = vunpack.c.l.b16 %v8585
    %v8721 = vunpack.c.l.b16 %v8586
    %v8722 = vunpack.c.l.b16 %v8587
    %v8723 = vunpack.c.l.b16 %v8588
    %v8724 = vunpack.c.l.b16 %v8589
    %v8725 = vunpack.c.l.b16 %v8590
    %v8726 = vunpack.c.l.b16 %v8591
    %v8727 = vunpack.c.l.b16 %v8592
    %v8728 = vunpack.c.l.b16 %v8593
    %v8729 = vunpack.c.l.b16 %v8594
    %v8730 = vunpack.c.l.b16 %v8595
    %v8731 = vunpack.c.l.b16 %v8596
    %v8732 = vunpack.c.l.b16 %v8597
    %v8733 = vunpack.c.l.b16 %v8598
    %v8734 = vunpack.c.l.b16 %v8599
    %v8735 = vunpack.c.l.b16 %v8600
    %v8736 = vunpack.c.l.b16 %v8601
    %v8737 = vunpack.c.l.b16 %v8602
    %v8738 = vunpack.c.l.b16 %v8603
    %v8739 = vunpack.c.l.b16 %v8604
    %v8740 = vunpack.c.l.b16 %v8605
    %v8741 = vunpack.c.l.b16 %v8606
    %v8742 = vunpack.c.l.b16 %v8607
    %v8743 = vunpack.c.l.b16 %v8608
    %v8744 = vunpack.c.l.b16 %v8609
    %v8745 = vunpack.c.l.b16 %v8610
    %v8746 = vunpack.c.l.b16 %v8611
    %v8747 = vunpack.c.l.b16 %v8612
    %v8748 = vunpack.c.l.b16 %v8613
    %v8749 = vunpack.c.l.b16 %v8614
    %v8750 = vunpack.c.l.b16 %v8615
    %v8751 = vunpack.c.l.b16 %v8616
    %v8752 = vunpack.c.l.b16 %v8617
    %v8753 = vunpack.c.l.b16 %v8618
    %v8754 = vunpack.c.l.b16 %v8619
    %v8755 = vunpack.c.l.b16 %v8620
    %v8756 = vunpack.c.l.b16 %v8621
    %v8757 = vunpack.c.l.b16 %v8622
    %v8758 = vunpack.c.l.b16 %v8623
    %v8759 = vunpack.c.l.b16 %v8624
    %v8760 = vunpack.c.l.b16 %v8625
    %v8761 = vunpack.c.l.b16 %v8626
    %v8762 = vunpack.c.l.b16 %v8627
    %v8763 = vunpack.c.l.b16 %v8628
    %v8764 = vunpack.c.l.b16 %v8629
    %v8765 = vunpack.c.l.b16 %v8630
    %v8766 = vunpack.c.l.b16 %v8631
    %v8767 = vunpack.c.l.b16 %v8632
    %v8768 = vunpack.c.l.b16 %v8633
    %v8769 = vunpack.c.l.b16 %v8634
    %v8770 = vunpack.c.l.b16 %v8635
    %v8771 = vunpack.c.l.b16 %v8636
    %v8772 = vunpack.c.l.b16 %v8637
    %v8773 = vunpack.c.l.b16 %v8638
    %v8774 = vunpack.c.l.b16 %v8639
    %v8775 = vunpack.c.l.b16 %v8640
    %v8776 = vpack.c.b16 %v8713, %v8712
    %v8777 = vpack.c.b16 %v8715, %v8714
    %v8778 = vpack.c.b16 %v8717, %v8716
    %v8779 = vpack.c.b16 %v8719, %v8718
    %v8780 = vpack.c.b16 %v8721, %v8720
    %v8781 = vpack.c.b16 %v8723, %v8722
    %v8782 = vpack.c.b16 %v8725, %v8724
    %v8783 = vpack.c.b16 %v8727, %v8726
    %v8784 = vpack.c.b16 %v8729, %v8728
    %v8785 = vpack.c.b16 %v8731, %v8730
    %v8786 = vpack.c.b16 %v8733, %v8732
    %v8787 = vpack.c.b16 %v8735, %v8734
    %v8788 = vpack.c.b16 %v8737, %v8736
    %v8789 = vpack.c.b16 %v8739, %v8738
    %v8790 = vpack.c.b16 %v8741, %v8740
    %v8791 = vpack.c.b16 %v8743, %v8742
    %v8792 = vpack.c.b16 %v8745, %v8744
    %v8793 = vpack.c.b16 %v8747, %v8746
    %v8794 = vpack.c.b16 %v8749, %v8748
    %v8795 = vpack.c.b16 %v8751, %v8750
    %v8796 = vpack.c.b16 %v8753, %v8752
    %v8797 = vpack.c.b16 %v8755, %v8754
    %v8798 = vpack.c.b16 %v8757, %v8756
    %v8799 = vpack.c.b16 %v8759, %v8758
    %v8800 = vpack.c.b16 %v8761, %v8760
    %v8801 = vpack.c.b16 %v8763, %v8762
    %v8802 = vpack.c.b16 %v8765, %v8764
    %v8803 = vpack.c.b16 %v8767, %v8766
    %v8804 = vpack.c.b16 %v8769, %v8768
    %v8805 = vpack.c.b16 %v8771, %v8770
    %v8806 = vpack.c.b16 %v8773, %v8772
    %v8807 = vpack.c.b16 %v8775, %v8774
    %8840 = vmatprep.subr.bf16.mxu0 0
    %8841 = vmatpush1.bf16.msra.mxu0 %v8783
    %8842 = vmatprep.subr.bf16.mxu0 0
    %8843 = vmatpush1.bf16.msra.mxu0 %v8782
    %8844 = vmatprep.subr.bf16.mxu0 0
    %8845 = vmatpush1.bf16.msra.mxu0 %v8781
    %8846 = vmatprep.subr.bf16.mxu0 0
    %8847 = vmatpush1.bf16.msra.mxu0 %v8780
    %8848 = vmatprep.subr.bf16.mxu0 0
    %8849 = vmatpush1.bf16.msra.mxu0 %v8779
    %8850 = vmatprep.subr.bf16.mxu0 0
    %8851 = vmatpush1.bf16.msra.mxu0 %v8778
    %8852 = vmatprep.subr.bf16.mxu0 0
    %8853 = vmatpush1.bf16.msra.mxu0 %v8777
    %8854 = vmatprep.subr.bf16.mxu0 0
    %8855 = vmatpush1.bf16.msra.mxu0 %v8776
    %8856 = vmatprep.subr.bf16.mxu0 0
    %8857 = vmatpush2.bf16.msra.mxu0 %v8791
    %8858 = vmatprep.subr.bf16.mxu0 0
    %8859 = vmatpush2.bf16.msra.mxu0 %v8790
    %8860 = vmatprep.subr.bf16.mxu0 0
    %8861 = vmatpush2.bf16.msra.mxu0 %v8789
    %8862 = vmatprep.subr.bf16.mxu0 0
    %8863 = vmatpush2.bf16.msra.mxu0 %v8788
    %8864 = vmatprep.subr.bf16.mxu0 0
    %8865 = vmatpush2.bf16.msra.mxu0 %v8787
    %8866 = vmatprep.subr.bf16.mxu0 0
    %8867 = vmatpush2.bf16.msra.mxu0 %v8786
    %8868 = vmatprep.subr.bf16.mxu0 0
    %8869 = vmatpush2.bf16.msra.mxu0 %v8785
    %8870 = vmatprep.subr.bf16.mxu0 0
    %8871 = vmatpush2.bf16.msra.mxu0 %v8784
    %8872 = vmatprep.mubr.bf16.mxu0 %v8574
    %8873 = vmatmul.mubr.bf16.gmra.mxu0 %v8573
    %v8874 = vpop.f32.mrf.mxu0
    %v8875 = vadd.f32 %v8646, %v8874
    %v8876 = vpop.f32.mrf.mxu0
    %v8877 = vpop.f32.mrf.mxu0
    %v8878 = vadd.f32 %v8646, %v8877
    %v8879 = vpop.f32.mrf.mxu0
    %8880 = vdwg.mxu0
    %8881 = vmatprep.subr.bf16.mxu0 0
    %8882 = vmatpush1.bf16.msra.mxu0 %v8799
    %8883 = vmatprep.subr.bf16.mxu0 0
    %8884 = vmatpush1.bf16.msra.mxu0 %v8798
    %8885 = vmatprep.subr.bf16.mxu0 0
    %8886 = vmatpush1.bf16.msra.mxu0 %v8797
    %8887 = vmatprep.subr.bf16.mxu0 0
    %8888 = vmatpush1.bf16.msra.mxu0 %v8796
    %8889 = vmatprep.subr.bf16.mxu0 0
    %8890 = vmatpush1.bf16.msra.mxu0 %v8795
    %8891 = vmatprep.subr.bf16.mxu0 0
    %8892 = vmatpush1.bf16.msra.mxu0 %v8794
    %8893 = vmatprep.subr.bf16.mxu0 0
    %8894 = vmatpush1.bf16.msra.mxu0 %v8793
    %8895 = vmatprep.subr.bf16.mxu0 0
    %8896 = vmatpush1.bf16.msra.mxu0 %v8792
    %8897 = vmatprep.subr.bf16.mxu0 0
    %8898 = vmatpush2.bf16.msra.mxu0 %v8807
    %8899 = vmatprep.subr.bf16.mxu0 0
    %8900 = vmatpush2.bf16.msra.mxu0 %v8806
    %8901 = vmatprep.subr.bf16.mxu0 0
    %8902 = vmatpush2.bf16.msra.mxu0 %v8805
    %8903 = vmatprep.subr.bf16.mxu0 0
    %8904 = vmatpush2.bf16.msra.mxu0 %v8804
    %8905 = vmatprep.subr.bf16.mxu0 0
    %8906 = vmatpush2.bf16.msra.mxu0 %v8803
    %8907 = vmatprep.subr.bf16.mxu0 0
    %8908 = vmatpush2.bf16.msra.mxu0 %v8802
    %8909 = vmatprep.subr.bf16.mxu0 0
    %8910 = vmatpush2.bf16.msra.mxu0 %v8801
    %8911 = vmatprep.subr.bf16.mxu0 0
    %8912 = vmatpush2.bf16.msra.mxu0 %v8800
    %8913 = vmatprep.mubr.bf16.mxu0 %v8576
    %8914 = vmatmul.mubr.bf16.gmra.mxu0 %v8575
    %v8915 = vpop.f32.mrf.mxu0
    %v8916 = vadd.f32 %v8875, %v8915
    %v8917 = vpop.f32.mrf.mxu0
    %v8918 = vpop.f32.mrf.mxu0
    %v8919 = vadd.f32 %v8878, %v8918
    %v8920 = vpop.f32.mrf.mxu0
    %8921 = vdwg.mxu0
    %8922 = vst [vmem:[%s9] sm:$0xff] %v8916
    %8923 = vst [vmem:[%s9 + $0x8] sm:$0xff] %v8919
    // Predicated region
    $region42: #{onset_detection_net.1} parent=1 // pred_check
      _
    $region43: #{onset_detection_net.1} parent=1 // pred_check_branch
      %8925 = sbr.rel (0) target = $region45
    $region44: #{onset_detection_net.1} parent=1 // pred_region
      _
    $region45: #{onset_detection_net.1} parent=1 // pred_fallthru
      _
    // Predicated region
    $region46: #{onset_detection_net.1} parent=1 // pred_check
      _
    $region47: #{onset_detection_net.1} parent=1 // pred_check_branch
      %8927 = sbr.rel (0) target = $region49
    $region48: #{onset_detection_net.1} parent=1 // pred_region
      _
    $region49: #{onset_detection_net.1} parent=1 // pred_fallthru
      _
    %8928 = vsyncpa [#allocation4], 1

</llo_original>
